<compile_context>
chip_gen: v7x
topology: tpu7x:2x2x1
jax: 0.10.0
libtpu: 0.0.40
codegen_flags: <defaults>
</compile_context>

<pallas_src>
import functools

import jax
import jax.numpy as jnp
from jax.experimental import pallas as pl
from jax.experimental.pallas import tpu as pltpu

TAU = 2.0
V_THRESHOLD = 1.0


# ----------------------------- Pallas kernel ------------------------------- #

def _conv3x3_im2col(pad_ref, col_ref, w_ref, H, W, C):
    """3x3 'same' conv over a pre-padded VMEM image via a single im2col matmul.

    pad_ref: (H+2, W+2, C) f32 VMEM (zero-padded image)
    col_ref: (H, W, 9*C)   f32 VMEM (im2col staging buffer)
    w_ref  : (9*C, Cout)   bf16     (taps ordered kh-major, kw, then channel)
    returns: (H*W, Cout)   f32 conv output
    """
    for kh in range(3):
        for kw in range(3):
            t = kh * 3 + kw
            col_ref[:, :, pl.ds(t * C, C)] = pad_ref[pl.ds(kh, H), pl.ds(kw, W), :]
    patches = col_ref[...].reshape(H * W, 9 * C).astype(jnp.bfloat16)
    return jnp.dot(patches, w_ref[...], preferred_element_type=jnp.float32)


def csnn_vgg3_fused_kernel(x_ref, w1_ref, w2_ref, w3_ref, o_ref,
                           pad1_ref, pad2_ref, col1_ref, col2_ref, *, thresh):
    """One batch element: conv1+LIF -> conv2+LIF -> conv3+LIF -> (identity hook) -> maxpool2x2.

    x_ref : (1, H, W, Cin) f32   w*_ref: (9*C, Cout) bf16   o_ref: (1, H//2, W//2, Cout) f32
    """
    _, H, W, Cin = x_ref.shape
    Cout = w1_ref.shape[1]

    # ---- conv1 (3x3, pad=1, bias=False) + LIF -------------------------------
    pad1_ref[...] = jnp.zeros_like(pad1_ref)
    pad1_ref[pl.ds(1, H), pl.ds(1, W), :] = x_ref[0].astype(pad1_ref.dtype)
    acc = _conv3x3_im2col(pad1_ref, col1_ref, w1_ref, H, W, Cin)      # (H*W, Cout) f32
    s = jnp.where(acc >= thresh, 1.0, 0.0)                            # LIF spike (v = x/tau >= v_th)

    # ---- conv2 + LIF ---------------------------------------------------------
    pad2_ref[...] = jnp.zeros_like(pad2_ref)
    pad2_ref[pl.ds(1, H), pl.ds(1, W), :] = s.reshape(H, W, Cout).astype(pad2_ref.dtype)
    acc = _conv3x3_im2col(pad2_ref, col2_ref, w2_ref, H, W, Cout)
    s = jnp.where(acc >= thresh, 1.0, 0.0)

    # ---- conv3 + LIF  (pad2 border is still zero; overwrite interior only) ---
    pad2_ref[pl.ds(1, H), pl.ds(1, W), :] = s.reshape(H, W, Cout).astype(pad2_ref.dtype)
    acc = _conv3x3_im2col(pad2_ref, col2_ref, w3_ref, H, W, Cout)
    s = jnp.where(acc >= thresh, 1.0, 0.0).reshape(H, W, Cout)

    # TrainingHook(labels, y): forward is identity (feedback is backward-only).

    # ---- fused 2x2 stride-2 max pool; only the pooled result is stored to HBM
    t = jnp.max(s.reshape(H // 2, 2, W, Cout), axis=1)                # pool along H
    p = jnp.max(t.reshape(H // 2, W // 2, 2, Cout), axis=2)           # pool along W
    o_ref[...] = p.reshape(1, H // 2, W // 2, Cout).astype(o_ref.dtype)


# ------------------------------- wrapper ------------------------------------ #

def _repack_weight(w_torch):
    """(Cout, Cin, 3, 3) PyTorch conv weight -> (9*Cin, Cout) bf16 im2col weight."""
    cout, cin = w_torch.shape[0], w_torch.shape[1]
    return jnp.transpose(w_torch, (2, 3, 1, 0)).reshape(9 * cin, cout).astype(jnp.bfloat16)


def csnn_block_vgg3_forward(x_nchw, params, labels=None, y=None):
    """Forward pass of CSNN_block_VGG3. Accepts/returns PyTorch NCHW layout.

    TODO(synk): TrainingHook / FA_wrapper random-feedback only affects the backward pass;
    this is a forward-only kernel, so they are (correctly) identity / plain conv here.
    """
    x = jnp.transpose(x_nchw, (0, 2, 3, 1)).astype(jnp.float32)       # NCHW -> NHWC
    B, H, W, Cin = x.shape
    Cout = params["w1"].shape[0]
    H2, W2 = H // 2, W // 2

    w1 = _repack_weight(params["w1"])
    w2 = _repack_weight(params["w2"])
    w3 = _repack_weight(params["w3"])

    kernel = functools.partial(csnn_vgg3_fused_kernel, thresh=V_THRESHOLD * TAU)

    out = pl.pallas_call(
        kernel,
        out_shape=jax.ShapeDtypeStruct((B, H2, W2, Cout), jnp.float32),
        grid_spec=pltpu.PrefetchScalarGridSpec(
            num_scalar_prefetch=0,
            grid=(B,),
            in_specs=[
                pl.BlockSpec((1, H, W, Cin), lambda b: (b, 0, 0, 0)),
                pl.BlockSpec((9 * Cin, Cout), lambda b: (0, 0)),
                pl.BlockSpec((9 * Cout, Cout), lambda b: (0, 0)),
                pl.BlockSpec((9 * Cout, Cout), lambda b: (0, 0)),
            ],
            out_specs=pl.BlockSpec((1, H2, W2, Cout), lambda b: (b, 0, 0, 0)),
            scratch_shapes=[
                pltpu.VMEM((H + 2, W + 2, Cin), jnp.float32),    # padded input (layer 1)
                pltpu.VMEM((H + 2, W + 2, Cout), jnp.float32),   # padded spikes (layers 2/3)
                pltpu.VMEM((H, W, 9 * Cin), jnp.float32),        # im2col buffer (layer 1)
                pltpu.VMEM((H, W, 9 * Cout), jnp.float32),       # im2col buffer (layers 2/3)
            ],
        ),
        compiler_params=pltpu.CompilerParams(
            dimension_semantics=("parallel",),                   # batch across TCs on v7x
            vmem_limit_bytes=32 * 1024 * 1024,                   # explicit; safe on v5e/v6e/v7x
        ),
    )(x, w1, w2, w3)

    return jnp.transpose(out, (0, 3, 1, 2))                           # NHWC -> NCHW


# --------------------------------- main ------------------------------------- #

def _uniform(key, shape, bound):
    return jax.random.uniform(key, shape, jnp.float32, -bound, bound)


if __name__ == "__main__":
    # Module hyperparameters (bias=False, tau=2.0, kernel_size=3, stride=1, padding=1)
    B, Cin, H, W = 2, 4, 16, 16
    Cout = 8
    label_features = 10

    key = jax.random.PRNGKey(0)
    k1, k2, k3, kx, ky = jax.random.split(key, 5)

    # PyTorch Conv2d default init: U(-1/sqrt(fan_in), 1/sqrt(fan_in))
    fan1 = Cin * 3 * 3
    fan2 = Cout * 3 * 3
    params = {
        "w1": _uniform(k1, (Cout, Cin, 3, 3), fan1 ** -0.5),
        "w2": _uniform(k2, (Cout, Cout, 3, 3), fan2 ** -0.5),
        "w3": _uniform(k3, (Cout, Cout, 3, 3), fan2 ** -0.5),
    }

    x = jax.random.normal(kx, (B, Cin, H, W), jnp.float32)
    labels = jax.nn.one_hot(jnp.array([1, 3]), label_features, dtype=jnp.float32)
    y = jax.random.normal(ky, (B, label_features), jnp.float32)

    out = csnn_block_vgg3_forward(x, params, labels, y)
    out = jax.block_until_ready(out)

    assert out.shape == (B, Cout, H // 2, W // 2), out.shape
    assert out.dtype == jnp.float32
    print("KERNEL_OK")
</pallas_src>

<mosaic_0001>
module attributes {stable_mosaic.version = 11 : i64} {
  func.func @csnn_vgg3_fused_kernel(%arg0: i32, %arg1: memref<1x16x16x4xf32, #tpu.memory_space<vmem>>, %arg2: memref<36x8xbf16, #tpu.memory_space<vmem>>, %arg3: memref<72x8xbf16, #tpu.memory_space<vmem>>, %arg4: memref<72x8xbf16, #tpu.memory_space<vmem>>, %arg5: memref<1x8x8x8xf32, #tpu.memory_space<vmem>>, %arg6: memref<18x18x4xf32, #tpu.memory_space<vmem>>, %arg7: memref<18x18x8xf32, #tpu.memory_space<vmem>>, %arg8: memref<16x16x36xf32, #tpu.memory_space<vmem>>, %arg9: memref<16x16x72xf32, #tpu.memory_space<vmem>>) attributes {dimension_semantics = [#tpu.dimension_semantics<parallel>], iteration_bounds = array<i64: 2>, scalar_prefetch = 0 : i64, scratch_operands = 4 : i64, tpu.core_type = #tpu.core_type<tc>, window_params = [{transform_indices = @transform_0, window_bounds = array<i64: 1, 16, 16, 4>}, {pipeline_mode = #tpu.pipeline_mode<synchronous>, transform_indices = @transform_1, window_bounds = array<i64: 36, 8>}, {pipeline_mode = #tpu.pipeline_mode<synchronous>, transform_indices = @transform_2, window_bounds = array<i64: 72, 8>}, {pipeline_mode = #tpu.pipeline_mode<synchronous>, transform_indices = @transform_3, window_bounds = array<i64: 72, 8>}, {transform_indices = @transform_4, window_bounds = array<i64: 1, 8, 8, 8>}]} {
    %cst = arith.constant 0.000000e+00 : f32
    %0 = vector.broadcast %cst : f32 to vector<18x18x4xf32>
    %c0 = arith.constant 0 : index
    %c0_0 = arith.constant 0 : index
    %c0_1 = arith.constant 0 : index
    %1 = vector.load %arg6[%c0, %c0_0, %c0_1] : memref<18x18x4xf32, #tpu.memory_space<vmem>>, vector<18x18x4xf32>
    tpu.vector_store %arg6[%c0, %c0_0, %c0_1], %0 {strides = array<i32>} : memref<18x18x4xf32, #tpu.memory_space<vmem>>, vector<18x18x4xf32>,
    %c0_2 = arith.constant 0 : index
    %c0_3 = arith.constant 0 : index
    %c0_4 = arith.constant 0 : index
    %c0_5 = arith.constant 0 : index
    %2 = vector.load %arg1[%c0_2, %c0_3, %c0_4, %c0_5] : memref<1x16x16x4xf32, #tpu.memory_space<vmem>>, vector<1x16x16x4xf32>
    %3 = vector.shape_cast %2 : vector<1x16x16x4xf32> to vector<16x16x4xf32>
    %c1 = arith.constant 1 : index
    %c1_6 = arith.constant 1 : index
    %c0_7 = arith.constant 0 : index
    %4 = vector.load %arg6[%c1, %c1_6, %c0_7] : memref<18x18x4xf32, #tpu.memory_space<vmem>>, vector<16x16x4xf32>
    tpu.vector_store %arg6[%c1, %c1_6, %c0_7], %3 {strides = array<i32>} : memref<18x18x4xf32, #tpu.memory_space<vmem>>, vector<16x16x4xf32>,
    %c0_8 = arith.constant 0 : index
    %c0_9 = arith.constant 0 : index
    %c0_10 = arith.constant 0 : index
    %5 = vector.load %arg6[%c0_8, %c0_9, %c0_10] : memref<18x18x4xf32, #tpu.memory_space<vmem>>, vector<16x16x4xf32>
    %c0_11 = arith.constant 0 : index
    %c0_12 = arith.constant 0 : index
    %c0_13 = arith.constant 0 : index
    %6 = vector.load %arg8[%c0_11, %c0_12, %c0_13] : memref<16x16x36xf32, #tpu.memory_space<vmem>>, vector<16x16x4xf32>
    tpu.vector_store %arg8[%c0_11, %c0_12, %c0_13], %5 {strides = array<i32>} : memref<16x16x36xf32, #tpu.memory_space<vmem>>, vector<16x16x4xf32>,
    %c0_14 = arith.constant 0 : index
    %c1_15 = arith.constant 1 : index
    %c0_16 = arith.constant 0 : index
    %7 = vector.load %arg6[%c0_14, %c1_15, %c0_16] : memref<18x18x4xf32, #tpu.memory_space<vmem>>, vector<16x16x4xf32>
    %c0_17 = arith.constant 0 : index
    %c0_18 = arith.constant 0 : index
    %c4 = arith.constant 4 : index
    %8 = vector.load %arg8[%c0_17, %c0_18, %c4] : memref<16x16x36xf32, #tpu.memory_space<vmem>>, vector<16x16x4xf32>
    tpu.vector_store %arg8[%c0_17, %c0_18, %c4], %7 {strides = array<i32>} : memref<16x16x36xf32, #tpu.memory_space<vmem>>, vector<16x16x4xf32>,
    %c0_19 = arith.constant 0 : index
    %c2 = arith.constant 2 : index
    %c0_20 = arith.constant 0 : index
    %9 = vector.load %arg6[%c0_19, %c2, %c0_20] : memref<18x18x4xf32, #tpu.memory_space<vmem>>, vector<16x16x4xf32>
    %c0_21 = arith.constant 0 : index
    %c0_22 = arith.constant 0 : index
    %c8 = arith.constant 8 : index
    %10 = vector.load %arg8[%c0_21, %c0_22, %c8] : memref<16x16x36xf32, #tpu.memory_space<vmem>>, vector<16x16x4xf32>
    tpu.vector_store %arg8[%c0_21, %c0_22, %c8], %9 {strides = array<i32>} : memref<16x16x36xf32, #tpu.memory_space<vmem>>, vector<16x16x4xf32>,
    %c1_23 = arith.constant 1 : index
    %c0_24 = arith.constant 0 : index
    %c0_25 = arith.constant 0 : index
    %11 = vector.load %arg6[%c1_23, %c0_24, %c0_25] : memref<18x18x4xf32, #tpu.memory_space<vmem>>, vector<16x16x4xf32>
    %c0_26 = arith.constant 0 : index
    %c0_27 = arith.constant 0 : index
    %c12 = arith.constant 12 : index
    %12 = vector.load %arg8[%c0_26, %c0_27, %c12] : memref<16x16x36xf32, #tpu.memory_space<vmem>>, vector<16x16x4xf32>
    tpu.vector_store %arg8[%c0_26, %c0_27, %c12], %11 {strides = array<i32>} : memref<16x16x36xf32, #tpu.memory_space<vmem>>, vector<16x16x4xf32>,
    %c1_28 = arith.constant 1 : index
    %c1_29 = arith.constant 1 : index
    %c0_30 = arith.constant 0 : index
    %13 = vector.load %arg6[%c1_28, %c1_29, %c0_30] : memref<18x18x4xf32, #tpu.memory_space<vmem>>, vector<16x16x4xf32>
    %c0_31 = arith.constant 0 : index
    %c0_32 = arith.constant 0 : index
    %c16 = arith.constant 16 : index
    %14 = vector.load %arg8[%c0_31, %c0_32, %c16] : memref<16x16x36xf32, #tpu.memory_space<vmem>>, vector<16x16x4xf32>
    tpu.vector_store %arg8[%c0_31, %c0_32, %c16], %13 {strides = array<i32>} : memref<16x16x36xf32, #tpu.memory_space<vmem>>, vector<16x16x4xf32>,
    %c1_33 = arith.constant 1 : index
    %c2_34 = arith.constant 2 : index
    %c0_35 = arith.constant 0 : index
    %15 = vector.load %arg6[%c1_33, %c2_34, %c0_35] : memref<18x18x4xf32, #tpu.memory_space<vmem>>, vector<16x16x4xf32>
    %c0_36 = arith.constant 0 : index
    %c0_37 = arith.constant 0 : index
    %c20 = arith.constant 20 : index
    %16 = vector.load %arg8[%c0_36, %c0_37, %c20] : memref<16x16x36xf32, #tpu.memory_space<vmem>>, vector<16x16x4xf32>
    tpu.vector_store %arg8[%c0_36, %c0_37, %c20], %15 {strides = array<i32>} : memref<16x16x36xf32, #tpu.memory_space<vmem>>, vector<16x16x4xf32>,
    %c2_38 = arith.constant 2 : index
    %c0_39 = arith.constant 0 : index
    %c0_40 = arith.constant 0 : index
    %17 = vector.load %arg6[%c2_38, %c0_39, %c0_40] : memref<18x18x4xf32, #tpu.memory_space<vmem>>, vector<16x16x4xf32>
    %c0_41 = arith.constant 0 : index
    %c0_42 = arith.constant 0 : index
    %c24 = arith.constant 24 : index
    %18 = vector.load %arg8[%c0_41, %c0_42, %c24] : memref<16x16x36xf32, #tpu.memory_space<vmem>>, vector<16x16x4xf32>
    tpu.vector_store %arg8[%c0_41, %c0_42, %c24], %17 {strides = array<i32>} : memref<16x16x36xf32, #tpu.memory_space<vmem>>, vector<16x16x4xf32>,
    %c2_43 = arith.constant 2 : index
    %c1_44 = arith.constant 1 : index
    %c0_45 = arith.constant 0 : index
    %19 = vector.load %arg6[%c2_43, %c1_44, %c0_45] : memref<18x18x4xf32, #tpu.memory_space<vmem>>, vector<16x16x4xf32>
    %c0_46 = arith.constant 0 : index
    %c0_47 = arith.constant 0 : index
    %c28 = arith.constant 28 : index
    %20 = vector.load %arg8[%c0_46, %c0_47, %c28] : memref<16x16x36xf32, #tpu.memory_space<vmem>>, vector<16x16x4xf32>
    tpu.vector_store %arg8[%c0_46, %c0_47, %c28], %19 {strides = array<i32>} : memref<16x16x36xf32, #tpu.memory_space<vmem>>, vector<16x16x4xf32>,
    %c2_48 = arith.constant 2 : index
    %c2_49 = arith.constant 2 : index
    %c0_50 = arith.constant 0 : index
    %21 = vector.load %arg6[%c2_48, %c2_49, %c0_50] : memref<18x18x4xf32, #tpu.memory_space<vmem>>, vector<16x16x4xf32>
    %c0_51 = arith.constant 0 : index
    %c0_52 = arith.constant 0 : index
    %c32 = arith.constant 32 : index
    %22 = vector.load %arg8[%c0_51, %c0_52, %c32] : memref<16x16x36xf32, #tpu.memory_space<vmem>>, vector<16x16x4xf32>
    tpu.vector_store %arg8[%c0_51, %c0_52, %c32], %21 {strides = array<i32>} : memref<16x16x36xf32, #tpu.memory_space<vmem>>, vector<16x16x4xf32>,
    %c0_53 = arith.constant 0 : index
    %c0_54 = arith.constant 0 : index
    %c0_55 = arith.constant 0 : index
    %23 = vector.load %arg8[%c0_53, %c0_54, %c0_55] : memref<16x16x36xf32, #tpu.memory_space<vmem>>, vector<16x16x36xf32>
    %24 = vector.shape_cast %23 : vector<16x16x36xf32> to vector<256x36xf32>
    %25 = arith.truncf %24 : vector<256x36xf32> to vector<256x36xbf16>
    %c0_56 = arith.constant 0 : index
    %c0_57 = arith.constant 0 : index
    %26 = vector.load %arg2[%c0_56, %c0_57] : memref<36x8xbf16, #tpu.memory_space<vmem>>, vector<36x8xbf16>
    %cst_58 = arith.constant dense<0.000000e+00> : vector<256x8xf32>
    %27 = tpu.matmul %25, %26, %cst_58 {dimension_numbers = #tpu.dot_dimension_numbers<[1], [0], [0], [1], [0, 0, 1, 1], [], []>} : vector<256x36xbf16>, vector<36x8xbf16>, vector<256x8xf32> -> vector<256x8xf32>
    %cst_59 = arith.constant 2.000000e+00 : f32
    %28 = vector.broadcast %cst_59 : f32 to vector<256x8xf32>
    %29 = arith.cmpf oge, %27, %28 : vector<256x8xf32>
    %cst_60 = arith.constant 1.000000e+00 : f32
    %cst_61 = arith.constant 0.000000e+00 : f32
    %30 = vector.broadcast %cst_60 : f32 to vector<256x8xf32>
    %31 = vector.broadcast %cst_61 : f32 to vector<256x8xf32>
    %32 = arith.select %29, %30, %31 : vector<256x8xi1>, vector<256x8xf32>
    %cst_62 = arith.constant 0.000000e+00 : f32
    %33 = vector.broadcast %cst_62 : f32 to vector<18x18x8xf32>
    %c0_63 = arith.constant 0 : index
    %c0_64 = arith.constant 0 : index
    %c0_65 = arith.constant 0 : index
    %34 = vector.load %arg7[%c0_63, %c0_64, %c0_65] : memref<18x18x8xf32, #tpu.memory_space<vmem>>, vector<18x18x8xf32>
    tpu.vector_store %arg7[%c0_63, %c0_64, %c0_65], %33 {strides = array<i32>} : memref<18x18x8xf32, #tpu.memory_space<vmem>>, vector<18x18x8xf32>,
    %35 = vector.shape_cast %32 : vector<256x8xf32> to vector<16x16x8xf32>
    %c1_66 = arith.constant 1 : index
    %c1_67 = arith.constant 1 : index
    %c0_68 = arith.constant 0 : index
    %36 = vector.load %arg7[%c1_66, %c1_67, %c0_68] : memref<18x18x8xf32, #tpu.memory_space<vmem>>, vector<16x16x8xf32>
    tpu.vector_store %arg7[%c1_66, %c1_67, %c0_68], %35 {strides = array<i32>} : memref<18x18x8xf32, #tpu.memory_space<vmem>>, vector<16x16x8xf32>,
    %c0_69 = arith.constant 0 : index
    %c0_70 = arith.constant 0 : index
    %c0_71 = arith.constant 0 : index
    %37 = vector.load %arg7[%c0_69, %c0_70, %c0_71] : memref<18x18x8xf32, #tpu.memory_space<vmem>>, vector<16x16x8xf32>
    %c0_72 = arith.constant 0 : index
    %c0_73 = arith.constant 0 : index
    %c0_74 = arith.constant 0 : index
    %38 = vector.load %arg9[%c0_72, %c0_73, %c0_74] : memref<16x16x72xf32, #tpu.memory_space<vmem>>, vector<16x16x8xf32>
    tpu.vector_store %arg9[%c0_72, %c0_73, %c0_74], %37 {strides = array<i32>} : memref<16x16x72xf32, #tpu.memory_space<vmem>>, vector<16x16x8xf32>,
    %c0_75 = arith.constant 0 : index
    %c1_76 = arith.constant 1 : index
    %c0_77 = arith.constant 0 : index
    %39 = vector.load %arg7[%c0_75, %c1_76, %c0_77] : memref<18x18x8xf32, #tpu.memory_space<vmem>>, vector<16x16x8xf32>
    %c0_78 = arith.constant 0 : index
    %c0_79 = arith.constant 0 : index
    %c8_80 = arith.constant 8 : index
    %40 = vector.load %arg9[%c0_78, %c0_79, %c8_80] : memref<16x16x72xf32, #tpu.memory_space<vmem>>, vector<16x16x8xf32>
    tpu.vector_store %arg9[%c0_78, %c0_79, %c8_80], %39 {strides = array<i32>} : memref<16x16x72xf32, #tpu.memory_space<vmem>>, vector<16x16x8xf32>,
    %c0_81 = arith.constant 0 : index
    %c2_82 = arith.constant 2 : index
    %c0_83 = arith.constant 0 : index
    %41 = vector.load %arg7[%c0_81, %c2_82, %c0_83] : memref<18x18x8xf32, #tpu.memory_space<vmem>>, vector<16x16x8xf32>
    %c0_84 = arith.constant 0 : index
    %c0_85 = arith.constant 0 : index
    %c16_86 = arith.constant 16 : index
    %42 = vector.load %arg9[%c0_84, %c0_85, %c16_86] : memref<16x16x72xf32, #tpu.memory_space<vmem>>, vector<16x16x8xf32>
    tpu.vector_store %arg9[%c0_84, %c0_85, %c16_86], %41 {strides = array<i32>} : memref<16x16x72xf32, #tpu.memory_space<vmem>>, vector<16x16x8xf32>,
    %c1_87 = arith.constant 1 : index
    %c0_88 = arith.constant 0 : index
    %c0_89 = arith.constant 0 : index
    %43 = vector.load %arg7[%c1_87, %c0_88, %c0_89] : memref<18x18x8xf32, #tpu.memory_space<vmem>>, vector<16x16x8xf32>
    %c0_90 = arith.constant 0 : index
    %c0_91 = arith.constant 0 : index
    %c24_92 = arith.constant 24 : index
    %44 = vector.load %arg9[%c0_90, %c0_91, %c24_92] : memref<16x16x72xf32, #tpu.memory_space<vmem>>, vector<16x16x8xf32>
    tpu.vector_store %arg9[%c0_90, %c0_91, %c24_92], %43 {strides = array<i32>} : memref<16x16x72xf32, #tpu.memory_space<vmem>>, vector<16x16x8xf32>,
    %c1_93 = arith.constant 1 : index
    %c1_94 = arith.constant 1 : index
    %c0_95 = arith.constant 0 : index
    %45 = vector.load %arg7[%c1_93, %c1_94, %c0_95] : memref<18x18x8xf32, #tpu.memory_space<vmem>>, vector<16x16x8xf32>
    %c0_96 = arith.constant 0 : index
    %c0_97 = arith.constant 0 : index
    %c32_98 = arith.constant 32 : index
    %46 = vector.load %arg9[%c0_96, %c0_97, %c32_98] : memref<16x16x72xf32, #tpu.memory_space<vmem>>, vector<16x16x8xf32>
    tpu.vector_store %arg9[%c0_96, %c0_97, %c32_98], %45 {strides = array<i32>} : memref<16x16x72xf32, #tpu.memory_space<vmem>>, vector<16x16x8xf32>,
    %c1_99 = arith.constant 1 : index
    %c2_100 = arith.constant 2 : index
    %c0_101 = arith.constant 0 : index
    %47 = vector.load %arg7[%c1_99, %c2_100, %c0_101] : memref<18x18x8xf32, #tpu.memory_space<vmem>>, vector<16x16x8xf32>
    %c0_102 = arith.constant 0 : index
    %c0_103 = arith.constant 0 : index
    %c40 = arith.constant 40 : index
    %48 = vector.load %arg9[%c0_102, %c0_103, %c40] : memref<16x16x72xf32, #tpu.memory_space<vmem>>, vector<16x16x8xf32>
    tpu.vector_store %arg9[%c0_102, %c0_103, %c40], %47 {strides = array<i32>} : memref<16x16x72xf32, #tpu.memory_space<vmem>>, vector<16x16x8xf32>,
    %c2_104 = arith.constant 2 : index
    %c0_105 = arith.constant 0 : index
    %c0_106 = arith.constant 0 : index
    %49 = vector.load %arg7[%c2_104, %c0_105, %c0_106] : memref<18x18x8xf32, #tpu.memory_space<vmem>>, vector<16x16x8xf32>
    %c0_107 = arith.constant 0 : index
    %c0_108 = arith.constant 0 : index
    %c48 = arith.constant 48 : index
    %50 = vector.load %arg9[%c0_107, %c0_108, %c48] : memref<16x16x72xf32, #tpu.memory_space<vmem>>, vector<16x16x8xf32>
    tpu.vector_store %arg9[%c0_107, %c0_108, %c48], %49 {strides = array<i32>} : memref<16x16x72xf32, #tpu.memory_space<vmem>>, vector<16x16x8xf32>,
    %c2_109 = arith.constant 2 : index
    %c1_110 = arith.constant 1 : index
    %c0_111 = arith.constant 0 : index
    %51 = vector.load %arg7[%c2_109, %c1_110, %c0_111] : memref<18x18x8xf32, #tpu.memory_space<vmem>>, vector<16x16x8xf32>
    %c0_112 = arith.constant 0 : index
    %c0_113 = arith.constant 0 : index
    %c56 = arith.constant 56 : index
    %52 = vector.load %arg9[%c0_112, %c0_113, %c56] : memref<16x16x72xf32, #tpu.memory_space<vmem>>, vector<16x16x8xf32>
    tpu.vector_store %arg9[%c0_112, %c0_113, %c56], %51 {strides = array<i32>} : memref<16x16x72xf32, #tpu.memory_space<vmem>>, vector<16x16x8xf32>,
    %c2_114 = arith.constant 2 : index
    %c2_115 = arith.constant 2 : index
    %c0_116 = arith.constant 0 : index
    %53 = vector.load %arg7[%c2_114, %c2_115, %c0_116] : memref<18x18x8xf32, #tpu.memory_space<vmem>>, vector<16x16x8xf32>
    %c0_117 = arith.constant 0 : index
    %c0_118 = arith.constant 0 : index
    %c64 = arith.constant 64 : index
    %54 = vector.load %arg9[%c0_117, %c0_118, %c64] : memref<16x16x72xf32, #tpu.memory_space<vmem>>, vector<16x16x8xf32>
    tpu.vector_store %arg9[%c0_117, %c0_118, %c64], %53 {strides = array<i32>} : memref<16x16x72xf32, #tpu.memory_space<vmem>>, vector<16x16x8xf32>,
    %c0_119 = arith.constant 0 : index
    %c0_120 = arith.constant 0 : index
    %c0_121 = arith.constant 0 : index
    %55 = vector.load %arg9[%c0_119, %c0_120, %c0_121] : memref<16x16x72xf32, #tpu.memory_space<vmem>>, vector<16x16x72xf32>
    %56 = vector.shape_cast %55 : vector<16x16x72xf32> to vector<256x72xf32>
    %57 = arith.truncf %56 : vector<256x72xf32> to vector<256x72xbf16>
    %c0_122 = arith.constant 0 : index
    %c0_123 = arith.constant 0 : index
    %58 = vector.load %arg3[%c0_122, %c0_123] : memref<72x8xbf16, #tpu.memory_space<vmem>>, vector<72x8xbf16>
    %cst_124 = arith.constant dense<0.000000e+00> : vector<256x8xf32>
    %59 = tpu.matmul %57, %58, %cst_124 {dimension_numbers = #tpu.dot_dimension_numbers<[1], [0], [0], [1], [0, 0, 1, 1], [], []>} : vector<256x72xbf16>, vector<72x8xbf16>, vector<256x8xf32> -> vector<256x8xf32>
    %cst_125 = arith.constant 2.000000e+00 : f32
    %60 = vector.broadcast %cst_125 : f32 to vector<256x8xf32>
    %61 = arith.cmpf oge, %59, %60 : vector<256x8xf32>
    %cst_126 = arith.constant 1.000000e+00 : f32
    %cst_127 = arith.constant 0.000000e+00 : f32
    %62 = vector.broadcast %cst_126 : f32 to vector<256x8xf32>
    %63 = vector.broadcast %cst_127 : f32 to vector<256x8xf32>
    %64 = arith.select %61, %62, %63 : vector<256x8xi1>, vector<256x8xf32>
    %65 = vector.shape_cast %64 : vector<256x8xf32> to vector<16x16x8xf32>
    %c1_128 = arith.constant 1 : index
    %c1_129 = arith.constant 1 : index
    %c0_130 = arith.constant 0 : index
    %66 = vector.load %arg7[%c1_128, %c1_129, %c0_130] : memref<18x18x8xf32, #tpu.memory_space<vmem>>, vector<16x16x8xf32>
    tpu.vector_store %arg7[%c1_128, %c1_129, %c0_130], %65 {strides = array<i32>} : memref<18x18x8xf32, #tpu.memory_space<vmem>>, vector<16x16x8xf32>,
    %c0_131 = arith.constant 0 : index
    %c0_132 = arith.constant 0 : index
    %c0_133 = arith.constant 0 : index
    %67 = vector.load %arg7[%c0_131, %c0_132, %c0_133] : memref<18x18x8xf32, #tpu.memory_space<vmem>>, vector<16x16x8xf32>
    %c0_134 = arith.constant 0 : index
    %c0_135 = arith.constant 0 : index
    %c0_136 = arith.constant 0 : index
    %68 = vector.load %arg9[%c0_134, %c0_135, %c0_136] : memref<16x16x72xf32, #tpu.memory_space<vmem>>, vector<16x16x8xf32>
    tpu.vector_store %arg9[%c0_134, %c0_135, %c0_136], %67 {strides = array<i32>} : memref<16x16x72xf32, #tpu.memory_space<vmem>>, vector<16x16x8xf32>,
    %c0_137 = arith.constant 0 : index
    %c1_138 = arith.constant 1 : index
    %c0_139 = arith.constant 0 : index
    %69 = vector.load %arg7[%c0_137, %c1_138, %c0_139] : memref<18x18x8xf32, #tpu.memory_space<vmem>>, vector<16x16x8xf32>
    %c0_140 = arith.constant 0 : index
    %c0_141 = arith.constant 0 : index
    %c8_142 = arith.constant 8 : index
    %70 = vector.load %arg9[%c0_140, %c0_141, %c8_142] : memref<16x16x72xf32, #tpu.memory_space<vmem>>, vector<16x16x8xf32>
    tpu.vector_store %arg9[%c0_140, %c0_141, %c8_142], %69 {strides = array<i32>} : memref<16x16x72xf32, #tpu.memory_space<vmem>>, vector<16x16x8xf32>,
    %c0_143 = arith.constant 0 : index
    %c2_144 = arith.constant 2 : index
    %c0_145 = arith.constant 0 : index
    %71 = vector.load %arg7[%c0_143, %c2_144, %c0_145] : memref<18x18x8xf32, #tpu.memory_space<vmem>>, vector<16x16x8xf32>
    %c0_146 = arith.constant 0 : index
    %c0_147 = arith.constant 0 : index
    %c16_148 = arith.constant 16 : index
    %72 = vector.load %arg9[%c0_146, %c0_147, %c16_148] : memref<16x16x72xf32, #tpu.memory_space<vmem>>, vector<16x16x8xf32>
    tpu.vector_store %arg9[%c0_146, %c0_147, %c16_148], %71 {strides = array<i32>} : memref<16x16x72xf32, #tpu.memory_space<vmem>>, vector<16x16x8xf32>,
    %c1_149 = arith.constant 1 : index
    %c0_150 = arith.constant 0 : index
    %c0_151 = arith.constant 0 : index
    %73 = vector.load %arg7[%c1_149, %c0_150, %c0_151] : memref<18x18x8xf32, #tpu.memory_space<vmem>>, vector<16x16x8xf32>
    %c0_152 = arith.constant 0 : index
    %c0_153 = arith.constant 0 : index
    %c24_154 = arith.constant 24 : index
    %74 = vector.load %arg9[%c0_152, %c0_153, %c24_154] : memref<16x16x72xf32, #tpu.memory_space<vmem>>, vector<16x16x8xf32>
    tpu.vector_store %arg9[%c0_152, %c0_153, %c24_154], %73 {strides = array<i32>} : memref<16x16x72xf32, #tpu.memory_space<vmem>>, vector<16x16x8xf32>,
    %c1_155 = arith.constant 1 : index
    %c1_156 = arith.constant 1 : index
    %c0_157 = arith.constant 0 : index
    %75 = vector.load %arg7[%c1_155, %c1_156, %c0_157] : memref<18x18x8xf32, #tpu.memory_space<vmem>>, vector<16x16x8xf32>
    %c0_158 = arith.constant 0 : index
    %c0_159 = arith.constant 0 : index
    %c32_160 = arith.constant 32 : index
    %76 = vector.load %arg9[%c0_158, %c0_159, %c32_160] : memref<16x16x72xf32, #tpu.memory_space<vmem>>, vector<16x16x8xf32>
    tpu.vector_store %arg9[%c0_158, %c0_159, %c32_160], %75 {strides = array<i32>} : memref<16x16x72xf32, #tpu.memory_space<vmem>>, vector<16x16x8xf32>,
    %c1_161 = arith.constant 1 : index
    %c2_162 = arith.constant 2 : index
    %c0_163 = arith.constant 0 : index
    %77 = vector.load %arg7[%c1_161, %c2_162, %c0_163] : memref<18x18x8xf32, #tpu.memory_space<vmem>>, vector<16x16x8xf32>
    %c0_164 = arith.constant 0 : index
    %c0_165 = arith.constant 0 : index
    %c40_166 = arith.constant 40 : index
    %78 = vector.load %arg9[%c0_164, %c0_165, %c40_166] : memref<16x16x72xf32, #tpu.memory_space<vmem>>, vector<16x16x8xf32>
    tpu.vector_store %arg9[%c0_164, %c0_165, %c40_166], %77 {strides = array<i32>} : memref<16x16x72xf32, #tpu.memory_space<vmem>>, vector<16x16x8xf32>,
    %c2_167 = arith.constant 2 : index
    %c0_168 = arith.constant 0 : index
    %c0_169 = arith.constant 0 : index
    %79 = vector.load %arg7[%c2_167, %c0_168, %c0_169] : memref<18x18x8xf32, #tpu.memory_space<vmem>>, vector<16x16x8xf32>
    %c0_170 = arith.constant 0 : index
    %c0_171 = arith.constant 0 : index
    %c48_172 = arith.constant 48 : index
    %80 = vector.load %arg9[%c0_170, %c0_171, %c48_172] : memref<16x16x72xf32, #tpu.memory_space<vmem>>, vector<16x16x8xf32>
    tpu.vector_store %arg9[%c0_170, %c0_171, %c48_172], %79 {strides = array<i32>} : memref<16x16x72xf32, #tpu.memory_space<vmem>>, vector<16x16x8xf32>,
    %c2_173 = arith.constant 2 : index
    %c1_174 = arith.constant 1 : index
    %c0_175 = arith.constant 0 : index
    %81 = vector.load %arg7[%c2_173, %c1_174, %c0_175] : memref<18x18x8xf32, #tpu.memory_space<vmem>>, vector<16x16x8xf32>
    %c0_176 = arith.constant 0 : index
    %c0_177 = arith.constant 0 : index
    %c56_178 = arith.constant 56 : index
    %82 = vector.load %arg9[%c0_176, %c0_177, %c56_178] : memref<16x16x72xf32, #tpu.memory_space<vmem>>, vector<16x16x8xf32>
    tpu.vector_store %arg9[%c0_176, %c0_177, %c56_178], %81 {strides = array<i32>} : memref<16x16x72xf32, #tpu.memory_space<vmem>>, vector<16x16x8xf32>,
    %c2_179 = arith.constant 2 : index
    %c2_180 = arith.constant 2 : index
    %c0_181 = arith.constant 0 : index
    %83 = vector.load %arg7[%c2_179, %c2_180, %c0_181] : memref<18x18x8xf32, #tpu.memory_space<vmem>>, vector<16x16x8xf32>
    %c0_182 = arith.constant 0 : index
    %c0_183 = arith.constant 0 : index
    %c64_184 = arith.constant 64 : index
    %84 = vector.load %arg9[%c0_182, %c0_183, %c64_184] : memref<16x16x72xf32, #tpu.memory_space<vmem>>, vector<16x16x8xf32>
    tpu.vector_store %arg9[%c0_182, %c0_183, %c64_184], %83 {strides = array<i32>} : memref<16x16x72xf32, #tpu.memory_space<vmem>>, vector<16x16x8xf32>,
    %c0_185 = arith.constant 0 : index
    %c0_186 = arith.constant 0 : index
    %c0_187 = arith.constant 0 : index
    %85 = vector.load %arg9[%c0_185, %c0_186, %c0_187] : memref<16x16x72xf32, #tpu.memory_space<vmem>>, vector<16x16x72xf32>
    %86 = vector.shape_cast %85 : vector<16x16x72xf32> to vector<256x72xf32>
    %87 = arith.truncf %86 : vector<256x72xf32> to vector<256x72xbf16>
    %c0_188 = arith.constant 0 : index
    %c0_189 = arith.constant 0 : index
    %88 = vector.load %arg4[%c0_188, %c0_189] : memref<72x8xbf16, #tpu.memory_space<vmem>>, vector<72x8xbf16>
    %cst_190 = arith.constant dense<0.000000e+00> : vector<256x8xf32>
    %89 = tpu.matmul %87, %88, %cst_190 {dimension_numbers = #tpu.dot_dimension_numbers<[1], [0], [0], [1], [0, 0, 1, 1], [], []>} : vector<256x72xbf16>, vector<72x8xbf16>, vector<256x8xf32> -> vector<256x8xf32>
    %cst_191 = arith.constant 2.000000e+00 : f32
    %90 = vector.broadcast %cst_191 : f32 to vector<256x8xf32>
    %91 = arith.cmpf oge, %89, %90 : vector<256x8xf32>
    %cst_192 = arith.constant 1.000000e+00 : f32
    %cst_193 = arith.constant 0.000000e+00 : f32
    %92 = vector.broadcast %cst_192 : f32 to vector<256x8xf32>
    %93 = vector.broadcast %cst_193 : f32 to vector<256x8xf32>
    %94 = arith.select %91, %92, %93 : vector<256x8xi1>, vector<256x8xf32>
    %95 = vector.shape_cast %94 : vector<256x8xf32> to vector<16x16x8xf32>
    %96 = vector.shape_cast %95 : vector<16x16x8xf32> to vector<8x2x16x8xf32>
    %cst_194 = arith.constant dense<0xFF800000> : vector<8x16x8xf32>
    %97 = vector.multi_reduction <maximumf>, %96, %cst_194 [1] : vector<8x2x16x8xf32> to vector<8x16x8xf32>
    %98 = vector.shape_cast %97 : vector<8x16x8xf32> to vector<8x8x2x8xf32>
    %cst_195 = arith.constant dense<0xFF800000> : vector<8x8x8xf32>
    %99 = vector.multi_reduction <maximumf>, %98, %cst_195 [2] : vector<8x8x2x8xf32> to vector<8x8x8xf32>
    %100 = vector.shape_cast %99 : vector<8x8x8xf32> to vector<1x8x8x8xf32>
    %c0_196 = arith.constant 0 : index
    %c0_197 = arith.constant 0 : index
    %c0_198 = arith.constant 0 : index
    %c0_199 = arith.constant 0 : index
    %101 = vector.load %arg5[%c0_196, %c0_197, %c0_198, %c0_199] : memref<1x8x8x8xf32, #tpu.memory_space<vmem>>, vector<1x8x8x8xf32>
    tpu.vector_store %arg5[%c0_196, %c0_197, %c0_198, %c0_199], %100 {strides = array<i32>} : memref<1x8x8x8xf32, #tpu.memory_space<vmem>>, vector<1x8x8x8xf32>,
    return
  }
  func.func @transform_0(%arg0: i32) -> (i32, i32, i32, i32) {
    %c0_i32 = arith.constant 0 : i32
    %c0_i32_0 = arith.constant 0 : i32
    %c0_i32_1 = arith.constant 0 : i32
    %c0_i32_2 = arith.constant 0 : i32
    return %arg0, %c0_i32, %c0_i32_0, %c0_i32_1 : i32, i32, i32, i32
  }
  func.func @transform_1(%arg0: i32) -> (i32, i32) {
    %c0_i32 = arith.constant 0 : i32
    %c0_i32_0 = arith.constant 0 : i32
    %c0_i32_1 = arith.constant 0 : i32
    return %c0_i32, %c0_i32_0 : i32, i32
  }
  func.func @transform_2(%arg0: i32) -> (i32, i32) {
    %c0_i32 = arith.constant 0 : i32
    %c0_i32_0 = arith.constant 0 : i32
    %c0_i32_1 = arith.constant 0 : i32
    return %c0_i32, %c0_i32_0 : i32, i32
  }
  func.func @transform_3(%arg0: i32) -> (i32, i32) {
    %c0_i32 = arith.constant 0 : i32
    %c0_i32_0 = arith.constant 0 : i32
    %c0_i32_1 = arith.constant 0 : i32
    return %c0_i32, %c0_i32_0 : i32, i32
  }
  func.func @transform_4(%arg0: i32) -> (i32, i32, i32, i32) {
    %c0_i32 = arith.constant 0 : i32
    %c0_i32_0 = arith.constant 0 : i32
    %c0_i32_1 = arith.constant 0 : i32
    %c0_i32_2 = arith.constant 0 : i32
    return %arg0, %c0_i32, %c0_i32_0, %c0_i32_1 : i32, i32, i32, i32
  }
}

</mosaic_0001>

<llo_original>
// kernel: tpu_custom_call.1
$region0: #{tpu_custom_call.1}
  #allocation0 [shape = 'u32[]', space=smem, size = 0x4, offset = 0x4, fixed_abs, tag = 'smem constant byte address 0x4 - core index']
  #allocation1 [shape = 'u32[144,128]{1,0:T(1,128)}', space=vmem, size = 0x12000, scoped, tag = 'internal scratch']
  #allocation2 [shape = 'f32[18,18,4]{2,1,0:T(8,128)}', space=vmem, size = 0x36000, scoped, tag = 'scratch operand']
  #allocation3 [shape = 'f32[18,18,8]{2,1,0:T(8,128)}', space=vmem, size = 0x36000, scoped, tag = 'scratch operand']
  #allocation4 [shape = 'f32[16,16,36]{2,1,0:T(8,128)}', space=vmem, size = 0x20000, scoped, tag = 'scratch operand']
  #allocation5 [shape = 'f32[16,16,72]{2,1,0:T(8,128)}', space=vmem, size = 0x20000, scoped, tag = 'scratch operand']
  %s0 = inlined_call_operand.vmem [shape: f32[2,16,16,4], index: 0, kind: input, shape index: {}]
  %s1 = inlined_call_operand.vmem [shape: bf16[36,8], index: 1, kind: input, shape index: {}]
  %s2 = inlined_call_operand.vmem [shape: bf16[72,8], index: 2, kind: input, shape index: {}]
  %s3 = inlined_call_operand.vmem [shape: bf16[72,8], index: 3, kind: input, shape index: {}]
  %s4 = inlined_call_operand.hbm [shape: f32[2,8,8,8], index: 4, kind: output, shape index: {}]
  %s5 = sld [smem:[#allocation0]]
  $region49: #{tpu_custom_call.1} parent=0
    _
  %s7 = ssub.s32 1, %s5
  %s8 = scalar_select 0, %s7, %s5
  $region1: #{tpu_custom_call.1} parent=0
    #allocation6 [shape = 'u8[65536]{0}', space=vmem, size = 0x10000, scoped, tag = 'output window, operand 0']
    #allocation7 [shape = 's32[2]{0}', space=sflag, size = 0x8, scoped, tag = 'scoped memory for tpu_custom_call.1']
    %9 = vsyncpa [#allocation7], 0
    %s10 = scalar_lea.sflag [#allocation7], 1
    %11 = vsyncpa %s10, 0
    loop: start=0, step=1, limit=4
    $region2: #{tpu_custom_call.1} parent=1 // loop_pre_header
      _
    $region3: #{tpu_custom_call.1} parent=1 // loop_header
      %s13 = sphi 0, %s17
      %p14 = scmp.ge.s32.totalorder %s13, 4
      %s23 = sphi 0, %s25
      %s26 = sphi 0, %s23
      %s27 = sphi 0, %s26
      %s43 = sphi 0, %s27
      %s47 = sphi 0, %s47
      %s49 = sphi 0, %s47
      %s50 = sphi 0, %s49
      %s64 = sphi 0, %s50
      %s68 = sphi 0, %s68
      %s70 = sphi 0, %s68
      %s71 = sphi 0, %s70
      %s85 = sphi 0, %s71
      %s89 = sphi 0, %s89
      %s91 = sphi 0, %s89
      %s92 = sphi 0, %s91
      %s106 = sphi 0, %s92
      %s112 = sphi 0, %s114
      %s115 = sphi 0, %s112
      %s116 = sphi 0, %s115
      %s132 = sphi 0, %s116
    $region4: #{tpu_custom_call.1} parent=1 // loop_header_branch
      %16 = sbr.rel (%p14) target = $region8
    $region5: #{tpu_custom_call.1} parent=1 // loop_body
      %s18 = ssub.s32 %s13, 1
      %s19 = ssub.s32 %s13, 2
      %s20 = sadd.s32 %s13, 1
      %s21 = ssub.s32 %s13, %s20
      %p22 = scmp.eq.s32.totalorder %s21, 0
      %s24 = sadd.s32 %s23, 1
      %s25 = scalar_select %p22, %s23, %s24
      %p28 = pneg %p22
      %p29 = scmp.eq.s32.totalorder %s13, 1
      %p30 = por %p28, %p29
      %p31 = scmp.ne.s32.totalorder %s23, %s26
      %p32 = scmp.eq.s32.totalorder %s13, 0
      %p33 = por %p31, %p32
      %p34 = scmp.ne.s32.totalorder %s23, %s26
      %p35 = scmp.eq.s32.totalorder %s18, 1
      %p36 = por %p34, %p35
      %p37 = scmp.ne.s32.totalorder %s26, %s27
      %p38 = scmp.eq.s32.totalorder %s18, 0
      %p39 = por %p37, %p38
      %p40 = scmp.ne.s32.totalorder %s26, %s27
      %p41 = scmp.eq.s32.totalorder %s19, 1
      %p42 = por %p40, %p41
      %p44 = scmp.ne.s32.totalorder %s27, %s43
      %p45 = scmp.eq.s32.totalorder %s19, 0
      %p46 = por %p44, %p45
      %s48 = sadd.s32 %s47, 1
      %p51 = scmp.eq.s32.totalorder %s13, 1
      %p52 = scmp.ne.s32.totalorder %s47, %s49
      %p53 = scmp.eq.s32.totalorder %s13, 0
      %p54 = por %p52, %p53
      %p55 = scmp.ne.s32.totalorder %s47, %s49
      %p56 = scmp.eq.s32.totalorder %s18, 1
      %p57 = por %p55, %p56
      %p58 = scmp.ne.s32.totalorder %s49, %s50
      %p59 = scmp.eq.s32.totalorder %s18, 0
      %p60 = por %p58, %p59
      %p61 = scmp.ne.s32.totalorder %s49, %s50
      %p62 = scmp.eq.s32.totalorder %s19, 1
      %p63 = por %p61, %p62
      %p65 = scmp.ne.s32.totalorder %s50, %s64
      %p66 = scmp.eq.s32.totalorder %s19, 0
      %p67 = por %p65, %p66
      %s69 = sadd.s32 %s68, 1
      %p72 = scmp.eq.s32.totalorder %s13, 1
      %p73 = scmp.ne.s32.totalorder %s68, %s70
      %p74 = scmp.eq.s32.totalorder %s13, 0
      %p75 = por %p73, %p74
      %p76 = scmp.ne.s32.totalorder %s68, %s70
      %p77 = scmp.eq.s32.totalorder %s18, 1
      %p78 = por %p76, %p77
      %p79 = scmp.ne.s32.totalorder %s70, %s71
      %p80 = scmp.eq.s32.totalorder %s18, 0
      %p81 = por %p79, %p80
      %p82 = scmp.ne.s32.totalorder %s70, %s71
      %p83 = scmp.eq.s32.totalorder %s19, 1
      %p84 = por %p82, %p83
      %p86 = scmp.ne.s32.totalorder %s71, %s85
      %p87 = scmp.eq.s32.totalorder %s19, 0
      %p88 = por %p86, %p87
      %s90 = sadd.s32 %s89, 1
      %p93 = scmp.eq.s32.totalorder %s13, 1
      %p94 = scmp.ne.s32.totalorder %s89, %s91
      %p95 = scmp.eq.s32.totalorder %s13, 0
      %p96 = por %p94, %p95
      %p97 = scmp.ne.s32.totalorder %s89, %s91
      %p98 = scmp.eq.s32.totalorder %s18, 1
      %p99 = por %p97, %p98
      %p100 = scmp.ne.s32.totalorder %s91, %s92
      %p101 = scmp.eq.s32.totalorder %s18, 0
      %p102 = por %p100, %p101
      %p103 = scmp.ne.s32.totalorder %s91, %s92
      %p104 = scmp.eq.s32.totalorder %s19, 1
      %p105 = por %p103, %p104
      %p107 = scmp.ne.s32.totalorder %s92, %s106
      %p108 = scmp.eq.s32.totalorder %s19, 0
      %p109 = por %p107, %p108
      %s110 = ssub.s32 %s13, %s20
      %p111 = scmp.eq.s32.totalorder %s110, 0
      %s113 = sadd.s32 %s112, 1
      %s114 = scalar_select %p111, %s112, %s113
      %p117 = pneg %p111
      %p118 = scmp.eq.s32.totalorder %s13, 1
      %p119 = por %p117, %p118
      %p120 = scmp.ne.s32.totalorder %s112, %s115
      %p121 = scmp.eq.s32.totalorder %s13, 0
      %p122 = por %p120, %p121
      %p123 = scmp.ne.s32.totalorder %s112, %s115
      %p124 = scmp.eq.s32.totalorder %s18, 1
      %p125 = por %p123, %p124
      %p126 = scmp.ne.s32.totalorder %s115, %s116
      %p127 = scmp.eq.s32.totalorder %s18, 0
      %p128 = por %p126, %p127
      %p129 = scmp.ne.s32.totalorder %s115, %s116
      %p130 = scmp.eq.s32.totalorder %s19, 1
      %p131 = por %p129, %p130
      %p133 = scmp.ne.s32.totalorder %s116, %s132
      %p134 = scmp.eq.s32.totalorder %s19, 0
      %p135 = por %p133, %p134
      %p136 = scmp.le.s32.totalorder 1, %s13
      %p137 = scmp.lt.s32.totalorder %s13, 3
      %p138 = pnand %p136, %p137
      %p139 = pneg %p138
      // Predicated region
      $region9: #{tpu_custom_call.1} parent=5 // pred_check
        _
      $region10: #{tpu_custom_call.1} parent=5 // pred_check_branch
        %141 = sbr.rel (%p138) target = $region12
      $region11: #{tpu_custom_call.1} parent=5 // pred_region
        %s142 = ssub.s32 %s13, 1
        // Predicated region
        $region13: #{tpu_custom_call.1} parent=11 // pred_check
          %p143 = pneg %p60
        $region14: #{tpu_custom_call.1} parent=11 // pred_check_branch
          %145 = sbr.rel (%p143) target = $region16
        $region15: #{tpu_custom_call.1} parent=11 // pred_region
          _
        $region16: #{tpu_custom_call.1} parent=11 // pred_fallthru
          _
        // Predicated region
        $region17: #{tpu_custom_call.1} parent=11 // pred_check
          %p146 = pneg %p81
        $region18: #{tpu_custom_call.1} parent=11 // pred_check_branch
          %148 = sbr.rel (%p146) target = $region20
        $region19: #{tpu_custom_call.1} parent=11 // pred_region
          _
        $region20: #{tpu_custom_call.1} parent=11 // pred_fallthru
          _
        // Predicated region
        $region21: #{tpu_custom_call.1} parent=11 // pred_check
          %p149 = pneg %p102
        $region22: #{tpu_custom_call.1} parent=11 // pred_check_branch
          %151 = sbr.rel (%p149) target = $region24
        $region23: #{tpu_custom_call.1} parent=11 // pred_region
          _
        $region24: #{tpu_custom_call.1} parent=11 // pred_fallthru
          _
      $region12: #{tpu_custom_call.1} parent=5 // pred_fallthru
        _
      %p152 = scmp.lt.s32.totalorder %s13, 2
      // Predicated region
      $region25: #{tpu_custom_call.1} parent=5 // pred_check
        %p153 = pneg %p152
      $region26: #{tpu_custom_call.1} parent=5 // pred_check_branch
        %155 = sbr.rel (%p153) target = $region28
      $region27: #{tpu_custom_call.1} parent=5 // pred_region
        // Predicated region
        $region29: #{tpu_custom_call.1} parent=27 // pred_check
          %p156 = pneg %p33
        $region30: #{tpu_custom_call.1} parent=27 // pred_check_branch
          %158 = sbr.rel (%p156) target = $region32
        $region31: #{tpu_custom_call.1} parent=27 // pred_region
          %p159 = scmp.lt.s32.totalorder %s13, 1
          %s160 = scalar_select %p159, %s13, 1
          %s161 = smul.addr %s160, 32
          %s162 = smul.addr %s161, 8
          %s163 = scalar_lea.vmem %s0, %s162
        $region32: #{tpu_custom_call.1} parent=27 // pred_fallthru
          _
      $region28: #{tpu_custom_call.1} parent=5 // pred_fallthru
        _
      %p164 = scmp.le.s32.totalorder 1, %s13
      %p165 = scmp.lt.s32.totalorder %s13, 3
      %p166 = pnand %p164, %p165
      %p167 = pneg %p166
      // Predicated region
      $region33: #{tpu_custom_call.1} parent=5 // pred_check
        _
      $region34: #{tpu_custom_call.1} parent=5 // pred_check_branch
        %169 = sbr.rel (%p166) target = $region36
      $region35: #{tpu_custom_call.1} parent=5 // pred_region
        %s170 = ssub.s32 %s13, 1
        %p171 = scmp.lt.s32.totalorder %s18, 1
        %s172 = scalar_select %p171, %s18, 1
        %s173 = smul.addr %s172, 32
        %s174 = smul.addr %s173, 8
        %s175 = scalar_lea.vmem %s0, %s174
        %p176 = pneg %p39
        %p177 = pneg %p36
        %p178 = pneg %p60
        %p179 = pneg %p57
        %p180 = pneg %p81
        %p181 = pneg %p78
        %p182 = pneg %p102
        %p183 = pneg %p99
        %p184 = pneg %p128
        %p185 = pneg %p125
        %s186 = sand.u32 %s115, 1
        %s187 = scalar_lea.sflag [#allocation7], %s186
        %s188 = sand.u32 %s115, 1
        %s189 = smul.addr %s188, 64
        %s190 = scalar_lea.vmem [#allocation6], %s189
        %p191 = scmp.lt.s32.totalorder %s18, 1
        %s192 = scalar_select %p191, %s18, 1
        %s193 = smul.addr %s192, 32
        %s194 = smul.addr %s193, 8
        %s195 = scalar_lea.vmem %s0, %s194
        %vm197 = vcmask 31744
        %198 = vst.msk [vmem:[#allocation2] sm:$0xff] %vm197, 0.0
        %199 = vst.msk [vmem:[#allocation2 + $0x8] sm:$0xff] %vm197, 0.0
        %vm200 = vcmask 25600
        %201 = vst.msk [vmem:[#allocation2 + $0x10] sm:$0x3] %vm200, 0.0
        %202 = vst.msk [vmem:[#allocation2 + $0x18] sm:$0xff] %vm197, 0.0
        %203 = vst.msk [vmem:[#allocation2 + $0x20] sm:$0xff] %vm197, 0.0
        %204 = vst.msk [vmem:[#allocation2 + $0x28] sm:$0x3] %vm200, 0.0
        %205 = vst.msk [vmem:[#allocation2 + $0x30] sm:$0xff] %vm197, 0.0
        %206 = vst.msk [vmem:[#allocation2 + $0x38] sm:$0xff] %vm197, 0.0
        %207 = vst.msk [vmem:[#allocation2 + $0x40] sm:$0x3] %vm200, 0.0
        %208 = vst.msk [vmem:[#allocation2 + $0x48] sm:$0xff] %vm197, 0.0
        %209 = vst.msk [vmem:[#allocation2 + $0x50] sm:$0xff] %vm197, 0.0
        %210 = vst.msk [vmem:[#allocation2 + $0x58] sm:$0x3] %vm200, 0.0
        %211 = vst.msk [vmem:[#allocation2 + $0x60] sm:$0xff] %vm197, 0.0
        %212 = vst.msk [vmem:[#allocation2 + $0x68] sm:$0xff] %vm197, 0.0
        %213 = vst.msk [vmem:[#allocation2 + $0x70] sm:$0x3] %vm200, 0.0
        %214 = vst.msk [vmem:[#allocation2 + $0x78] sm:$0xff] %vm197, 0.0
        %215 = vst.msk [vmem:[#allocation2 + $0x80] sm:$0xff] %vm197, 0.0
        %216 = vst.msk [vmem:[#allocation2 + $0x88] sm:$0x3] %vm200, 0.0
        %217 = vst.msk [vmem:[#allocation2 + $0x90] sm:$0xff] %vm197, 0.0
        %218 = vst.msk [vmem:[#allocation2 + $0x98] sm:$0xff] %vm197, 0.0
        %219 = vst.msk [vmem:[#allocation2 + $0xa0] sm:$0x3] %vm200, 0.0
        %220 = vst.msk [vmem:[#allocation2 + $0xa8] sm:$0xff] %vm197, 0.0
        %221 = vst.msk [vmem:[#allocation2 + $0xb0] sm:$0xff] %vm197, 0.0
        %222 = vst.msk [vmem:[#allocation2 + $0xb8] sm:$0x3] %vm200, 0.0
        %223 = vst.msk [vmem:[#allocation2 + $0xc0] sm:$0xff] %vm197, 0.0
        %224 = vst.msk [vmem:[#allocation2 + $0xc8] sm:$0xff] %vm197, 0.0
        %225 = vst.msk [vmem:[#allocation2 + $0xd0] sm:$0x3] %vm200, 0.0
        %226 = vst.msk [vmem:[#allocation2 + $0xd8] sm:$0xff] %vm197, 0.0
        %227 = vst.msk [vmem:[#allocation2 + $0xe0] sm:$0xff] %vm197, 0.0
        %228 = vst.msk [vmem:[#allocation2 + $0xe8] sm:$0x3] %vm200, 0.0
        %229 = vst.msk [vmem:[#allocation2 + $0xf0] sm:$0xff] %vm197, 0.0
        %230 = vst.msk [vmem:[#allocation2 + $0xf8] sm:$0xff] %vm197, 0.0
        %231 = vst.msk [vmem:[#allocation2 + $0x100] sm:$0x3] %vm200, 0.0
        %232 = vst.msk [vmem:[#allocation2 + $0x108] sm:$0xff] %vm197, 0.0
        %233 = vst.msk [vmem:[#allocation2 + $0x110] sm:$0xff] %vm197, 0.0
        %234 = vst.msk [vmem:[#allocation2 + $0x118] sm:$0x3] %vm200, 0.0
        %235 = vst.msk [vmem:[#allocation2 + $0x120] sm:$0xff] %vm197, 0.0
        %236 = vst.msk [vmem:[#allocation2 + $0x128] sm:$0xff] %vm197, 0.0
        %237 = vst.msk [vmem:[#allocation2 + $0x130] sm:$0x3] %vm200, 0.0
        %238 = vst.msk [vmem:[#allocation2 + $0x138] sm:$0xff] %vm197, 0.0
        %239 = vst.msk [vmem:[#allocation2 + $0x140] sm:$0xff] %vm197, 0.0
        %240 = vst.msk [vmem:[#allocation2 + $0x148] sm:$0x3] %vm200, 0.0
        %241 = vst.msk [vmem:[#allocation2 + $0x150] sm:$0xff] %vm197, 0.0
        %242 = vst.msk [vmem:[#allocation2 + $0x158] sm:$0xff] %vm197, 0.0
        %243 = vst.msk [vmem:[#allocation2 + $0x160] sm:$0x3] %vm200, 0.0
        %244 = vst.msk [vmem:[#allocation2 + $0x168] sm:$0xff] %vm197, 0.0
        %245 = vst.msk [vmem:[#allocation2 + $0x170] sm:$0xff] %vm197, 0.0
        %246 = vst.msk [vmem:[#allocation2 + $0x178] sm:$0x3] %vm200, 0.0
        %247 = vst.msk [vmem:[#allocation2 + $0x180] sm:$0xff] %vm197, 0.0
        %248 = vst.msk [vmem:[#allocation2 + $0x188] sm:$0xff] %vm197, 0.0
        %249 = vst.msk [vmem:[#allocation2 + $0x190] sm:$0x3] %vm200, 0.0
        %250 = vst.msk [vmem:[#allocation2 + $0x198] sm:$0xff] %vm197, 0.0
        %251 = vst.msk [vmem:[#allocation2 + $0x1a0] sm:$0xff] %vm197, 0.0
        %252 = vst.msk [vmem:[#allocation2 + $0x1a8] sm:$0x3] %vm200, 0.0
        %v253 = vld [vmem:[%s195] sm:$0xff]
        %v254 = vld [vmem:[%s195 + $0x8] sm:$0xff]
        %v255 = vld [vmem:[%s195 + $0x10] sm:$0xff]
        %v256 = vld [vmem:[%s195 + $0x18] sm:$0xff]
        %v257 = vld [vmem:[%s195 + $0x20] sm:$0xff]
        %v258 = vld [vmem:[%s195 + $0x28] sm:$0xff]
        %v259 = vld [vmem:[%s195 + $0x30] sm:$0xff]
        %v260 = vld [vmem:[%s195 + $0x38] sm:$0xff]
        %v261 = vld [vmem:[%s195 + $0x40] sm:$0xff]
        %v262 = vld [vmem:[%s195 + $0x48] sm:$0xff]
        %v263 = vld [vmem:[%s195 + $0x50] sm:$0xff]
        %v264 = vld [vmem:[%s195 + $0x58] sm:$0xff]
        %v265 = vld [vmem:[%s195 + $0x60] sm:$0xff]
        %v266 = vld [vmem:[%s195 + $0x68] sm:$0xff]
        %v267 = vld [vmem:[%s195 + $0x70] sm:$0xff]
        %v268 = vld [vmem:[%s195 + $0x78] sm:$0xff]
        %v269 = vld [vmem:[%s195 + $0x80] sm:$0xff]
        %v270 = vld [vmem:[%s195 + $0x88] sm:$0xff]
        %v271 = vld [vmem:[%s195 + $0x90] sm:$0xff]
        %v272 = vld [vmem:[%s195 + $0x98] sm:$0xff]
        %v273 = vld [vmem:[%s195 + $0xa0] sm:$0xff]
        %v274 = vld [vmem:[%s195 + $0xa8] sm:$0xff]
        %v275 = vld [vmem:[%s195 + $0xb0] sm:$0xff]
        %v276 = vld [vmem:[%s195 + $0xb8] sm:$0xff]
        %v277 = vld [vmem:[%s195 + $0xc0] sm:$0xff]
        %v278 = vld [vmem:[%s195 + $0xc8] sm:$0xff]
        %v279 = vld [vmem:[%s195 + $0xd0] sm:$0xff]
        %v280 = vld [vmem:[%s195 + $0xd8] sm:$0xff]
        %v281 = vld [vmem:[%s195 + $0xe0] sm:$0xff]
        %v282 = vld [vmem:[%s195 + $0xe8] sm:$0xff]
        %v283 = vld [vmem:[%s195 + $0xf0] sm:$0xff]
        %v284 = vld [vmem:[%s195 + $0xf8] sm:$0xff]
        %s285 = scalar_lea.vmem [#allocation2], 24
        %286 = vst.msk [vmem:[%s285 + $0x1] sm:$0xff] %vm197, %v253
        %287 = vst.msk [vmem:[%s285 + $0x9] sm:$0xff] %vm197, %v254
        %288 = vst.msk [vmem:[%s285 + $0x19] sm:$0xff] %vm197, %v255
        %289 = vst.msk [vmem:[%s285 + $0x21] sm:$0xff] %vm197, %v256
        %290 = vst.msk [vmem:[%s285 + $0x31] sm:$0xff] %vm197, %v257
        %291 = vst.msk [vmem:[%s285 + $0x39] sm:$0xff] %vm197, %v258
        %292 = vst.msk [vmem:[%s285 + $0x49] sm:$0xff] %vm197, %v259
        %293 = vst.msk [vmem:[%s285 + $0x51] sm:$0xff] %vm197, %v260
        %294 = vst.msk [vmem:[%s285 + $0x61] sm:$0xff] %vm197, %v261
        %295 = vst.msk [vmem:[%s285 + $0x69] sm:$0xff] %vm197, %v262
        %296 = vst.msk [vmem:[%s285 + $0x79] sm:$0xff] %vm197, %v263
        %297 = vst.msk [vmem:[%s285 + $0x81] sm:$0xff] %vm197, %v264
        %298 = vst.msk [vmem:[%s285 + $0x91] sm:$0xff] %vm197, %v265
        %299 = vst.msk [vmem:[%s285 + $0x99] sm:$0xff] %vm197, %v266
        %300 = vst.msk [vmem:[%s285 + $0xa9] sm:$0xff] %vm197, %v267
        %301 = vst.msk [vmem:[%s285 + $0xb1] sm:$0xff] %vm197, %v268
        %302 = vst.msk [vmem:[%s285 + $0xc1] sm:$0xff] %vm197, %v269
        %303 = vst.msk [vmem:[%s285 + $0xc9] sm:$0xff] %vm197, %v270
        %304 = vst.msk [vmem:[%s285 + $0xd9] sm:$0xff] %vm197, %v271
        %305 = vst.msk [vmem:[%s285 + $0xe1] sm:$0xff] %vm197, %v272
        %306 = vst.msk [vmem:[%s285 + $0xf1] sm:$0xff] %vm197, %v273
        %307 = vst.msk [vmem:[%s285 + $0xf9] sm:$0xff] %vm197, %v274
        %308 = vst.msk [vmem:[%s285 + $0x109] sm:$0xff] %vm197, %v275
        %309 = vst.msk [vmem:[%s285 + $0x111] sm:$0xff] %vm197, %v276
        %310 = vst.msk [vmem:[%s285 + $0x121] sm:$0xff] %vm197, %v277
        %311 = vst.msk [vmem:[%s285 + $0x129] sm:$0xff] %vm197, %v278
        %312 = vst.msk [vmem:[%s285 + $0x139] sm:$0xff] %vm197, %v279
        %313 = vst.msk [vmem:[%s285 + $0x141] sm:$0xff] %vm197, %v280
        %314 = vst.msk [vmem:[%s285 + $0x151] sm:$0xff] %vm197, %v281
        %315 = vst.msk [vmem:[%s285 + $0x159] sm:$0xff] %vm197, %v282
        %316 = vst.msk [vmem:[%s285 + $0x169] sm:$0xff] %vm197, %v283
        %317 = vst.msk [vmem:[%s285 + $0x171] sm:$0xff] %vm197, %v284
        %v318 = vld [vmem:[#allocation2] sm:$0xff]
        %v319 = vld [vmem:[#allocation2 + $0x8] sm:$0xff]
        %v320 = vld [vmem:[#allocation2 + $0x18] sm:$0xff]
        %v321 = vld [vmem:[#allocation2 + $0x20] sm:$0xff]
        %v322 = vld [vmem:[#allocation2 + $0x30] sm:$0xff]
        %v323 = vld [vmem:[#allocation2 + $0x38] sm:$0xff]
        %v324 = vld [vmem:[#allocation2 + $0x48] sm:$0xff]
        %v325 = vld [vmem:[#allocation2 + $0x50] sm:$0xff]
        %v326 = vld [vmem:[#allocation2 + $0x60] sm:$0xff]
        %v327 = vld [vmem:[#allocation2 + $0x68] sm:$0xff]
        %v328 = vld [vmem:[#allocation2 + $0x78] sm:$0xff]
        %v329 = vld [vmem:[#allocation2 + $0x80] sm:$0xff]
        %v330 = vld [vmem:[#allocation2 + $0x90] sm:$0xff]
        %v331 = vld [vmem:[#allocation2 + $0x98] sm:$0xff]
        %v332 = vld [vmem:[#allocation2 + $0xa8] sm:$0xff]
        %v333 = vld [vmem:[#allocation2 + $0xb0] sm:$0xff]
        %v334 = vld [vmem:[#allocation2 + $0xc0] sm:$0xff]
        %v335 = vld [vmem:[#allocation2 + $0xc8] sm:$0xff]
        %v336 = vld [vmem:[#allocation2 + $0xd8] sm:$0xff]
        %v337 = vld [vmem:[#allocation2 + $0xe0] sm:$0xff]
        %v338 = vld [vmem:[#allocation2 + $0xf0] sm:$0xff]
        %v339 = vld [vmem:[#allocation2 + $0xf8] sm:$0xff]
        %v340 = vld [vmem:[#allocation2 + $0x108] sm:$0xff]
        %v341 = vld [vmem:[#allocation2 + $0x110] sm:$0xff]
        %v342 = vld [vmem:[#allocation2 + $0x120] sm:$0xff]
        %v343 = vld [vmem:[#allocation2 + $0x128] sm:$0xff]
        %v344 = vld [vmem:[#allocation2 + $0x138] sm:$0xff]
        %v345 = vld [vmem:[#allocation2 + $0x140] sm:$0xff]
        %v346 = vld [vmem:[#allocation2 + $0x150] sm:$0xff]
        %v347 = vld [vmem:[#allocation2 + $0x158] sm:$0xff]
        %v348 = vld [vmem:[#allocation2 + $0x168] sm:$0xff]
        %v349 = vld [vmem:[#allocation2 + $0x170] sm:$0xff]
        %350 = vst.msk [vmem:[#allocation4] sm:$0xff] %vm197, %v318
        %351 = vst.msk [vmem:[#allocation4 + $0x8] sm:$0xff] %vm197, %v319
        %352 = vst.msk [vmem:[#allocation4 + $0x10] sm:$0xff] %vm197, %v320
        %353 = vst.msk [vmem:[#allocation4 + $0x18] sm:$0xff] %vm197, %v321
        %354 = vst.msk [vmem:[#allocation4 + $0x20] sm:$0xff] %vm197, %v322
        %355 = vst.msk [vmem:[#allocation4 + $0x28] sm:$0xff] %vm197, %v323
        %356 = vst.msk [vmem:[#allocation4 + $0x30] sm:$0xff] %vm197, %v324
        %357 = vst.msk [vmem:[#allocation4 + $0x38] sm:$0xff] %vm197, %v325
        %358 = vst.msk [vmem:[#allocation4 + $0x40] sm:$0xff] %vm197, %v326
        %359 = vst.msk [vmem:[#allocation4 + $0x48] sm:$0xff] %vm197, %v327
        %360 = vst.msk [vmem:[#allocation4 + $0x50] sm:$0xff] %vm197, %v328
        %361 = vst.msk [vmem:[#allocation4 + $0x58] sm:$0xff] %vm197, %v329
        %362 = vst.msk [vmem:[#allocation4 + $0x60] sm:$0xff] %vm197, %v330
        %363 = vst.msk [vmem:[#allocation4 + $0x68] sm:$0xff] %vm197, %v331
        %364 = vst.msk [vmem:[#allocation4 + $0x70] sm:$0xff] %vm197, %v332
        %365 = vst.msk [vmem:[#allocation4 + $0x78] sm:$0xff] %vm197, %v333
        %366 = vst.msk [vmem:[#allocation4 + $0x80] sm:$0xff] %vm197, %v334
        %367 = vst.msk [vmem:[#allocation4 + $0x88] sm:$0xff] %vm197, %v335
        %368 = vst.msk [vmem:[#allocation4 + $0x90] sm:$0xff] %vm197, %v336
        %369 = vst.msk [vmem:[#allocation4 + $0x98] sm:$0xff] %vm197, %v337
        %370 = vst.msk [vmem:[#allocation4 + $0xa0] sm:$0xff] %vm197, %v338
        %371 = vst.msk [vmem:[#allocation4 + $0xa8] sm:$0xff] %vm197, %v339
        %372 = vst.msk [vmem:[#allocation4 + $0xb0] sm:$0xff] %vm197, %v340
        %373 = vst.msk [vmem:[#allocation4 + $0xb8] sm:$0xff] %vm197, %v341
        %374 = vst.msk [vmem:[#allocation4 + $0xc0] sm:$0xff] %vm197, %v342
        %375 = vst.msk [vmem:[#allocation4 + $0xc8] sm:$0xff] %vm197, %v343
        %376 = vst.msk [vmem:[#allocation4 + $0xd0] sm:$0xff] %vm197, %v344
        %377 = vst.msk [vmem:[#allocation4 + $0xd8] sm:$0xff] %vm197, %v345
        %378 = vst.msk [vmem:[#allocation4 + $0xe0] sm:$0xff] %vm197, %v346
        %379 = vst.msk [vmem:[#allocation4 + $0xe8] sm:$0xff] %vm197, %v347
        %380 = vst.msk [vmem:[#allocation4 + $0xf0] sm:$0xff] %vm197, %v348
        %381 = vst.msk [vmem:[#allocation4 + $0xf8] sm:$0xff] %vm197, %v349
        %v382 = vld [vmem:[#allocation2 + $0x1] sm:$0xff]
        %v383 = vld [vmem:[#allocation2 + $0x9] sm:$0xff]
        %v384 = vld [vmem:[#allocation2 + $0x19] sm:$0xff]
        %v385 = vld [vmem:[#allocation2 + $0x21] sm:$0xff]
        %v386 = vld [vmem:[#allocation2 + $0x31] sm:$0xff]
        %v387 = vld [vmem:[#allocation2 + $0x39] sm:$0xff]
        %v388 = vld [vmem:[#allocation2 + $0x49] sm:$0xff]
        %v389 = vld [vmem:[#allocation2 + $0x51] sm:$0xff]
        %v390 = vld [vmem:[#allocation2 + $0x61] sm:$0xff]
        %v391 = vld [vmem:[#allocation2 + $0x69] sm:$0xff]
        %v392 = vld [vmem:[#allocation2 + $0x79] sm:$0xff]
        %v393 = vld [vmem:[#allocation2 + $0x81] sm:$0xff]
        %v394 = vld [vmem:[#allocation2 + $0x91] sm:$0xff]
        %v395 = vld [vmem:[#allocation2 + $0x99] sm:$0xff]
        %v396 = vld [vmem:[#allocation2 + $0xa9] sm:$0xff]
        %v397 = vld [vmem:[#allocation2 + $0xb1] sm:$0xff]
        %v398 = vld [vmem:[#allocation2 + $0xc1] sm:$0xff]
        %v399 = vld [vmem:[#allocation2 + $0xc9] sm:$0xff]
        %v400 = vld [vmem:[#allocation2 + $0xd9] sm:$0xff]
        %v401 = vld [vmem:[#allocation2 + $0xe1] sm:$0xff]
        %v402 = vld [vmem:[#allocation2 + $0xf1] sm:$0xff]
        %v403 = vld [vmem:[#allocation2 + $0xf9] sm:$0xff]
        %v404 = vld [vmem:[#allocation2 + $0x109] sm:$0xff]
        %v405 = vld [vmem:[#allocation2 + $0x111] sm:$0xff]
        %v406 = vld [vmem:[#allocation2 + $0x121] sm:$0xff]
        %v407 = vld [vmem:[#allocation2 + $0x129] sm:$0xff]
        %v408 = vld [vmem:[#allocation2 + $0x139] sm:$0xff]
        %v409 = vld [vmem:[#allocation2 + $0x141] sm:$0xff]
        %v410 = vld [vmem:[#allocation2 + $0x151] sm:$0xff]
        %v411 = vld [vmem:[#allocation2 + $0x159] sm:$0xff]
        %v412 = vld [vmem:[#allocation2 + $0x169] sm:$0xff]
        %v413 = vld [vmem:[#allocation2 + $0x171] sm:$0xff]
        %446 = vrot.lane.b32.xlu0 %v382, 4
        %v447 = vpop.permute.xlu0 %446
        %448 = vrot.lane.b32.xlu0 %v383, 4
        %v449 = vpop.permute.xlu0 %448
        %450 = vrot.lane.b32.xlu0 %v384, 4
        %v451 = vpop.permute.xlu0 %450
        %452 = vrot.lane.b32.xlu0 %v385, 4
        %v453 = vpop.permute.xlu0 %452
        %454 = vrot.lane.b32.xlu0 %v386, 4
        %v455 = vpop.permute.xlu0 %454
        %456 = vrot.lane.b32.xlu0 %v387, 4
        %v457 = vpop.permute.xlu0 %456
        %458 = vrot.lane.b32.xlu0 %v388, 4
        %v459 = vpop.permute.xlu0 %458
        %460 = vrot.lane.b32.xlu0 %v389, 4
        %v461 = vpop.permute.xlu0 %460
        %462 = vrot.lane.b32.xlu0 %v390, 4
        %v463 = vpop.permute.xlu0 %462
        %464 = vrot.lane.b32.xlu0 %v391, 4
        %v465 = vpop.permute.xlu0 %464
        %466 = vrot.lane.b32.xlu0 %v392, 4
        %v467 = vpop.permute.xlu0 %466
        %468 = vrot.lane.b32.xlu0 %v393, 4
        %v469 = vpop.permute.xlu0 %468
        %470 = vrot.lane.b32.xlu0 %v394, 4
        %v471 = vpop.permute.xlu0 %470
        %472 = vrot.lane.b32.xlu0 %v395, 4
        %v473 = vpop.permute.xlu0 %472
        %474 = vrot.lane.b32.xlu0 %v396, 4
        %v475 = vpop.permute.xlu0 %474
        %476 = vrot.lane.b32.xlu0 %v397, 4
        %v477 = vpop.permute.xlu0 %476
        %478 = vrot.lane.b32.xlu0 %v398, 4
        %v479 = vpop.permute.xlu0 %478
        %480 = vrot.lane.b32.xlu0 %v399, 4
        %v481 = vpop.permute.xlu0 %480
        %482 = vrot.lane.b32.xlu0 %v400, 4
        %v483 = vpop.permute.xlu0 %482
        %484 = vrot.lane.b32.xlu0 %v401, 4
        %v485 = vpop.permute.xlu0 %484
        %486 = vrot.lane.b32.xlu0 %v402, 4
        %v487 = vpop.permute.xlu0 %486
        %488 = vrot.lane.b32.xlu0 %v403, 4
        %v489 = vpop.permute.xlu0 %488
        %490 = vrot.lane.b32.xlu0 %v404, 4
        %v491 = vpop.permute.xlu0 %490
        %492 = vrot.lane.b32.xlu0 %v405, 4
        %v493 = vpop.permute.xlu0 %492
        %494 = vrot.lane.b32.xlu0 %v406, 4
        %v495 = vpop.permute.xlu0 %494
        %496 = vrot.lane.b32.xlu0 %v407, 4
        %v497 = vpop.permute.xlu0 %496
        %498 = vrot.lane.b32.xlu0 %v408, 4
        %v499 = vpop.permute.xlu0 %498
        %500 = vrot.lane.b32.xlu0 %v409, 4
        %v501 = vpop.permute.xlu0 %500
        %502 = vrot.lane.b32.xlu0 %v410, 4
        %v503 = vpop.permute.xlu0 %502
        %504 = vrot.lane.b32.xlu0 %v411, 4
        %v505 = vpop.permute.xlu0 %504
        %506 = vrot.lane.b32.xlu0 %v412, 4
        %v507 = vpop.permute.xlu0 %506
        %508 = vrot.lane.b32.xlu0 %v413, 4
        %v509 = vpop.permute.xlu0 %508
        %vm542 = vcmask 64544
        %543 = vst.msk [vmem:[#allocation4] sm:$0xff] %vm542, %v447
        %544 = vst.msk [vmem:[#allocation4 + $0x8] sm:$0xff] %vm542, %v449
        %545 = vst.msk [vmem:[#allocation4 + $0x10] sm:$0xff] %vm542, %v451
        %546 = vst.msk [vmem:[#allocation4 + $0x18] sm:$0xff] %vm542, %v453
        %547 = vst.msk [vmem:[#allocation4 + $0x20] sm:$0xff] %vm542, %v455
        %548 = vst.msk [vmem:[#allocation4 + $0x28] sm:$0xff] %vm542, %v457
        %549 = vst.msk [vmem:[#allocation4 + $0x30] sm:$0xff] %vm542, %v459
        %550 = vst.msk [vmem:[#allocation4 + $0x38] sm:$0xff] %vm542, %v461
        %551 = vst.msk [vmem:[#allocation4 + $0x40] sm:$0xff] %vm542, %v463
        %552 = vst.msk [vmem:[#allocation4 + $0x48] sm:$0xff] %vm542, %v465
        %553 = vst.msk [vmem:[#allocation4 + $0x50] sm:$0xff] %vm542, %v467
        %554 = vst.msk [vmem:[#allocation4 + $0x58] sm:$0xff] %vm542, %v469
        %555 = vst.msk [vmem:[#allocation4 + $0x60] sm:$0xff] %vm542, %v471
        %556 = vst.msk [vmem:[#allocation4 + $0x68] sm:$0xff] %vm542, %v473
        %557 = vst.msk [vmem:[#allocation4 + $0x70] sm:$0xff] %vm542, %v475
        %558 = vst.msk [vmem:[#allocation4 + $0x78] sm:$0xff] %vm542, %v477
        %559 = vst.msk [vmem:[#allocation4 + $0x80] sm:$0xff] %vm542, %v479
        %560 = vst.msk [vmem:[#allocation4 + $0x88] sm:$0xff] %vm542, %v481
        %561 = vst.msk [vmem:[#allocation4 + $0x90] sm:$0xff] %vm542, %v483
        %562 = vst.msk [vmem:[#allocation4 + $0x98] sm:$0xff] %vm542, %v485
        %563 = vst.msk [vmem:[#allocation4 + $0xa0] sm:$0xff] %vm542, %v487
        %564 = vst.msk [vmem:[#allocation4 + $0xa8] sm:$0xff] %vm542, %v489
        %565 = vst.msk [vmem:[#allocation4 + $0xb0] sm:$0xff] %vm542, %v491
        %566 = vst.msk [vmem:[#allocation4 + $0xb8] sm:$0xff] %vm542, %v493
        %567 = vst.msk [vmem:[#allocation4 + $0xc0] sm:$0xff] %vm542, %v495
        %568 = vst.msk [vmem:[#allocation4 + $0xc8] sm:$0xff] %vm542, %v497
        %569 = vst.msk [vmem:[#allocation4 + $0xd0] sm:$0xff] %vm542, %v499
        %570 = vst.msk [vmem:[#allocation4 + $0xd8] sm:$0xff] %vm542, %v501
        %571 = vst.msk [vmem:[#allocation4 + $0xe0] sm:$0xff] %vm542, %v503
        %572 = vst.msk [vmem:[#allocation4 + $0xe8] sm:$0xff] %vm542, %v505
        %573 = vst.msk [vmem:[#allocation4 + $0xf0] sm:$0xff] %vm542, %v507
        %574 = vst.msk [vmem:[#allocation4 + $0xf8] sm:$0xff] %vm542, %v509
        %v575 = vld [vmem:[#allocation2 + $0x2] sm:$0xff]
        %v576 = vld [vmem:[#allocation2 + $0xa] sm:$0xff]
        %v577 = vld [vmem:[#allocation2 + $0x1a] sm:$0xff]
        %v578 = vld [vmem:[#allocation2 + $0x22] sm:$0xff]
        %v579 = vld [vmem:[#allocation2 + $0x32] sm:$0xff]
        %v580 = vld [vmem:[#allocation2 + $0x3a] sm:$0xff]
        %v581 = vld [vmem:[#allocation2 + $0x4a] sm:$0xff]
        %v582 = vld [vmem:[#allocation2 + $0x52] sm:$0xff]
        %v583 = vld [vmem:[#allocation2 + $0x62] sm:$0xff]
        %v584 = vld [vmem:[#allocation2 + $0x6a] sm:$0xff]
        %v585 = vld [vmem:[#allocation2 + $0x7a] sm:$0xff]
        %v586 = vld [vmem:[#allocation2 + $0x82] sm:$0xff]
        %v587 = vld [vmem:[#allocation2 + $0x92] sm:$0xff]
        %v588 = vld [vmem:[#allocation2 + $0x9a] sm:$0xff]
        %v589 = vld [vmem:[#allocation2 + $0xaa] sm:$0xff]
        %v590 = vld [vmem:[#allocation2 + $0xb2] sm:$0xff]
        %v591 = vld [vmem:[#allocation2 + $0xc2] sm:$0xff]
        %v592 = vld [vmem:[#allocation2 + $0xca] sm:$0xff]
        %v593 = vld [vmem:[#allocation2 + $0xda] sm:$0xff]
        %v594 = vld [vmem:[#allocation2 + $0xe2] sm:$0xff]
        %v595 = vld [vmem:[#allocation2 + $0xf2] sm:$0xff]
        %v596 = vld [vmem:[#allocation2 + $0xfa] sm:$0xff]
        %v597 = vld [vmem:[#allocation2 + $0x10a] sm:$0xff]
        %v598 = vld [vmem:[#allocation2 + $0x112] sm:$0xff]
        %v599 = vld [vmem:[#allocation2 + $0x122] sm:$0xff]
        %v600 = vld [vmem:[#allocation2 + $0x12a] sm:$0xff]
        %v601 = vld [vmem:[#allocation2 + $0x13a] sm:$0xff]
        %v602 = vld [vmem:[#allocation2 + $0x142] sm:$0xff]
        %v603 = vld [vmem:[#allocation2 + $0x152] sm:$0xff]
        %v604 = vld [vmem:[#allocation2 + $0x15a] sm:$0xff]
        %v605 = vld [vmem:[#allocation2 + $0x16a] sm:$0xff]
        %v606 = vld [vmem:[#allocation2 + $0x172] sm:$0xff]
        %639 = vrot.lane.b32.xlu0 %v575, 8
        %v640 = vpop.permute.xlu0 %639
        %641 = vrot.lane.b32.xlu0 %v576, 8
        %v642 = vpop.permute.xlu0 %641
        %643 = vrot.lane.b32.xlu0 %v577, 8
        %v644 = vpop.permute.xlu0 %643
        %645 = vrot.lane.b32.xlu0 %v578, 8
        %v646 = vpop.permute.xlu0 %645
        %647 = vrot.lane.b32.xlu0 %v579, 8
        %v648 = vpop.permute.xlu0 %647
        %649 = vrot.lane.b32.xlu0 %v580, 8
        %v650 = vpop.permute.xlu0 %649
        %651 = vrot.lane.b32.xlu0 %v581, 8
        %v652 = vpop.permute.xlu0 %651
        %653 = vrot.lane.b32.xlu0 %v582, 8
        %v654 = vpop.permute.xlu0 %653
        %655 = vrot.lane.b32.xlu0 %v583, 8
        %v656 = vpop.permute.xlu0 %655
        %657 = vrot.lane.b32.xlu0 %v584, 8
        %v658 = vpop.permute.xlu0 %657
        %659 = vrot.lane.b32.xlu0 %v585, 8
        %v660 = vpop.permute.xlu0 %659
        %661 = vrot.lane.b32.xlu0 %v586, 8
        %v662 = vpop.permute.xlu0 %661
        %663 = vrot.lane.b32.xlu0 %v587, 8
        %v664 = vpop.permute.xlu0 %663
        %665 = vrot.lane.b32.xlu0 %v588, 8
        %v666 = vpop.permute.xlu0 %665
        %667 = vrot.lane.b32.xlu0 %v589, 8
        %v668 = vpop.permute.xlu0 %667
        %669 = vrot.lane.b32.xlu0 %v590, 8
        %v670 = vpop.permute.xlu0 %669
        %671 = vrot.lane.b32.xlu0 %v591, 8
        %v672 = vpop.permute.xlu0 %671
        %673 = vrot.lane.b32.xlu0 %v592, 8
        %v674 = vpop.permute.xlu0 %673
        %675 = vrot.lane.b32.xlu0 %v593, 8
        %v676 = vpop.permute.xlu0 %675
        %677 = vrot.lane.b32.xlu0 %v594, 8
        %v678 = vpop.permute.xlu0 %677
        %679 = vrot.lane.b32.xlu0 %v595, 8
        %v680 = vpop.permute.xlu0 %679
        %681 = vrot.lane.b32.xlu0 %v596, 8
        %v682 = vpop.permute.xlu0 %681
        %683 = vrot.lane.b32.xlu0 %v597, 8
        %v684 = vpop.permute.xlu0 %683
        %685 = vrot.lane.b32.xlu0 %v598, 8
        %v686 = vpop.permute.xlu0 %685
        %687 = vrot.lane.b32.xlu0 %v599, 8
        %v688 = vpop.permute.xlu0 %687
        %689 = vrot.lane.b32.xlu0 %v600, 8
        %v690 = vpop.permute.xlu0 %689
        %691 = vrot.lane.b32.xlu0 %v601, 8
        %v692 = vpop.permute.xlu0 %691
        %693 = vrot.lane.b32.xlu0 %v602, 8
        %v694 = vpop.permute.xlu0 %693
        %695 = vrot.lane.b32.xlu0 %v603, 8
        %v696 = vpop.permute.xlu0 %695
        %697 = vrot.lane.b32.xlu0 %v604, 8
        %v698 = vpop.permute.xlu0 %697
        %699 = vrot.lane.b32.xlu0 %v605, 8
        %v700 = vpop.permute.xlu0 %699
        %701 = vrot.lane.b32.xlu0 %v606, 8
        %v702 = vpop.permute.xlu0 %701
        %vm735 = vcmask 97344
        %736 = vst.msk [vmem:[#allocation4] sm:$0xff] %vm735, %v640
        %737 = vst.msk [vmem:[#allocation4 + $0x8] sm:$0xff] %vm735, %v642
        %738 = vst.msk [vmem:[#allocation4 + $0x10] sm:$0xff] %vm735, %v644
        %739 = vst.msk [vmem:[#allocation4 + $0x18] sm:$0xff] %vm735, %v646
        %740 = vst.msk [vmem:[#allocation4 + $0x20] sm:$0xff] %vm735, %v648
        %741 = vst.msk [vmem:[#allocation4 + $0x28] sm:$0xff] %vm735, %v650
        %742 = vst.msk [vmem:[#allocation4 + $0x30] sm:$0xff] %vm735, %v652
        %743 = vst.msk [vmem:[#allocation4 + $0x38] sm:$0xff] %vm735, %v654
        %744 = vst.msk [vmem:[#allocation4 + $0x40] sm:$0xff] %vm735, %v656
        %745 = vst.msk [vmem:[#allocation4 + $0x48] sm:$0xff] %vm735, %v658
        %746 = vst.msk [vmem:[#allocation4 + $0x50] sm:$0xff] %vm735, %v660
        %747 = vst.msk [vmem:[#allocation4 + $0x58] sm:$0xff] %vm735, %v662
        %748 = vst.msk [vmem:[#allocation4 + $0x60] sm:$0xff] %vm735, %v664
        %749 = vst.msk [vmem:[#allocation4 + $0x68] sm:$0xff] %vm735, %v666
        %750 = vst.msk [vmem:[#allocation4 + $0x70] sm:$0xff] %vm735, %v668
        %751 = vst.msk [vmem:[#allocation4 + $0x78] sm:$0xff] %vm735, %v670
        %752 = vst.msk [vmem:[#allocation4 + $0x80] sm:$0xff] %vm735, %v672
        %753 = vst.msk [vmem:[#allocation4 + $0x88] sm:$0xff] %vm735, %v674
        %754 = vst.msk [vmem:[#allocation4 + $0x90] sm:$0xff] %vm735, %v676
        %755 = vst.msk [vmem:[#allocation4 + $0x98] sm:$0xff] %vm735, %v678
        %756 = vst.msk [vmem:[#allocation4 + $0xa0] sm:$0xff] %vm735, %v680
        %757 = vst.msk [vmem:[#allocation4 + $0xa8] sm:$0xff] %vm735, %v682
        %758 = vst.msk [vmem:[#allocation4 + $0xb0] sm:$0xff] %vm735, %v684
        %759 = vst.msk [vmem:[#allocation4 + $0xb8] sm:$0xff] %vm735, %v686
        %760 = vst.msk [vmem:[#allocation4 + $0xc0] sm:$0xff] %vm735, %v688
        %761 = vst.msk [vmem:[#allocation4 + $0xc8] sm:$0xff] %vm735, %v690
        %762 = vst.msk [vmem:[#allocation4 + $0xd0] sm:$0xff] %vm735, %v692
        %763 = vst.msk [vmem:[#allocation4 + $0xd8] sm:$0xff] %vm735, %v694
        %764 = vst.msk [vmem:[#allocation4 + $0xe0] sm:$0xff] %vm735, %v696
        %765 = vst.msk [vmem:[#allocation4 + $0xe8] sm:$0xff] %vm735, %v698
        %766 = vst.msk [vmem:[#allocation4 + $0xf0] sm:$0xff] %vm735, %v700
        %767 = vst.msk [vmem:[#allocation4 + $0xf8] sm:$0xff] %vm735, %v702
        %v768 = vld [vmem:[%s285] sm:$0xff]
        %v769 = vld [vmem:[%s285 + $0x8] sm:$0xff]
        %v770 = vld [vmem:[%s285 + $0x18] sm:$0xff]
        %v771 = vld [vmem:[%s285 + $0x20] sm:$0xff]
        %v772 = vld [vmem:[%s285 + $0x30] sm:$0xff]
        %v773 = vld [vmem:[%s285 + $0x38] sm:$0xff]
        %v774 = vld [vmem:[%s285 + $0x48] sm:$0xff]
        %v775 = vld [vmem:[%s285 + $0x50] sm:$0xff]
        %v776 = vld [vmem:[%s285 + $0x60] sm:$0xff]
        %v777 = vld [vmem:[%s285 + $0x68] sm:$0xff]
        %v778 = vld [vmem:[%s285 + $0x78] sm:$0xff]
        %v779 = vld [vmem:[%s285 + $0x80] sm:$0xff]
        %v780 = vld [vmem:[%s285 + $0x90] sm:$0xff]
        %v781 = vld [vmem:[%s285 + $0x98] sm:$0xff]
        %v782 = vld [vmem:[%s285 + $0xa8] sm:$0xff]
        %v783 = vld [vmem:[%s285 + $0xb0] sm:$0xff]
        %v784 = vld [vmem:[%s285 + $0xc0] sm:$0xff]
        %v785 = vld [vmem:[%s285 + $0xc8] sm:$0xff]
        %v786 = vld [vmem:[%s285 + $0xd8] sm:$0xff]
        %v787 = vld [vmem:[%s285 + $0xe0] sm:$0xff]
        %v788 = vld [vmem:[%s285 + $0xf0] sm:$0xff]
        %v789 = vld [vmem:[%s285 + $0xf8] sm:$0xff]
        %v790 = vld [vmem:[%s285 + $0x108] sm:$0xff]
        %v791 = vld [vmem:[%s285 + $0x110] sm:$0xff]
        %v792 = vld [vmem:[%s285 + $0x120] sm:$0xff]
        %v793 = vld [vmem:[%s285 + $0x128] sm:$0xff]
        %v794 = vld [vmem:[%s285 + $0x138] sm:$0xff]
        %v795 = vld [vmem:[%s285 + $0x140] sm:$0xff]
        %v796 = vld [vmem:[%s285 + $0x150] sm:$0xff]
        %v797 = vld [vmem:[%s285 + $0x158] sm:$0xff]
        %v798 = vld [vmem:[%s285 + $0x168] sm:$0xff]
        %v799 = vld [vmem:[%s285 + $0x170] sm:$0xff]
        %832 = vrot.lane.b32.xlu0 %v768, 12
        %v833 = vpop.permute.xlu0 %832
        %834 = vrot.lane.b32.xlu0 %v769, 12
        %v835 = vpop.permute.xlu0 %834
        %836 = vrot.lane.b32.xlu0 %v770, 12
        %v837 = vpop.permute.xlu0 %836
        %838 = vrot.lane.b32.xlu0 %v771, 12
        %v839 = vpop.permute.xlu0 %838
        %840 = vrot.lane.b32.xlu0 %v772, 12
        %v841 = vpop.permute.xlu0 %840
        %842 = vrot.lane.b32.xlu0 %v773, 12
        %v843 = vpop.permute.xlu0 %842
        %844 = vrot.lane.b32.xlu0 %v774, 12
        %v845 = vpop.permute.xlu0 %844
        %846 = vrot.lane.b32.xlu0 %v775, 12
        %v847 = vpop.permute.xlu0 %846
        %848 = vrot.lane.b32.xlu0 %v776, 12
        %v849 = vpop.permute.xlu0 %848
        %850 = vrot.lane.b32.xlu0 %v777, 12
        %v851 = vpop.permute.xlu0 %850
        %852 = vrot.lane.b32.xlu0 %v778, 12
        %v853 = vpop.permute.xlu0 %852
        %854 = vrot.lane.b32.xlu0 %v779, 12
        %v855 = vpop.permute.xlu0 %854
        %856 = vrot.lane.b32.xlu0 %v780, 12
        %v857 = vpop.permute.xlu0 %856
        %858 = vrot.lane.b32.xlu0 %v781, 12
        %v859 = vpop.permute.xlu0 %858
        %860 = vrot.lane.b32.xlu0 %v782, 12
        %v861 = vpop.permute.xlu0 %860
        %862 = vrot.lane.b32.xlu0 %v783, 12
        %v863 = vpop.permute.xlu0 %862
        %864 = vrot.lane.b32.xlu0 %v784, 12
        %v865 = vpop.permute.xlu0 %864
        %866 = vrot.lane.b32.xlu0 %v785, 12
        %v867 = vpop.permute.xlu0 %866
        %868 = vrot.lane.b32.xlu0 %v786, 12
        %v869 = vpop.permute.xlu0 %868
        %870 = vrot.lane.b32.xlu0 %v787, 12
        %v871 = vpop.permute.xlu0 %870
        %872 = vrot.lane.b32.xlu0 %v788, 12
        %v873 = vpop.permute.xlu0 %872
        %874 = vrot.lane.b32.xlu0 %v789, 12
        %v875 = vpop.permute.xlu0 %874
        %876 = vrot.lane.b32.xlu0 %v790, 12
        %v877 = vpop.permute.xlu0 %876
        %878 = vrot.lane.b32.xlu0 %v791, 12
        %v879 = vpop.permute.xlu0 %878
        %880 = vrot.lane.b32.xlu0 %v792, 12
        %v881 = vpop.permute.xlu0 %880
        %882 = vrot.lane.b32.xlu0 %v793, 12
        %v883 = vpop.permute.xlu0 %882
        %884 = vrot.lane.b32.xlu0 %v794, 12
        %v885 = vpop.permute.xlu0 %884
        %886 = vrot.lane.b32.xlu0 %v795, 12
        %v887 = vpop.permute.xlu0 %886
        %888 = vrot.lane.b32.xlu0 %v796, 12
        %v889 = vpop.permute.xlu0 %888
        %890 = vrot.lane.b32.xlu0 %v797, 12
        %v891 = vpop.permute.xlu0 %890
        %892 = vrot.lane.b32.xlu0 %v798, 12
        %v893 = vpop.permute.xlu0 %892
        %894 = vrot.lane.b32.xlu0 %v799, 12
        %v895 = vpop.permute.xlu0 %894
        %vm928 = vcmask 130144
        %929 = vst.msk [vmem:[#allocation4] sm:$0xff] %vm928, %v833
        %930 = vst.msk [vmem:[#allocation4 + $0x8] sm:$0xff] %vm928, %v835
        %931 = vst.msk [vmem:[#allocation4 + $0x10] sm:$0xff] %vm928, %v837
        %932 = vst.msk [vmem:[#allocation4 + $0x18] sm:$0xff] %vm928, %v839
        %933 = vst.msk [vmem:[#allocation4 + $0x20] sm:$0xff] %vm928, %v841
        %934 = vst.msk [vmem:[#allocation4 + $0x28] sm:$0xff] %vm928, %v843
        %935 = vst.msk [vmem:[#allocation4 + $0x30] sm:$0xff] %vm928, %v845
        %936 = vst.msk [vmem:[#allocation4 + $0x38] sm:$0xff] %vm928, %v847
        %937 = vst.msk [vmem:[#allocation4 + $0x40] sm:$0xff] %vm928, %v849
        %938 = vst.msk [vmem:[#allocation4 + $0x48] sm:$0xff] %vm928, %v851
        %939 = vst.msk [vmem:[#allocation4 + $0x50] sm:$0xff] %vm928, %v853
        %940 = vst.msk [vmem:[#allocation4 + $0x58] sm:$0xff] %vm928, %v855
        %941 = vst.msk [vmem:[#allocation4 + $0x60] sm:$0xff] %vm928, %v857
        %942 = vst.msk [vmem:[#allocation4 + $0x68] sm:$0xff] %vm928, %v859
        %943 = vst.msk [vmem:[#allocation4 + $0x70] sm:$0xff] %vm928, %v861
        %944 = vst.msk [vmem:[#allocation4 + $0x78] sm:$0xff] %vm928, %v863
        %945 = vst.msk [vmem:[#allocation4 + $0x80] sm:$0xff] %vm928, %v865
        %946 = vst.msk [vmem:[#allocation4 + $0x88] sm:$0xff] %vm928, %v867
        %947 = vst.msk [vmem:[#allocation4 + $0x90] sm:$0xff] %vm928, %v869
        %948 = vst.msk [vmem:[#allocation4 + $0x98] sm:$0xff] %vm928, %v871
        %949 = vst.msk [vmem:[#allocation4 + $0xa0] sm:$0xff] %vm928, %v873
        %950 = vst.msk [vmem:[#allocation4 + $0xa8] sm:$0xff] %vm928, %v875
        %951 = vst.msk [vmem:[#allocation4 + $0xb0] sm:$0xff] %vm928, %v877
        %952 = vst.msk [vmem:[#allocation4 + $0xb8] sm:$0xff] %vm928, %v879
        %953 = vst.msk [vmem:[#allocation4 + $0xc0] sm:$0xff] %vm928, %v881
        %954 = vst.msk [vmem:[#allocation4 + $0xc8] sm:$0xff] %vm928, %v883
        %955 = vst.msk [vmem:[#allocation4 + $0xd0] sm:$0xff] %vm928, %v885
        %956 = vst.msk [vmem:[#allocation4 + $0xd8] sm:$0xff] %vm928, %v887
        %957 = vst.msk [vmem:[#allocation4 + $0xe0] sm:$0xff] %vm928, %v889
        %958 = vst.msk [vmem:[#allocation4 + $0xe8] sm:$0xff] %vm928, %v891
        %959 = vst.msk [vmem:[#allocation4 + $0xf0] sm:$0xff] %vm928, %v893
        %960 = vst.msk [vmem:[#allocation4 + $0xf8] sm:$0xff] %vm928, %v895
        %v961 = vld [vmem:[%s285 + $0x1] sm:$0xff]
        %v962 = vld [vmem:[%s285 + $0x9] sm:$0xff]
        %v963 = vld [vmem:[%s285 + $0x19] sm:$0xff]
        %v964 = vld [vmem:[%s285 + $0x21] sm:$0xff]
        %v965 = vld [vmem:[%s285 + $0x31] sm:$0xff]
        %v966 = vld [vmem:[%s285 + $0x39] sm:$0xff]
        %v967 = vld [vmem:[%s285 + $0x49] sm:$0xff]
        %v968 = vld [vmem:[%s285 + $0x51] sm:$0xff]
        %v969 = vld [vmem:[%s285 + $0x61] sm:$0xff]
        %v970 = vld [vmem:[%s285 + $0x69] sm:$0xff]
        %v971 = vld [vmem:[%s285 + $0x79] sm:$0xff]
        %v972 = vld [vmem:[%s285 + $0x81] sm:$0xff]
        %v973 = vld [vmem:[%s285 + $0x91] sm:$0xff]
        %v974 = vld [vmem:[%s285 + $0x99] sm:$0xff]
        %v975 = vld [vmem:[%s285 + $0xa9] sm:$0xff]
        %v976 = vld [vmem:[%s285 + $0xb1] sm:$0xff]
        %v977 = vld [vmem:[%s285 + $0xc1] sm:$0xff]
        %v978 = vld [vmem:[%s285 + $0xc9] sm:$0xff]
        %v979 = vld [vmem:[%s285 + $0xd9] sm:$0xff]
        %v980 = vld [vmem:[%s285 + $0xe1] sm:$0xff]
        %v981 = vld [vmem:[%s285 + $0xf1] sm:$0xff]
        %v982 = vld [vmem:[%s285 + $0xf9] sm:$0xff]
        %v983 = vld [vmem:[%s285 + $0x109] sm:$0xff]
        %v984 = vld [vmem:[%s285 + $0x111] sm:$0xff]
        %v985 = vld [vmem:[%s285 + $0x121] sm:$0xff]
        %v986 = vld [vmem:[%s285 + $0x129] sm:$0xff]
        %v987 = vld [vmem:[%s285 + $0x139] sm:$0xff]
        %v988 = vld [vmem:[%s285 + $0x141] sm:$0xff]
        %v989 = vld [vmem:[%s285 + $0x151] sm:$0xff]
        %v990 = vld [vmem:[%s285 + $0x159] sm:$0xff]
        %v991 = vld [vmem:[%s285 + $0x169] sm:$0xff]
        %v992 = vld [vmem:[%s285 + $0x171] sm:$0xff]
        %1025 = vrot.lane.b32.xlu0 %v961, 16
        %v1026 = vpop.permute.xlu0 %1025
        %1027 = vrot.lane.b32.xlu0 %v962, 16
        %v1028 = vpop.permute.xlu0 %1027
        %1029 = vrot.lane.b32.xlu0 %v963, 16
        %v1030 = vpop.permute.xlu0 %1029
        %1031 = vrot.lane.b32.xlu0 %v964, 16
        %v1032 = vpop.permute.xlu0 %1031
        %1033 = vrot.lane.b32.xlu0 %v965, 16
        %v1034 = vpop.permute.xlu0 %1033
        %1035 = vrot.lane.b32.xlu0 %v966, 16
        %v1036 = vpop.permute.xlu0 %1035
        %1037 = vrot.lane.b32.xlu0 %v967, 16
        %v1038 = vpop.permute.xlu0 %1037
        %1039 = vrot.lane.b32.xlu0 %v968, 16
        %v1040 = vpop.permute.xlu0 %1039
        %1041 = vrot.lane.b32.xlu0 %v969, 16
        %v1042 = vpop.permute.xlu0 %1041
        %1043 = vrot.lane.b32.xlu0 %v970, 16
        %v1044 = vpop.permute.xlu0 %1043
        %1045 = vrot.lane.b32.xlu0 %v971, 16
        %v1046 = vpop.permute.xlu0 %1045
        %1047 = vrot.lane.b32.xlu0 %v972, 16
        %v1048 = vpop.permute.xlu0 %1047
        %1049 = vrot.lane.b32.xlu0 %v973, 16
        %v1050 = vpop.permute.xlu0 %1049
        %1051 = vrot.lane.b32.xlu0 %v974, 16
        %v1052 = vpop.permute.xlu0 %1051
        %1053 = vrot.lane.b32.xlu0 %v975, 16
        %v1054 = vpop.permute.xlu0 %1053
        %1055 = vrot.lane.b32.xlu0 %v976, 16
        %v1056 = vpop.permute.xlu0 %1055
        %1057 = vrot.lane.b32.xlu0 %v977, 16
        %v1058 = vpop.permute.xlu0 %1057
        %1059 = vrot.lane.b32.xlu0 %v978, 16
        %v1060 = vpop.permute.xlu0 %1059
        %1061 = vrot.lane.b32.xlu0 %v979, 16
        %v1062 = vpop.permute.xlu0 %1061
        %1063 = vrot.lane.b32.xlu0 %v980, 16
        %v1064 = vpop.permute.xlu0 %1063
        %1065 = vrot.lane.b32.xlu0 %v981, 16
        %v1066 = vpop.permute.xlu0 %1065
        %1067 = vrot.lane.b32.xlu0 %v982, 16
        %v1068 = vpop.permute.xlu0 %1067
        %1069 = vrot.lane.b32.xlu0 %v983, 16
        %v1070 = vpop.permute.xlu0 %1069
        %1071 = vrot.lane.b32.xlu0 %v984, 16
        %v1072 = vpop.permute.xlu0 %1071
        %1073 = vrot.lane.b32.xlu0 %v985, 16
        %v1074 = vpop.permute.xlu0 %1073
        %1075 = vrot.lane.b32.xlu0 %v986, 16
        %v1076 = vpop.permute.xlu0 %1075
        %1077 = vrot.lane.b32.xlu0 %v987, 16
        %v1078 = vpop.permute.xlu0 %1077
        %1079 = vrot.lane.b32.xlu0 %v988, 16
        %v1080 = vpop.permute.xlu0 %1079
        %1081 = vrot.lane.b32.xlu0 %v989, 16
        %v1082 = vpop.permute.xlu0 %1081
        %1083 = vrot.lane.b32.xlu0 %v990, 16
        %v1084 = vpop.permute.xlu0 %1083
        %1085 = vrot.lane.b32.xlu0 %v991, 16
        %v1086 = vpop.permute.xlu0 %1085
        %1087 = vrot.lane.b32.xlu0 %v992, 16
        %v1088 = vpop.permute.xlu0 %1087
        %vm1121 = vcmask 162944
        %1122 = vst.msk [vmem:[#allocation4] sm:$0xff] %vm1121, %v1026
        %1123 = vst.msk [vmem:[#allocation4 + $0x8] sm:$0xff] %vm1121, %v1028
        %1124 = vst.msk [vmem:[#allocation4 + $0x10] sm:$0xff] %vm1121, %v1030
        %1125 = vst.msk [vmem:[#allocation4 + $0x18] sm:$0xff] %vm1121, %v1032
        %1126 = vst.msk [vmem:[#allocation4 + $0x20] sm:$0xff] %vm1121, %v1034
        %1127 = vst.msk [vmem:[#allocation4 + $0x28] sm:$0xff] %vm1121, %v1036
        %1128 = vst.msk [vmem:[#allocation4 + $0x30] sm:$0xff] %vm1121, %v1038
        %1129 = vst.msk [vmem:[#allocation4 + $0x38] sm:$0xff] %vm1121, %v1040
        %1130 = vst.msk [vmem:[#allocation4 + $0x40] sm:$0xff] %vm1121, %v1042
        %1131 = vst.msk [vmem:[#allocation4 + $0x48] sm:$0xff] %vm1121, %v1044
        %1132 = vst.msk [vmem:[#allocation4 + $0x50] sm:$0xff] %vm1121, %v1046
        %1133 = vst.msk [vmem:[#allocation4 + $0x58] sm:$0xff] %vm1121, %v1048
        %1134 = vst.msk [vmem:[#allocation4 + $0x60] sm:$0xff] %vm1121, %v1050
        %1135 = vst.msk [vmem:[#allocation4 + $0x68] sm:$0xff] %vm1121, %v1052
        %1136 = vst.msk [vmem:[#allocation4 + $0x70] sm:$0xff] %vm1121, %v1054
        %1137 = vst.msk [vmem:[#allocation4 + $0x78] sm:$0xff] %vm1121, %v1056
        %1138 = vst.msk [vmem:[#allocation4 + $0x80] sm:$0xff] %vm1121, %v1058
        %1139 = vst.msk [vmem:[#allocation4 + $0x88] sm:$0xff] %vm1121, %v1060
        %1140 = vst.msk [vmem:[#allocation4 + $0x90] sm:$0xff] %vm1121, %v1062
        %1141 = vst.msk [vmem:[#allocation4 + $0x98] sm:$0xff] %vm1121, %v1064
        %1142 = vst.msk [vmem:[#allocation4 + $0xa0] sm:$0xff] %vm1121, %v1066
        %1143 = vst.msk [vmem:[#allocation4 + $0xa8] sm:$0xff] %vm1121, %v1068
        %1144 = vst.msk [vmem:[#allocation4 + $0xb0] sm:$0xff] %vm1121, %v1070
        %1145 = vst.msk [vmem:[#allocation4 + $0xb8] sm:$0xff] %vm1121, %v1072
        %1146 = vst.msk [vmem:[#allocation4 + $0xc0] sm:$0xff] %vm1121, %v1074
        %1147 = vst.msk [vmem:[#allocation4 + $0xc8] sm:$0xff] %vm1121, %v1076
        %1148 = vst.msk [vmem:[#allocation4 + $0xd0] sm:$0xff] %vm1121, %v1078
        %1149 = vst.msk [vmem:[#allocation4 + $0xd8] sm:$0xff] %vm1121, %v1080
        %1150 = vst.msk [vmem:[#allocation4 + $0xe0] sm:$0xff] %vm1121, %v1082
        %1151 = vst.msk [vmem:[#allocation4 + $0xe8] sm:$0xff] %vm1121, %v1084
        %1152 = vst.msk [vmem:[#allocation4 + $0xf0] sm:$0xff] %vm1121, %v1086
        %1153 = vst.msk [vmem:[#allocation4 + $0xf8] sm:$0xff] %vm1121, %v1088
        %v1154 = vld [vmem:[%s285 + $0x2] sm:$0xff]
        %v1155 = vld [vmem:[%s285 + $0xa] sm:$0xff]
        %v1156 = vld [vmem:[%s285 + $0x1a] sm:$0xff]
        %v1157 = vld [vmem:[%s285 + $0x22] sm:$0xff]
        %v1158 = vld [vmem:[%s285 + $0x32] sm:$0xff]
        %v1159 = vld [vmem:[%s285 + $0x3a] sm:$0xff]
        %v1160 = vld [vmem:[%s285 + $0x4a] sm:$0xff]
        %v1161 = vld [vmem:[%s285 + $0x52] sm:$0xff]
        %v1162 = vld [vmem:[%s285 + $0x62] sm:$0xff]
        %v1163 = vld [vmem:[%s285 + $0x6a] sm:$0xff]
        %v1164 = vld [vmem:[%s285 + $0x7a] sm:$0xff]
        %v1165 = vld [vmem:[%s285 + $0x82] sm:$0xff]
        %v1166 = vld [vmem:[%s285 + $0x92] sm:$0xff]
        %v1167 = vld [vmem:[%s285 + $0x9a] sm:$0xff]
        %v1168 = vld [vmem:[%s285 + $0xaa] sm:$0xff]
        %v1169 = vld [vmem:[%s285 + $0xb2] sm:$0xff]
        %v1170 = vld [vmem:[%s285 + $0xc2] sm:$0xff]
        %v1171 = vld [vmem:[%s285 + $0xca] sm:$0xff]
        %v1172 = vld [vmem:[%s285 + $0xda] sm:$0xff]
        %v1173 = vld [vmem:[%s285 + $0xe2] sm:$0xff]
        %v1174 = vld [vmem:[%s285 + $0xf2] sm:$0xff]
        %v1175 = vld [vmem:[%s285 + $0xfa] sm:$0xff]
        %v1176 = vld [vmem:[%s285 + $0x10a] sm:$0xff]
        %v1177 = vld [vmem:[%s285 + $0x112] sm:$0xff]
        %v1178 = vld [vmem:[%s285 + $0x122] sm:$0xff]
        %v1179 = vld [vmem:[%s285 + $0x12a] sm:$0xff]
        %v1180 = vld [vmem:[%s285 + $0x13a] sm:$0xff]
        %v1181 = vld [vmem:[%s285 + $0x142] sm:$0xff]
        %v1182 = vld [vmem:[%s285 + $0x152] sm:$0xff]
        %v1183 = vld [vmem:[%s285 + $0x15a] sm:$0xff]
        %v1184 = vld [vmem:[%s285 + $0x16a] sm:$0xff]
        %v1185 = vld [vmem:[%s285 + $0x172] sm:$0xff]
        %1218 = vrot.lane.b32.xlu0 %v1154, 20
        %v1219 = vpop.permute.xlu0 %1218
        %1220 = vrot.lane.b32.xlu0 %v1155, 20
        %v1221 = vpop.permute.xlu0 %1220
        %1222 = vrot.lane.b32.xlu0 %v1156, 20
        %v1223 = vpop.permute.xlu0 %1222
        %1224 = vrot.lane.b32.xlu0 %v1157, 20
        %v1225 = vpop.permute.xlu0 %1224
        %1226 = vrot.lane.b32.xlu0 %v1158, 20
        %v1227 = vpop.permute.xlu0 %1226
        %1228 = vrot.lane.b32.xlu0 %v1159, 20
        %v1229 = vpop.permute.xlu0 %1228
        %1230 = vrot.lane.b32.xlu0 %v1160, 20
        %v1231 = vpop.permute.xlu0 %1230
        %1232 = vrot.lane.b32.xlu0 %v1161, 20
        %v1233 = vpop.permute.xlu0 %1232
        %1234 = vrot.lane.b32.xlu0 %v1162, 20
        %v1235 = vpop.permute.xlu0 %1234
        %1236 = vrot.lane.b32.xlu0 %v1163, 20
        %v1237 = vpop.permute.xlu0 %1236
        %1238 = vrot.lane.b32.xlu0 %v1164, 20
        %v1239 = vpop.permute.xlu0 %1238
        %1240 = vrot.lane.b32.xlu0 %v1165, 20
        %v1241 = vpop.permute.xlu0 %1240
        %1242 = vrot.lane.b32.xlu0 %v1166, 20
        %v1243 = vpop.permute.xlu0 %1242
        %1244 = vrot.lane.b32.xlu0 %v1167, 20
        %v1245 = vpop.permute.xlu0 %1244
        %1246 = vrot.lane.b32.xlu0 %v1168, 20
        %v1247 = vpop.permute.xlu0 %1246
        %1248 = vrot.lane.b32.xlu0 %v1169, 20
        %v1249 = vpop.permute.xlu0 %1248
        %1250 = vrot.lane.b32.xlu0 %v1170, 20
        %v1251 = vpop.permute.xlu0 %1250
        %1252 = vrot.lane.b32.xlu0 %v1171, 20
        %v1253 = vpop.permute.xlu0 %1252
        %1254 = vrot.lane.b32.xlu0 %v1172, 20
        %v1255 = vpop.permute.xlu0 %1254
        %1256 = vrot.lane.b32.xlu0 %v1173, 20
        %v1257 = vpop.permute.xlu0 %1256
        %1258 = vrot.lane.b32.xlu0 %v1174, 20
        %v1259 = vpop.permute.xlu0 %1258
        %1260 = vrot.lane.b32.xlu0 %v1175, 20
        %v1261 = vpop.permute.xlu0 %1260
        %1262 = vrot.lane.b32.xlu0 %v1176, 20
        %v1263 = vpop.permute.xlu0 %1262
        %1264 = vrot.lane.b32.xlu0 %v1177, 20
        %v1265 = vpop.permute.xlu0 %1264
        %1266 = vrot.lane.b32.xlu0 %v1178, 20
        %v1267 = vpop.permute.xlu0 %1266
        %1268 = vrot.lane.b32.xlu0 %v1179, 20
        %v1269 = vpop.permute.xlu0 %1268
        %1270 = vrot.lane.b32.xlu0 %v1180, 20
        %v1271 = vpop.permute.xlu0 %1270
        %1272 = vrot.lane.b32.xlu0 %v1181, 20
        %v1273 = vpop.permute.xlu0 %1272
        %1274 = vrot.lane.b32.xlu0 %v1182, 20
        %v1275 = vpop.permute.xlu0 %1274
        %1276 = vrot.lane.b32.xlu0 %v1183, 20
        %v1277 = vpop.permute.xlu0 %1276
        %1278 = vrot.lane.b32.xlu0 %v1184, 20
        %v1279 = vpop.permute.xlu0 %1278
        %1280 = vrot.lane.b32.xlu0 %v1185, 20
        %v1281 = vpop.permute.xlu0 %1280
        %vm1314 = vcmask 195744
        %1315 = vst.msk [vmem:[#allocation4] sm:$0xff] %vm1314, %v1219
        %1316 = vst.msk [vmem:[#allocation4 + $0x8] sm:$0xff] %vm1314, %v1221
        %1317 = vst.msk [vmem:[#allocation4 + $0x10] sm:$0xff] %vm1314, %v1223
        %1318 = vst.msk [vmem:[#allocation4 + $0x18] sm:$0xff] %vm1314, %v1225
        %1319 = vst.msk [vmem:[#allocation4 + $0x20] sm:$0xff] %vm1314, %v1227
        %1320 = vst.msk [vmem:[#allocation4 + $0x28] sm:$0xff] %vm1314, %v1229
        %1321 = vst.msk [vmem:[#allocation4 + $0x30] sm:$0xff] %vm1314, %v1231
        %1322 = vst.msk [vmem:[#allocation4 + $0x38] sm:$0xff] %vm1314, %v1233
        %1323 = vst.msk [vmem:[#allocation4 + $0x40] sm:$0xff] %vm1314, %v1235
        %1324 = vst.msk [vmem:[#allocation4 + $0x48] sm:$0xff] %vm1314, %v1237
        %1325 = vst.msk [vmem:[#allocation4 + $0x50] sm:$0xff] %vm1314, %v1239
        %1326 = vst.msk [vmem:[#allocation4 + $0x58] sm:$0xff] %vm1314, %v1241
        %1327 = vst.msk [vmem:[#allocation4 + $0x60] sm:$0xff] %vm1314, %v1243
        %1328 = vst.msk [vmem:[#allocation4 + $0x68] sm:$0xff] %vm1314, %v1245
        %1329 = vst.msk [vmem:[#allocation4 + $0x70] sm:$0xff] %vm1314, %v1247
        %1330 = vst.msk [vmem:[#allocation4 + $0x78] sm:$0xff] %vm1314, %v1249
        %1331 = vst.msk [vmem:[#allocation4 + $0x80] sm:$0xff] %vm1314, %v1251
        %1332 = vst.msk [vmem:[#allocation4 + $0x88] sm:$0xff] %vm1314, %v1253
        %1333 = vst.msk [vmem:[#allocation4 + $0x90] sm:$0xff] %vm1314, %v1255
        %1334 = vst.msk [vmem:[#allocation4 + $0x98] sm:$0xff] %vm1314, %v1257
        %1335 = vst.msk [vmem:[#allocation4 + $0xa0] sm:$0xff] %vm1314, %v1259
        %1336 = vst.msk [vmem:[#allocation4 + $0xa8] sm:$0xff] %vm1314, %v1261
        %1337 = vst.msk [vmem:[#allocation4 + $0xb0] sm:$0xff] %vm1314, %v1263
        %1338 = vst.msk [vmem:[#allocation4 + $0xb8] sm:$0xff] %vm1314, %v1265
        %1339 = vst.msk [vmem:[#allocation4 + $0xc0] sm:$0xff] %vm1314, %v1267
        %1340 = vst.msk [vmem:[#allocation4 + $0xc8] sm:$0xff] %vm1314, %v1269
        %1341 = vst.msk [vmem:[#allocation4 + $0xd0] sm:$0xff] %vm1314, %v1271
        %1342 = vst.msk [vmem:[#allocation4 + $0xd8] sm:$0xff] %vm1314, %v1273
        %1343 = vst.msk [vmem:[#allocation4 + $0xe0] sm:$0xff] %vm1314, %v1275
        %1344 = vst.msk [vmem:[#allocation4 + $0xe8] sm:$0xff] %vm1314, %v1277
        %1345 = vst.msk [vmem:[#allocation4 + $0xf0] sm:$0xff] %vm1314, %v1279
        %1346 = vst.msk [vmem:[#allocation4 + $0xf8] sm:$0xff] %vm1314, %v1281
        %s1347 = scalar_lea.vmem [#allocation2], 48
        %v1348 = vld [vmem:[%s1347] sm:$0xff]
        %v1349 = vld [vmem:[%s1347 + $0x8] sm:$0xff]
        %v1350 = vld [vmem:[%s1347 + $0x18] sm:$0xff]
        %v1351 = vld [vmem:[%s1347 + $0x20] sm:$0xff]
        %v1352 = vld [vmem:[%s1347 + $0x30] sm:$0xff]
        %v1353 = vld [vmem:[%s1347 + $0x38] sm:$0xff]
        %v1354 = vld [vmem:[%s1347 + $0x48] sm:$0xff]
        %v1355 = vld [vmem:[%s1347 + $0x50] sm:$0xff]
        %v1356 = vld [vmem:[%s1347 + $0x60] sm:$0xff]
        %v1357 = vld [vmem:[%s1347 + $0x68] sm:$0xff]
        %v1358 = vld [vmem:[%s1347 + $0x78] sm:$0xff]
        %v1359 = vld [vmem:[%s1347 + $0x80] sm:$0xff]
        %v1360 = vld [vmem:[%s1347 + $0x90] sm:$0xff]
        %v1361 = vld [vmem:[%s1347 + $0x98] sm:$0xff]
        %v1362 = vld [vmem:[%s1347 + $0xa8] sm:$0xff]
        %v1363 = vld [vmem:[%s1347 + $0xb0] sm:$0xff]
        %v1364 = vld [vmem:[%s1347 + $0xc0] sm:$0xff]
        %v1365 = vld [vmem:[%s1347 + $0xc8] sm:$0xff]
        %v1366 = vld [vmem:[%s1347 + $0xd8] sm:$0xff]
        %v1367 = vld [vmem:[%s1347 + $0xe0] sm:$0xff]
        %v1368 = vld [vmem:[%s1347 + $0xf0] sm:$0xff]
        %v1369 = vld [vmem:[%s1347 + $0xf8] sm:$0xff]
        %v1370 = vld [vmem:[%s1347 + $0x108] sm:$0xff]
        %v1371 = vld [vmem:[%s1347 + $0x110] sm:$0xff]
        %v1372 = vld [vmem:[%s1347 + $0x120] sm:$0xff]
        %v1373 = vld [vmem:[%s1347 + $0x128] sm:$0xff]
        %v1374 = vld [vmem:[%s1347 + $0x138] sm:$0xff]
        %v1375 = vld [vmem:[%s1347 + $0x140] sm:$0xff]
        %v1376 = vld [vmem:[%s1347 + $0x150] sm:$0xff]
        %v1377 = vld [vmem:[%s1347 + $0x158] sm:$0xff]
        %v1378 = vld [vmem:[%s1347 + $0x168] sm:$0xff]
        %v1379 = vld [vmem:[%s1347 + $0x170] sm:$0xff]
        %1412 = vrot.lane.b32.xlu0 %v1348, 24
        %v1413 = vpop.permute.xlu0 %1412
        %1414 = vrot.lane.b32.xlu0 %v1349, 24
        %v1415 = vpop.permute.xlu0 %1414
        %1416 = vrot.lane.b32.xlu0 %v1350, 24
        %v1417 = vpop.permute.xlu0 %1416
        %1418 = vrot.lane.b32.xlu0 %v1351, 24
        %v1419 = vpop.permute.xlu0 %1418
        %1420 = vrot.lane.b32.xlu0 %v1352, 24
        %v1421 = vpop.permute.xlu0 %1420
        %1422 = vrot.lane.b32.xlu0 %v1353, 24
        %v1423 = vpop.permute.xlu0 %1422
        %1424 = vrot.lane.b32.xlu0 %v1354, 24
        %v1425 = vpop.permute.xlu0 %1424
        %1426 = vrot.lane.b32.xlu0 %v1355, 24
        %v1427 = vpop.permute.xlu0 %1426
        %1428 = vrot.lane.b32.xlu0 %v1356, 24
        %v1429 = vpop.permute.xlu0 %1428
        %1430 = vrot.lane.b32.xlu0 %v1357, 24
        %v1431 = vpop.permute.xlu0 %1430
        %1432 = vrot.lane.b32.xlu0 %v1358, 24
        %v1433 = vpop.permute.xlu0 %1432
        %1434 = vrot.lane.b32.xlu0 %v1359, 24
        %v1435 = vpop.permute.xlu0 %1434
        %1436 = vrot.lane.b32.xlu0 %v1360, 24
        %v1437 = vpop.permute.xlu0 %1436
        %1438 = vrot.lane.b32.xlu0 %v1361, 24
        %v1439 = vpop.permute.xlu0 %1438
        %1440 = vrot.lane.b32.xlu0 %v1362, 24
        %v1441 = vpop.permute.xlu0 %1440
        %1442 = vrot.lane.b32.xlu0 %v1363, 24
        %v1443 = vpop.permute.xlu0 %1442
        %1444 = vrot.lane.b32.xlu0 %v1364, 24
        %v1445 = vpop.permute.xlu0 %1444
        %1446 = vrot.lane.b32.xlu0 %v1365, 24
        %v1447 = vpop.permute.xlu0 %1446
        %1448 = vrot.lane.b32.xlu0 %v1366, 24
        %v1449 = vpop.permute.xlu0 %1448
        %1450 = vrot.lane.b32.xlu0 %v1367, 24
        %v1451 = vpop.permute.xlu0 %1450
        %1452 = vrot.lane.b32.xlu0 %v1368, 24
        %v1453 = vpop.permute.xlu0 %1452
        %1454 = vrot.lane.b32.xlu0 %v1369, 24
        %v1455 = vpop.permute.xlu0 %1454
        %1456 = vrot.lane.b32.xlu0 %v1370, 24
        %v1457 = vpop.permute.xlu0 %1456
        %1458 = vrot.lane.b32.xlu0 %v1371, 24
        %v1459 = vpop.permute.xlu0 %1458
        %1460 = vrot.lane.b32.xlu0 %v1372, 24
        %v1461 = vpop.permute.xlu0 %1460
        %1462 = vrot.lane.b32.xlu0 %v1373, 24
        %v1463 = vpop.permute.xlu0 %1462
        %1464 = vrot.lane.b32.xlu0 %v1374, 24
        %v1465 = vpop.permute.xlu0 %1464
        %1466 = vrot.lane.b32.xlu0 %v1375, 24
        %v1467 = vpop.permute.xlu0 %1466
        %1468 = vrot.lane.b32.xlu0 %v1376, 24
        %v1469 = vpop.permute.xlu0 %1468
        %1470 = vrot.lane.b32.xlu0 %v1377, 24
        %v1471 = vpop.permute.xlu0 %1470
        %1472 = vrot.lane.b32.xlu0 %v1378, 24
        %v1473 = vpop.permute.xlu0 %1472
        %1474 = vrot.lane.b32.xlu0 %v1379, 24
        %v1475 = vpop.permute.xlu0 %1474
        %vm1508 = vcmask 228544
        %1509 = vst.msk [vmem:[#allocation4] sm:$0xff] %vm1508, %v1413
        %1510 = vst.msk [vmem:[#allocation4 + $0x8] sm:$0xff] %vm1508, %v1415
        %1511 = vst.msk [vmem:[#allocation4 + $0x10] sm:$0xff] %vm1508, %v1417
        %1512 = vst.msk [vmem:[#allocation4 + $0x18] sm:$0xff] %vm1508, %v1419
        %1513 = vst.msk [vmem:[#allocation4 + $0x20] sm:$0xff] %vm1508, %v1421
        %1514 = vst.msk [vmem:[#allocation4 + $0x28] sm:$0xff] %vm1508, %v1423
        %1515 = vst.msk [vmem:[#allocation4 + $0x30] sm:$0xff] %vm1508, %v1425
        %1516 = vst.msk [vmem:[#allocation4 + $0x38] sm:$0xff] %vm1508, %v1427
        %1517 = vst.msk [vmem:[#allocation4 + $0x40] sm:$0xff] %vm1508, %v1429
        %1518 = vst.msk [vmem:[#allocation4 + $0x48] sm:$0xff] %vm1508, %v1431
        %1519 = vst.msk [vmem:[#allocation4 + $0x50] sm:$0xff] %vm1508, %v1433
        %1520 = vst.msk [vmem:[#allocation4 + $0x58] sm:$0xff] %vm1508, %v1435
        %1521 = vst.msk [vmem:[#allocation4 + $0x60] sm:$0xff] %vm1508, %v1437
        %1522 = vst.msk [vmem:[#allocation4 + $0x68] sm:$0xff] %vm1508, %v1439
        %1523 = vst.msk [vmem:[#allocation4 + $0x70] sm:$0xff] %vm1508, %v1441
        %1524 = vst.msk [vmem:[#allocation4 + $0x78] sm:$0xff] %vm1508, %v1443
        %1525 = vst.msk [vmem:[#allocation4 + $0x80] sm:$0xff] %vm1508, %v1445
        %1526 = vst.msk [vmem:[#allocation4 + $0x88] sm:$0xff] %vm1508, %v1447
        %1527 = vst.msk [vmem:[#allocation4 + $0x90] sm:$0xff] %vm1508, %v1449
        %1528 = vst.msk [vmem:[#allocation4 + $0x98] sm:$0xff] %vm1508, %v1451
        %1529 = vst.msk [vmem:[#allocation4 + $0xa0] sm:$0xff] %vm1508, %v1453
        %1530 = vst.msk [vmem:[#allocation4 + $0xa8] sm:$0xff] %vm1508, %v1455
        %1531 = vst.msk [vmem:[#allocation4 + $0xb0] sm:$0xff] %vm1508, %v1457
        %1532 = vst.msk [vmem:[#allocation4 + $0xb8] sm:$0xff] %vm1508, %v1459
        %1533 = vst.msk [vmem:[#allocation4 + $0xc0] sm:$0xff] %vm1508, %v1461
        %1534 = vst.msk [vmem:[#allocation4 + $0xc8] sm:$0xff] %vm1508, %v1463
        %1535 = vst.msk [vmem:[#allocation4 + $0xd0] sm:$0xff] %vm1508, %v1465
        %1536 = vst.msk [vmem:[#allocation4 + $0xd8] sm:$0xff] %vm1508, %v1467
        %1537 = vst.msk [vmem:[#allocation4 + $0xe0] sm:$0xff] %vm1508, %v1469
        %1538 = vst.msk [vmem:[#allocation4 + $0xe8] sm:$0xff] %vm1508, %v1471
        %1539 = vst.msk [vmem:[#allocation4 + $0xf0] sm:$0xff] %vm1508, %v1473
        %1540 = vst.msk [vmem:[#allocation4 + $0xf8] sm:$0xff] %vm1508, %v1475
        %v1541 = vld [vmem:[%s1347 + $0x1] sm:$0xff]
        %v1542 = vld [vmem:[%s1347 + $0x9] sm:$0xff]
        %v1543 = vld [vmem:[%s1347 + $0x19] sm:$0xff]
        %v1544 = vld [vmem:[%s1347 + $0x21] sm:$0xff]
        %v1545 = vld [vmem:[%s1347 + $0x31] sm:$0xff]
        %v1546 = vld [vmem:[%s1347 + $0x39] sm:$0xff]
        %v1547 = vld [vmem:[%s1347 + $0x49] sm:$0xff]
        %v1548 = vld [vmem:[%s1347 + $0x51] sm:$0xff]
        %v1549 = vld [vmem:[%s1347 + $0x61] sm:$0xff]
        %v1550 = vld [vmem:[%s1347 + $0x69] sm:$0xff]
        %v1551 = vld [vmem:[%s1347 + $0x79] sm:$0xff]
        %v1552 = vld [vmem:[%s1347 + $0x81] sm:$0xff]
        %v1553 = vld [vmem:[%s1347 + $0x91] sm:$0xff]
        %v1554 = vld [vmem:[%s1347 + $0x99] sm:$0xff]
        %v1555 = vld [vmem:[%s1347 + $0xa9] sm:$0xff]
        %v1556 = vld [vmem:[%s1347 + $0xb1] sm:$0xff]
        %v1557 = vld [vmem:[%s1347 + $0xc1] sm:$0xff]
        %v1558 = vld [vmem:[%s1347 + $0xc9] sm:$0xff]
        %v1559 = vld [vmem:[%s1347 + $0xd9] sm:$0xff]
        %v1560 = vld [vmem:[%s1347 + $0xe1] sm:$0xff]
        %v1561 = vld [vmem:[%s1347 + $0xf1] sm:$0xff]
        %v1562 = vld [vmem:[%s1347 + $0xf9] sm:$0xff]
        %v1563 = vld [vmem:[%s1347 + $0x109] sm:$0xff]
        %v1564 = vld [vmem:[%s1347 + $0x111] sm:$0xff]
        %v1565 = vld [vmem:[%s1347 + $0x121] sm:$0xff]
        %v1566 = vld [vmem:[%s1347 + $0x129] sm:$0xff]
        %v1567 = vld [vmem:[%s1347 + $0x139] sm:$0xff]
        %v1568 = vld [vmem:[%s1347 + $0x141] sm:$0xff]
        %v1569 = vld [vmem:[%s1347 + $0x151] sm:$0xff]
        %v1570 = vld [vmem:[%s1347 + $0x159] sm:$0xff]
        %v1571 = vld [vmem:[%s1347 + $0x169] sm:$0xff]
        %v1572 = vld [vmem:[%s1347 + $0x171] sm:$0xff]
        %1605 = vrot.lane.b32.xlu0 %v1541, 28
        %v1606 = vpop.permute.xlu0 %1605
        %1607 = vrot.lane.b32.xlu0 %v1542, 28
        %v1608 = vpop.permute.xlu0 %1607
        %1609 = vrot.lane.b32.xlu0 %v1543, 28
        %v1610 = vpop.permute.xlu0 %1609
        %1611 = vrot.lane.b32.xlu0 %v1544, 28
        %v1612 = vpop.permute.xlu0 %1611
        %1613 = vrot.lane.b32.xlu0 %v1545, 28
        %v1614 = vpop.permute.xlu0 %1613
        %1615 = vrot.lane.b32.xlu0 %v1546, 28
        %v1616 = vpop.permute.xlu0 %1615
        %1617 = vrot.lane.b32.xlu0 %v1547, 28
        %v1618 = vpop.permute.xlu0 %1617
        %1619 = vrot.lane.b32.xlu0 %v1548, 28
        %v1620 = vpop.permute.xlu0 %1619
        %1621 = vrot.lane.b32.xlu0 %v1549, 28
        %v1622 = vpop.permute.xlu0 %1621
        %1623 = vrot.lane.b32.xlu0 %v1550, 28
        %v1624 = vpop.permute.xlu0 %1623
        %1625 = vrot.lane.b32.xlu0 %v1551, 28
        %v1626 = vpop.permute.xlu0 %1625
        %1627 = vrot.lane.b32.xlu0 %v1552, 28
        %v1628 = vpop.permute.xlu0 %1627
        %1629 = vrot.lane.b32.xlu0 %v1553, 28
        %v1630 = vpop.permute.xlu0 %1629
        %1631 = vrot.lane.b32.xlu0 %v1554, 28
        %v1632 = vpop.permute.xlu0 %1631
        %1633 = vrot.lane.b32.xlu0 %v1555, 28
        %v1634 = vpop.permute.xlu0 %1633
        %1635 = vrot.lane.b32.xlu0 %v1556, 28
        %v1636 = vpop.permute.xlu0 %1635
        %1637 = vrot.lane.b32.xlu0 %v1557, 28
        %v1638 = vpop.permute.xlu0 %1637
        %1639 = vrot.lane.b32.xlu0 %v1558, 28
        %v1640 = vpop.permute.xlu0 %1639
        %1641 = vrot.lane.b32.xlu0 %v1559, 28
        %v1642 = vpop.permute.xlu0 %1641
        %1643 = vrot.lane.b32.xlu0 %v1560, 28
        %v1644 = vpop.permute.xlu0 %1643
        %1645 = vrot.lane.b32.xlu0 %v1561, 28
        %v1646 = vpop.permute.xlu0 %1645
        %1647 = vrot.lane.b32.xlu0 %v1562, 28
        %v1648 = vpop.permute.xlu0 %1647
        %1649 = vrot.lane.b32.xlu0 %v1563, 28
        %v1650 = vpop.permute.xlu0 %1649
        %1651 = vrot.lane.b32.xlu0 %v1564, 28
        %v1652 = vpop.permute.xlu0 %1651
        %1653 = vrot.lane.b32.xlu0 %v1565, 28
        %v1654 = vpop.permute.xlu0 %1653
        %1655 = vrot.lane.b32.xlu0 %v1566, 28
        %v1656 = vpop.permute.xlu0 %1655
        %1657 = vrot.lane.b32.xlu0 %v1567, 28
        %v1658 = vpop.permute.xlu0 %1657
        %1659 = vrot.lane.b32.xlu0 %v1568, 28
        %v1660 = vpop.permute.xlu0 %1659
        %1661 = vrot.lane.b32.xlu0 %v1569, 28
        %v1662 = vpop.permute.xlu0 %1661
        %1663 = vrot.lane.b32.xlu0 %v1570, 28
        %v1664 = vpop.permute.xlu0 %1663
        %1665 = vrot.lane.b32.xlu0 %v1571, 28
        %v1666 = vpop.permute.xlu0 %1665
        %1667 = vrot.lane.b32.xlu0 %v1572, 28
        %v1668 = vpop.permute.xlu0 %1667
        %vm1701 = vcmask 261344
        %1702 = vst.msk [vmem:[#allocation4] sm:$0xff] %vm1701, %v1606
        %1703 = vst.msk [vmem:[#allocation4 + $0x8] sm:$0xff] %vm1701, %v1608
        %1704 = vst.msk [vmem:[#allocation4 + $0x10] sm:$0xff] %vm1701, %v1610
        %1705 = vst.msk [vmem:[#allocation4 + $0x18] sm:$0xff] %vm1701, %v1612
        %1706 = vst.msk [vmem:[#allocation4 + $0x20] sm:$0xff] %vm1701, %v1614
        %1707 = vst.msk [vmem:[#allocation4 + $0x28] sm:$0xff] %vm1701, %v1616
        %1708 = vst.msk [vmem:[#allocation4 + $0x30] sm:$0xff] %vm1701, %v1618
        %1709 = vst.msk [vmem:[#allocation4 + $0x38] sm:$0xff] %vm1701, %v1620
        %1710 = vst.msk [vmem:[#allocation4 + $0x40] sm:$0xff] %vm1701, %v1622
        %1711 = vst.msk [vmem:[#allocation4 + $0x48] sm:$0xff] %vm1701, %v1624
        %1712 = vst.msk [vmem:[#allocation4 + $0x50] sm:$0xff] %vm1701, %v1626
        %1713 = vst.msk [vmem:[#allocation4 + $0x58] sm:$0xff] %vm1701, %v1628
        %1714 = vst.msk [vmem:[#allocation4 + $0x60] sm:$0xff] %vm1701, %v1630
        %1715 = vst.msk [vmem:[#allocation4 + $0x68] sm:$0xff] %vm1701, %v1632
        %1716 = vst.msk [vmem:[#allocation4 + $0x70] sm:$0xff] %vm1701, %v1634
        %1717 = vst.msk [vmem:[#allocation4 + $0x78] sm:$0xff] %vm1701, %v1636
        %1718 = vst.msk [vmem:[#allocation4 + $0x80] sm:$0xff] %vm1701, %v1638
        %1719 = vst.msk [vmem:[#allocation4 + $0x88] sm:$0xff] %vm1701, %v1640
        %1720 = vst.msk [vmem:[#allocation4 + $0x90] sm:$0xff] %vm1701, %v1642
        %1721 = vst.msk [vmem:[#allocation4 + $0x98] sm:$0xff] %vm1701, %v1644
        %1722 = vst.msk [vmem:[#allocation4 + $0xa0] sm:$0xff] %vm1701, %v1646
        %1723 = vst.msk [vmem:[#allocation4 + $0xa8] sm:$0xff] %vm1701, %v1648
        %1724 = vst.msk [vmem:[#allocation4 + $0xb0] sm:$0xff] %vm1701, %v1650
        %1725 = vst.msk [vmem:[#allocation4 + $0xb8] sm:$0xff] %vm1701, %v1652
        %1726 = vst.msk [vmem:[#allocation4 + $0xc0] sm:$0xff] %vm1701, %v1654
        %1727 = vst.msk [vmem:[#allocation4 + $0xc8] sm:$0xff] %vm1701, %v1656
        %1728 = vst.msk [vmem:[#allocation4 + $0xd0] sm:$0xff] %vm1701, %v1658
        %1729 = vst.msk [vmem:[#allocation4 + $0xd8] sm:$0xff] %vm1701, %v1660
        %1730 = vst.msk [vmem:[#allocation4 + $0xe0] sm:$0xff] %vm1701, %v1662
        %1731 = vst.msk [vmem:[#allocation4 + $0xe8] sm:$0xff] %vm1701, %v1664
        %1732 = vst.msk [vmem:[#allocation4 + $0xf0] sm:$0xff] %vm1701, %v1666
        %1733 = vst.msk [vmem:[#allocation4 + $0xf8] sm:$0xff] %vm1701, %v1668
        %v1734 = vld [vmem:[%s1347 + $0x2] sm:$0xff]
        %v1735 = vld [vmem:[%s1347 + $0xa] sm:$0xff]
        %v1736 = vld [vmem:[%s1347 + $0x1a] sm:$0xff]
        %v1737 = vld [vmem:[%s1347 + $0x22] sm:$0xff]
        %v1738 = vld [vmem:[%s1347 + $0x32] sm:$0xff]
        %v1739 = vld [vmem:[%s1347 + $0x3a] sm:$0xff]
        %v1740 = vld [vmem:[%s1347 + $0x4a] sm:$0xff]
        %v1741 = vld [vmem:[%s1347 + $0x52] sm:$0xff]
        %v1742 = vld [vmem:[%s1347 + $0x62] sm:$0xff]
        %v1743 = vld [vmem:[%s1347 + $0x6a] sm:$0xff]
        %v1744 = vld [vmem:[%s1347 + $0x7a] sm:$0xff]
        %v1745 = vld [vmem:[%s1347 + $0x82] sm:$0xff]
        %v1746 = vld [vmem:[%s1347 + $0x92] sm:$0xff]
        %v1747 = vld [vmem:[%s1347 + $0x9a] sm:$0xff]
        %v1748 = vld [vmem:[%s1347 + $0xaa] sm:$0xff]
        %v1749 = vld [vmem:[%s1347 + $0xb2] sm:$0xff]
        %v1750 = vld [vmem:[%s1347 + $0xc2] sm:$0xff]
        %v1751 = vld [vmem:[%s1347 + $0xca] sm:$0xff]
        %v1752 = vld [vmem:[%s1347 + $0xda] sm:$0xff]
        %v1753 = vld [vmem:[%s1347 + $0xe2] sm:$0xff]
        %v1754 = vld [vmem:[%s1347 + $0xf2] sm:$0xff]
        %v1755 = vld [vmem:[%s1347 + $0xfa] sm:$0xff]
        %v1756 = vld [vmem:[%s1347 + $0x10a] sm:$0xff]
        %v1757 = vld [vmem:[%s1347 + $0x112] sm:$0xff]
        %v1758 = vld [vmem:[%s1347 + $0x122] sm:$0xff]
        %v1759 = vld [vmem:[%s1347 + $0x12a] sm:$0xff]
        %v1760 = vld [vmem:[%s1347 + $0x13a] sm:$0xff]
        %v1761 = vld [vmem:[%s1347 + $0x142] sm:$0xff]
        %v1762 = vld [vmem:[%s1347 + $0x152] sm:$0xff]
        %v1763 = vld [vmem:[%s1347 + $0x15a] sm:$0xff]
        %v1764 = vld [vmem:[%s1347 + $0x16a] sm:$0xff]
        %v1765 = vld [vmem:[%s1347 + $0x172] sm:$0xff]
        %1798 = vrot.lane.b32.xlu0 %v1734, 32
        %v1799 = vpop.permute.xlu0 %1798
        %1800 = vrot.lane.b32.xlu0 %v1735, 32
        %v1801 = vpop.permute.xlu0 %1800
        %1802 = vrot.lane.b32.xlu0 %v1736, 32
        %v1803 = vpop.permute.xlu0 %1802
        %1804 = vrot.lane.b32.xlu0 %v1737, 32
        %v1805 = vpop.permute.xlu0 %1804
        %1806 = vrot.lane.b32.xlu0 %v1738, 32
        %v1807 = vpop.permute.xlu0 %1806
        %1808 = vrot.lane.b32.xlu0 %v1739, 32
        %v1809 = vpop.permute.xlu0 %1808
        %1810 = vrot.lane.b32.xlu0 %v1740, 32
        %v1811 = vpop.permute.xlu0 %1810
        %1812 = vrot.lane.b32.xlu0 %v1741, 32
        %v1813 = vpop.permute.xlu0 %1812
        %1814 = vrot.lane.b32.xlu0 %v1742, 32
        %v1815 = vpop.permute.xlu0 %1814
        %1816 = vrot.lane.b32.xlu0 %v1743, 32
        %v1817 = vpop.permute.xlu0 %1816
        %1818 = vrot.lane.b32.xlu0 %v1744, 32
        %v1819 = vpop.permute.xlu0 %1818
        %1820 = vrot.lane.b32.xlu0 %v1745, 32
        %v1821 = vpop.permute.xlu0 %1820
        %1822 = vrot.lane.b32.xlu0 %v1746, 32
        %v1823 = vpop.permute.xlu0 %1822
        %1824 = vrot.lane.b32.xlu0 %v1747, 32
        %v1825 = vpop.permute.xlu0 %1824
        %1826 = vrot.lane.b32.xlu0 %v1748, 32
        %v1827 = vpop.permute.xlu0 %1826
        %1828 = vrot.lane.b32.xlu0 %v1749, 32
        %v1829 = vpop.permute.xlu0 %1828
        %1830 = vrot.lane.b32.xlu0 %v1750, 32
        %v1831 = vpop.permute.xlu0 %1830
        %1832 = vrot.lane.b32.xlu0 %v1751, 32
        %v1833 = vpop.permute.xlu0 %1832
        %1834 = vrot.lane.b32.xlu0 %v1752, 32
        %v1835 = vpop.permute.xlu0 %1834
        %1836 = vrot.lane.b32.xlu0 %v1753, 32
        %v1837 = vpop.permute.xlu0 %1836
        %1838 = vrot.lane.b32.xlu0 %v1754, 32
        %v1839 = vpop.permute.xlu0 %1838
        %1840 = vrot.lane.b32.xlu0 %v1755, 32
        %v1841 = vpop.permute.xlu0 %1840
        %1842 = vrot.lane.b32.xlu0 %v1756, 32
        %v1843 = vpop.permute.xlu0 %1842
        %1844 = vrot.lane.b32.xlu0 %v1757, 32
        %v1845 = vpop.permute.xlu0 %1844
        %1846 = vrot.lane.b32.xlu0 %v1758, 32
        %v1847 = vpop.permute.xlu0 %1846
        %1848 = vrot.lane.b32.xlu0 %v1759, 32
        %v1849 = vpop.permute.xlu0 %1848
        %1850 = vrot.lane.b32.xlu0 %v1760, 32
        %v1851 = vpop.permute.xlu0 %1850
        %1852 = vrot.lane.b32.xlu0 %v1761, 32
        %v1853 = vpop.permute.xlu0 %1852
        %1854 = vrot.lane.b32.xlu0 %v1762, 32
        %v1855 = vpop.permute.xlu0 %1854
        %1856 = vrot.lane.b32.xlu0 %v1763, 32
        %v1857 = vpop.permute.xlu0 %1856
        %1858 = vrot.lane.b32.xlu0 %v1764, 32
        %v1859 = vpop.permute.xlu0 %1858
        %1860 = vrot.lane.b32.xlu0 %v1765, 32
        %v1861 = vpop.permute.xlu0 %1860
        %vm1894 = vcmask 294144
        %1895 = vst.msk [vmem:[#allocation4] sm:$0xff] %vm1894, %v1799
        %1896 = vst.msk [vmem:[#allocation4 + $0x8] sm:$0xff] %vm1894, %v1801
        %1897 = vst.msk [vmem:[#allocation4 + $0x10] sm:$0xff] %vm1894, %v1803
        %1898 = vst.msk [vmem:[#allocation4 + $0x18] sm:$0xff] %vm1894, %v1805
        %1899 = vst.msk [vmem:[#allocation4 + $0x20] sm:$0xff] %vm1894, %v1807
        %1900 = vst.msk [vmem:[#allocation4 + $0x28] sm:$0xff] %vm1894, %v1809
        %1901 = vst.msk [vmem:[#allocation4 + $0x30] sm:$0xff] %vm1894, %v1811
        %1902 = vst.msk [vmem:[#allocation4 + $0x38] sm:$0xff] %vm1894, %v1813
        %1903 = vst.msk [vmem:[#allocation4 + $0x40] sm:$0xff] %vm1894, %v1815
        %1904 = vst.msk [vmem:[#allocation4 + $0x48] sm:$0xff] %vm1894, %v1817
        %1905 = vst.msk [vmem:[#allocation4 + $0x50] sm:$0xff] %vm1894, %v1819
        %1906 = vst.msk [vmem:[#allocation4 + $0x58] sm:$0xff] %vm1894, %v1821
        %1907 = vst.msk [vmem:[#allocation4 + $0x60] sm:$0xff] %vm1894, %v1823
        %1908 = vst.msk [vmem:[#allocation4 + $0x68] sm:$0xff] %vm1894, %v1825
        %1909 = vst.msk [vmem:[#allocation4 + $0x70] sm:$0xff] %vm1894, %v1827
        %1910 = vst.msk [vmem:[#allocation4 + $0x78] sm:$0xff] %vm1894, %v1829
        %1911 = vst.msk [vmem:[#allocation4 + $0x80] sm:$0xff] %vm1894, %v1831
        %1912 = vst.msk [vmem:[#allocation4 + $0x88] sm:$0xff] %vm1894, %v1833
        %1913 = vst.msk [vmem:[#allocation4 + $0x90] sm:$0xff] %vm1894, %v1835
        %1914 = vst.msk [vmem:[#allocation4 + $0x98] sm:$0xff] %vm1894, %v1837
        %1915 = vst.msk [vmem:[#allocation4 + $0xa0] sm:$0xff] %vm1894, %v1839
        %1916 = vst.msk [vmem:[#allocation4 + $0xa8] sm:$0xff] %vm1894, %v1841
        %1917 = vst.msk [vmem:[#allocation4 + $0xb0] sm:$0xff] %vm1894, %v1843
        %1918 = vst.msk [vmem:[#allocation4 + $0xb8] sm:$0xff] %vm1894, %v1845
        %1919 = vst.msk [vmem:[#allocation4 + $0xc0] sm:$0xff] %vm1894, %v1847
        %1920 = vst.msk [vmem:[#allocation4 + $0xc8] sm:$0xff] %vm1894, %v1849
        %1921 = vst.msk [vmem:[#allocation4 + $0xd0] sm:$0xff] %vm1894, %v1851
        %1922 = vst.msk [vmem:[#allocation4 + $0xd8] sm:$0xff] %vm1894, %v1853
        %1923 = vst.msk [vmem:[#allocation4 + $0xe0] sm:$0xff] %vm1894, %v1855
        %1924 = vst.msk [vmem:[#allocation4 + $0xe8] sm:$0xff] %vm1894, %v1857
        %1925 = vst.msk [vmem:[#allocation4 + $0xf0] sm:$0xff] %vm1894, %v1859
        %1926 = vst.msk [vmem:[#allocation4 + $0xf8] sm:$0xff] %vm1894, %v1861
        %v1927 = vld [vmem:[#allocation4] sm:$0xff]
        %v1928 = vld [vmem:[#allocation4 + $0x8] sm:$0xff]
        %v1929 = vld [vmem:[#allocation4 + $0x10] sm:$0xff]
        %v1930 = vld [vmem:[#allocation4 + $0x18] sm:$0xff]
        %v1931 = vld [vmem:[#allocation4 + $0x20] sm:$0xff]
        %v1932 = vld [vmem:[#allocation4 + $0x28] sm:$0xff]
        %v1933 = vld [vmem:[#allocation4 + $0x30] sm:$0xff]
        %v1934 = vld [vmem:[#allocation4 + $0x38] sm:$0xff]
        %v1935 = vld [vmem:[#allocation4 + $0x40] sm:$0xff]
        %v1936 = vld [vmem:[#allocation4 + $0x48] sm:$0xff]
        %v1937 = vld [vmem:[#allocation4 + $0x50] sm:$0xff]
        %v1938 = vld [vmem:[#allocation4 + $0x58] sm:$0xff]
        %v1939 = vld [vmem:[#allocation4 + $0x60] sm:$0xff]
        %v1940 = vld [vmem:[#allocation4 + $0x68] sm:$0xff]
        %v1941 = vld [vmem:[#allocation4 + $0x70] sm:$0xff]
        %v1942 = vld [vmem:[#allocation4 + $0x78] sm:$0xff]
        %v1943 = vld [vmem:[#allocation4 + $0x80] sm:$0xff]
        %v1944 = vld [vmem:[#allocation4 + $0x88] sm:$0xff]
        %v1945 = vld [vmem:[#allocation4 + $0x90] sm:$0xff]
        %v1946 = vld [vmem:[#allocation4 + $0x98] sm:$0xff]
        %v1947 = vld [vmem:[#allocation4 + $0xa0] sm:$0xff]
        %v1948 = vld [vmem:[#allocation4 + $0xa8] sm:$0xff]
        %v1949 = vld [vmem:[#allocation4 + $0xb0] sm:$0xff]
        %v1950 = vld [vmem:[#allocation4 + $0xb8] sm:$0xff]
        %v1951 = vld [vmem:[#allocation4 + $0xc0] sm:$0xff]
        %v1952 = vld [vmem:[#allocation4 + $0xc8] sm:$0xff]
        %v1953 = vld [vmem:[#allocation4 + $0xd0] sm:$0xff]
        %v1954 = vld [vmem:[#allocation4 + $0xd8] sm:$0xff]
        %v1955 = vld [vmem:[#allocation4 + $0xe0] sm:$0xff]
        %v1956 = vld [vmem:[#allocation4 + $0xe8] sm:$0xff]
        %v1957 = vld [vmem:[#allocation4 + $0xf0] sm:$0xff]
        %v1958 = vld [vmem:[#allocation4 + $0xf8] sm:$0xff]
        %v1959 = vpack.c.bf16 %v1928, %v1927
        %v1960 = vpack.c.bf16 %v1930, %v1929
        %v1961 = vpack.c.bf16 %v1932, %v1931
        %v1962 = vpack.c.bf16 %v1934, %v1933
        %v1963 = vpack.c.bf16 %v1936, %v1935
        %v1964 = vpack.c.bf16 %v1938, %v1937
        %v1965 = vpack.c.bf16 %v1940, %v1939
        %v1966 = vpack.c.bf16 %v1942, %v1941
        %v1967 = vpack.c.bf16 %v1944, %v1943
        %v1968 = vpack.c.bf16 %v1946, %v1945
        %v1969 = vpack.c.bf16 %v1948, %v1947
        %v1970 = vpack.c.bf16 %v1950, %v1949
        %v1971 = vpack.c.bf16 %v1952, %v1951
        %v1972 = vpack.c.bf16 %v1954, %v1953
        %v1973 = vpack.c.bf16 %v1956, %v1955
        %v1974 = vpack.c.bf16 %v1958, %v1957
        %v1975 = vld [vmem:[%s1] sm:$0xf]
        %v1976 = vld [vmem:[%s1 + $0x4] sm:$0xf]
        %v1977 = vld [vmem:[%s1 + $0x8] sm:$0xf]
        %v1978 = vld [vmem:[%s1 + $0xc] sm:$0xf]
        %v1979 = vld [vmem:[%s1 + $0x10] sm:$0x3]
        %v1985 = vunpack.c.l.b16 %v1975
        %v1986 = vunpack.c.l.b16 %v1976
        %v1987 = vunpack.c.l.b16 %v1977
        %v1988 = vunpack.c.l.b16 %v1978
        %v1989 = vunpack.c.l.b16 %v1979
        %v1990 = vpack.c.b16 %v1986, %v1985
        %v1991 = vpack.c.b16 %v1988, %v1987
        %v1992 = vpack.c.b16 %v1989, %v1989
        %vm1995 = vcmask 293888
        %v1997 = vsel %vm1995, %v1959, 0
        %v2000 = vsel %vm1995, %v1960, 0
        %v2003 = vsel %vm1995, %v1961, 0
        %v2006 = vsel %vm1995, %v1962, 0
        %v2009 = vsel %vm1995, %v1963, 0
        %v2012 = vsel %vm1995, %v1964, 0
        %v2015 = vsel %vm1995, %v1965, 0
        %v2018 = vsel %vm1995, %v1966, 0
        %v2021 = vsel %vm1995, %v1967, 0
        %v2024 = vsel %vm1995, %v1968, 0
        %v2027 = vsel %vm1995, %v1969, 0
        %v2030 = vsel %vm1995, %v1970, 0
        %v2033 = vsel %vm1995, %v1971, 0
        %v2036 = vsel %vm1995, %v1972, 0
        %v2039 = vsel %vm1995, %v1973, 0
        %v2042 = vsel %vm1995, %v1974, 0
        %vm2044 = vcmask 1041408
        %v2046 = vsel %vm2044, %v1992, 0
        %2048 = vmatprep.subr.bf16.mxu0 0
        %2049 = vmatpush1.bf16.msra.mxu0 %v1990
        %2050 = vmatprep.subr.bf16.mxu0 0
        %2051 = vmatpush1.bf16.msra.mxu0 %v1991
        %2052 = vmatprep.subr.bf16.mxu0 0
        %2053 = vmatpush1.bf16.msra.mxu0 %v2046
        %2054 = vmatprep.subr.bf16.mxu0 0
        %2055 = vmatpush1.bf16.msra.mxu0 0
        %2056 = vmatprep.subr.bf16.mxu0 0
        %2057 = vmatpush1.bf16.msra.mxu0 0
        %2058 = vmatprep.subr.bf16.mxu0 0
        %2059 = vmatpush1.bf16.msra.mxu0 0
        %2060 = vmatprep.subr.bf16.mxu0 0
        %2061 = vmatpush1.bf16.msra.mxu0 0
        %2062 = vmatprep.subr.bf16.mxu0 0
        %2063 = vmatpush1.bf16.msra.mxu0 0
        %2064 = vmatprep.subr.bf16.mxu0 0
        %2065 = vmatpush1.bf16.msra.mxu0 0
        %2066 = vmatprep.subr.bf16.mxu0 0
        %2067 = vmatpush1.bf16.msra.mxu0 0
        %2068 = vmatprep.subr.bf16.mxu0 0
        %2069 = vmatpush1.bf16.msra.mxu0 0
        %2070 = vmatprep.subr.bf16.mxu0 0
        %2071 = vmatpush1.bf16.msra.mxu0 0
        %2072 = vmatprep.subr.bf16.mxu0 0
        %2073 = vmatpush1.bf16.msra.mxu0 0
        %2074 = vmatprep.subr.bf16.mxu0 0
        %2075 = vmatpush1.bf16.msra.mxu0 0
        %2076 = vmatprep.subr.bf16.mxu0 0
        %2077 = vmatpush1.bf16.msra.mxu0 0
        %2078 = vmatprep.subr.bf16.mxu0 0
        %2079 = vmatpush1.bf16.msra.mxu0 0
        %2080 = vmatprep.mubr.bf16.mxu0 0
        %2081 = vmatmul.mubr.bf16.gmra.mrb[0].mxu0 %v1997
        %v2082 = vpop.f32.mrb[0].mxu0
        %v2083 = vadd.f32 0.0, %v2082
        %v2084 = vpop.f32.mrb[0].mxu0
        %v2085 = vpop.f32.mrb[0].mxu0
        %v2086 = vadd.f32 0.0, %v2085
        %v2087 = vpop.f32.mrb[0].mxu0
        %2088 = vmatprep.mubr.bf16.mxu0 0
        %2089 = vmatmul.mubr.bf16.gmra.mrb[0].mxu0 %v2000
        %v2090 = vpop.f32.mrb[0].mxu0
        %v2091 = vadd.f32 0.0, %v2090
        %v2092 = vpop.f32.mrb[0].mxu0
        %v2093 = vpop.f32.mrb[0].mxu0
        %v2094 = vadd.f32 0.0, %v2093
        %v2095 = vpop.f32.mrb[0].mxu0
        %2096 = vmatprep.mubr.bf16.mxu0 0
        %2097 = vmatmul.mubr.bf16.gmra.mrb[0].mxu0 %v2003
        %v2098 = vpop.f32.mrb[0].mxu0
        %v2099 = vadd.f32 0.0, %v2098
        %v2100 = vpop.f32.mrb[0].mxu0
        %v2101 = vpop.f32.mrb[0].mxu0
        %v2102 = vadd.f32 0.0, %v2101
        %v2103 = vpop.f32.mrb[0].mxu0
        %2104 = vmatprep.mubr.bf16.mxu0 0
        %2105 = vmatmul.mubr.bf16.gmra.mrb[0].mxu0 %v2006
        %v2106 = vpop.f32.mrb[0].mxu0
        %v2107 = vadd.f32 0.0, %v2106
        %v2108 = vpop.f32.mrb[0].mxu0
        %v2109 = vpop.f32.mrb[0].mxu0
        %v2110 = vadd.f32 0.0, %v2109
        %v2111 = vpop.f32.mrb[0].mxu0
        %2112 = vmatprep.mubr.bf16.mxu0 0
        %2113 = vmatmul.mubr.bf16.gmra.mrb[0].mxu0 %v2009
        %v2114 = vpop.f32.mrb[0].mxu0
        %v2115 = vadd.f32 0.0, %v2114
        %v2116 = vpop.f32.mrb[0].mxu0
        %v2117 = vpop.f32.mrb[0].mxu0
        %v2118 = vadd.f32 0.0, %v2117
        %v2119 = vpop.f32.mrb[0].mxu0
        %2120 = vmatprep.mubr.bf16.mxu0 0
        %2121 = vmatmul.mubr.bf16.gmra.mrb[0].mxu0 %v2012
        %v2122 = vpop.f32.mrb[0].mxu0
        %v2123 = vadd.f32 0.0, %v2122
        %v2124 = vpop.f32.mrb[0].mxu0
        %v2125 = vpop.f32.mrb[0].mxu0
        %v2126 = vadd.f32 0.0, %v2125
        %v2127 = vpop.f32.mrb[0].mxu0
        %2128 = vmatprep.mubr.bf16.mxu0 0
        %2129 = vmatmul.mubr.bf16.gmra.mrb[0].mxu0 %v2015
        %v2130 = vpop.f32.mrb[0].mxu0
        %v2131 = vadd.f32 0.0, %v2130
        %v2132 = vpop.f32.mrb[0].mxu0
        %v2133 = vpop.f32.mrb[0].mxu0
        %v2134 = vadd.f32 0.0, %v2133
        %v2135 = vpop.f32.mrb[0].mxu0
        %2136 = vmatprep.mubr.bf16.mxu0 0
        %2137 = vmatmul.mubr.bf16.gmra.mrb[0].mxu0 %v2018
        %v2138 = vpop.f32.mrb[0].mxu0
        %v2139 = vadd.f32 0.0, %v2138
        %v2140 = vpop.f32.mrb[0].mxu0
        %v2141 = vpop.f32.mrb[0].mxu0
        %v2142 = vadd.f32 0.0, %v2141
        %v2143 = vpop.f32.mrb[0].mxu0
        %2144 = vmatprep.mubr.bf16.mxu0 0
        %2145 = vmatmul.mubr.bf16.gmra.mrb[0].mxu0 %v2021
        %v2146 = vpop.f32.mrb[0].mxu0
        %v2147 = vadd.f32 0.0, %v2146
        %v2148 = vpop.f32.mrb[0].mxu0
        %v2149 = vpop.f32.mrb[0].mxu0
        %v2150 = vadd.f32 0.0, %v2149
        %v2151 = vpop.f32.mrb[0].mxu0
        %2152 = vmatprep.mubr.bf16.mxu0 0
        %2153 = vmatmul.mubr.bf16.gmra.mrb[0].mxu0 %v2024
        %v2154 = vpop.f32.mrb[0].mxu0
        %v2155 = vadd.f32 0.0, %v2154
        %v2156 = vpop.f32.mrb[0].mxu0
        %v2157 = vpop.f32.mrb[0].mxu0
        %v2158 = vadd.f32 0.0, %v2157
        %v2159 = vpop.f32.mrb[0].mxu0
        %2160 = vmatprep.mubr.bf16.mxu0 0
        %2161 = vmatmul.mubr.bf16.gmra.mrb[0].mxu0 %v2027
        %v2162 = vpop.f32.mrb[0].mxu0
        %v2163 = vadd.f32 0.0, %v2162
        %v2164 = vpop.f32.mrb[0].mxu0
        %v2165 = vpop.f32.mrb[0].mxu0
        %v2166 = vadd.f32 0.0, %v2165
        %v2167 = vpop.f32.mrb[0].mxu0
        %2168 = vmatprep.mubr.bf16.mxu0 0
        %2169 = vmatmul.mubr.bf16.gmra.mrb[0].mxu0 %v2030
        %v2170 = vpop.f32.mrb[0].mxu0
        %v2171 = vadd.f32 0.0, %v2170
        %v2172 = vpop.f32.mrb[0].mxu0
        %v2173 = vpop.f32.mrb[0].mxu0
        %v2174 = vadd.f32 0.0, %v2173
        %v2175 = vpop.f32.mrb[0].mxu0
        %2176 = vmatprep.mubr.bf16.mxu0 0
        %2177 = vmatmul.mubr.bf16.gmra.mrb[0].mxu0 %v2033
        %v2178 = vpop.f32.mrb[0].mxu0
        %v2179 = vadd.f32 0.0, %v2178
        %v2180 = vpop.f32.mrb[0].mxu0
        %v2181 = vpop.f32.mrb[0].mxu0
        %v2182 = vadd.f32 0.0, %v2181
        %v2183 = vpop.f32.mrb[0].mxu0
        %2184 = vmatprep.mubr.bf16.mxu0 0
        %2185 = vmatmul.mubr.bf16.gmra.mrb[0].mxu0 %v2036
        %v2186 = vpop.f32.mrb[0].mxu0
        %v2187 = vadd.f32 0.0, %v2186
        %v2188 = vpop.f32.mrb[0].mxu0
        %v2189 = vpop.f32.mrb[0].mxu0
        %v2190 = vadd.f32 0.0, %v2189
        %v2191 = vpop.f32.mrb[0].mxu0
        %2192 = vmatprep.mubr.bf16.mxu0 0
        %2193 = vmatmul.mubr.bf16.gmra.mrb[0].mxu0 %v2039
        %v2194 = vpop.f32.mrb[0].mxu0
        %v2195 = vadd.f32 0.0, %v2194
        %v2196 = vpop.f32.mrb[0].mxu0
        %v2197 = vpop.f32.mrb[0].mxu0
        %v2198 = vadd.f32 0.0, %v2197
        %v2199 = vpop.f32.mrb[0].mxu0
        %2200 = vmatprep.mubr.bf16.mxu0 0
        %2201 = vmatmul.mubr.bf16.gmra.mrb[0].mxu0 %v2042
        %v2202 = vpop.f32.mrb[0].mxu0
        %v2203 = vadd.f32 0.0, %v2202
        %v2204 = vpop.f32.mrb[0].mxu0
        %v2205 = vpop.f32.mrb[0].mxu0
        %v2206 = vadd.f32 0.0, %v2205
        %v2207 = vpop.f32.mrb[0].mxu0
        %2208 = vdwg.mxu0
        %vm2209 = vcmp.ge.f32.partialorder %v2083, 2.0
        %vm2210 = vcmp.ge.f32.partialorder %v2086, 2.0
        %vm2211 = vcmp.ge.f32.partialorder %v2091, 2.0
        %vm2212 = vcmp.ge.f32.partialorder %v2094, 2.0
        %vm2213 = vcmp.ge.f32.partialorder %v2099, 2.0
        %vm2214 = vcmp.ge.f32.partialorder %v2102, 2.0
        %vm2215 = vcmp.ge.f32.partialorder %v2107, 2.0
        %vm2216 = vcmp.ge.f32.partialorder %v2110, 2.0
        %vm2217 = vcmp.ge.f32.partialorder %v2115, 2.0
        %vm2218 = vcmp.ge.f32.partialorder %v2118, 2.0
        %vm2219 = vcmp.ge.f32.partialorder %v2123, 2.0
        %vm2220 = vcmp.ge.f32.partialorder %v2126, 2.0
        %vm2221 = vcmp.ge.f32.partialorder %v2131, 2.0
        %vm2222 = vcmp.ge.f32.partialorder %v2134, 2.0
        %vm2223 = vcmp.ge.f32.partialorder %v2139, 2.0
        %vm2224 = vcmp.ge.f32.partialorder %v2142, 2.0
        %vm2225 = vcmp.ge.f32.partialorder %v2147, 2.0
        %vm2226 = vcmp.ge.f32.partialorder %v2150, 2.0
        %vm2227 = vcmp.ge.f32.partialorder %v2155, 2.0
        %vm2228 = vcmp.ge.f32.partialorder %v2158, 2.0
        %vm2229 = vcmp.ge.f32.partialorder %v2163, 2.0
        %vm2230 = vcmp.ge.f32.partialorder %v2166, 2.0
        %vm2231 = vcmp.ge.f32.partialorder %v2171, 2.0
        %vm2232 = vcmp.ge.f32.partialorder %v2174, 2.0
        %vm2233 = vcmp.ge.f32.partialorder %v2179, 2.0
        %vm2234 = vcmp.ge.f32.partialorder %v2182, 2.0
        %vm2235 = vcmp.ge.f32.partialorder %v2187, 2.0
        %vm2236 = vcmp.ge.f32.partialorder %v2190, 2.0
        %vm2237 = vcmp.ge.f32.partialorder %v2195, 2.0
        %vm2238 = vcmp.ge.f32.partialorder %v2198, 2.0
        %vm2239 = vcmp.ge.f32.partialorder %v2203, 2.0
        %vm2240 = vcmp.ge.f32.partialorder %v2206, 2.0
        %v2241 = vsel %vm2209, 1.0, 0.0
        %v2242 = vsel %vm2210, 1.0, 0.0
        %v2243 = vsel %vm2211, 1.0, 0.0
        %v2244 = vsel %vm2212, 1.0, 0.0
        %v2245 = vsel %vm2213, 1.0, 0.0
        %v2246 = vsel %vm2214, 1.0, 0.0
        %v2247 = vsel %vm2215, 1.0, 0.0
        %v2248 = vsel %vm2216, 1.0, 0.0
        %v2249 = vsel %vm2217, 1.0, 0.0
        %v2250 = vsel %vm2218, 1.0, 0.0
        %v2251 = vsel %vm2219, 1.0, 0.0
        %v2252 = vsel %vm2220, 1.0, 0.0
        %v2253 = vsel %vm2221, 1.0, 0.0
        %v2254 = vsel %vm2222, 1.0, 0.0
        %v2255 = vsel %vm2223, 1.0, 0.0
        %v2256 = vsel %vm2224, 1.0, 0.0
        %v2257 = vsel %vm2225, 1.0, 0.0
        %v2258 = vsel %vm2226, 1.0, 0.0
        %v2259 = vsel %vm2227, 1.0, 0.0
        %v2260 = vsel %vm2228, 1.0, 0.0
        %v2261 = vsel %vm2229, 1.0, 0.0
        %v2262 = vsel %vm2230, 1.0, 0.0
        %v2263 = vsel %vm2231, 1.0, 0.0
        %v2264 = vsel %vm2232, 1.0, 0.0
        %v2265 = vsel %vm2233, 1.0, 0.0
        %v2266 = vsel %vm2234, 1.0, 0.0
        %v2267 = vsel %vm2235, 1.0, 0.0
        %v2268 = vsel %vm2236, 1.0, 0.0
        %v2269 = vsel %vm2237, 1.0, 0.0
        %v2270 = vsel %vm2238, 1.0, 0.0
        %v2271 = vsel %vm2239, 1.0, 0.0
        %v2272 = vsel %vm2240, 1.0, 0.0
        %vm2273 = vcmask 64512
        %2274 = vst.msk [vmem:[#allocation3] sm:$0xff] %vm2273, 0.0
        %2275 = vst.msk [vmem:[#allocation3 + $0x8] sm:$0xff] %vm2273, 0.0
        %vm2276 = vcmask 58368
        %2277 = vst.msk [vmem:[#allocation3 + $0x10] sm:$0x3] %vm2276, 0.0
        %2278 = vst.msk [vmem:[#allocation3 + $0x18] sm:$0xff] %vm2273, 0.0
        %2279 = vst.msk [vmem:[#allocation3 + $0x20] sm:$0xff] %vm2273, 0.0
        %2280 = vst.msk [vmem:[#allocation3 + $0x28] sm:$0x3] %vm2276, 0.0
        %2281 = vst.msk [vmem:[#allocation3 + $0x30] sm:$0xff] %vm2273, 0.0
        %2282 = vst.msk [vmem:[#allocation3 + $0x38] sm:$0xff] %vm2273, 0.0
        %2283 = vst.msk [vmem:[#allocation3 + $0x40] sm:$0x3] %vm2276, 0.0
        %2284 = vst.msk [vmem:[#allocation3 + $0x48] sm:$0xff] %vm2273, 0.0
        %2285 = vst.msk [vmem:[#allocation3 + $0x50] sm:$0xff] %vm2273, 0.0
        %2286 = vst.msk [vmem:[#allocation3 + $0x58] sm:$0x3] %vm2276, 0.0
        %2287 = vst.msk [vmem:[#allocation3 + $0x60] sm:$0xff] %vm2273, 0.0
        %2288 = vst.msk [vmem:[#allocation3 + $0x68] sm:$0xff] %vm2273, 0.0
        %2289 = vst.msk [vmem:[#allocation3 + $0x70] sm:$0x3] %vm2276, 0.0
        %2290 = vst.msk [vmem:[#allocation3 + $0x78] sm:$0xff] %vm2273, 0.0
        %2291 = vst.msk [vmem:[#allocation3 + $0x80] sm:$0xff] %vm2273, 0.0
        %2292 = vst.msk [vmem:[#allocation3 + $0x88] sm:$0x3] %vm2276, 0.0
        %2293 = vst.msk [vmem:[#allocation3 + $0x90] sm:$0xff] %vm2273, 0.0
        %2294 = vst.msk [vmem:[#allocation3 + $0x98] sm:$0xff] %vm2273, 0.0
        %2295 = vst.msk [vmem:[#allocation3 + $0xa0] sm:$0x3] %vm2276, 0.0
        %2296 = vst.msk [vmem:[#allocation3 + $0xa8] sm:$0xff] %vm2273, 0.0
        %2297 = vst.msk [vmem:[#allocation3 + $0xb0] sm:$0xff] %vm2273, 0.0
        %2298 = vst.msk [vmem:[#allocation3 + $0xb8] sm:$0x3] %vm2276, 0.0
        %2299 = vst.msk [vmem:[#allocation3 + $0xc0] sm:$0xff] %vm2273, 0.0
        %2300 = vst.msk [vmem:[#allocation3 + $0xc8] sm:$0xff] %vm2273, 0.0
        %2301 = vst.msk [vmem:[#allocation3 + $0xd0] sm:$0x3] %vm2276, 0.0
        %2302 = vst.msk [vmem:[#allocation3 + $0xd8] sm:$0xff] %vm2273, 0.0
        %2303 = vst.msk [vmem:[#allocation3 + $0xe0] sm:$0xff] %vm2273, 0.0
        %2304 = vst.msk [vmem:[#allocation3 + $0xe8] sm:$0x3] %vm2276, 0.0
        %2305 = vst.msk [vmem:[#allocation3 + $0xf0] sm:$0xff] %vm2273, 0.0
        %2306 = vst.msk [vmem:[#allocation3 + $0xf8] sm:$0xff] %vm2273, 0.0
        %2307 = vst.msk [vmem:[#allocation3 + $0x100] sm:$0x3] %vm2276, 0.0
        %2308 = vst.msk [vmem:[#allocation3 + $0x108] sm:$0xff] %vm2273, 0.0
        %2309 = vst.msk [vmem:[#allocation3 + $0x110] sm:$0xff] %vm2273, 0.0
        %2310 = vst.msk [vmem:[#allocation3 + $0x118] sm:$0x3] %vm2276, 0.0
        %2311 = vst.msk [vmem:[#allocation3 + $0x120] sm:$0xff] %vm2273, 0.0
        %2312 = vst.msk [vmem:[#allocation3 + $0x128] sm:$0xff] %vm2273, 0.0
        %2313 = vst.msk [vmem:[#allocation3 + $0x130] sm:$0x3] %vm2276, 0.0
        %2314 = vst.msk [vmem:[#allocation3 + $0x138] sm:$0xff] %vm2273, 0.0
        %2315 = vst.msk [vmem:[#allocation3 + $0x140] sm:$0xff] %vm2273, 0.0
        %2316 = vst.msk [vmem:[#allocation3 + $0x148] sm:$0x3] %vm2276, 0.0
        %2317 = vst.msk [vmem:[#allocation3 + $0x150] sm:$0xff] %vm2273, 0.0
        %2318 = vst.msk [vmem:[#allocation3 + $0x158] sm:$0xff] %vm2273, 0.0
        %2319 = vst.msk [vmem:[#allocation3 + $0x160] sm:$0x3] %vm2276, 0.0
        %2320 = vst.msk [vmem:[#allocation3 + $0x168] sm:$0xff] %vm2273, 0.0
        %2321 = vst.msk [vmem:[#allocation3 + $0x170] sm:$0xff] %vm2273, 0.0
        %2322 = vst.msk [vmem:[#allocation3 + $0x178] sm:$0x3] %vm2276, 0.0
        %2323 = vst.msk [vmem:[#allocation3 + $0x180] sm:$0xff] %vm2273, 0.0
        %2324 = vst.msk [vmem:[#allocation3 + $0x188] sm:$0xff] %vm2273, 0.0
        %2325 = vst.msk [vmem:[#allocation3 + $0x190] sm:$0x3] %vm2276, 0.0
        %2326 = vst.msk [vmem:[#allocation3 + $0x198] sm:$0xff] %vm2273, 0.0
        %2327 = vst.msk [vmem:[#allocation3 + $0x1a0] sm:$0xff] %vm2273, 0.0
        %2328 = vst.msk [vmem:[#allocation3 + $0x1a8] sm:$0x3] %vm2276, 0.0
        %s2329 = scalar_lea.vmem [#allocation3], 24
        %2330 = vst.msk [vmem:[%s2329 + $0x1] sm:$0xff] %vm2273, %v2241
        %2331 = vst.msk [vmem:[%s2329 + $0x9] sm:$0xff] %vm2273, %v2242
        %2332 = vst.msk [vmem:[%s2329 + $0x19] sm:$0xff] %vm2273, %v2243
        %2333 = vst.msk [vmem:[%s2329 + $0x21] sm:$0xff] %vm2273, %v2244
        %2334 = vst.msk [vmem:[%s2329 + $0x31] sm:$0xff] %vm2273, %v2245
        %2335 = vst.msk [vmem:[%s2329 + $0x39] sm:$0xff] %vm2273, %v2246
        %2336 = vst.msk [vmem:[%s2329 + $0x49] sm:$0xff] %vm2273, %v2247
        %2337 = vst.msk [vmem:[%s2329 + $0x51] sm:$0xff] %vm2273, %v2248
        %2338 = vst.msk [vmem:[%s2329 + $0x61] sm:$0xff] %vm2273, %v2249
        %2339 = vst.msk [vmem:[%s2329 + $0x69] sm:$0xff] %vm2273, %v2250
        %2340 = vst.msk [vmem:[%s2329 + $0x79] sm:$0xff] %vm2273, %v2251
        %2341 = vst.msk [vmem:[%s2329 + $0x81] sm:$0xff] %vm2273, %v2252
        %2342 = vst.msk [vmem:[%s2329 + $0x91] sm:$0xff] %vm2273, %v2253
        %2343 = vst.msk [vmem:[%s2329 + $0x99] sm:$0xff] %vm2273, %v2254
        %2344 = vst.msk [vmem:[%s2329 + $0xa9] sm:$0xff] %vm2273, %v2255
        %2345 = vst.msk [vmem:[%s2329 + $0xb1] sm:$0xff] %vm2273, %v2256
        %2346 = vst.msk [vmem:[%s2329 + $0xc1] sm:$0xff] %vm2273, %v2257
        %2347 = vst.msk [vmem:[%s2329 + $0xc9] sm:$0xff] %vm2273, %v2258
        %2348 = vst.msk [vmem:[%s2329 + $0xd9] sm:$0xff] %vm2273, %v2259
        %2349 = vst.msk [vmem:[%s2329 + $0xe1] sm:$0xff] %vm2273, %v2260
        %2350 = vst.msk [vmem:[%s2329 + $0xf1] sm:$0xff] %vm2273, %v2261
        %2351 = vst.msk [vmem:[%s2329 + $0xf9] sm:$0xff] %vm2273, %v2262
        %2352 = vst.msk [vmem:[%s2329 + $0x109] sm:$0xff] %vm2273, %v2263
        %2353 = vst.msk [vmem:[%s2329 + $0x111] sm:$0xff] %vm2273, %v2264
        %2354 = vst.msk [vmem:[%s2329 + $0x121] sm:$0xff] %vm2273, %v2265
        %2355 = vst.msk [vmem:[%s2329 + $0x129] sm:$0xff] %vm2273, %v2266
        %2356 = vst.msk [vmem:[%s2329 + $0x139] sm:$0xff] %vm2273, %v2267
        %2357 = vst.msk [vmem:[%s2329 + $0x141] sm:$0xff] %vm2273, %v2268
        %2358 = vst.msk [vmem:[%s2329 + $0x151] sm:$0xff] %vm2273, %v2269
        %2359 = vst.msk [vmem:[%s2329 + $0x159] sm:$0xff] %vm2273, %v2270
        %2360 = vst.msk [vmem:[%s2329 + $0x169] sm:$0xff] %vm2273, %v2271
        %2361 = vst.msk [vmem:[%s2329 + $0x171] sm:$0xff] %vm2273, %v2272
        %v2362 = vld [vmem:[#allocation3] sm:$0xff]
        %v2363 = vld [vmem:[#allocation3 + $0x8] sm:$0xff]
        %v2364 = vld [vmem:[#allocation3 + $0x18] sm:$0xff]
        %v2365 = vld [vmem:[#allocation3 + $0x20] sm:$0xff]
        %v2366 = vld [vmem:[#allocation3 + $0x30] sm:$0xff]
        %v2367 = vld [vmem:[#allocation3 + $0x38] sm:$0xff]
        %v2368 = vld [vmem:[#allocation3 + $0x48] sm:$0xff]
        %v2369 = vld [vmem:[#allocation3 + $0x50] sm:$0xff]
        %v2370 = vld [vmem:[#allocation3 + $0x60] sm:$0xff]
        %v2371 = vld [vmem:[#allocation3 + $0x68] sm:$0xff]
        %v2372 = vld [vmem:[#allocation3 + $0x78] sm:$0xff]
        %v2373 = vld [vmem:[#allocation3 + $0x80] sm:$0xff]
        %v2374 = vld [vmem:[#allocation3 + $0x90] sm:$0xff]
        %v2375 = vld [vmem:[#allocation3 + $0x98] sm:$0xff]
        %v2376 = vld [vmem:[#allocation3 + $0xa8] sm:$0xff]
        %v2377 = vld [vmem:[#allocation3 + $0xb0] sm:$0xff]
        %v2378 = vld [vmem:[#allocation3 + $0xc0] sm:$0xff]
        %v2379 = vld [vmem:[#allocation3 + $0xc8] sm:$0xff]
        %v2380 = vld [vmem:[#allocation3 + $0xd8] sm:$0xff]
        %v2381 = vld [vmem:[#allocation3 + $0xe0] sm:$0xff]
        %v2382 = vld [vmem:[#allocation3 + $0xf0] sm:$0xff]
        %v2383 = vld [vmem:[#allocation3 + $0xf8] sm:$0xff]
        %v2384 = vld [vmem:[#allocation3 + $0x108] sm:$0xff]
        %v2385 = vld [vmem:[#allocation3 + $0x110] sm:$0xff]
        %v2386 = vld [vmem:[#allocation3 + $0x120] sm:$0xff]
        %v2387 = vld [vmem:[#allocation3 + $0x128] sm:$0xff]
        %v2388 = vld [vmem:[#allocation3 + $0x138] sm:$0xff]
        %v2389 = vld [vmem:[#allocation3 + $0x140] sm:$0xff]
        %v2390 = vld [vmem:[#allocation3 + $0x150] sm:$0xff]
        %v2391 = vld [vmem:[#allocation3 + $0x158] sm:$0xff]
        %v2392 = vld [vmem:[#allocation3 + $0x168] sm:$0xff]
        %v2393 = vld [vmem:[#allocation3 + $0x170] sm:$0xff]
        %2394 = vst.msk [vmem:[#allocation5] sm:$0xff] %vm2273, %v2362
        %2395 = vst.msk [vmem:[#allocation5 + $0x8] sm:$0xff] %vm2273, %v2363
        %2396 = vst.msk [vmem:[#allocation5 + $0x10] sm:$0xff] %vm2273, %v2364
        %2397 = vst.msk [vmem:[#allocation5 + $0x18] sm:$0xff] %vm2273, %v2365
        %2398 = vst.msk [vmem:[#allocation5 + $0x20] sm:$0xff] %vm2273, %v2366
        %2399 = vst.msk [vmem:[#allocation5 + $0x28] sm:$0xff] %vm2273, %v2367
        %2400 = vst.msk [vmem:[#allocation5 + $0x30] sm:$0xff] %vm2273, %v2368
        %2401 = vst.msk [vmem:[#allocation5 + $0x38] sm:$0xff] %vm2273, %v2369
        %2402 = vst.msk [vmem:[#allocation5 + $0x40] sm:$0xff] %vm2273, %v2370
        %2403 = vst.msk [vmem:[#allocation5 + $0x48] sm:$0xff] %vm2273, %v2371
        %2404 = vst.msk [vmem:[#allocation5 + $0x50] sm:$0xff] %vm2273, %v2372
        %2405 = vst.msk [vmem:[#allocation5 + $0x58] sm:$0xff] %vm2273, %v2373
        %2406 = vst.msk [vmem:[#allocation5 + $0x60] sm:$0xff] %vm2273, %v2374
        %2407 = vst.msk [vmem:[#allocation5 + $0x68] sm:$0xff] %vm2273, %v2375
        %2408 = vst.msk [vmem:[#allocation5 + $0x70] sm:$0xff] %vm2273, %v2376
        %2409 = vst.msk [vmem:[#allocation5 + $0x78] sm:$0xff] %vm2273, %v2377
        %2410 = vst.msk [vmem:[#allocation5 + $0x80] sm:$0xff] %vm2273, %v2378
        %2411 = vst.msk [vmem:[#allocation5 + $0x88] sm:$0xff] %vm2273, %v2379
        %2412 = vst.msk [vmem:[#allocation5 + $0x90] sm:$0xff] %vm2273, %v2380
        %2413 = vst.msk [vmem:[#allocation5 + $0x98] sm:$0xff] %vm2273, %v2381
        %2414 = vst.msk [vmem:[#allocation5 + $0xa0] sm:$0xff] %vm2273, %v2382
        %2415 = vst.msk [vmem:[#allocation5 + $0xa8] sm:$0xff] %vm2273, %v2383
        %2416 = vst.msk [vmem:[#allocation5 + $0xb0] sm:$0xff] %vm2273, %v2384
        %2417 = vst.msk [vmem:[#allocation5 + $0xb8] sm:$0xff] %vm2273, %v2385
        %2418 = vst.msk [vmem:[#allocation5 + $0xc0] sm:$0xff] %vm2273, %v2386
        %2419 = vst.msk [vmem:[#allocation5 + $0xc8] sm:$0xff] %vm2273, %v2387
        %2420 = vst.msk [vmem:[#allocation5 + $0xd0] sm:$0xff] %vm2273, %v2388
        %2421 = vst.msk [vmem:[#allocation5 + $0xd8] sm:$0xff] %vm2273, %v2389
        %2422 = vst.msk [vmem:[#allocation5 + $0xe0] sm:$0xff] %vm2273, %v2390
        %2423 = vst.msk [vmem:[#allocation5 + $0xe8] sm:$0xff] %vm2273, %v2391
        %2424 = vst.msk [vmem:[#allocation5 + $0xf0] sm:$0xff] %vm2273, %v2392
        %2425 = vst.msk [vmem:[#allocation5 + $0xf8] sm:$0xff] %vm2273, %v2393
        %v2426 = vld [vmem:[#allocation3 + $0x1] sm:$0xff]
        %v2427 = vld [vmem:[#allocation3 + $0x9] sm:$0xff]
        %v2428 = vld [vmem:[#allocation3 + $0x19] sm:$0xff]
        %v2429 = vld [vmem:[#allocation3 + $0x21] sm:$0xff]
        %v2430 = vld [vmem:[#allocation3 + $0x31] sm:$0xff]
        %v2431 = vld [vmem:[#allocation3 + $0x39] sm:$0xff]
        %v2432 = vld [vmem:[#allocation3 + $0x49] sm:$0xff]
        %v2433 = vld [vmem:[#allocation3 + $0x51] sm:$0xff]
        %v2434 = vld [vmem:[#allocation3 + $0x61] sm:$0xff]
        %v2435 = vld [vmem:[#allocation3 + $0x69] sm:$0xff]
        %v2436 = vld [vmem:[#allocation3 + $0x79] sm:$0xff]
        %v2437 = vld [vmem:[#allocation3 + $0x81] sm:$0xff]
        %v2438 = vld [vmem:[#allocation3 + $0x91] sm:$0xff]
        %v2439 = vld [vmem:[#allocation3 + $0x99] sm:$0xff]
        %v2440 = vld [vmem:[#allocation3 + $0xa9] sm:$0xff]
        %v2441 = vld [vmem:[#allocation3 + $0xb1] sm:$0xff]
        %v2442 = vld [vmem:[#allocation3 + $0xc1] sm:$0xff]
        %v2443 = vld [vmem:[#allocation3 + $0xc9] sm:$0xff]
        %v2444 = vld [vmem:[#allocation3 + $0xd9] sm:$0xff]
        %v2445 = vld [vmem:[#allocation3 + $0xe1] sm:$0xff]
        %v2446 = vld [vmem:[#allocation3 + $0xf1] sm:$0xff]
        %v2447 = vld [vmem:[#allocation3 + $0xf9] sm:$0xff]
        %v2448 = vld [vmem:[#allocation3 + $0x109] sm:$0xff]
        %v2449 = vld [vmem:[#allocation3 + $0x111] sm:$0xff]
        %v2450 = vld [vmem:[#allocation3 + $0x121] sm:$0xff]
        %v2451 = vld [vmem:[#allocation3 + $0x129] sm:$0xff]
        %v2452 = vld [vmem:[#allocation3 + $0x139] sm:$0xff]
        %v2453 = vld [vmem:[#allocation3 + $0x141] sm:$0xff]
        %v2454 = vld [vmem:[#allocation3 + $0x151] sm:$0xff]
        %v2455 = vld [vmem:[#allocation3 + $0x159] sm:$0xff]
        %v2456 = vld [vmem:[#allocation3 + $0x169] sm:$0xff]
        %v2457 = vld [vmem:[#allocation3 + $0x171] sm:$0xff]
        %2490 = vrot.lane.b32.xlu0 %v2426, 8
        %v2491 = vpop.permute.xlu0 %2490
        %2492 = vrot.lane.b32.xlu0 %v2427, 8
        %v2493 = vpop.permute.xlu0 %2492
        %2494 = vrot.lane.b32.xlu0 %v2428, 8
        %v2495 = vpop.permute.xlu0 %2494
        %2496 = vrot.lane.b32.xlu0 %v2429, 8
        %v2497 = vpop.permute.xlu0 %2496
        %2498 = vrot.lane.b32.xlu0 %v2430, 8
        %v2499 = vpop.permute.xlu0 %2498
        %2500 = vrot.lane.b32.xlu0 %v2431, 8
        %v2501 = vpop.permute.xlu0 %2500
        %2502 = vrot.lane.b32.xlu0 %v2432, 8
        %v2503 = vpop.permute.xlu0 %2502
        %2504 = vrot.lane.b32.xlu0 %v2433, 8
        %v2505 = vpop.permute.xlu0 %2504
        %2506 = vrot.lane.b32.xlu0 %v2434, 8
        %v2507 = vpop.permute.xlu0 %2506
        %2508 = vrot.lane.b32.xlu0 %v2435, 8
        %v2509 = vpop.permute.xlu0 %2508
        %2510 = vrot.lane.b32.xlu0 %v2436, 8
        %v2511 = vpop.permute.xlu0 %2510
        %2512 = vrot.lane.b32.xlu0 %v2437, 8
        %v2513 = vpop.permute.xlu0 %2512
        %2514 = vrot.lane.b32.xlu0 %v2438, 8
        %v2515 = vpop.permute.xlu0 %2514
        %2516 = vrot.lane.b32.xlu0 %v2439, 8
        %v2517 = vpop.permute.xlu0 %2516
        %2518 = vrot.lane.b32.xlu0 %v2440, 8
        %v2519 = vpop.permute.xlu0 %2518
        %2520 = vrot.lane.b32.xlu0 %v2441, 8
        %v2521 = vpop.permute.xlu0 %2520
        %2522 = vrot.lane.b32.xlu0 %v2442, 8
        %v2523 = vpop.permute.xlu0 %2522
        %2524 = vrot.lane.b32.xlu0 %v2443, 8
        %v2525 = vpop.permute.xlu0 %2524
        %2526 = vrot.lane.b32.xlu0 %v2444, 8
        %v2527 = vpop.permute.xlu0 %2526
        %2528 = vrot.lane.b32.xlu0 %v2445, 8
        %v2529 = vpop.permute.xlu0 %2528
        %2530 = vrot.lane.b32.xlu0 %v2446, 8
        %v2531 = vpop.permute.xlu0 %2530
        %2532 = vrot.lane.b32.xlu0 %v2447, 8
        %v2533 = vpop.permute.xlu0 %2532
        %2534 = vrot.lane.b32.xlu0 %v2448, 8
        %v2535 = vpop.permute.xlu0 %2534
        %2536 = vrot.lane.b32.xlu0 %v2449, 8
        %v2537 = vpop.permute.xlu0 %2536
        %2538 = vrot.lane.b32.xlu0 %v2450, 8
        %v2539 = vpop.permute.xlu0 %2538
        %2540 = vrot.lane.b32.xlu0 %v2451, 8
        %v2541 = vpop.permute.xlu0 %2540
        %2542 = vrot.lane.b32.xlu0 %v2452, 8
        %v2543 = vpop.permute.xlu0 %2542
        %2544 = vrot.lane.b32.xlu0 %v2453, 8
        %v2545 = vpop.permute.xlu0 %2544
        %2546 = vrot.lane.b32.xlu0 %v2454, 8
        %v2547 = vpop.permute.xlu0 %2546
        %2548 = vrot.lane.b32.xlu0 %v2455, 8
        %v2549 = vpop.permute.xlu0 %2548
        %2550 = vrot.lane.b32.xlu0 %v2456, 8
        %v2551 = vpop.permute.xlu0 %2550
        %2552 = vrot.lane.b32.xlu0 %v2457, 8
        %v2553 = vpop.permute.xlu0 %2552
        %vm2586 = vcmask 130112
        %2587 = vst.msk [vmem:[#allocation5] sm:$0xff] %vm2586, %v2491
        %2588 = vst.msk [vmem:[#allocation5 + $0x8] sm:$0xff] %vm2586, %v2493
        %2589 = vst.msk [vmem:[#allocation5 + $0x10] sm:$0xff] %vm2586, %v2495
        %2590 = vst.msk [vmem:[#allocation5 + $0x18] sm:$0xff] %vm2586, %v2497
        %2591 = vst.msk [vmem:[#allocation5 + $0x20] sm:$0xff] %vm2586, %v2499
        %2592 = vst.msk [vmem:[#allocation5 + $0x28] sm:$0xff] %vm2586, %v2501
        %2593 = vst.msk [vmem:[#allocation5 + $0x30] sm:$0xff] %vm2586, %v2503
        %2594 = vst.msk [vmem:[#allocation5 + $0x38] sm:$0xff] %vm2586, %v2505
        %2595 = vst.msk [vmem:[#allocation5 + $0x40] sm:$0xff] %vm2586, %v2507
        %2596 = vst.msk [vmem:[#allocation5 + $0x48] sm:$0xff] %vm2586, %v2509
        %2597 = vst.msk [vmem:[#allocation5 + $0x50] sm:$0xff] %vm2586, %v2511
        %2598 = vst.msk [vmem:[#allocation5 + $0x58] sm:$0xff] %vm2586, %v2513
        %2599 = vst.msk [vmem:[#allocation5 + $0x60] sm:$0xff] %vm2586, %v2515
        %2600 = vst.msk [vmem:[#allocation5 + $0x68] sm:$0xff] %vm2586, %v2517
        %2601 = vst.msk [vmem:[#allocation5 + $0x70] sm:$0xff] %vm2586, %v2519
        %2602 = vst.msk [vmem:[#allocation5 + $0x78] sm:$0xff] %vm2586, %v2521
        %2603 = vst.msk [vmem:[#allocation5 + $0x80] sm:$0xff] %vm2586, %v2523
        %2604 = vst.msk [vmem:[#allocation5 + $0x88] sm:$0xff] %vm2586, %v2525
        %2605 = vst.msk [vmem:[#allocation5 + $0x90] sm:$0xff] %vm2586, %v2527
        %2606 = vst.msk [vmem:[#allocation5 + $0x98] sm:$0xff] %vm2586, %v2529
        %2607 = vst.msk [vmem:[#allocation5 + $0xa0] sm:$0xff] %vm2586, %v2531
        %2608 = vst.msk [vmem:[#allocation5 + $0xa8] sm:$0xff] %vm2586, %v2533
        %2609 = vst.msk [vmem:[#allocation5 + $0xb0] sm:$0xff] %vm2586, %v2535
        %2610 = vst.msk [vmem:[#allocation5 + $0xb8] sm:$0xff] %vm2586, %v2537
        %2611 = vst.msk [vmem:[#allocation5 + $0xc0] sm:$0xff] %vm2586, %v2539
        %2612 = vst.msk [vmem:[#allocation5 + $0xc8] sm:$0xff] %vm2586, %v2541
        %2613 = vst.msk [vmem:[#allocation5 + $0xd0] sm:$0xff] %vm2586, %v2543
        %2614 = vst.msk [vmem:[#allocation5 + $0xd8] sm:$0xff] %vm2586, %v2545
        %2615 = vst.msk [vmem:[#allocation5 + $0xe0] sm:$0xff] %vm2586, %v2547
        %2616 = vst.msk [vmem:[#allocation5 + $0xe8] sm:$0xff] %vm2586, %v2549
        %2617 = vst.msk [vmem:[#allocation5 + $0xf0] sm:$0xff] %vm2586, %v2551
        %2618 = vst.msk [vmem:[#allocation5 + $0xf8] sm:$0xff] %vm2586, %v2553
        %v2619 = vld [vmem:[#allocation3 + $0x2] sm:$0xff]
        %v2620 = vld [vmem:[#allocation3 + $0xa] sm:$0xff]
        %v2621 = vld [vmem:[#allocation3 + $0x1a] sm:$0xff]
        %v2622 = vld [vmem:[#allocation3 + $0x22] sm:$0xff]
        %v2623 = vld [vmem:[#allocation3 + $0x32] sm:$0xff]
        %v2624 = vld [vmem:[#allocation3 + $0x3a] sm:$0xff]
        %v2625 = vld [vmem:[#allocation3 + $0x4a] sm:$0xff]
        %v2626 = vld [vmem:[#allocation3 + $0x52] sm:$0xff]
        %v2627 = vld [vmem:[#allocation3 + $0x62] sm:$0xff]
        %v2628 = vld [vmem:[#allocation3 + $0x6a] sm:$0xff]
        %v2629 = vld [vmem:[#allocation3 + $0x7a] sm:$0xff]
        %v2630 = vld [vmem:[#allocation3 + $0x82] sm:$0xff]
        %v2631 = vld [vmem:[#allocation3 + $0x92] sm:$0xff]
        %v2632 = vld [vmem:[#allocation3 + $0x9a] sm:$0xff]
        %v2633 = vld [vmem:[#allocation3 + $0xaa] sm:$0xff]
        %v2634 = vld [vmem:[#allocation3 + $0xb2] sm:$0xff]
        %v2635 = vld [vmem:[#allocation3 + $0xc2] sm:$0xff]
        %v2636 = vld [vmem:[#allocation3 + $0xca] sm:$0xff]
        %v2637 = vld [vmem:[#allocation3 + $0xda] sm:$0xff]
        %v2638 = vld [vmem:[#allocation3 + $0xe2] sm:$0xff]
        %v2639 = vld [vmem:[#allocation3 + $0xf2] sm:$0xff]
        %v2640 = vld [vmem:[#allocation3 + $0xfa] sm:$0xff]
        %v2641 = vld [vmem:[#allocation3 + $0x10a] sm:$0xff]
        %v2642 = vld [vmem:[#allocation3 + $0x112] sm:$0xff]
        %v2643 = vld [vmem:[#allocation3 + $0x122] sm:$0xff]
        %v2644 = vld [vmem:[#allocation3 + $0x12a] sm:$0xff]
        %v2645 = vld [vmem:[#allocation3 + $0x13a] sm:$0xff]
        %v2646 = vld [vmem:[#allocation3 + $0x142] sm:$0xff]
        %v2647 = vld [vmem:[#allocation3 + $0x152] sm:$0xff]
        %v2648 = vld [vmem:[#allocation3 + $0x15a] sm:$0xff]
        %v2649 = vld [vmem:[#allocation3 + $0x16a] sm:$0xff]
        %v2650 = vld [vmem:[#allocation3 + $0x172] sm:$0xff]
        %2683 = vrot.lane.b32.xlu0 %v2619, 16
        %v2684 = vpop.permute.xlu0 %2683
        %2685 = vrot.lane.b32.xlu0 %v2620, 16
        %v2686 = vpop.permute.xlu0 %2685
        %2687 = vrot.lane.b32.xlu0 %v2621, 16
        %v2688 = vpop.permute.xlu0 %2687
        %2689 = vrot.lane.b32.xlu0 %v2622, 16
        %v2690 = vpop.permute.xlu0 %2689
        %2691 = vrot.lane.b32.xlu0 %v2623, 16
        %v2692 = vpop.permute.xlu0 %2691
        %2693 = vrot.lane.b32.xlu0 %v2624, 16
        %v2694 = vpop.permute.xlu0 %2693
        %2695 = vrot.lane.b32.xlu0 %v2625, 16
        %v2696 = vpop.permute.xlu0 %2695
        %2697 = vrot.lane.b32.xlu0 %v2626, 16
        %v2698 = vpop.permute.xlu0 %2697
        %2699 = vrot.lane.b32.xlu0 %v2627, 16
        %v2700 = vpop.permute.xlu0 %2699
        %2701 = vrot.lane.b32.xlu0 %v2628, 16
        %v2702 = vpop.permute.xlu0 %2701
        %2703 = vrot.lane.b32.xlu0 %v2629, 16
        %v2704 = vpop.permute.xlu0 %2703
        %2705 = vrot.lane.b32.xlu0 %v2630, 16
        %v2706 = vpop.permute.xlu0 %2705
        %2707 = vrot.lane.b32.xlu0 %v2631, 16
        %v2708 = vpop.permute.xlu0 %2707
        %2709 = vrot.lane.b32.xlu0 %v2632, 16
        %v2710 = vpop.permute.xlu0 %2709
        %2711 = vrot.lane.b32.xlu0 %v2633, 16
        %v2712 = vpop.permute.xlu0 %2711
        %2713 = vrot.lane.b32.xlu0 %v2634, 16
        %v2714 = vpop.permute.xlu0 %2713
        %2715 = vrot.lane.b32.xlu0 %v2635, 16
        %v2716 = vpop.permute.xlu0 %2715
        %2717 = vrot.lane.b32.xlu0 %v2636, 16
        %v2718 = vpop.permute.xlu0 %2717
        %2719 = vrot.lane.b32.xlu0 %v2637, 16
        %v2720 = vpop.permute.xlu0 %2719
        %2721 = vrot.lane.b32.xlu0 %v2638, 16
        %v2722 = vpop.permute.xlu0 %2721
        %2723 = vrot.lane.b32.xlu0 %v2639, 16
        %v2724 = vpop.permute.xlu0 %2723
        %2725 = vrot.lane.b32.xlu0 %v2640, 16
        %v2726 = vpop.permute.xlu0 %2725
        %2727 = vrot.lane.b32.xlu0 %v2641, 16
        %v2728 = vpop.permute.xlu0 %2727
        %2729 = vrot.lane.b32.xlu0 %v2642, 16
        %v2730 = vpop.permute.xlu0 %2729
        %2731 = vrot.lane.b32.xlu0 %v2643, 16
        %v2732 = vpop.permute.xlu0 %2731
        %2733 = vrot.lane.b32.xlu0 %v2644, 16
        %v2734 = vpop.permute.xlu0 %2733
        %2735 = vrot.lane.b32.xlu0 %v2645, 16
        %v2736 = vpop.permute.xlu0 %2735
        %2737 = vrot.lane.b32.xlu0 %v2646, 16
        %v2738 = vpop.permute.xlu0 %2737
        %2739 = vrot.lane.b32.xlu0 %v2647, 16
        %v2740 = vpop.permute.xlu0 %2739
        %2741 = vrot.lane.b32.xlu0 %v2648, 16
        %v2742 = vpop.permute.xlu0 %2741
        %2743 = vrot.lane.b32.xlu0 %v2649, 16
        %v2744 = vpop.permute.xlu0 %2743
        %2745 = vrot.lane.b32.xlu0 %v2650, 16
        %v2746 = vpop.permute.xlu0 %2745
        %vm2779 = vcmask 195712
        %2780 = vst.msk [vmem:[#allocation5] sm:$0xff] %vm2779, %v2684
        %2781 = vst.msk [vmem:[#allocation5 + $0x8] sm:$0xff] %vm2779, %v2686
        %2782 = vst.msk [vmem:[#allocation5 + $0x10] sm:$0xff] %vm2779, %v2688
        %2783 = vst.msk [vmem:[#allocation5 + $0x18] sm:$0xff] %vm2779, %v2690
        %2784 = vst.msk [vmem:[#allocation5 + $0x20] sm:$0xff] %vm2779, %v2692
        %2785 = vst.msk [vmem:[#allocation5 + $0x28] sm:$0xff] %vm2779, %v2694
        %2786 = vst.msk [vmem:[#allocation5 + $0x30] sm:$0xff] %vm2779, %v2696
        %2787 = vst.msk [vmem:[#allocation5 + $0x38] sm:$0xff] %vm2779, %v2698
        %2788 = vst.msk [vmem:[#allocation5 + $0x40] sm:$0xff] %vm2779, %v2700
        %2789 = vst.msk [vmem:[#allocation5 + $0x48] sm:$0xff] %vm2779, %v2702
        %2790 = vst.msk [vmem:[#allocation5 + $0x50] sm:$0xff] %vm2779, %v2704
        %2791 = vst.msk [vmem:[#allocation5 + $0x58] sm:$0xff] %vm2779, %v2706
        %2792 = vst.msk [vmem:[#allocation5 + $0x60] sm:$0xff] %vm2779, %v2708
        %2793 = vst.msk [vmem:[#allocation5 + $0x68] sm:$0xff] %vm2779, %v2710
        %2794 = vst.msk [vmem:[#allocation5 + $0x70] sm:$0xff] %vm2779, %v2712
        %2795 = vst.msk [vmem:[#allocation5 + $0x78] sm:$0xff] %vm2779, %v2714
        %2796 = vst.msk [vmem:[#allocation5 + $0x80] sm:$0xff] %vm2779, %v2716
        %2797 = vst.msk [vmem:[#allocation5 + $0x88] sm:$0xff] %vm2779, %v2718
        %2798 = vst.msk [vmem:[#allocation5 + $0x90] sm:$0xff] %vm2779, %v2720
        %2799 = vst.msk [vmem:[#allocation5 + $0x98] sm:$0xff] %vm2779, %v2722
        %2800 = vst.msk [vmem:[#allocation5 + $0xa0] sm:$0xff] %vm2779, %v2724
        %2801 = vst.msk [vmem:[#allocation5 + $0xa8] sm:$0xff] %vm2779, %v2726
        %2802 = vst.msk [vmem:[#allocation5 + $0xb0] sm:$0xff] %vm2779, %v2728
        %2803 = vst.msk [vmem:[#allocation5 + $0xb8] sm:$0xff] %vm2779, %v2730
        %2804 = vst.msk [vmem:[#allocation5 + $0xc0] sm:$0xff] %vm2779, %v2732
        %2805 = vst.msk [vmem:[#allocation5 + $0xc8] sm:$0xff] %vm2779, %v2734
        %2806 = vst.msk [vmem:[#allocation5 + $0xd0] sm:$0xff] %vm2779, %v2736
        %2807 = vst.msk [vmem:[#allocation5 + $0xd8] sm:$0xff] %vm2779, %v2738
        %2808 = vst.msk [vmem:[#allocation5 + $0xe0] sm:$0xff] %vm2779, %v2740
        %2809 = vst.msk [vmem:[#allocation5 + $0xe8] sm:$0xff] %vm2779, %v2742
        %2810 = vst.msk [vmem:[#allocation5 + $0xf0] sm:$0xff] %vm2779, %v2744
        %2811 = vst.msk [vmem:[#allocation5 + $0xf8] sm:$0xff] %vm2779, %v2746
        %v2812 = vld [vmem:[%s2329] sm:$0xff]
        %v2813 = vld [vmem:[%s2329 + $0x8] sm:$0xff]
        %v2814 = vld [vmem:[%s2329 + $0x18] sm:$0xff]
        %v2815 = vld [vmem:[%s2329 + $0x20] sm:$0xff]
        %v2816 = vld [vmem:[%s2329 + $0x30] sm:$0xff]
        %v2817 = vld [vmem:[%s2329 + $0x38] sm:$0xff]
        %v2818 = vld [vmem:[%s2329 + $0x48] sm:$0xff]
        %v2819 = vld [vmem:[%s2329 + $0x50] sm:$0xff]
        %v2820 = vld [vmem:[%s2329 + $0x60] sm:$0xff]
        %v2821 = vld [vmem:[%s2329 + $0x68] sm:$0xff]
        %v2822 = vld [vmem:[%s2329 + $0x78] sm:$0xff]
        %v2823 = vld [vmem:[%s2329 + $0x80] sm:$0xff]
        %v2824 = vld [vmem:[%s2329 + $0x90] sm:$0xff]
        %v2825 = vld [vmem:[%s2329 + $0x98] sm:$0xff]
        %v2826 = vld [vmem:[%s2329 + $0xa8] sm:$0xff]
        %v2827 = vld [vmem:[%s2329 + $0xb0] sm:$0xff]
        %v2828 = vld [vmem:[%s2329 + $0xc0] sm:$0xff]
        %v2829 = vld [vmem:[%s2329 + $0xc8] sm:$0xff]
        %v2830 = vld [vmem:[%s2329 + $0xd8] sm:$0xff]
        %v2831 = vld [vmem:[%s2329 + $0xe0] sm:$0xff]
        %v2832 = vld [vmem:[%s2329 + $0xf0] sm:$0xff]
        %v2833 = vld [vmem:[%s2329 + $0xf8] sm:$0xff]
        %v2834 = vld [vmem:[%s2329 + $0x108] sm:$0xff]
        %v2835 = vld [vmem:[%s2329 + $0x110] sm:$0xff]
        %v2836 = vld [vmem:[%s2329 + $0x120] sm:$0xff]
        %v2837 = vld [vmem:[%s2329 + $0x128] sm:$0xff]
        %v2838 = vld [vmem:[%s2329 + $0x138] sm:$0xff]
        %v2839 = vld [vmem:[%s2329 + $0x140] sm:$0xff]
        %v2840 = vld [vmem:[%s2329 + $0x150] sm:$0xff]
        %v2841 = vld [vmem:[%s2329 + $0x158] sm:$0xff]
        %v2842 = vld [vmem:[%s2329 + $0x168] sm:$0xff]
        %v2843 = vld [vmem:[%s2329 + $0x170] sm:$0xff]
        %2876 = vrot.lane.b32.xlu0 %v2812, 24
        %v2877 = vpop.permute.xlu0 %2876
        %2878 = vrot.lane.b32.xlu0 %v2813, 24
        %v2879 = vpop.permute.xlu0 %2878
        %2880 = vrot.lane.b32.xlu0 %v2814, 24
        %v2881 = vpop.permute.xlu0 %2880
        %2882 = vrot.lane.b32.xlu0 %v2815, 24
        %v2883 = vpop.permute.xlu0 %2882
        %2884 = vrot.lane.b32.xlu0 %v2816, 24
        %v2885 = vpop.permute.xlu0 %2884
        %2886 = vrot.lane.b32.xlu0 %v2817, 24
        %v2887 = vpop.permute.xlu0 %2886
        %2888 = vrot.lane.b32.xlu0 %v2818, 24
        %v2889 = vpop.permute.xlu0 %2888
        %2890 = vrot.lane.b32.xlu0 %v2819, 24
        %v2891 = vpop.permute.xlu0 %2890
        %2892 = vrot.lane.b32.xlu0 %v2820, 24
        %v2893 = vpop.permute.xlu0 %2892
        %2894 = vrot.lane.b32.xlu0 %v2821, 24
        %v2895 = vpop.permute.xlu0 %2894
        %2896 = vrot.lane.b32.xlu0 %v2822, 24
        %v2897 = vpop.permute.xlu0 %2896
        %2898 = vrot.lane.b32.xlu0 %v2823, 24
        %v2899 = vpop.permute.xlu0 %2898
        %2900 = vrot.lane.b32.xlu0 %v2824, 24
        %v2901 = vpop.permute.xlu0 %2900
        %2902 = vrot.lane.b32.xlu0 %v2825, 24
        %v2903 = vpop.permute.xlu0 %2902
        %2904 = vrot.lane.b32.xlu0 %v2826, 24
        %v2905 = vpop.permute.xlu0 %2904
        %2906 = vrot.lane.b32.xlu0 %v2827, 24
        %v2907 = vpop.permute.xlu0 %2906
        %2908 = vrot.lane.b32.xlu0 %v2828, 24
        %v2909 = vpop.permute.xlu0 %2908
        %2910 = vrot.lane.b32.xlu0 %v2829, 24
        %v2911 = vpop.permute.xlu0 %2910
        %2912 = vrot.lane.b32.xlu0 %v2830, 24
        %v2913 = vpop.permute.xlu0 %2912
        %2914 = vrot.lane.b32.xlu0 %v2831, 24
        %v2915 = vpop.permute.xlu0 %2914
        %2916 = vrot.lane.b32.xlu0 %v2832, 24
        %v2917 = vpop.permute.xlu0 %2916
        %2918 = vrot.lane.b32.xlu0 %v2833, 24
        %v2919 = vpop.permute.xlu0 %2918
        %2920 = vrot.lane.b32.xlu0 %v2834, 24
        %v2921 = vpop.permute.xlu0 %2920
        %2922 = vrot.lane.b32.xlu0 %v2835, 24
        %v2923 = vpop.permute.xlu0 %2922
        %2924 = vrot.lane.b32.xlu0 %v2836, 24
        %v2925 = vpop.permute.xlu0 %2924
        %2926 = vrot.lane.b32.xlu0 %v2837, 24
        %v2927 = vpop.permute.xlu0 %2926
        %2928 = vrot.lane.b32.xlu0 %v2838, 24
        %v2929 = vpop.permute.xlu0 %2928
        %2930 = vrot.lane.b32.xlu0 %v2839, 24
        %v2931 = vpop.permute.xlu0 %2930
        %2932 = vrot.lane.b32.xlu0 %v2840, 24
        %v2933 = vpop.permute.xlu0 %2932
        %2934 = vrot.lane.b32.xlu0 %v2841, 24
        %v2935 = vpop.permute.xlu0 %2934
        %2936 = vrot.lane.b32.xlu0 %v2842, 24
        %v2937 = vpop.permute.xlu0 %2936
        %2938 = vrot.lane.b32.xlu0 %v2843, 24
        %v2939 = vpop.permute.xlu0 %2938
        %vm2972 = vcmask 261312
        %2973 = vst.msk [vmem:[#allocation5] sm:$0xff] %vm2972, %v2877
        %2974 = vst.msk [vmem:[#allocation5 + $0x8] sm:$0xff] %vm2972, %v2879
        %2975 = vst.msk [vmem:[#allocation5 + $0x10] sm:$0xff] %vm2972, %v2881
        %2976 = vst.msk [vmem:[#allocation5 + $0x18] sm:$0xff] %vm2972, %v2883
        %2977 = vst.msk [vmem:[#allocation5 + $0x20] sm:$0xff] %vm2972, %v2885
        %2978 = vst.msk [vmem:[#allocation5 + $0x28] sm:$0xff] %vm2972, %v2887
        %2979 = vst.msk [vmem:[#allocation5 + $0x30] sm:$0xff] %vm2972, %v2889
        %2980 = vst.msk [vmem:[#allocation5 + $0x38] sm:$0xff] %vm2972, %v2891
        %2981 = vst.msk [vmem:[#allocation5 + $0x40] sm:$0xff] %vm2972, %v2893
        %2982 = vst.msk [vmem:[#allocation5 + $0x48] sm:$0xff] %vm2972, %v2895
        %2983 = vst.msk [vmem:[#allocation5 + $0x50] sm:$0xff] %vm2972, %v2897
        %2984 = vst.msk [vmem:[#allocation5 + $0x58] sm:$0xff] %vm2972, %v2899
        %2985 = vst.msk [vmem:[#allocation5 + $0x60] sm:$0xff] %vm2972, %v2901
        %2986 = vst.msk [vmem:[#allocation5 + $0x68] sm:$0xff] %vm2972, %v2903
        %2987 = vst.msk [vmem:[#allocation5 + $0x70] sm:$0xff] %vm2972, %v2905
        %2988 = vst.msk [vmem:[#allocation5 + $0x78] sm:$0xff] %vm2972, %v2907
        %2989 = vst.msk [vmem:[#allocation5 + $0x80] sm:$0xff] %vm2972, %v2909
        %2990 = vst.msk [vmem:[#allocation5 + $0x88] sm:$0xff] %vm2972, %v2911
        %2991 = vst.msk [vmem:[#allocation5 + $0x90] sm:$0xff] %vm2972, %v2913
        %2992 = vst.msk [vmem:[#allocation5 + $0x98] sm:$0xff] %vm2972, %v2915
        %2993 = vst.msk [vmem:[#allocation5 + $0xa0] sm:$0xff] %vm2972, %v2917
        %2994 = vst.msk [vmem:[#allocation5 + $0xa8] sm:$0xff] %vm2972, %v2919
        %2995 = vst.msk [vmem:[#allocation5 + $0xb0] sm:$0xff] %vm2972, %v2921
        %2996 = vst.msk [vmem:[#allocation5 + $0xb8] sm:$0xff] %vm2972, %v2923
        %2997 = vst.msk [vmem:[#allocation5 + $0xc0] sm:$0xff] %vm2972, %v2925
        %2998 = vst.msk [vmem:[#allocation5 + $0xc8] sm:$0xff] %vm2972, %v2927
        %2999 = vst.msk [vmem:[#allocation5 + $0xd0] sm:$0xff] %vm2972, %v2929
        %3000 = vst.msk [vmem:[#allocation5 + $0xd8] sm:$0xff] %vm2972, %v2931
        %3001 = vst.msk [vmem:[#allocation5 + $0xe0] sm:$0xff] %vm2972, %v2933
        %3002 = vst.msk [vmem:[#allocation5 + $0xe8] sm:$0xff] %vm2972, %v2935
        %3003 = vst.msk [vmem:[#allocation5 + $0xf0] sm:$0xff] %vm2972, %v2937
        %3004 = vst.msk [vmem:[#allocation5 + $0xf8] sm:$0xff] %vm2972, %v2939
        %v3005 = vld [vmem:[%s2329 + $0x1] sm:$0xff]
        %v3006 = vld [vmem:[%s2329 + $0x9] sm:$0xff]
        %v3007 = vld [vmem:[%s2329 + $0x19] sm:$0xff]
        %v3008 = vld [vmem:[%s2329 + $0x21] sm:$0xff]
        %v3009 = vld [vmem:[%s2329 + $0x31] sm:$0xff]
        %v3010 = vld [vmem:[%s2329 + $0x39] sm:$0xff]
        %v3011 = vld [vmem:[%s2329 + $0x49] sm:$0xff]
        %v3012 = vld [vmem:[%s2329 + $0x51] sm:$0xff]
        %v3013 = vld [vmem:[%s2329 + $0x61] sm:$0xff]
        %v3014 = vld [vmem:[%s2329 + $0x69] sm:$0xff]
        %v3015 = vld [vmem:[%s2329 + $0x79] sm:$0xff]
        %v3016 = vld [vmem:[%s2329 + $0x81] sm:$0xff]
        %v3017 = vld [vmem:[%s2329 + $0x91] sm:$0xff]
        %v3018 = vld [vmem:[%s2329 + $0x99] sm:$0xff]
        %v3019 = vld [vmem:[%s2329 + $0xa9] sm:$0xff]
        %v3020 = vld [vmem:[%s2329 + $0xb1] sm:$0xff]
        %v3021 = vld [vmem:[%s2329 + $0xc1] sm:$0xff]
        %v3022 = vld [vmem:[%s2329 + $0xc9] sm:$0xff]
        %v3023 = vld [vmem:[%s2329 + $0xd9] sm:$0xff]
        %v3024 = vld [vmem:[%s2329 + $0xe1] sm:$0xff]
        %v3025 = vld [vmem:[%s2329 + $0xf1] sm:$0xff]
        %v3026 = vld [vmem:[%s2329 + $0xf9] sm:$0xff]
        %v3027 = vld [vmem:[%s2329 + $0x109] sm:$0xff]
        %v3028 = vld [vmem:[%s2329 + $0x111] sm:$0xff]
        %v3029 = vld [vmem:[%s2329 + $0x121] sm:$0xff]
        %v3030 = vld [vmem:[%s2329 + $0x129] sm:$0xff]
        %v3031 = vld [vmem:[%s2329 + $0x139] sm:$0xff]
        %v3032 = vld [vmem:[%s2329 + $0x141] sm:$0xff]
        %v3033 = vld [vmem:[%s2329 + $0x151] sm:$0xff]
        %v3034 = vld [vmem:[%s2329 + $0x159] sm:$0xff]
        %v3035 = vld [vmem:[%s2329 + $0x169] sm:$0xff]
        %v3036 = vld [vmem:[%s2329 + $0x171] sm:$0xff]
        %3069 = vrot.lane.b32.xlu0 %v3005, 32
        %v3070 = vpop.permute.xlu0 %3069
        %3071 = vrot.lane.b32.xlu0 %v3006, 32
        %v3072 = vpop.permute.xlu0 %3071
        %3073 = vrot.lane.b32.xlu0 %v3007, 32
        %v3074 = vpop.permute.xlu0 %3073
        %3075 = vrot.lane.b32.xlu0 %v3008, 32
        %v3076 = vpop.permute.xlu0 %3075
        %3077 = vrot.lane.b32.xlu0 %v3009, 32
        %v3078 = vpop.permute.xlu0 %3077
        %3079 = vrot.lane.b32.xlu0 %v3010, 32
        %v3080 = vpop.permute.xlu0 %3079
        %3081 = vrot.lane.b32.xlu0 %v3011, 32
        %v3082 = vpop.permute.xlu0 %3081
        %3083 = vrot.lane.b32.xlu0 %v3012, 32
        %v3084 = vpop.permute.xlu0 %3083
        %3085 = vrot.lane.b32.xlu0 %v3013, 32
        %v3086 = vpop.permute.xlu0 %3085
        %3087 = vrot.lane.b32.xlu0 %v3014, 32
        %v3088 = vpop.permute.xlu0 %3087
        %3089 = vrot.lane.b32.xlu0 %v3015, 32
        %v3090 = vpop.permute.xlu0 %3089
        %3091 = vrot.lane.b32.xlu0 %v3016, 32
        %v3092 = vpop.permute.xlu0 %3091
        %3093 = vrot.lane.b32.xlu0 %v3017, 32
        %v3094 = vpop.permute.xlu0 %3093
        %3095 = vrot.lane.b32.xlu0 %v3018, 32
        %v3096 = vpop.permute.xlu0 %3095
        %3097 = vrot.lane.b32.xlu0 %v3019, 32
        %v3098 = vpop.permute.xlu0 %3097
        %3099 = vrot.lane.b32.xlu0 %v3020, 32
        %v3100 = vpop.permute.xlu0 %3099
        %3101 = vrot.lane.b32.xlu0 %v3021, 32
        %v3102 = vpop.permute.xlu0 %3101
        %3103 = vrot.lane.b32.xlu0 %v3022, 32
        %v3104 = vpop.permute.xlu0 %3103
        %3105 = vrot.lane.b32.xlu0 %v3023, 32
        %v3106 = vpop.permute.xlu0 %3105
        %3107 = vrot.lane.b32.xlu0 %v3024, 32
        %v3108 = vpop.permute.xlu0 %3107
        %3109 = vrot.lane.b32.xlu0 %v3025, 32
        %v3110 = vpop.permute.xlu0 %3109
        %3111 = vrot.lane.b32.xlu0 %v3026, 32
        %v3112 = vpop.permute.xlu0 %3111
        %3113 = vrot.lane.b32.xlu0 %v3027, 32
        %v3114 = vpop.permute.xlu0 %3113
        %3115 = vrot.lane.b32.xlu0 %v3028, 32
        %v3116 = vpop.permute.xlu0 %3115
        %3117 = vrot.lane.b32.xlu0 %v3029, 32
        %v3118 = vpop.permute.xlu0 %3117
        %3119 = vrot.lane.b32.xlu0 %v3030, 32
        %v3120 = vpop.permute.xlu0 %3119
        %3121 = vrot.lane.b32.xlu0 %v3031, 32
        %v3122 = vpop.permute.xlu0 %3121
        %3123 = vrot.lane.b32.xlu0 %v3032, 32
        %v3124 = vpop.permute.xlu0 %3123
        %3125 = vrot.lane.b32.xlu0 %v3033, 32
        %v3126 = vpop.permute.xlu0 %3125
        %3127 = vrot.lane.b32.xlu0 %v3034, 32
        %v3128 = vpop.permute.xlu0 %3127
        %3129 = vrot.lane.b32.xlu0 %v3035, 32
        %v3130 = vpop.permute.xlu0 %3129
        %3131 = vrot.lane.b32.xlu0 %v3036, 32
        %v3132 = vpop.permute.xlu0 %3131
        %vm3165 = vcmask 326912
        %3166 = vst.msk [vmem:[#allocation5] sm:$0xff] %vm3165, %v3070
        %3167 = vst.msk [vmem:[#allocation5 + $0x8] sm:$0xff] %vm3165, %v3072
        %3168 = vst.msk [vmem:[#allocation5 + $0x10] sm:$0xff] %vm3165, %v3074
        %3169 = vst.msk [vmem:[#allocation5 + $0x18] sm:$0xff] %vm3165, %v3076
        %3170 = vst.msk [vmem:[#allocation5 + $0x20] sm:$0xff] %vm3165, %v3078
        %3171 = vst.msk [vmem:[#allocation5 + $0x28] sm:$0xff] %vm3165, %v3080
        %3172 = vst.msk [vmem:[#allocation5 + $0x30] sm:$0xff] %vm3165, %v3082
        %3173 = vst.msk [vmem:[#allocation5 + $0x38] sm:$0xff] %vm3165, %v3084
        %3174 = vst.msk [vmem:[#allocation5 + $0x40] sm:$0xff] %vm3165, %v3086
        %3175 = vst.msk [vmem:[#allocation5 + $0x48] sm:$0xff] %vm3165, %v3088
        %3176 = vst.msk [vmem:[#allocation5 + $0x50] sm:$0xff] %vm3165, %v3090
        %3177 = vst.msk [vmem:[#allocation5 + $0x58] sm:$0xff] %vm3165, %v3092
        %3178 = vst.msk [vmem:[#allocation5 + $0x60] sm:$0xff] %vm3165, %v3094
        %3179 = vst.msk [vmem:[#allocation5 + $0x68] sm:$0xff] %vm3165, %v3096
        %3180 = vst.msk [vmem:[#allocation5 + $0x70] sm:$0xff] %vm3165, %v3098
        %3181 = vst.msk [vmem:[#allocation5 + $0x78] sm:$0xff] %vm3165, %v3100
        %3182 = vst.msk [vmem:[#allocation5 + $0x80] sm:$0xff] %vm3165, %v3102
        %3183 = vst.msk [vmem:[#allocation5 + $0x88] sm:$0xff] %vm3165, %v3104
        %3184 = vst.msk [vmem:[#allocation5 + $0x90] sm:$0xff] %vm3165, %v3106
        %3185 = vst.msk [vmem:[#allocation5 + $0x98] sm:$0xff] %vm3165, %v3108
        %3186 = vst.msk [vmem:[#allocation5 + $0xa0] sm:$0xff] %vm3165, %v3110
        %3187 = vst.msk [vmem:[#allocation5 + $0xa8] sm:$0xff] %vm3165, %v3112
        %3188 = vst.msk [vmem:[#allocation5 + $0xb0] sm:$0xff] %vm3165, %v3114
        %3189 = vst.msk [vmem:[#allocation5 + $0xb8] sm:$0xff] %vm3165, %v3116
        %3190 = vst.msk [vmem:[#allocation5 + $0xc0] sm:$0xff] %vm3165, %v3118
        %3191 = vst.msk [vmem:[#allocation5 + $0xc8] sm:$0xff] %vm3165, %v3120
        %3192 = vst.msk [vmem:[#allocation5 + $0xd0] sm:$0xff] %vm3165, %v3122
        %3193 = vst.msk [vmem:[#allocation5 + $0xd8] sm:$0xff] %vm3165, %v3124
        %3194 = vst.msk [vmem:[#allocation5 + $0xe0] sm:$0xff] %vm3165, %v3126
        %3195 = vst.msk [vmem:[#allocation5 + $0xe8] sm:$0xff] %vm3165, %v3128
        %3196 = vst.msk [vmem:[#allocation5 + $0xf0] sm:$0xff] %vm3165, %v3130
        %3197 = vst.msk [vmem:[#allocation5 + $0xf8] sm:$0xff] %vm3165, %v3132
        %v3198 = vld [vmem:[%s2329 + $0x2] sm:$0xff]
        %v3199 = vld [vmem:[%s2329 + $0xa] sm:$0xff]
        %v3200 = vld [vmem:[%s2329 + $0x1a] sm:$0xff]
        %v3201 = vld [vmem:[%s2329 + $0x22] sm:$0xff]
        %v3202 = vld [vmem:[%s2329 + $0x32] sm:$0xff]
        %v3203 = vld [vmem:[%s2329 + $0x3a] sm:$0xff]
        %v3204 = vld [vmem:[%s2329 + $0x4a] sm:$0xff]
        %v3205 = vld [vmem:[%s2329 + $0x52] sm:$0xff]
        %v3206 = vld [vmem:[%s2329 + $0x62] sm:$0xff]
        %v3207 = vld [vmem:[%s2329 + $0x6a] sm:$0xff]
        %v3208 = vld [vmem:[%s2329 + $0x7a] sm:$0xff]
        %v3209 = vld [vmem:[%s2329 + $0x82] sm:$0xff]
        %v3210 = vld [vmem:[%s2329 + $0x92] sm:$0xff]
        %v3211 = vld [vmem:[%s2329 + $0x9a] sm:$0xff]
        %v3212 = vld [vmem:[%s2329 + $0xaa] sm:$0xff]
        %v3213 = vld [vmem:[%s2329 + $0xb2] sm:$0xff]
        %v3214 = vld [vmem:[%s2329 + $0xc2] sm:$0xff]
        %v3215 = vld [vmem:[%s2329 + $0xca] sm:$0xff]
        %v3216 = vld [vmem:[%s2329 + $0xda] sm:$0xff]
        %v3217 = vld [vmem:[%s2329 + $0xe2] sm:$0xff]
        %v3218 = vld [vmem:[%s2329 + $0xf2] sm:$0xff]
        %v3219 = vld [vmem:[%s2329 + $0xfa] sm:$0xff]
        %v3220 = vld [vmem:[%s2329 + $0x10a] sm:$0xff]
        %v3221 = vld [vmem:[%s2329 + $0x112] sm:$0xff]
        %v3222 = vld [vmem:[%s2329 + $0x122] sm:$0xff]
        %v3223 = vld [vmem:[%s2329 + $0x12a] sm:$0xff]
        %v3224 = vld [vmem:[%s2329 + $0x13a] sm:$0xff]
        %v3225 = vld [vmem:[%s2329 + $0x142] sm:$0xff]
        %v3226 = vld [vmem:[%s2329 + $0x152] sm:$0xff]
        %v3227 = vld [vmem:[%s2329 + $0x15a] sm:$0xff]
        %v3228 = vld [vmem:[%s2329 + $0x16a] sm:$0xff]
        %v3229 = vld [vmem:[%s2329 + $0x172] sm:$0xff]
        %3262 = vrot.lane.b32.xlu0 %v3198, 40
        %v3263 = vpop.permute.xlu0 %3262
        %3264 = vrot.lane.b32.xlu0 %v3199, 40
        %v3265 = vpop.permute.xlu0 %3264
        %3266 = vrot.lane.b32.xlu0 %v3200, 40
        %v3267 = vpop.permute.xlu0 %3266
        %3268 = vrot.lane.b32.xlu0 %v3201, 40
        %v3269 = vpop.permute.xlu0 %3268
        %3270 = vrot.lane.b32.xlu0 %v3202, 40
        %v3271 = vpop.permute.xlu0 %3270
        %3272 = vrot.lane.b32.xlu0 %v3203, 40
        %v3273 = vpop.permute.xlu0 %3272
        %3274 = vrot.lane.b32.xlu0 %v3204, 40
        %v3275 = vpop.permute.xlu0 %3274
        %3276 = vrot.lane.b32.xlu0 %v3205, 40
        %v3277 = vpop.permute.xlu0 %3276
        %3278 = vrot.lane.b32.xlu0 %v3206, 40
        %v3279 = vpop.permute.xlu0 %3278
        %3280 = vrot.lane.b32.xlu0 %v3207, 40
        %v3281 = vpop.permute.xlu0 %3280
        %3282 = vrot.lane.b32.xlu0 %v3208, 40
        %v3283 = vpop.permute.xlu0 %3282
        %3284 = vrot.lane.b32.xlu0 %v3209, 40
        %v3285 = vpop.permute.xlu0 %3284
        %3286 = vrot.lane.b32.xlu0 %v3210, 40
        %v3287 = vpop.permute.xlu0 %3286
        %3288 = vrot.lane.b32.xlu0 %v3211, 40
        %v3289 = vpop.permute.xlu0 %3288
        %3290 = vrot.lane.b32.xlu0 %v3212, 40
        %v3291 = vpop.permute.xlu0 %3290
        %3292 = vrot.lane.b32.xlu0 %v3213, 40
        %v3293 = vpop.permute.xlu0 %3292
        %3294 = vrot.lane.b32.xlu0 %v3214, 40
        %v3295 = vpop.permute.xlu0 %3294
        %3296 = vrot.lane.b32.xlu0 %v3215, 40
        %v3297 = vpop.permute.xlu0 %3296
        %3298 = vrot.lane.b32.xlu0 %v3216, 40
        %v3299 = vpop.permute.xlu0 %3298
        %3300 = vrot.lane.b32.xlu0 %v3217, 40
        %v3301 = vpop.permute.xlu0 %3300
        %3302 = vrot.lane.b32.xlu0 %v3218, 40
        %v3303 = vpop.permute.xlu0 %3302
        %3304 = vrot.lane.b32.xlu0 %v3219, 40
        %v3305 = vpop.permute.xlu0 %3304
        %3306 = vrot.lane.b32.xlu0 %v3220, 40
        %v3307 = vpop.permute.xlu0 %3306
        %3308 = vrot.lane.b32.xlu0 %v3221, 40
        %v3309 = vpop.permute.xlu0 %3308
        %3310 = vrot.lane.b32.xlu0 %v3222, 40
        %v3311 = vpop.permute.xlu0 %3310
        %3312 = vrot.lane.b32.xlu0 %v3223, 40
        %v3313 = vpop.permute.xlu0 %3312
        %3314 = vrot.lane.b32.xlu0 %v3224, 40
        %v3315 = vpop.permute.xlu0 %3314
        %3316 = vrot.lane.b32.xlu0 %v3225, 40
        %v3317 = vpop.permute.xlu0 %3316
        %3318 = vrot.lane.b32.xlu0 %v3226, 40
        %v3319 = vpop.permute.xlu0 %3318
        %3320 = vrot.lane.b32.xlu0 %v3227, 40
        %v3321 = vpop.permute.xlu0 %3320
        %3322 = vrot.lane.b32.xlu0 %v3228, 40
        %v3323 = vpop.permute.xlu0 %3322
        %3324 = vrot.lane.b32.xlu0 %v3229, 40
        %v3325 = vpop.permute.xlu0 %3324
        %vm3358 = vcmask 392512
        %3359 = vst.msk [vmem:[#allocation5] sm:$0xff] %vm3358, %v3263
        %3360 = vst.msk [vmem:[#allocation5 + $0x8] sm:$0xff] %vm3358, %v3265
        %3361 = vst.msk [vmem:[#allocation5 + $0x10] sm:$0xff] %vm3358, %v3267
        %3362 = vst.msk [vmem:[#allocation5 + $0x18] sm:$0xff] %vm3358, %v3269
        %3363 = vst.msk [vmem:[#allocation5 + $0x20] sm:$0xff] %vm3358, %v3271
        %3364 = vst.msk [vmem:[#allocation5 + $0x28] sm:$0xff] %vm3358, %v3273
        %3365 = vst.msk [vmem:[#allocation5 + $0x30] sm:$0xff] %vm3358, %v3275
        %3366 = vst.msk [vmem:[#allocation5 + $0x38] sm:$0xff] %vm3358, %v3277
        %3367 = vst.msk [vmem:[#allocation5 + $0x40] sm:$0xff] %vm3358, %v3279
        %3368 = vst.msk [vmem:[#allocation5 + $0x48] sm:$0xff] %vm3358, %v3281
        %3369 = vst.msk [vmem:[#allocation5 + $0x50] sm:$0xff] %vm3358, %v3283
        %3370 = vst.msk [vmem:[#allocation5 + $0x58] sm:$0xff] %vm3358, %v3285
        %3371 = vst.msk [vmem:[#allocation5 + $0x60] sm:$0xff] %vm3358, %v3287
        %3372 = vst.msk [vmem:[#allocation5 + $0x68] sm:$0xff] %vm3358, %v3289
        %3373 = vst.msk [vmem:[#allocation5 + $0x70] sm:$0xff] %vm3358, %v3291
        %3374 = vst.msk [vmem:[#allocation5 + $0x78] sm:$0xff] %vm3358, %v3293
        %3375 = vst.msk [vmem:[#allocation5 + $0x80] sm:$0xff] %vm3358, %v3295
        %3376 = vst.msk [vmem:[#allocation5 + $0x88] sm:$0xff] %vm3358, %v3297
        %3377 = vst.msk [vmem:[#allocation5 + $0x90] sm:$0xff] %vm3358, %v3299
        %3378 = vst.msk [vmem:[#allocation5 + $0x98] sm:$0xff] %vm3358, %v3301
        %3379 = vst.msk [vmem:[#allocation5 + $0xa0] sm:$0xff] %vm3358, %v3303
        %3380 = vst.msk [vmem:[#allocation5 + $0xa8] sm:$0xff] %vm3358, %v3305
        %3381 = vst.msk [vmem:[#allocation5 + $0xb0] sm:$0xff] %vm3358, %v3307
        %3382 = vst.msk [vmem:[#allocation5 + $0xb8] sm:$0xff] %vm3358, %v3309
        %3383 = vst.msk [vmem:[#allocation5 + $0xc0] sm:$0xff] %vm3358, %v3311
        %3384 = vst.msk [vmem:[#allocation5 + $0xc8] sm:$0xff] %vm3358, %v3313
        %3385 = vst.msk [vmem:[#allocation5 + $0xd0] sm:$0xff] %vm3358, %v3315
        %3386 = vst.msk [vmem:[#allocation5 + $0xd8] sm:$0xff] %vm3358, %v3317
        %3387 = vst.msk [vmem:[#allocation5 + $0xe0] sm:$0xff] %vm3358, %v3319
        %3388 = vst.msk [vmem:[#allocation5 + $0xe8] sm:$0xff] %vm3358, %v3321
        %3389 = vst.msk [vmem:[#allocation5 + $0xf0] sm:$0xff] %vm3358, %v3323
        %3390 = vst.msk [vmem:[#allocation5 + $0xf8] sm:$0xff] %vm3358, %v3325
        %s3391 = scalar_lea.vmem [#allocation3], 48
        %v3392 = vld [vmem:[%s3391] sm:$0xff]
        %v3393 = vld [vmem:[%s3391 + $0x8] sm:$0xff]
        %v3394 = vld [vmem:[%s3391 + $0x18] sm:$0xff]
        %v3395 = vld [vmem:[%s3391 + $0x20] sm:$0xff]
        %v3396 = vld [vmem:[%s3391 + $0x30] sm:$0xff]
        %v3397 = vld [vmem:[%s3391 + $0x38] sm:$0xff]
        %v3398 = vld [vmem:[%s3391 + $0x48] sm:$0xff]
        %v3399 = vld [vmem:[%s3391 + $0x50] sm:$0xff]
        %v3400 = vld [vmem:[%s3391 + $0x60] sm:$0xff]
        %v3401 = vld [vmem:[%s3391 + $0x68] sm:$0xff]
        %v3402 = vld [vmem:[%s3391 + $0x78] sm:$0xff]
        %v3403 = vld [vmem:[%s3391 + $0x80] sm:$0xff]
        %v3404 = vld [vmem:[%s3391 + $0x90] sm:$0xff]
        %v3405 = vld [vmem:[%s3391 + $0x98] sm:$0xff]
        %v3406 = vld [vmem:[%s3391 + $0xa8] sm:$0xff]
        %v3407 = vld [vmem:[%s3391 + $0xb0] sm:$0xff]
        %v3408 = vld [vmem:[%s3391 + $0xc0] sm:$0xff]
        %v3409 = vld [vmem:[%s3391 + $0xc8] sm:$0xff]
        %v3410 = vld [vmem:[%s3391 + $0xd8] sm:$0xff]
        %v3411 = vld [vmem:[%s3391 + $0xe0] sm:$0xff]
        %v3412 = vld [vmem:[%s3391 + $0xf0] sm:$0xff]
        %v3413 = vld [vmem:[%s3391 + $0xf8] sm:$0xff]
        %v3414 = vld [vmem:[%s3391 + $0x108] sm:$0xff]
        %v3415 = vld [vmem:[%s3391 + $0x110] sm:$0xff]
        %v3416 = vld [vmem:[%s3391 + $0x120] sm:$0xff]
        %v3417 = vld [vmem:[%s3391 + $0x128] sm:$0xff]
        %v3418 = vld [vmem:[%s3391 + $0x138] sm:$0xff]
        %v3419 = vld [vmem:[%s3391 + $0x140] sm:$0xff]
        %v3420 = vld [vmem:[%s3391 + $0x150] sm:$0xff]
        %v3421 = vld [vmem:[%s3391 + $0x158] sm:$0xff]
        %v3422 = vld [vmem:[%s3391 + $0x168] sm:$0xff]
        %v3423 = vld [vmem:[%s3391 + $0x170] sm:$0xff]
        %3456 = vrot.lane.b32.xlu0 %v3392, 48
        %v3457 = vpop.permute.xlu0 %3456
        %3458 = vrot.lane.b32.xlu0 %v3393, 48
        %v3459 = vpop.permute.xlu0 %3458
        %3460 = vrot.lane.b32.xlu0 %v3394, 48
        %v3461 = vpop.permute.xlu0 %3460
        %3462 = vrot.lane.b32.xlu0 %v3395, 48
        %v3463 = vpop.permute.xlu0 %3462
        %3464 = vrot.lane.b32.xlu0 %v3396, 48
        %v3465 = vpop.permute.xlu0 %3464
        %3466 = vrot.lane.b32.xlu0 %v3397, 48
        %v3467 = vpop.permute.xlu0 %3466
        %3468 = vrot.lane.b32.xlu0 %v3398, 48
        %v3469 = vpop.permute.xlu0 %3468
        %3470 = vrot.lane.b32.xlu0 %v3399, 48
        %v3471 = vpop.permute.xlu0 %3470
        %3472 = vrot.lane.b32.xlu0 %v3400, 48
        %v3473 = vpop.permute.xlu0 %3472
        %3474 = vrot.lane.b32.xlu0 %v3401, 48
        %v3475 = vpop.permute.xlu0 %3474
        %3476 = vrot.lane.b32.xlu0 %v3402, 48
        %v3477 = vpop.permute.xlu0 %3476
        %3478 = vrot.lane.b32.xlu0 %v3403, 48
        %v3479 = vpop.permute.xlu0 %3478
        %3480 = vrot.lane.b32.xlu0 %v3404, 48
        %v3481 = vpop.permute.xlu0 %3480
        %3482 = vrot.lane.b32.xlu0 %v3405, 48
        %v3483 = vpop.permute.xlu0 %3482
        %3484 = vrot.lane.b32.xlu0 %v3406, 48
        %v3485 = vpop.permute.xlu0 %3484
        %3486 = vrot.lane.b32.xlu0 %v3407, 48
        %v3487 = vpop.permute.xlu0 %3486
        %3488 = vrot.lane.b32.xlu0 %v3408, 48
        %v3489 = vpop.permute.xlu0 %3488
        %3490 = vrot.lane.b32.xlu0 %v3409, 48
        %v3491 = vpop.permute.xlu0 %3490
        %3492 = vrot.lane.b32.xlu0 %v3410, 48
        %v3493 = vpop.permute.xlu0 %3492
        %3494 = vrot.lane.b32.xlu0 %v3411, 48
        %v3495 = vpop.permute.xlu0 %3494
        %3496 = vrot.lane.b32.xlu0 %v3412, 48
        %v3497 = vpop.permute.xlu0 %3496
        %3498 = vrot.lane.b32.xlu0 %v3413, 48
        %v3499 = vpop.permute.xlu0 %3498
        %3500 = vrot.lane.b32.xlu0 %v3414, 48
        %v3501 = vpop.permute.xlu0 %3500
        %3502 = vrot.lane.b32.xlu0 %v3415, 48
        %v3503 = vpop.permute.xlu0 %3502
        %3504 = vrot.lane.b32.xlu0 %v3416, 48
        %v3505 = vpop.permute.xlu0 %3504
        %3506 = vrot.lane.b32.xlu0 %v3417, 48
        %v3507 = vpop.permute.xlu0 %3506
        %3508 = vrot.lane.b32.xlu0 %v3418, 48
        %v3509 = vpop.permute.xlu0 %3508
        %3510 = vrot.lane.b32.xlu0 %v3419, 48
        %v3511 = vpop.permute.xlu0 %3510
        %3512 = vrot.lane.b32.xlu0 %v3420, 48
        %v3513 = vpop.permute.xlu0 %3512
        %3514 = vrot.lane.b32.xlu0 %v3421, 48
        %v3515 = vpop.permute.xlu0 %3514
        %3516 = vrot.lane.b32.xlu0 %v3422, 48
        %v3517 = vpop.permute.xlu0 %3516
        %3518 = vrot.lane.b32.xlu0 %v3423, 48
        %v3519 = vpop.permute.xlu0 %3518
        %vm3552 = vcmask 458112
        %3553 = vst.msk [vmem:[#allocation5] sm:$0xff] %vm3552, %v3457
        %3554 = vst.msk [vmem:[#allocation5 + $0x8] sm:$0xff] %vm3552, %v3459
        %3555 = vst.msk [vmem:[#allocation5 + $0x10] sm:$0xff] %vm3552, %v3461
        %3556 = vst.msk [vmem:[#allocation5 + $0x18] sm:$0xff] %vm3552, %v3463
        %3557 = vst.msk [vmem:[#allocation5 + $0x20] sm:$0xff] %vm3552, %v3465
        %3558 = vst.msk [vmem:[#allocation5 + $0x28] sm:$0xff] %vm3552, %v3467
        %3559 = vst.msk [vmem:[#allocation5 + $0x30] sm:$0xff] %vm3552, %v3469
        %3560 = vst.msk [vmem:[#allocation5 + $0x38] sm:$0xff] %vm3552, %v3471
        %3561 = vst.msk [vmem:[#allocation5 + $0x40] sm:$0xff] %vm3552, %v3473
        %3562 = vst.msk [vmem:[#allocation5 + $0x48] sm:$0xff] %vm3552, %v3475
        %3563 = vst.msk [vmem:[#allocation5 + $0x50] sm:$0xff] %vm3552, %v3477
        %3564 = vst.msk [vmem:[#allocation5 + $0x58] sm:$0xff] %vm3552, %v3479
        %3565 = vst.msk [vmem:[#allocation5 + $0x60] sm:$0xff] %vm3552, %v3481
        %3566 = vst.msk [vmem:[#allocation5 + $0x68] sm:$0xff] %vm3552, %v3483
        %3567 = vst.msk [vmem:[#allocation5 + $0x70] sm:$0xff] %vm3552, %v3485
        %3568 = vst.msk [vmem:[#allocation5 + $0x78] sm:$0xff] %vm3552, %v3487
        %3569 = vst.msk [vmem:[#allocation5 + $0x80] sm:$0xff] %vm3552, %v3489
        %3570 = vst.msk [vmem:[#allocation5 + $0x88] sm:$0xff] %vm3552, %v3491
        %3571 = vst.msk [vmem:[#allocation5 + $0x90] sm:$0xff] %vm3552, %v3493
        %3572 = vst.msk [vmem:[#allocation5 + $0x98] sm:$0xff] %vm3552, %v3495
        %3573 = vst.msk [vmem:[#allocation5 + $0xa0] sm:$0xff] %vm3552, %v3497
        %3574 = vst.msk [vmem:[#allocation5 + $0xa8] sm:$0xff] %vm3552, %v3499
        %3575 = vst.msk [vmem:[#allocation5 + $0xb0] sm:$0xff] %vm3552, %v3501
        %3576 = vst.msk [vmem:[#allocation5 + $0xb8] sm:$0xff] %vm3552, %v3503
        %3577 = vst.msk [vmem:[#allocation5 + $0xc0] sm:$0xff] %vm3552, %v3505
        %3578 = vst.msk [vmem:[#allocation5 + $0xc8] sm:$0xff] %vm3552, %v3507
        %3579 = vst.msk [vmem:[#allocation5 + $0xd0] sm:$0xff] %vm3552, %v3509
        %3580 = vst.msk [vmem:[#allocation5 + $0xd8] sm:$0xff] %vm3552, %v3511
        %3581 = vst.msk [vmem:[#allocation5 + $0xe0] sm:$0xff] %vm3552, %v3513
        %3582 = vst.msk [vmem:[#allocation5 + $0xe8] sm:$0xff] %vm3552, %v3515
        %3583 = vst.msk [vmem:[#allocation5 + $0xf0] sm:$0xff] %vm3552, %v3517
        %3584 = vst.msk [vmem:[#allocation5 + $0xf8] sm:$0xff] %vm3552, %v3519
        %v3585 = vld [vmem:[%s3391 + $0x1] sm:$0xff]
        %v3586 = vld [vmem:[%s3391 + $0x9] sm:$0xff]
        %v3587 = vld [vmem:[%s3391 + $0x19] sm:$0xff]
        %v3588 = vld [vmem:[%s3391 + $0x21] sm:$0xff]
        %v3589 = vld [vmem:[%s3391 + $0x31] sm:$0xff]
        %v3590 = vld [vmem:[%s3391 + $0x39] sm:$0xff]
        %v3591 = vld [vmem:[%s3391 + $0x49] sm:$0xff]
        %v3592 = vld [vmem:[%s3391 + $0x51] sm:$0xff]
        %v3593 = vld [vmem:[%s3391 + $0x61] sm:$0xff]
        %v3594 = vld [vmem:[%s3391 + $0x69] sm:$0xff]
        %v3595 = vld [vmem:[%s3391 + $0x79] sm:$0xff]
        %v3596 = vld [vmem:[%s3391 + $0x81] sm:$0xff]
        %v3597 = vld [vmem:[%s3391 + $0x91] sm:$0xff]
        %v3598 = vld [vmem:[%s3391 + $0x99] sm:$0xff]
        %v3599 = vld [vmem:[%s3391 + $0xa9] sm:$0xff]
        %v3600 = vld [vmem:[%s3391 + $0xb1] sm:$0xff]
        %v3601 = vld [vmem:[%s3391 + $0xc1] sm:$0xff]
        %v3602 = vld [vmem:[%s3391 + $0xc9] sm:$0xff]
        %v3603 = vld [vmem:[%s3391 + $0xd9] sm:$0xff]
        %v3604 = vld [vmem:[%s3391 + $0xe1] sm:$0xff]
        %v3605 = vld [vmem:[%s3391 + $0xf1] sm:$0xff]
        %v3606 = vld [vmem:[%s3391 + $0xf9] sm:$0xff]
        %v3607 = vld [vmem:[%s3391 + $0x109] sm:$0xff]
        %v3608 = vld [vmem:[%s3391 + $0x111] sm:$0xff]
        %v3609 = vld [vmem:[%s3391 + $0x121] sm:$0xff]
        %v3610 = vld [vmem:[%s3391 + $0x129] sm:$0xff]
        %v3611 = vld [vmem:[%s3391 + $0x139] sm:$0xff]
        %v3612 = vld [vmem:[%s3391 + $0x141] sm:$0xff]
        %v3613 = vld [vmem:[%s3391 + $0x151] sm:$0xff]
        %v3614 = vld [vmem:[%s3391 + $0x159] sm:$0xff]
        %v3615 = vld [vmem:[%s3391 + $0x169] sm:$0xff]
        %v3616 = vld [vmem:[%s3391 + $0x171] sm:$0xff]
        %3649 = vrot.lane.b32.xlu0 %v3585, 56
        %v3650 = vpop.permute.xlu0 %3649
        %3651 = vrot.lane.b32.xlu0 %v3586, 56
        %v3652 = vpop.permute.xlu0 %3651
        %3653 = vrot.lane.b32.xlu0 %v3587, 56
        %v3654 = vpop.permute.xlu0 %3653
        %3655 = vrot.lane.b32.xlu0 %v3588, 56
        %v3656 = vpop.permute.xlu0 %3655
        %3657 = vrot.lane.b32.xlu0 %v3589, 56
        %v3658 = vpop.permute.xlu0 %3657
        %3659 = vrot.lane.b32.xlu0 %v3590, 56
        %v3660 = vpop.permute.xlu0 %3659
        %3661 = vrot.lane.b32.xlu0 %v3591, 56
        %v3662 = vpop.permute.xlu0 %3661
        %3663 = vrot.lane.b32.xlu0 %v3592, 56
        %v3664 = vpop.permute.xlu0 %3663
        %3665 = vrot.lane.b32.xlu0 %v3593, 56
        %v3666 = vpop.permute.xlu0 %3665
        %3667 = vrot.lane.b32.xlu0 %v3594, 56
        %v3668 = vpop.permute.xlu0 %3667
        %3669 = vrot.lane.b32.xlu0 %v3595, 56
        %v3670 = vpop.permute.xlu0 %3669
        %3671 = vrot.lane.b32.xlu0 %v3596, 56
        %v3672 = vpop.permute.xlu0 %3671
        %3673 = vrot.lane.b32.xlu0 %v3597, 56
        %v3674 = vpop.permute.xlu0 %3673
        %3675 = vrot.lane.b32.xlu0 %v3598, 56
        %v3676 = vpop.permute.xlu0 %3675
        %3677 = vrot.lane.b32.xlu0 %v3599, 56
        %v3678 = vpop.permute.xlu0 %3677
        %3679 = vrot.lane.b32.xlu0 %v3600, 56
        %v3680 = vpop.permute.xlu0 %3679
        %3681 = vrot.lane.b32.xlu0 %v3601, 56
        %v3682 = vpop.permute.xlu0 %3681
        %3683 = vrot.lane.b32.xlu0 %v3602, 56
        %v3684 = vpop.permute.xlu0 %3683
        %3685 = vrot.lane.b32.xlu0 %v3603, 56
        %v3686 = vpop.permute.xlu0 %3685
        %3687 = vrot.lane.b32.xlu0 %v3604, 56
        %v3688 = vpop.permute.xlu0 %3687
        %3689 = vrot.lane.b32.xlu0 %v3605, 56
        %v3690 = vpop.permute.xlu0 %3689
        %3691 = vrot.lane.b32.xlu0 %v3606, 56
        %v3692 = vpop.permute.xlu0 %3691
        %3693 = vrot.lane.b32.xlu0 %v3607, 56
        %v3694 = vpop.permute.xlu0 %3693
        %3695 = vrot.lane.b32.xlu0 %v3608, 56
        %v3696 = vpop.permute.xlu0 %3695
        %3697 = vrot.lane.b32.xlu0 %v3609, 56
        %v3698 = vpop.permute.xlu0 %3697
        %3699 = vrot.lane.b32.xlu0 %v3610, 56
        %v3700 = vpop.permute.xlu0 %3699
        %3701 = vrot.lane.b32.xlu0 %v3611, 56
        %v3702 = vpop.permute.xlu0 %3701
        %3703 = vrot.lane.b32.xlu0 %v3612, 56
        %v3704 = vpop.permute.xlu0 %3703
        %3705 = vrot.lane.b32.xlu0 %v3613, 56
        %v3706 = vpop.permute.xlu0 %3705
        %3707 = vrot.lane.b32.xlu0 %v3614, 56
        %v3708 = vpop.permute.xlu0 %3707
        %3709 = vrot.lane.b32.xlu0 %v3615, 56
        %v3710 = vpop.permute.xlu0 %3709
        %3711 = vrot.lane.b32.xlu0 %v3616, 56
        %v3712 = vpop.permute.xlu0 %3711
        %vm3745 = vcmask 523712
        %3746 = vst.msk [vmem:[#allocation5] sm:$0xff] %vm3745, %v3650
        %3747 = vst.msk [vmem:[#allocation5 + $0x8] sm:$0xff] %vm3745, %v3652
        %3748 = vst.msk [vmem:[#allocation5 + $0x10] sm:$0xff] %vm3745, %v3654
        %3749 = vst.msk [vmem:[#allocation5 + $0x18] sm:$0xff] %vm3745, %v3656
        %3750 = vst.msk [vmem:[#allocation5 + $0x20] sm:$0xff] %vm3745, %v3658
        %3751 = vst.msk [vmem:[#allocation5 + $0x28] sm:$0xff] %vm3745, %v3660
        %3752 = vst.msk [vmem:[#allocation5 + $0x30] sm:$0xff] %vm3745, %v3662
        %3753 = vst.msk [vmem:[#allocation5 + $0x38] sm:$0xff] %vm3745, %v3664
        %3754 = vst.msk [vmem:[#allocation5 + $0x40] sm:$0xff] %vm3745, %v3666
        %3755 = vst.msk [vmem:[#allocation5 + $0x48] sm:$0xff] %vm3745, %v3668
        %3756 = vst.msk [vmem:[#allocation5 + $0x50] sm:$0xff] %vm3745, %v3670
        %3757 = vst.msk [vmem:[#allocation5 + $0x58] sm:$0xff] %vm3745, %v3672
        %3758 = vst.msk [vmem:[#allocation5 + $0x60] sm:$0xff] %vm3745, %v3674
        %3759 = vst.msk [vmem:[#allocation5 + $0x68] sm:$0xff] %vm3745, %v3676
        %3760 = vst.msk [vmem:[#allocation5 + $0x70] sm:$0xff] %vm3745, %v3678
        %3761 = vst.msk [vmem:[#allocation5 + $0x78] sm:$0xff] %vm3745, %v3680
        %3762 = vst.msk [vmem:[#allocation5 + $0x80] sm:$0xff] %vm3745, %v3682
        %3763 = vst.msk [vmem:[#allocation5 + $0x88] sm:$0xff] %vm3745, %v3684
        %3764 = vst.msk [vmem:[#allocation5 + $0x90] sm:$0xff] %vm3745, %v3686
        %3765 = vst.msk [vmem:[#allocation5 + $0x98] sm:$0xff] %vm3745, %v3688
        %3766 = vst.msk [vmem:[#allocation5 + $0xa0] sm:$0xff] %vm3745, %v3690
        %3767 = vst.msk [vmem:[#allocation5 + $0xa8] sm:$0xff] %vm3745, %v3692
        %3768 = vst.msk [vmem:[#allocation5 + $0xb0] sm:$0xff] %vm3745, %v3694
        %3769 = vst.msk [vmem:[#allocation5 + $0xb8] sm:$0xff] %vm3745, %v3696
        %3770 = vst.msk [vmem:[#allocation5 + $0xc0] sm:$0xff] %vm3745, %v3698
        %3771 = vst.msk [vmem:[#allocation5 + $0xc8] sm:$0xff] %vm3745, %v3700
        %3772 = vst.msk [vmem:[#allocation5 + $0xd0] sm:$0xff] %vm3745, %v3702
        %3773 = vst.msk [vmem:[#allocation5 + $0xd8] sm:$0xff] %vm3745, %v3704
        %3774 = vst.msk [vmem:[#allocation5 + $0xe0] sm:$0xff] %vm3745, %v3706
        %3775 = vst.msk [vmem:[#allocation5 + $0xe8] sm:$0xff] %vm3745, %v3708
        %3776 = vst.msk [vmem:[#allocation5 + $0xf0] sm:$0xff] %vm3745, %v3710
        %3777 = vst.msk [vmem:[#allocation5 + $0xf8] sm:$0xff] %vm3745, %v3712
        %v3778 = vld [vmem:[%s3391 + $0x2] sm:$0xff]
        %v3779 = vld [vmem:[%s3391 + $0xa] sm:$0xff]
        %v3780 = vld [vmem:[%s3391 + $0x1a] sm:$0xff]
        %v3781 = vld [vmem:[%s3391 + $0x22] sm:$0xff]
        %v3782 = vld [vmem:[%s3391 + $0x32] sm:$0xff]
        %v3783 = vld [vmem:[%s3391 + $0x3a] sm:$0xff]
        %v3784 = vld [vmem:[%s3391 + $0x4a] sm:$0xff]
        %v3785 = vld [vmem:[%s3391 + $0x52] sm:$0xff]
        %v3786 = vld [vmem:[%s3391 + $0x62] sm:$0xff]
        %v3787 = vld [vmem:[%s3391 + $0x6a] sm:$0xff]
        %v3788 = vld [vmem:[%s3391 + $0x7a] sm:$0xff]
        %v3789 = vld [vmem:[%s3391 + $0x82] sm:$0xff]
        %v3790 = vld [vmem:[%s3391 + $0x92] sm:$0xff]
        %v3791 = vld [vmem:[%s3391 + $0x9a] sm:$0xff]
        %v3792 = vld [vmem:[%s3391 + $0xaa] sm:$0xff]
        %v3793 = vld [vmem:[%s3391 + $0xb2] sm:$0xff]
        %v3794 = vld [vmem:[%s3391 + $0xc2] sm:$0xff]
        %v3795 = vld [vmem:[%s3391 + $0xca] sm:$0xff]
        %v3796 = vld [vmem:[%s3391 + $0xda] sm:$0xff]
        %v3797 = vld [vmem:[%s3391 + $0xe2] sm:$0xff]
        %v3798 = vld [vmem:[%s3391 + $0xf2] sm:$0xff]
        %v3799 = vld [vmem:[%s3391 + $0xfa] sm:$0xff]
        %v3800 = vld [vmem:[%s3391 + $0x10a] sm:$0xff]
        %v3801 = vld [vmem:[%s3391 + $0x112] sm:$0xff]
        %v3802 = vld [vmem:[%s3391 + $0x122] sm:$0xff]
        %v3803 = vld [vmem:[%s3391 + $0x12a] sm:$0xff]
        %v3804 = vld [vmem:[%s3391 + $0x13a] sm:$0xff]
        %v3805 = vld [vmem:[%s3391 + $0x142] sm:$0xff]
        %v3806 = vld [vmem:[%s3391 + $0x152] sm:$0xff]
        %v3807 = vld [vmem:[%s3391 + $0x15a] sm:$0xff]
        %v3808 = vld [vmem:[%s3391 + $0x16a] sm:$0xff]
        %v3809 = vld [vmem:[%s3391 + $0x172] sm:$0xff]
        %3842 = vrot.lane.b32.xlu0 %v3778, 64
        %v3843 = vpop.permute.xlu0 %3842
        %3844 = vrot.lane.b32.xlu0 %v3779, 64
        %v3845 = vpop.permute.xlu0 %3844
        %3846 = vrot.lane.b32.xlu0 %v3780, 64
        %v3847 = vpop.permute.xlu0 %3846
        %3848 = vrot.lane.b32.xlu0 %v3781, 64
        %v3849 = vpop.permute.xlu0 %3848
        %3850 = vrot.lane.b32.xlu0 %v3782, 64
        %v3851 = vpop.permute.xlu0 %3850
        %3852 = vrot.lane.b32.xlu0 %v3783, 64
        %v3853 = vpop.permute.xlu0 %3852
        %3854 = vrot.lane.b32.xlu0 %v3784, 64
        %v3855 = vpop.permute.xlu0 %3854
        %3856 = vrot.lane.b32.xlu0 %v3785, 64
        %v3857 = vpop.permute.xlu0 %3856
        %3858 = vrot.lane.b32.xlu0 %v3786, 64
        %v3859 = vpop.permute.xlu0 %3858
        %3860 = vrot.lane.b32.xlu0 %v3787, 64
        %v3861 = vpop.permute.xlu0 %3860
        %3862 = vrot.lane.b32.xlu0 %v3788, 64
        %v3863 = vpop.permute.xlu0 %3862
        %3864 = vrot.lane.b32.xlu0 %v3789, 64
        %v3865 = vpop.permute.xlu0 %3864
        %3866 = vrot.lane.b32.xlu0 %v3790, 64
        %v3867 = vpop.permute.xlu0 %3866
        %3868 = vrot.lane.b32.xlu0 %v3791, 64
        %v3869 = vpop.permute.xlu0 %3868
        %3870 = vrot.lane.b32.xlu0 %v3792, 64
        %v3871 = vpop.permute.xlu0 %3870
        %3872 = vrot.lane.b32.xlu0 %v3793, 64
        %v3873 = vpop.permute.xlu0 %3872
        %3874 = vrot.lane.b32.xlu0 %v3794, 64
        %v3875 = vpop.permute.xlu0 %3874
        %3876 = vrot.lane.b32.xlu0 %v3795, 64
        %v3877 = vpop.permute.xlu0 %3876
        %3878 = vrot.lane.b32.xlu0 %v3796, 64
        %v3879 = vpop.permute.xlu0 %3878
        %3880 = vrot.lane.b32.xlu0 %v3797, 64
        %v3881 = vpop.permute.xlu0 %3880
        %3882 = vrot.lane.b32.xlu0 %v3798, 64
        %v3883 = vpop.permute.xlu0 %3882
        %3884 = vrot.lane.b32.xlu0 %v3799, 64
        %v3885 = vpop.permute.xlu0 %3884
        %3886 = vrot.lane.b32.xlu0 %v3800, 64
        %v3887 = vpop.permute.xlu0 %3886
        %3888 = vrot.lane.b32.xlu0 %v3801, 64
        %v3889 = vpop.permute.xlu0 %3888
        %3890 = vrot.lane.b32.xlu0 %v3802, 64
        %v3891 = vpop.permute.xlu0 %3890
        %3892 = vrot.lane.b32.xlu0 %v3803, 64
        %v3893 = vpop.permute.xlu0 %3892
        %3894 = vrot.lane.b32.xlu0 %v3804, 64
        %v3895 = vpop.permute.xlu0 %3894
        %3896 = vrot.lane.b32.xlu0 %v3805, 64
        %v3897 = vpop.permute.xlu0 %3896
        %3898 = vrot.lane.b32.xlu0 %v3806, 64
        %v3899 = vpop.permute.xlu0 %3898
        %3900 = vrot.lane.b32.xlu0 %v3807, 64
        %v3901 = vpop.permute.xlu0 %3900
        %3902 = vrot.lane.b32.xlu0 %v3808, 64
        %v3903 = vpop.permute.xlu0 %3902
        %3904 = vrot.lane.b32.xlu0 %v3809, 64
        %v3905 = vpop.permute.xlu0 %3904
        %vm3938 = vcmask 589312
        %3939 = vst.msk [vmem:[#allocation5] sm:$0xff] %vm3938, %v3843
        %3940 = vst.msk [vmem:[#allocation5 + $0x8] sm:$0xff] %vm3938, %v3845
        %3941 = vst.msk [vmem:[#allocation5 + $0x10] sm:$0xff] %vm3938, %v3847
        %3942 = vst.msk [vmem:[#allocation5 + $0x18] sm:$0xff] %vm3938, %v3849
        %3943 = vst.msk [vmem:[#allocation5 + $0x20] sm:$0xff] %vm3938, %v3851
        %3944 = vst.msk [vmem:[#allocation5 + $0x28] sm:$0xff] %vm3938, %v3853
        %3945 = vst.msk [vmem:[#allocation5 + $0x30] sm:$0xff] %vm3938, %v3855
        %3946 = vst.msk [vmem:[#allocation5 + $0x38] sm:$0xff] %vm3938, %v3857
        %3947 = vst.msk [vmem:[#allocation5 + $0x40] sm:$0xff] %vm3938, %v3859
        %3948 = vst.msk [vmem:[#allocation5 + $0x48] sm:$0xff] %vm3938, %v3861
        %3949 = vst.msk [vmem:[#allocation5 + $0x50] sm:$0xff] %vm3938, %v3863
        %3950 = vst.msk [vmem:[#allocation5 + $0x58] sm:$0xff] %vm3938, %v3865
        %3951 = vst.msk [vmem:[#allocation5 + $0x60] sm:$0xff] %vm3938, %v3867
        %3952 = vst.msk [vmem:[#allocation5 + $0x68] sm:$0xff] %vm3938, %v3869
        %3953 = vst.msk [vmem:[#allocation5 + $0x70] sm:$0xff] %vm3938, %v3871
        %3954 = vst.msk [vmem:[#allocation5 + $0x78] sm:$0xff] %vm3938, %v3873
        %3955 = vst.msk [vmem:[#allocation5 + $0x80] sm:$0xff] %vm3938, %v3875
        %3956 = vst.msk [vmem:[#allocation5 + $0x88] sm:$0xff] %vm3938, %v3877
        %3957 = vst.msk [vmem:[#allocation5 + $0x90] sm:$0xff] %vm3938, %v3879
        %3958 = vst.msk [vmem:[#allocation5 + $0x98] sm:$0xff] %vm3938, %v3881
        %3959 = vst.msk [vmem:[#allocation5 + $0xa0] sm:$0xff] %vm3938, %v3883
        %3960 = vst.msk [vmem:[#allocation5 + $0xa8] sm:$0xff] %vm3938, %v3885
        %3961 = vst.msk [vmem:[#allocation5 + $0xb0] sm:$0xff] %vm3938, %v3887
        %3962 = vst.msk [vmem:[#allocation5 + $0xb8] sm:$0xff] %vm3938, %v3889
        %3963 = vst.msk [vmem:[#allocation5 + $0xc0] sm:$0xff] %vm3938, %v3891
        %3964 = vst.msk [vmem:[#allocation5 + $0xc8] sm:$0xff] %vm3938, %v3893
        %3965 = vst.msk [vmem:[#allocation5 + $0xd0] sm:$0xff] %vm3938, %v3895
        %3966 = vst.msk [vmem:[#allocation5 + $0xd8] sm:$0xff] %vm3938, %v3897
        %3967 = vst.msk [vmem:[#allocation5 + $0xe0] sm:$0xff] %vm3938, %v3899
        %3968 = vst.msk [vmem:[#allocation5 + $0xe8] sm:$0xff] %vm3938, %v3901
        %3969 = vst.msk [vmem:[#allocation5 + $0xf0] sm:$0xff] %vm3938, %v3903
        %3970 = vst.msk [vmem:[#allocation5 + $0xf8] sm:$0xff] %vm3938, %v3905
        %v3971 = vld [vmem:[#allocation5] sm:$0xff]
        %v3972 = vld [vmem:[#allocation5 + $0x8] sm:$0xff]
        %v3973 = vld [vmem:[#allocation5 + $0x10] sm:$0xff]
        %v3974 = vld [vmem:[#allocation5 + $0x18] sm:$0xff]
        %v3975 = vld [vmem:[#allocation5 + $0x20] sm:$0xff]
        %v3976 = vld [vmem:[#allocation5 + $0x28] sm:$0xff]
        %v3977 = vld [vmem:[#allocation5 + $0x30] sm:$0xff]
        %v3978 = vld [vmem:[#allocation5 + $0x38] sm:$0xff]
        %v3979 = vld [vmem:[#allocation5 + $0x40] sm:$0xff]
        %v3980 = vld [vmem:[#allocation5 + $0x48] sm:$0xff]
        %v3981 = vld [vmem:[#allocation5 + $0x50] sm:$0xff]
        %v3982 = vld [vmem:[#allocation5 + $0x58] sm:$0xff]
        %v3983 = vld [vmem:[#allocation5 + $0x60] sm:$0xff]
        %v3984 = vld [vmem:[#allocation5 + $0x68] sm:$0xff]
        %v3985 = vld [vmem:[#allocation5 + $0x70] sm:$0xff]
        %v3986 = vld [vmem:[#allocation5 + $0x78] sm:$0xff]
        %v3987 = vld [vmem:[#allocation5 + $0x80] sm:$0xff]
        %v3988 = vld [vmem:[#allocation5 + $0x88] sm:$0xff]
        %v3989 = vld [vmem:[#allocation5 + $0x90] sm:$0xff]
        %v3990 = vld [vmem:[#allocation5 + $0x98] sm:$0xff]
        %v3991 = vld [vmem:[#allocation5 + $0xa0] sm:$0xff]
        %v3992 = vld [vmem:[#allocation5 + $0xa8] sm:$0xff]
        %v3993 = vld [vmem:[#allocation5 + $0xb0] sm:$0xff]
        %v3994 = vld [vmem:[#allocation5 + $0xb8] sm:$0xff]
        %v3995 = vld [vmem:[#allocation5 + $0xc0] sm:$0xff]
        %v3996 = vld [vmem:[#allocation5 + $0xc8] sm:$0xff]
        %v3997 = vld [vmem:[#allocation5 + $0xd0] sm:$0xff]
        %v3998 = vld [vmem:[#allocation5 + $0xd8] sm:$0xff]
        %v3999 = vld [vmem:[#allocation5 + $0xe0] sm:$0xff]
        %v4000 = vld [vmem:[#allocation5 + $0xe8] sm:$0xff]
        %v4001 = vld [vmem:[#allocation5 + $0xf0] sm:$0xff]
        %v4002 = vld [vmem:[#allocation5 + $0xf8] sm:$0xff]
        %v4003 = vpack.c.bf16 %v3972, %v3971
        %v4004 = vpack.c.bf16 %v3974, %v3973
        %v4005 = vpack.c.bf16 %v3976, %v3975
        %v4006 = vpack.c.bf16 %v3978, %v3977
        %v4007 = vpack.c.bf16 %v3980, %v3979
        %v4008 = vpack.c.bf16 %v3982, %v3981
        %v4009 = vpack.c.bf16 %v3984, %v3983
        %v4010 = vpack.c.bf16 %v3986, %v3985
        %v4011 = vpack.c.bf16 %v3988, %v3987
        %v4012 = vpack.c.bf16 %v3990, %v3989
        %v4013 = vpack.c.bf16 %v3992, %v3991
        %v4014 = vpack.c.bf16 %v3994, %v3993
        %v4015 = vpack.c.bf16 %v3996, %v3995
        %v4016 = vpack.c.bf16 %v3998, %v3997
        %v4017 = vpack.c.bf16 %v4000, %v3999
        %v4018 = vpack.c.bf16 %v4002, %v4001
        %v4019 = vld [vmem:[%s2] sm:$0xf]
        %v4020 = vld [vmem:[%s2 + $0x4] sm:$0xf]
        %v4021 = vld [vmem:[%s2 + $0x8] sm:$0xf]
        %v4022 = vld [vmem:[%s2 + $0xc] sm:$0xf]
        %v4023 = vld [vmem:[%s2 + $0x10] sm:$0xf]
        %v4024 = vld [vmem:[%s2 + $0x14] sm:$0xf]
        %v4025 = vld [vmem:[%s2 + $0x18] sm:$0xf]
        %v4026 = vld [vmem:[%s2 + $0x1c] sm:$0xf]
        %v4027 = vld [vmem:[%s2 + $0x20] sm:$0xf]
        %v4037 = vunpack.c.l.b16 %v4019
        %v4038 = vunpack.c.l.b16 %v4020
        %v4039 = vunpack.c.l.b16 %v4021
        %v4040 = vunpack.c.l.b16 %v4022
        %v4041 = vunpack.c.l.b16 %v4023
        %v4042 = vunpack.c.l.b16 %v4024
        %v4043 = vunpack.c.l.b16 %v4025
        %v4044 = vunpack.c.l.b16 %v4026
        %v4045 = vunpack.c.l.b16 %v4027
        %v4046 = vpack.c.b16 %v4038, %v4037
        %v4047 = vpack.c.b16 %v4040, %v4039
        %v4048 = vpack.c.b16 %v4042, %v4041
        %v4049 = vpack.c.b16 %v4044, %v4043
        %v4050 = vpack.c.b16 %v4045, %v4045
        %vm4055 = vcmask 588800
        %v4057 = vsel %vm4055, %v4003, 0
        %v4060 = vsel %vm4055, %v4004, 0
        %v4063 = vsel %vm4055, %v4005, 0
        %v4066 = vsel %vm4055, %v4006, 0
        %v4069 = vsel %vm4055, %v4007, 0
        %v4072 = vsel %vm4055, %v4008, 0
        %v4075 = vsel %vm4055, %v4009, 0
        %v4078 = vsel %vm4055, %v4010, 0
        %v4081 = vsel %vm4055, %v4011, 0
        %v4084 = vsel %vm4055, %v4012, 0
        %v4087 = vsel %vm4055, %v4013, 0
        %v4090 = vsel %vm4055, %v4014, 0
        %v4093 = vsel %vm4055, %v4015, 0
        %v4096 = vsel %vm4055, %v4016, 0
        %v4099 = vsel %vm4055, %v4017, 0
        %v4102 = vsel %vm4055, %v4018, 0
        %vm4104 = vcmask 1043456
        %v4106 = vsel %vm4104, %v4050, 0
        %4108 = vmatprep.subr.bf16.mxu0 0
        %4109 = vmatpush1.bf16.msra.mxu0 %v4046
        %4110 = vmatprep.subr.bf16.mxu0 0
        %4111 = vmatpush1.bf16.msra.mxu0 %v4047
        %4112 = vmatprep.subr.bf16.mxu0 0
        %4113 = vmatpush1.bf16.msra.mxu0 %v4048
        %4114 = vmatprep.subr.bf16.mxu0 0
        %4115 = vmatpush1.bf16.msra.mxu0 %v4049
        %4116 = vmatprep.subr.bf16.mxu0 0
        %4117 = vmatpush1.bf16.msra.mxu0 %v4106
        %4118 = vmatprep.subr.bf16.mxu0 0
        %4119 = vmatpush1.bf16.msra.mxu0 0
        %4120 = vmatprep.subr.bf16.mxu0 0
        %4121 = vmatpush1.bf16.msra.mxu0 0
        %4122 = vmatprep.subr.bf16.mxu0 0
        %4123 = vmatpush1.bf16.msra.mxu0 0
        %4124 = vmatprep.subr.bf16.mxu0 0
        %4125 = vmatpush1.bf16.msra.mxu0 0
        %4126 = vmatprep.subr.bf16.mxu0 0
        %4127 = vmatpush1.bf16.msra.mxu0 0
        %4128 = vmatprep.subr.bf16.mxu0 0
        %4129 = vmatpush1.bf16.msra.mxu0 0
        %4130 = vmatprep.subr.bf16.mxu0 0
        %4131 = vmatpush1.bf16.msra.mxu0 0
        %4132 = vmatprep.subr.bf16.mxu0 0
        %4133 = vmatpush1.bf16.msra.mxu0 0
        %4134 = vmatprep.subr.bf16.mxu0 0
        %4135 = vmatpush1.bf16.msra.mxu0 0
        %4136 = vmatprep.subr.bf16.mxu0 0
        %4137 = vmatpush1.bf16.msra.mxu0 0
        %4138 = vmatprep.subr.bf16.mxu0 0
        %4139 = vmatpush1.bf16.msra.mxu0 0
        %4140 = vmatprep.mubr.bf16.mxu0 0
        %4141 = vmatmul.mubr.bf16.gmra.mrb[0].mxu0 %v4057
        %v4142 = vpop.f32.mrb[0].mxu0
        %v4143 = vadd.f32 0.0, %v4142
        %v4144 = vpop.f32.mrb[0].mxu0
        %v4145 = vpop.f32.mrb[0].mxu0
        %v4146 = vadd.f32 0.0, %v4145
        %v4147 = vpop.f32.mrb[0].mxu0
        %4148 = vmatprep.mubr.bf16.mxu0 0
        %4149 = vmatmul.mubr.bf16.gmra.mrb[0].mxu0 %v4060
        %v4150 = vpop.f32.mrb[0].mxu0
        %v4151 = vadd.f32 0.0, %v4150
        %v4152 = vpop.f32.mrb[0].mxu0
        %v4153 = vpop.f32.mrb[0].mxu0
        %v4154 = vadd.f32 0.0, %v4153
        %v4155 = vpop.f32.mrb[0].mxu0
        %4156 = vmatprep.mubr.bf16.mxu0 0
        %4157 = vmatmul.mubr.bf16.gmra.mrb[0].mxu0 %v4063
        %v4158 = vpop.f32.mrb[0].mxu0
        %v4159 = vadd.f32 0.0, %v4158
        %v4160 = vpop.f32.mrb[0].mxu0
        %v4161 = vpop.f32.mrb[0].mxu0
        %v4162 = vadd.f32 0.0, %v4161
        %v4163 = vpop.f32.mrb[0].mxu0
        %4164 = vmatprep.mubr.bf16.mxu0 0
        %4165 = vmatmul.mubr.bf16.gmra.mrb[0].mxu0 %v4066
        %v4166 = vpop.f32.mrb[0].mxu0
        %v4167 = vadd.f32 0.0, %v4166
        %v4168 = vpop.f32.mrb[0].mxu0
        %v4169 = vpop.f32.mrb[0].mxu0
        %v4170 = vadd.f32 0.0, %v4169
        %v4171 = vpop.f32.mrb[0].mxu0
        %4172 = vmatprep.mubr.bf16.mxu0 0
        %4173 = vmatmul.mubr.bf16.gmra.mrb[0].mxu0 %v4069
        %v4174 = vpop.f32.mrb[0].mxu0
        %v4175 = vadd.f32 0.0, %v4174
        %v4176 = vpop.f32.mrb[0].mxu0
        %v4177 = vpop.f32.mrb[0].mxu0
        %v4178 = vadd.f32 0.0, %v4177
        %v4179 = vpop.f32.mrb[0].mxu0
        %4180 = vmatprep.mubr.bf16.mxu0 0
        %4181 = vmatmul.mubr.bf16.gmra.mrb[0].mxu0 %v4072
        %v4182 = vpop.f32.mrb[0].mxu0
        %v4183 = vadd.f32 0.0, %v4182
        %v4184 = vpop.f32.mrb[0].mxu0
        %v4185 = vpop.f32.mrb[0].mxu0
        %v4186 = vadd.f32 0.0, %v4185
        %v4187 = vpop.f32.mrb[0].mxu0
        %4188 = vmatprep.mubr.bf16.mxu0 0
        %4189 = vmatmul.mubr.bf16.gmra.mrb[0].mxu0 %v4075
        %v4190 = vpop.f32.mrb[0].mxu0
        %v4191 = vadd.f32 0.0, %v4190
        %v4192 = vpop.f32.mrb[0].mxu0
        %v4193 = vpop.f32.mrb[0].mxu0
        %v4194 = vadd.f32 0.0, %v4193
        %v4195 = vpop.f32.mrb[0].mxu0
        %4196 = vmatprep.mubr.bf16.mxu0 0
        %4197 = vmatmul.mubr.bf16.gmra.mrb[0].mxu0 %v4078
        %v4198 = vpop.f32.mrb[0].mxu0
        %v4199 = vadd.f32 0.0, %v4198
        %v4200 = vpop.f32.mrb[0].mxu0
        %v4201 = vpop.f32.mrb[0].mxu0
        %v4202 = vadd.f32 0.0, %v4201
        %v4203 = vpop.f32.mrb[0].mxu0
        %4204 = vmatprep.mubr.bf16.mxu0 0
        %4205 = vmatmul.mubr.bf16.gmra.mrb[0].mxu0 %v4081
        %v4206 = vpop.f32.mrb[0].mxu0
        %v4207 = vadd.f32 0.0, %v4206
        %v4208 = vpop.f32.mrb[0].mxu0
        %v4209 = vpop.f32.mrb[0].mxu0
        %v4210 = vadd.f32 0.0, %v4209
        %v4211 = vpop.f32.mrb[0].mxu0
        %4212 = vmatprep.mubr.bf16.mxu0 0
        %4213 = vmatmul.mubr.bf16.gmra.mrb[0].mxu0 %v4084
        %v4214 = vpop.f32.mrb[0].mxu0
        %v4215 = vadd.f32 0.0, %v4214
        %v4216 = vpop.f32.mrb[0].mxu0
        %v4217 = vpop.f32.mrb[0].mxu0
        %v4218 = vadd.f32 0.0, %v4217
        %v4219 = vpop.f32.mrb[0].mxu0
        %4220 = vmatprep.mubr.bf16.mxu0 0
        %4221 = vmatmul.mubr.bf16.gmra.mrb[0].mxu0 %v4087
        %v4222 = vpop.f32.mrb[0].mxu0
        %v4223 = vadd.f32 0.0, %v4222
        %v4224 = vpop.f32.mrb[0].mxu0
        %v4225 = vpop.f32.mrb[0].mxu0
        %v4226 = vadd.f32 0.0, %v4225
        %v4227 = vpop.f32.mrb[0].mxu0
        %4228 = vmatprep.mubr.bf16.mxu0 0
        %4229 = vmatmul.mubr.bf16.gmra.mrb[0].mxu0 %v4090
        %v4230 = vpop.f32.mrb[0].mxu0
        %v4231 = vadd.f32 0.0, %v4230
        %v4232 = vpop.f32.mrb[0].mxu0
        %v4233 = vpop.f32.mrb[0].mxu0
        %v4234 = vadd.f32 0.0, %v4233
        %v4235 = vpop.f32.mrb[0].mxu0
        %4236 = vmatprep.mubr.bf16.mxu0 0
        %4237 = vmatmul.mubr.bf16.gmra.mrb[0].mxu0 %v4093
        %v4238 = vpop.f32.mrb[0].mxu0
        %v4239 = vadd.f32 0.0, %v4238
        %v4240 = vpop.f32.mrb[0].mxu0
        %v4241 = vpop.f32.mrb[0].mxu0
        %v4242 = vadd.f32 0.0, %v4241
        %v4243 = vpop.f32.mrb[0].mxu0
        %4244 = vmatprep.mubr.bf16.mxu0 0
        %4245 = vmatmul.mubr.bf16.gmra.mrb[0].mxu0 %v4096
        %v4246 = vpop.f32.mrb[0].mxu0
        %v4247 = vadd.f32 0.0, %v4246
        %v4248 = vpop.f32.mrb[0].mxu0
        %v4249 = vpop.f32.mrb[0].mxu0
        %v4250 = vadd.f32 0.0, %v4249
        %v4251 = vpop.f32.mrb[0].mxu0
        %4252 = vmatprep.mubr.bf16.mxu0 0
        %4253 = vmatmul.mubr.bf16.gmra.mrb[0].mxu0 %v4099
        %v4254 = vpop.f32.mrb[0].mxu0
        %v4255 = vadd.f32 0.0, %v4254
        %v4256 = vpop.f32.mrb[0].mxu0
        %v4257 = vpop.f32.mrb[0].mxu0
        %v4258 = vadd.f32 0.0, %v4257
        %v4259 = vpop.f32.mrb[0].mxu0
        %4260 = vmatprep.mubr.bf16.mxu0 0
        %4261 = vmatmul.mubr.bf16.gmra.mrb[0].mxu0 %v4102
        %v4262 = vpop.f32.mrb[0].mxu0
        %v4263 = vadd.f32 0.0, %v4262
        %v4264 = vpop.f32.mrb[0].mxu0
        %v4265 = vpop.f32.mrb[0].mxu0
        %v4266 = vadd.f32 0.0, %v4265
        %v4267 = vpop.f32.mrb[0].mxu0
        %4268 = vdwg.mxu0
        %vm4269 = vcmp.ge.f32.partialorder %v4143, 2.0
        %vm4270 = vcmp.ge.f32.partialorder %v4146, 2.0
        %vm4271 = vcmp.ge.f32.partialorder %v4151, 2.0
        %vm4272 = vcmp.ge.f32.partialorder %v4154, 2.0
        %vm4273 = vcmp.ge.f32.partialorder %v4159, 2.0
        %vm4274 = vcmp.ge.f32.partialorder %v4162, 2.0
        %vm4275 = vcmp.ge.f32.partialorder %v4167, 2.0
        %vm4276 = vcmp.ge.f32.partialorder %v4170, 2.0
        %vm4277 = vcmp.ge.f32.partialorder %v4175, 2.0
        %vm4278 = vcmp.ge.f32.partialorder %v4178, 2.0
        %vm4279 = vcmp.ge.f32.partialorder %v4183, 2.0
        %vm4280 = vcmp.ge.f32.partialorder %v4186, 2.0
        %vm4281 = vcmp.ge.f32.partialorder %v4191, 2.0
        %vm4282 = vcmp.ge.f32.partialorder %v4194, 2.0
        %vm4283 = vcmp.ge.f32.partialorder %v4199, 2.0
        %vm4284 = vcmp.ge.f32.partialorder %v4202, 2.0
        %vm4285 = vcmp.ge.f32.partialorder %v4207, 2.0
        %vm4286 = vcmp.ge.f32.partialorder %v4210, 2.0
        %vm4287 = vcmp.ge.f32.partialorder %v4215, 2.0
        %vm4288 = vcmp.ge.f32.partialorder %v4218, 2.0
        %vm4289 = vcmp.ge.f32.partialorder %v4223, 2.0
        %vm4290 = vcmp.ge.f32.partialorder %v4226, 2.0
        %vm4291 = vcmp.ge.f32.partialorder %v4231, 2.0
        %vm4292 = vcmp.ge.f32.partialorder %v4234, 2.0
        %vm4293 = vcmp.ge.f32.partialorder %v4239, 2.0
        %vm4294 = vcmp.ge.f32.partialorder %v4242, 2.0
        %vm4295 = vcmp.ge.f32.partialorder %v4247, 2.0
        %vm4296 = vcmp.ge.f32.partialorder %v4250, 2.0
        %vm4297 = vcmp.ge.f32.partialorder %v4255, 2.0
        %vm4298 = vcmp.ge.f32.partialorder %v4258, 2.0
        %vm4299 = vcmp.ge.f32.partialorder %v4263, 2.0
        %vm4300 = vcmp.ge.f32.partialorder %v4266, 2.0
        %v4301 = vsel %vm4269, 1.0, 0.0
        %v4302 = vsel %vm4270, 1.0, 0.0
        %v4303 = vsel %vm4271, 1.0, 0.0
        %v4304 = vsel %vm4272, 1.0, 0.0
        %v4305 = vsel %vm4273, 1.0, 0.0
        %v4306 = vsel %vm4274, 1.0, 0.0
        %v4307 = vsel %vm4275, 1.0, 0.0
        %v4308 = vsel %vm4276, 1.0, 0.0
        %v4309 = vsel %vm4277, 1.0, 0.0
        %v4310 = vsel %vm4278, 1.0, 0.0
        %v4311 = vsel %vm4279, 1.0, 0.0
        %v4312 = vsel %vm4280, 1.0, 0.0
        %v4313 = vsel %vm4281, 1.0, 0.0
        %v4314 = vsel %vm4282, 1.0, 0.0
        %v4315 = vsel %vm4283, 1.0, 0.0
        %v4316 = vsel %vm4284, 1.0, 0.0
        %v4317 = vsel %vm4285, 1.0, 0.0
        %v4318 = vsel %vm4286, 1.0, 0.0
        %v4319 = vsel %vm4287, 1.0, 0.0
        %v4320 = vsel %vm4288, 1.0, 0.0
        %v4321 = vsel %vm4289, 1.0, 0.0
        %v4322 = vsel %vm4290, 1.0, 0.0
        %v4323 = vsel %vm4291, 1.0, 0.0
        %v4324 = vsel %vm4292, 1.0, 0.0
        %v4325 = vsel %vm4293, 1.0, 0.0
        %v4326 = vsel %vm4294, 1.0, 0.0
        %v4327 = vsel %vm4295, 1.0, 0.0
        %v4328 = vsel %vm4296, 1.0, 0.0
        %v4329 = vsel %vm4297, 1.0, 0.0
        %v4330 = vsel %vm4298, 1.0, 0.0
        %v4331 = vsel %vm4299, 1.0, 0.0
        %v4332 = vsel %vm4300, 1.0, 0.0
        %4333 = vst.msk [vmem:[%s2329 + $0x1] sm:$0xff] %vm2273, %v4301
        %4334 = vst.msk [vmem:[%s2329 + $0x9] sm:$0xff] %vm2273, %v4302
        %4335 = vst.msk [vmem:[%s2329 + $0x19] sm:$0xff] %vm2273, %v4303
        %4336 = vst.msk [vmem:[%s2329 + $0x21] sm:$0xff] %vm2273, %v4304
        %4337 = vst.msk [vmem:[%s2329 + $0x31] sm:$0xff] %vm2273, %v4305
        %4338 = vst.msk [vmem:[%s2329 + $0x39] sm:$0xff] %vm2273, %v4306
        %4339 = vst.msk [vmem:[%s2329 + $0x49] sm:$0xff] %vm2273, %v4307
        %4340 = vst.msk [vmem:[%s2329 + $0x51] sm:$0xff] %vm2273, %v4308
        %4341 = vst.msk [vmem:[%s2329 + $0x61] sm:$0xff] %vm2273, %v4309
        %4342 = vst.msk [vmem:[%s2329 + $0x69] sm:$0xff] %vm2273, %v4310
        %4343 = vst.msk [vmem:[%s2329 + $0x79] sm:$0xff] %vm2273, %v4311
        %4344 = vst.msk [vmem:[%s2329 + $0x81] sm:$0xff] %vm2273, %v4312
        %4345 = vst.msk [vmem:[%s2329 + $0x91] sm:$0xff] %vm2273, %v4313
        %4346 = vst.msk [vmem:[%s2329 + $0x99] sm:$0xff] %vm2273, %v4314
        %4347 = vst.msk [vmem:[%s2329 + $0xa9] sm:$0xff] %vm2273, %v4315
        %4348 = vst.msk [vmem:[%s2329 + $0xb1] sm:$0xff] %vm2273, %v4316
        %4349 = vst.msk [vmem:[%s2329 + $0xc1] sm:$0xff] %vm2273, %v4317
        %4350 = vst.msk [vmem:[%s2329 + $0xc9] sm:$0xff] %vm2273, %v4318
        %4351 = vst.msk [vmem:[%s2329 + $0xd9] sm:$0xff] %vm2273, %v4319
        %4352 = vst.msk [vmem:[%s2329 + $0xe1] sm:$0xff] %vm2273, %v4320
        %4353 = vst.msk [vmem:[%s2329 + $0xf1] sm:$0xff] %vm2273, %v4321
        %4354 = vst.msk [vmem:[%s2329 + $0xf9] sm:$0xff] %vm2273, %v4322
        %4355 = vst.msk [vmem:[%s2329 + $0x109] sm:$0xff] %vm2273, %v4323
        %4356 = vst.msk [vmem:[%s2329 + $0x111] sm:$0xff] %vm2273, %v4324
        %4357 = vst.msk [vmem:[%s2329 + $0x121] sm:$0xff] %vm2273, %v4325
        %4358 = vst.msk [vmem:[%s2329 + $0x129] sm:$0xff] %vm2273, %v4326
        %4359 = vst.msk [vmem:[%s2329 + $0x139] sm:$0xff] %vm2273, %v4327
        %4360 = vst.msk [vmem:[%s2329 + $0x141] sm:$0xff] %vm2273, %v4328
        %4361 = vst.msk [vmem:[%s2329 + $0x151] sm:$0xff] %vm2273, %v4329
        %4362 = vst.msk [vmem:[%s2329 + $0x159] sm:$0xff] %vm2273, %v4330
        %4363 = vst.msk [vmem:[%s2329 + $0x169] sm:$0xff] %vm2273, %v4331
        %4364 = vst.msk [vmem:[%s2329 + $0x171] sm:$0xff] %vm2273, %v4332
        %v4365 = vld [vmem:[#allocation3] sm:$0xff]
        %v4366 = vld [vmem:[#allocation3 + $0x8] sm:$0xff]
        %v4367 = vld [vmem:[#allocation3 + $0x18] sm:$0xff]
        %v4368 = vld [vmem:[#allocation3 + $0x20] sm:$0xff]
        %v4369 = vld [vmem:[#allocation3 + $0x30] sm:$0xff]
        %v4370 = vld [vmem:[#allocation3 + $0x38] sm:$0xff]
        %v4371 = vld [vmem:[#allocation3 + $0x48] sm:$0xff]
        %v4372 = vld [vmem:[#allocation3 + $0x50] sm:$0xff]
        %v4373 = vld [vmem:[#allocation3 + $0x60] sm:$0xff]
        %v4374 = vld [vmem:[#allocation3 + $0x68] sm:$0xff]
        %v4375 = vld [vmem:[#allocation3 + $0x78] sm:$0xff]
        %v4376 = vld [vmem:[#allocation3 + $0x80] sm:$0xff]
        %v4377 = vld [vmem:[#allocation3 + $0x90] sm:$0xff]
        %v4378 = vld [vmem:[#allocation3 + $0x98] sm:$0xff]
        %v4379 = vld [vmem:[#allocation3 + $0xa8] sm:$0xff]
        %v4380 = vld [vmem:[#allocation3 + $0xb0] sm:$0xff]
        %v4381 = vld [vmem:[#allocation3 + $0xc0] sm:$0xff]
        %v4382 = vld [vmem:[#allocation3 + $0xc8] sm:$0xff]
        %v4383 = vld [vmem:[#allocation3 + $0xd8] sm:$0xff]
        %v4384 = vld [vmem:[#allocation3 + $0xe0] sm:$0xff]
        %v4385 = vld [vmem:[#allocation3 + $0xf0] sm:$0xff]
        %v4386 = vld [vmem:[#allocation3 + $0xf8] sm:$0xff]
        %v4387 = vld [vmem:[#allocation3 + $0x108] sm:$0xff]
        %v4388 = vld [vmem:[#allocation3 + $0x110] sm:$0xff]
        %v4389 = vld [vmem:[#allocation3 + $0x120] sm:$0xff]
        %v4390 = vld [vmem:[#allocation3 + $0x128] sm:$0xff]
        %v4391 = vld [vmem:[#allocation3 + $0x138] sm:$0xff]
        %v4392 = vld [vmem:[#allocation3 + $0x140] sm:$0xff]
        %v4393 = vld [vmem:[#allocation3 + $0x150] sm:$0xff]
        %v4394 = vld [vmem:[#allocation3 + $0x158] sm:$0xff]
        %v4395 = vld [vmem:[#allocation3 + $0x168] sm:$0xff]
        %v4396 = vld [vmem:[#allocation3 + $0x170] sm:$0xff]
        %4397 = vst.msk [vmem:[#allocation5] sm:$0xff] %vm2273, %v4365
        %4398 = vst.msk [vmem:[#allocation5 + $0x8] sm:$0xff] %vm2273, %v4366
        %4399 = vst.msk [vmem:[#allocation5 + $0x10] sm:$0xff] %vm2273, %v4367
        %4400 = vst.msk [vmem:[#allocation5 + $0x18] sm:$0xff] %vm2273, %v4368
        %4401 = vst.msk [vmem:[#allocation5 + $0x20] sm:$0xff] %vm2273, %v4369
        %4402 = vst.msk [vmem:[#allocation5 + $0x28] sm:$0xff] %vm2273, %v4370
        %4403 = vst.msk [vmem:[#allocation5 + $0x30] sm:$0xff] %vm2273, %v4371
        %4404 = vst.msk [vmem:[#allocation5 + $0x38] sm:$0xff] %vm2273, %v4372
        %4405 = vst.msk [vmem:[#allocation5 + $0x40] sm:$0xff] %vm2273, %v4373
        %4406 = vst.msk [vmem:[#allocation5 + $0x48] sm:$0xff] %vm2273, %v4374
        %4407 = vst.msk [vmem:[#allocation5 + $0x50] sm:$0xff] %vm2273, %v4375
        %4408 = vst.msk [vmem:[#allocation5 + $0x58] sm:$0xff] %vm2273, %v4376
        %4409 = vst.msk [vmem:[#allocation5 + $0x60] sm:$0xff] %vm2273, %v4377
        %4410 = vst.msk [vmem:[#allocation5 + $0x68] sm:$0xff] %vm2273, %v4378
        %4411 = vst.msk [vmem:[#allocation5 + $0x70] sm:$0xff] %vm2273, %v4379
        %4412 = vst.msk [vmem:[#allocation5 + $0x78] sm:$0xff] %vm2273, %v4380
        %4413 = vst.msk [vmem:[#allocation5 + $0x80] sm:$0xff] %vm2273, %v4381
        %4414 = vst.msk [vmem:[#allocation5 + $0x88] sm:$0xff] %vm2273, %v4382
        %4415 = vst.msk [vmem:[#allocation5 + $0x90] sm:$0xff] %vm2273, %v4383
        %4416 = vst.msk [vmem:[#allocation5 + $0x98] sm:$0xff] %vm2273, %v4384
        %4417 = vst.msk [vmem:[#allocation5 + $0xa0] sm:$0xff] %vm2273, %v4385
        %4418 = vst.msk [vmem:[#allocation5 + $0xa8] sm:$0xff] %vm2273, %v4386
        %4419 = vst.msk [vmem:[#allocation5 + $0xb0] sm:$0xff] %vm2273, %v4387
        %4420 = vst.msk [vmem:[#allocation5 + $0xb8] sm:$0xff] %vm2273, %v4388
        %4421 = vst.msk [vmem:[#allocation5 + $0xc0] sm:$0xff] %vm2273, %v4389
        %4422 = vst.msk [vmem:[#allocation5 + $0xc8] sm:$0xff] %vm2273, %v4390
        %4423 = vst.msk [vmem:[#allocation5 + $0xd0] sm:$0xff] %vm2273, %v4391
        %4424 = vst.msk [vmem:[#allocation5 + $0xd8] sm:$0xff] %vm2273, %v4392
        %4425 = vst.msk [vmem:[#allocation5 + $0xe0] sm:$0xff] %vm2273, %v4393
        %4426 = vst.msk [vmem:[#allocation5 + $0xe8] sm:$0xff] %vm2273, %v4394
        %4427 = vst.msk [vmem:[#allocation5 + $0xf0] sm:$0xff] %vm2273, %v4395
        %4428 = vst.msk [vmem:[#allocation5 + $0xf8] sm:$0xff] %vm2273, %v4396
        %v4429 = vld [vmem:[#allocation3 + $0x1] sm:$0xff]
        %v4430 = vld [vmem:[#allocation3 + $0x9] sm:$0xff]
        %v4431 = vld [vmem:[#allocation3 + $0x19] sm:$0xff]
        %v4432 = vld [vmem:[#allocation3 + $0x21] sm:$0xff]
        %v4433 = vld [vmem:[#allocation3 + $0x31] sm:$0xff]
        %v4434 = vld [vmem:[#allocation3 + $0x39] sm:$0xff]
        %v4435 = vld [vmem:[#allocation3 + $0x49] sm:$0xff]
        %v4436 = vld [vmem:[#allocation3 + $0x51] sm:$0xff]
        %v4437 = vld [vmem:[#allocation3 + $0x61] sm:$0xff]
        %v4438 = vld [vmem:[#allocation3 + $0x69] sm:$0xff]
        %v4439 = vld [vmem:[#allocation3 + $0x79] sm:$0xff]
        %v4440 = vld [vmem:[#allocation3 + $0x81] sm:$0xff]
        %v4441 = vld [vmem:[#allocation3 + $0x91] sm:$0xff]
        %v4442 = vld [vmem:[#allocation3 + $0x99] sm:$0xff]
        %v4443 = vld [vmem:[#allocation3 + $0xa9] sm:$0xff]
        %v4444 = vld [vmem:[#allocation3 + $0xb1] sm:$0xff]
        %v4445 = vld [vmem:[#allocation3 + $0xc1] sm:$0xff]
        %v4446 = vld [vmem:[#allocation3 + $0xc9] sm:$0xff]
        %v4447 = vld [vmem:[#allocation3 + $0xd9] sm:$0xff]
        %v4448 = vld [vmem:[#allocation3 + $0xe1] sm:$0xff]
        %v4449 = vld [vmem:[#allocation3 + $0xf1] sm:$0xff]
        %v4450 = vld [vmem:[#allocation3 + $0xf9] sm:$0xff]
        %v4451 = vld [vmem:[#allocation3 + $0x109] sm:$0xff]
        %v4452 = vld [vmem:[#allocation3 + $0x111] sm:$0xff]
        %v4453 = vld [vmem:[#allocation3 + $0x121] sm:$0xff]
        %v4454 = vld [vmem:[#allocation3 + $0x129] sm:$0xff]
        %v4455 = vld [vmem:[#allocation3 + $0x139] sm:$0xff]
        %v4456 = vld [vmem:[#allocation3 + $0x141] sm:$0xff]
        %v4457 = vld [vmem:[#allocation3 + $0x151] sm:$0xff]
        %v4458 = vld [vmem:[#allocation3 + $0x159] sm:$0xff]
        %v4459 = vld [vmem:[#allocation3 + $0x169] sm:$0xff]
        %v4460 = vld [vmem:[#allocation3 + $0x171] sm:$0xff]
        %4493 = vrot.lane.b32.xlu0 %v4429, 8
        %v4494 = vpop.permute.xlu0 %4493
        %4495 = vrot.lane.b32.xlu0 %v4430, 8
        %v4496 = vpop.permute.xlu0 %4495
        %4497 = vrot.lane.b32.xlu0 %v4431, 8
        %v4498 = vpop.permute.xlu0 %4497
        %4499 = vrot.lane.b32.xlu0 %v4432, 8
        %v4500 = vpop.permute.xlu0 %4499
        %4501 = vrot.lane.b32.xlu0 %v4433, 8
        %v4502 = vpop.permute.xlu0 %4501
        %4503 = vrot.lane.b32.xlu0 %v4434, 8
        %v4504 = vpop.permute.xlu0 %4503
        %4505 = vrot.lane.b32.xlu0 %v4435, 8
        %v4506 = vpop.permute.xlu0 %4505
        %4507 = vrot.lane.b32.xlu0 %v4436, 8
        %v4508 = vpop.permute.xlu0 %4507
        %4509 = vrot.lane.b32.xlu0 %v4437, 8
        %v4510 = vpop.permute.xlu0 %4509
        %4511 = vrot.lane.b32.xlu0 %v4438, 8
        %v4512 = vpop.permute.xlu0 %4511
        %4513 = vrot.lane.b32.xlu0 %v4439, 8
        %v4514 = vpop.permute.xlu0 %4513
        %4515 = vrot.lane.b32.xlu0 %v4440, 8
        %v4516 = vpop.permute.xlu0 %4515
        %4517 = vrot.lane.b32.xlu0 %v4441, 8
        %v4518 = vpop.permute.xlu0 %4517
        %4519 = vrot.lane.b32.xlu0 %v4442, 8
        %v4520 = vpop.permute.xlu0 %4519
        %4521 = vrot.lane.b32.xlu0 %v4443, 8
        %v4522 = vpop.permute.xlu0 %4521
        %4523 = vrot.lane.b32.xlu0 %v4444, 8
        %v4524 = vpop.permute.xlu0 %4523
        %4525 = vrot.lane.b32.xlu0 %v4445, 8
        %v4526 = vpop.permute.xlu0 %4525
        %4527 = vrot.lane.b32.xlu0 %v4446, 8
        %v4528 = vpop.permute.xlu0 %4527
        %4529 = vrot.lane.b32.xlu0 %v4447, 8
        %v4530 = vpop.permute.xlu0 %4529
        %4531 = vrot.lane.b32.xlu0 %v4448, 8
        %v4532 = vpop.permute.xlu0 %4531
        %4533 = vrot.lane.b32.xlu0 %v4449, 8
        %v4534 = vpop.permute.xlu0 %4533
        %4535 = vrot.lane.b32.xlu0 %v4450, 8
        %v4536 = vpop.permute.xlu0 %4535
        %4537 = vrot.lane.b32.xlu0 %v4451, 8
        %v4538 = vpop.permute.xlu0 %4537
        %4539 = vrot.lane.b32.xlu0 %v4452, 8
        %v4540 = vpop.permute.xlu0 %4539
        %4541 = vrot.lane.b32.xlu0 %v4453, 8
        %v4542 = vpop.permute.xlu0 %4541
        %4543 = vrot.lane.b32.xlu0 %v4454, 8
        %v4544 = vpop.permute.xlu0 %4543
        %4545 = vrot.lane.b32.xlu0 %v4455, 8
        %v4546 = vpop.permute.xlu0 %4545
        %4547 = vrot.lane.b32.xlu0 %v4456, 8
        %v4548 = vpop.permute.xlu0 %4547
        %4549 = vrot.lane.b32.xlu0 %v4457, 8
        %v4550 = vpop.permute.xlu0 %4549
        %4551 = vrot.lane.b32.xlu0 %v4458, 8
        %v4552 = vpop.permute.xlu0 %4551
        %4553 = vrot.lane.b32.xlu0 %v4459, 8
        %v4554 = vpop.permute.xlu0 %4553
        %4555 = vrot.lane.b32.xlu0 %v4460, 8
        %v4556 = vpop.permute.xlu0 %4555
        %4589 = vst.msk [vmem:[#allocation5] sm:$0xff] %vm2586, %v4494
        %4590 = vst.msk [vmem:[#allocation5 + $0x8] sm:$0xff] %vm2586, %v4496
        %4591 = vst.msk [vmem:[#allocation5 + $0x10] sm:$0xff] %vm2586, %v4498
        %4592 = vst.msk [vmem:[#allocation5 + $0x18] sm:$0xff] %vm2586, %v4500
        %4593 = vst.msk [vmem:[#allocation5 + $0x20] sm:$0xff] %vm2586, %v4502
        %4594 = vst.msk [vmem:[#allocation5 + $0x28] sm:$0xff] %vm2586, %v4504
        %4595 = vst.msk [vmem:[#allocation5 + $0x30] sm:$0xff] %vm2586, %v4506
        %4596 = vst.msk [vmem:[#allocation5 + $0x38] sm:$0xff] %vm2586, %v4508
        %4597 = vst.msk [vmem:[#allocation5 + $0x40] sm:$0xff] %vm2586, %v4510
        %4598 = vst.msk [vmem:[#allocation5 + $0x48] sm:$0xff] %vm2586, %v4512
        %4599 = vst.msk [vmem:[#allocation5 + $0x50] sm:$0xff] %vm2586, %v4514
        %4600 = vst.msk [vmem:[#allocation5 + $0x58] sm:$0xff] %vm2586, %v4516
        %4601 = vst.msk [vmem:[#allocation5 + $0x60] sm:$0xff] %vm2586, %v4518
        %4602 = vst.msk [vmem:[#allocation5 + $0x68] sm:$0xff] %vm2586, %v4520
        %4603 = vst.msk [vmem:[#allocation5 + $0x70] sm:$0xff] %vm2586, %v4522
        %4604 = vst.msk [vmem:[#allocation5 + $0x78] sm:$0xff] %vm2586, %v4524
        %4605 = vst.msk [vmem:[#allocation5 + $0x80] sm:$0xff] %vm2586, %v4526
        %4606 = vst.msk [vmem:[#allocation5 + $0x88] sm:$0xff] %vm2586, %v4528
        %4607 = vst.msk [vmem:[#allocation5 + $0x90] sm:$0xff] %vm2586, %v4530
        %4608 = vst.msk [vmem:[#allocation5 + $0x98] sm:$0xff] %vm2586, %v4532
        %4609 = vst.msk [vmem:[#allocation5 + $0xa0] sm:$0xff] %vm2586, %v4534
        %4610 = vst.msk [vmem:[#allocation5 + $0xa8] sm:$0xff] %vm2586, %v4536
        %4611 = vst.msk [vmem:[#allocation5 + $0xb0] sm:$0xff] %vm2586, %v4538
        %4612 = vst.msk [vmem:[#allocation5 + $0xb8] sm:$0xff] %vm2586, %v4540
        %4613 = vst.msk [vmem:[#allocation5 + $0xc0] sm:$0xff] %vm2586, %v4542
        %4614 = vst.msk [vmem:[#allocation5 + $0xc8] sm:$0xff] %vm2586, %v4544
        %4615 = vst.msk [vmem:[#allocation5 + $0xd0] sm:$0xff] %vm2586, %v4546
        %4616 = vst.msk [vmem:[#allocation5 + $0xd8] sm:$0xff] %vm2586, %v4548
        %4617 = vst.msk [vmem:[#allocation5 + $0xe0] sm:$0xff] %vm2586, %v4550
        %4618 = vst.msk [vmem:[#allocation5 + $0xe8] sm:$0xff] %vm2586, %v4552
        %4619 = vst.msk [vmem:[#allocation5 + $0xf0] sm:$0xff] %vm2586, %v4554
        %4620 = vst.msk [vmem:[#allocation5 + $0xf8] sm:$0xff] %vm2586, %v4556
        %v4621 = vld [vmem:[#allocation3 + $0x2] sm:$0xff]
        %v4622 = vld [vmem:[#allocation3 + $0xa] sm:$0xff]
        %v4623 = vld [vmem:[#allocation3 + $0x1a] sm:$0xff]
        %v4624 = vld [vmem:[#allocation3 + $0x22] sm:$0xff]
        %v4625 = vld [vmem:[#allocation3 + $0x32] sm:$0xff]
        %v4626 = vld [vmem:[#allocation3 + $0x3a] sm:$0xff]
        %v4627 = vld [vmem:[#allocation3 + $0x4a] sm:$0xff]
        %v4628 = vld [vmem:[#allocation3 + $0x52] sm:$0xff]
        %v4629 = vld [vmem:[#allocation3 + $0x62] sm:$0xff]
        %v4630 = vld [vmem:[#allocation3 + $0x6a] sm:$0xff]
        %v4631 = vld [vmem:[#allocation3 + $0x7a] sm:$0xff]
        %v4632 = vld [vmem:[#allocation3 + $0x82] sm:$0xff]
        %v4633 = vld [vmem:[#allocation3 + $0x92] sm:$0xff]
        %v4634 = vld [vmem:[#allocation3 + $0x9a] sm:$0xff]
        %v4635 = vld [vmem:[#allocation3 + $0xaa] sm:$0xff]
        %v4636 = vld [vmem:[#allocation3 + $0xb2] sm:$0xff]
        %v4637 = vld [vmem:[#allocation3 + $0xc2] sm:$0xff]
        %v4638 = vld [vmem:[#allocation3 + $0xca] sm:$0xff]
        %v4639 = vld [vmem:[#allocation3 + $0xda] sm:$0xff]
        %v4640 = vld [vmem:[#allocation3 + $0xe2] sm:$0xff]
        %v4641 = vld [vmem:[#allocation3 + $0xf2] sm:$0xff]
        %v4642 = vld [vmem:[#allocation3 + $0xfa] sm:$0xff]
        %v4643 = vld [vmem:[#allocation3 + $0x10a] sm:$0xff]
        %v4644 = vld [vmem:[#allocation3 + $0x112] sm:$0xff]
        %v4645 = vld [vmem:[#allocation3 + $0x122] sm:$0xff]
        %v4646 = vld [vmem:[#allocation3 + $0x12a] sm:$0xff]
        %v4647 = vld [vmem:[#allocation3 + $0x13a] sm:$0xff]
        %v4648 = vld [vmem:[#allocation3 + $0x142] sm:$0xff]
        %v4649 = vld [vmem:[#allocation3 + $0x152] sm:$0xff]
        %v4650 = vld [vmem:[#allocation3 + $0x15a] sm:$0xff]
        %v4651 = vld [vmem:[#allocation3 + $0x16a] sm:$0xff]
        %v4652 = vld [vmem:[#allocation3 + $0x172] sm:$0xff]
        %4685 = vrot.lane.b32.xlu0 %v4621, 16
        %v4686 = vpop.permute.xlu0 %4685
        %4687 = vrot.lane.b32.xlu0 %v4622, 16
        %v4688 = vpop.permute.xlu0 %4687
        %4689 = vrot.lane.b32.xlu0 %v4623, 16
        %v4690 = vpop.permute.xlu0 %4689
        %4691 = vrot.lane.b32.xlu0 %v4624, 16
        %v4692 = vpop.permute.xlu0 %4691
        %4693 = vrot.lane.b32.xlu0 %v4625, 16
        %v4694 = vpop.permute.xlu0 %4693
        %4695 = vrot.lane.b32.xlu0 %v4626, 16
        %v4696 = vpop.permute.xlu0 %4695
        %4697 = vrot.lane.b32.xlu0 %v4627, 16
        %v4698 = vpop.permute.xlu0 %4697
        %4699 = vrot.lane.b32.xlu0 %v4628, 16
        %v4700 = vpop.permute.xlu0 %4699
        %4701 = vrot.lane.b32.xlu0 %v4629, 16
        %v4702 = vpop.permute.xlu0 %4701
        %4703 = vrot.lane.b32.xlu0 %v4630, 16
        %v4704 = vpop.permute.xlu0 %4703
        %4705 = vrot.lane.b32.xlu0 %v4631, 16
        %v4706 = vpop.permute.xlu0 %4705
        %4707 = vrot.lane.b32.xlu0 %v4632, 16
        %v4708 = vpop.permute.xlu0 %4707
        %4709 = vrot.lane.b32.xlu0 %v4633, 16
        %v4710 = vpop.permute.xlu0 %4709
        %4711 = vrot.lane.b32.xlu0 %v4634, 16
        %v4712 = vpop.permute.xlu0 %4711
        %4713 = vrot.lane.b32.xlu0 %v4635, 16
        %v4714 = vpop.permute.xlu0 %4713
        %4715 = vrot.lane.b32.xlu0 %v4636, 16
        %v4716 = vpop.permute.xlu0 %4715
        %4717 = vrot.lane.b32.xlu0 %v4637, 16
        %v4718 = vpop.permute.xlu0 %4717
        %4719 = vrot.lane.b32.xlu0 %v4638, 16
        %v4720 = vpop.permute.xlu0 %4719
        %4721 = vrot.lane.b32.xlu0 %v4639, 16
        %v4722 = vpop.permute.xlu0 %4721
        %4723 = vrot.lane.b32.xlu0 %v4640, 16
        %v4724 = vpop.permute.xlu0 %4723
        %4725 = vrot.lane.b32.xlu0 %v4641, 16
        %v4726 = vpop.permute.xlu0 %4725
        %4727 = vrot.lane.b32.xlu0 %v4642, 16
        %v4728 = vpop.permute.xlu0 %4727
        %4729 = vrot.lane.b32.xlu0 %v4643, 16
        %v4730 = vpop.permute.xlu0 %4729
        %4731 = vrot.lane.b32.xlu0 %v4644, 16
        %v4732 = vpop.permute.xlu0 %4731
        %4733 = vrot.lane.b32.xlu0 %v4645, 16
        %v4734 = vpop.permute.xlu0 %4733
        %4735 = vrot.lane.b32.xlu0 %v4646, 16
        %v4736 = vpop.permute.xlu0 %4735
        %4737 = vrot.lane.b32.xlu0 %v4647, 16
        %v4738 = vpop.permute.xlu0 %4737
        %4739 = vrot.lane.b32.xlu0 %v4648, 16
        %v4740 = vpop.permute.xlu0 %4739
        %4741 = vrot.lane.b32.xlu0 %v4649, 16
        %v4742 = vpop.permute.xlu0 %4741
        %4743 = vrot.lane.b32.xlu0 %v4650, 16
        %v4744 = vpop.permute.xlu0 %4743
        %4745 = vrot.lane.b32.xlu0 %v4651, 16
        %v4746 = vpop.permute.xlu0 %4745
        %4747 = vrot.lane.b32.xlu0 %v4652, 16
        %v4748 = vpop.permute.xlu0 %4747
        %4781 = vst.msk [vmem:[#allocation5] sm:$0xff] %vm2779, %v4686
        %4782 = vst.msk [vmem:[#allocation5 + $0x8] sm:$0xff] %vm2779, %v4688
        %4783 = vst.msk [vmem:[#allocation5 + $0x10] sm:$0xff] %vm2779, %v4690
        %4784 = vst.msk [vmem:[#allocation5 + $0x18] sm:$0xff] %vm2779, %v4692
        %4785 = vst.msk [vmem:[#allocation5 + $0x20] sm:$0xff] %vm2779, %v4694
        %4786 = vst.msk [vmem:[#allocation5 + $0x28] sm:$0xff] %vm2779, %v4696
        %4787 = vst.msk [vmem:[#allocation5 + $0x30] sm:$0xff] %vm2779, %v4698
        %4788 = vst.msk [vmem:[#allocation5 + $0x38] sm:$0xff] %vm2779, %v4700
        %4789 = vst.msk [vmem:[#allocation5 + $0x40] sm:$0xff] %vm2779, %v4702
        %4790 = vst.msk [vmem:[#allocation5 + $0x48] sm:$0xff] %vm2779, %v4704
        %4791 = vst.msk [vmem:[#allocation5 + $0x50] sm:$0xff] %vm2779, %v4706
        %4792 = vst.msk [vmem:[#allocation5 + $0x58] sm:$0xff] %vm2779, %v4708
        %4793 = vst.msk [vmem:[#allocation5 + $0x60] sm:$0xff] %vm2779, %v4710
        %4794 = vst.msk [vmem:[#allocation5 + $0x68] sm:$0xff] %vm2779, %v4712
        %4795 = vst.msk [vmem:[#allocation5 + $0x70] sm:$0xff] %vm2779, %v4714
        %4796 = vst.msk [vmem:[#allocation5 + $0x78] sm:$0xff] %vm2779, %v4716
        %4797 = vst.msk [vmem:[#allocation5 + $0x80] sm:$0xff] %vm2779, %v4718
        %4798 = vst.msk [vmem:[#allocation5 + $0x88] sm:$0xff] %vm2779, %v4720
        %4799 = vst.msk [vmem:[#allocation5 + $0x90] sm:$0xff] %vm2779, %v4722
        %4800 = vst.msk [vmem:[#allocation5 + $0x98] sm:$0xff] %vm2779, %v4724
        %4801 = vst.msk [vmem:[#allocation5 + $0xa0] sm:$0xff] %vm2779, %v4726
        %4802 = vst.msk [vmem:[#allocation5 + $0xa8] sm:$0xff] %vm2779, %v4728
        %4803 = vst.msk [vmem:[#allocation5 + $0xb0] sm:$0xff] %vm2779, %v4730
        %4804 = vst.msk [vmem:[#allocation5 + $0xb8] sm:$0xff] %vm2779, %v4732
        %4805 = vst.msk [vmem:[#allocation5 + $0xc0] sm:$0xff] %vm2779, %v4734
        %4806 = vst.msk [vmem:[#allocation5 + $0xc8] sm:$0xff] %vm2779, %v4736
        %4807 = vst.msk [vmem:[#allocation5 + $0xd0] sm:$0xff] %vm2779, %v4738
        %4808 = vst.msk [vmem:[#allocation5 + $0xd8] sm:$0xff] %vm2779, %v4740
        %4809 = vst.msk [vmem:[#allocation5 + $0xe0] sm:$0xff] %vm2779, %v4742
        %4810 = vst.msk [vmem:[#allocation5 + $0xe8] sm:$0xff] %vm2779, %v4744
        %4811 = vst.msk [vmem:[#allocation5 + $0xf0] sm:$0xff] %vm2779, %v4746
        %4812 = vst.msk [vmem:[#allocation5 + $0xf8] sm:$0xff] %vm2779, %v4748
        %v4813 = vld [vmem:[%s2329] sm:$0xff]
        %v4814 = vld [vmem:[%s2329 + $0x8] sm:$0xff]
        %v4815 = vld [vmem:[%s2329 + $0x18] sm:$0xff]
        %v4816 = vld [vmem:[%s2329 + $0x20] sm:$0xff]
        %v4817 = vld [vmem:[%s2329 + $0x30] sm:$0xff]
        %v4818 = vld [vmem:[%s2329 + $0x38] sm:$0xff]
        %v4819 = vld [vmem:[%s2329 + $0x48] sm:$0xff]
        %v4820 = vld [vmem:[%s2329 + $0x50] sm:$0xff]
        %v4821 = vld [vmem:[%s2329 + $0x60] sm:$0xff]
        %v4822 = vld [vmem:[%s2329 + $0x68] sm:$0xff]
        %v4823 = vld [vmem:[%s2329 + $0x78] sm:$0xff]
        %v4824 = vld [vmem:[%s2329 + $0x80] sm:$0xff]
        %v4825 = vld [vmem:[%s2329 + $0x90] sm:$0xff]
        %v4826 = vld [vmem:[%s2329 + $0x98] sm:$0xff]
        %v4827 = vld [vmem:[%s2329 + $0xa8] sm:$0xff]
        %v4828 = vld [vmem:[%s2329 + $0xb0] sm:$0xff]
        %v4829 = vld [vmem:[%s2329 + $0xc0] sm:$0xff]
        %v4830 = vld [vmem:[%s2329 + $0xc8] sm:$0xff]
        %v4831 = vld [vmem:[%s2329 + $0xd8] sm:$0xff]
        %v4832 = vld [vmem:[%s2329 + $0xe0] sm:$0xff]
        %v4833 = vld [vmem:[%s2329 + $0xf0] sm:$0xff]
        %v4834 = vld [vmem:[%s2329 + $0xf8] sm:$0xff]
        %v4835 = vld [vmem:[%s2329 + $0x108] sm:$0xff]
        %v4836 = vld [vmem:[%s2329 + $0x110] sm:$0xff]
        %v4837 = vld [vmem:[%s2329 + $0x120] sm:$0xff]
        %v4838 = vld [vmem:[%s2329 + $0x128] sm:$0xff]
        %v4839 = vld [vmem:[%s2329 + $0x138] sm:$0xff]
        %v4840 = vld [vmem:[%s2329 + $0x140] sm:$0xff]
        %v4841 = vld [vmem:[%s2329 + $0x150] sm:$0xff]
        %v4842 = vld [vmem:[%s2329 + $0x158] sm:$0xff]
        %v4843 = vld [vmem:[%s2329 + $0x168] sm:$0xff]
        %v4844 = vld [vmem:[%s2329 + $0x170] sm:$0xff]
        %4877 = vrot.lane.b32.xlu0 %v4813, 24
        %v4878 = vpop.permute.xlu0 %4877
        %4879 = vrot.lane.b32.xlu0 %v4814, 24
        %v4880 = vpop.permute.xlu0 %4879
        %4881 = vrot.lane.b32.xlu0 %v4815, 24
        %v4882 = vpop.permute.xlu0 %4881
        %4883 = vrot.lane.b32.xlu0 %v4816, 24
        %v4884 = vpop.permute.xlu0 %4883
        %4885 = vrot.lane.b32.xlu0 %v4817, 24
        %v4886 = vpop.permute.xlu0 %4885
        %4887 = vrot.lane.b32.xlu0 %v4818, 24
        %v4888 = vpop.permute.xlu0 %4887
        %4889 = vrot.lane.b32.xlu0 %v4819, 24
        %v4890 = vpop.permute.xlu0 %4889
        %4891 = vrot.lane.b32.xlu0 %v4820, 24
        %v4892 = vpop.permute.xlu0 %4891
        %4893 = vrot.lane.b32.xlu0 %v4821, 24
        %v4894 = vpop.permute.xlu0 %4893
        %4895 = vrot.lane.b32.xlu0 %v4822, 24
        %v4896 = vpop.permute.xlu0 %4895
        %4897 = vrot.lane.b32.xlu0 %v4823, 24
        %v4898 = vpop.permute.xlu0 %4897
        %4899 = vrot.lane.b32.xlu0 %v4824, 24
        %v4900 = vpop.permute.xlu0 %4899
        %4901 = vrot.lane.b32.xlu0 %v4825, 24
        %v4902 = vpop.permute.xlu0 %4901
        %4903 = vrot.lane.b32.xlu0 %v4826, 24
        %v4904 = vpop.permute.xlu0 %4903
        %4905 = vrot.lane.b32.xlu0 %v4827, 24
        %v4906 = vpop.permute.xlu0 %4905
        %4907 = vrot.lane.b32.xlu0 %v4828, 24
        %v4908 = vpop.permute.xlu0 %4907
        %4909 = vrot.lane.b32.xlu0 %v4829, 24
        %v4910 = vpop.permute.xlu0 %4909
        %4911 = vrot.lane.b32.xlu0 %v4830, 24
        %v4912 = vpop.permute.xlu0 %4911
        %4913 = vrot.lane.b32.xlu0 %v4831, 24
        %v4914 = vpop.permute.xlu0 %4913
        %4915 = vrot.lane.b32.xlu0 %v4832, 24
        %v4916 = vpop.permute.xlu0 %4915
        %4917 = vrot.lane.b32.xlu0 %v4833, 24
        %v4918 = vpop.permute.xlu0 %4917
        %4919 = vrot.lane.b32.xlu0 %v4834, 24
        %v4920 = vpop.permute.xlu0 %4919
        %4921 = vrot.lane.b32.xlu0 %v4835, 24
        %v4922 = vpop.permute.xlu0 %4921
        %4923 = vrot.lane.b32.xlu0 %v4836, 24
        %v4924 = vpop.permute.xlu0 %4923
        %4925 = vrot.lane.b32.xlu0 %v4837, 24
        %v4926 = vpop.permute.xlu0 %4925
        %4927 = vrot.lane.b32.xlu0 %v4838, 24
        %v4928 = vpop.permute.xlu0 %4927
        %4929 = vrot.lane.b32.xlu0 %v4839, 24
        %v4930 = vpop.permute.xlu0 %4929
        %4931 = vrot.lane.b32.xlu0 %v4840, 24
        %v4932 = vpop.permute.xlu0 %4931
        %4933 = vrot.lane.b32.xlu0 %v4841, 24
        %v4934 = vpop.permute.xlu0 %4933
        %4935 = vrot.lane.b32.xlu0 %v4842, 24
        %v4936 = vpop.permute.xlu0 %4935
        %4937 = vrot.lane.b32.xlu0 %v4843, 24
        %v4938 = vpop.permute.xlu0 %4937
        %4939 = vrot.lane.b32.xlu0 %v4844, 24
        %v4940 = vpop.permute.xlu0 %4939
        %4973 = vst.msk [vmem:[#allocation5] sm:$0xff] %vm2972, %v4878
        %4974 = vst.msk [vmem:[#allocation5 + $0x8] sm:$0xff] %vm2972, %v4880
        %4975 = vst.msk [vmem:[#allocation5 + $0x10] sm:$0xff] %vm2972, %v4882
        %4976 = vst.msk [vmem:[#allocation5 + $0x18] sm:$0xff] %vm2972, %v4884
        %4977 = vst.msk [vmem:[#allocation5 + $0x20] sm:$0xff] %vm2972, %v4886
        %4978 = vst.msk [vmem:[#allocation5 + $0x28] sm:$0xff] %vm2972, %v4888
        %4979 = vst.msk [vmem:[#allocation5 + $0x30] sm:$0xff] %vm2972, %v4890
        %4980 = vst.msk [vmem:[#allocation5 + $0x38] sm:$0xff] %vm2972, %v4892
        %4981 = vst.msk [vmem:[#allocation5 + $0x40] sm:$0xff] %vm2972, %v4894
        %4982 = vst.msk [vmem:[#allocation5 + $0x48] sm:$0xff] %vm2972, %v4896
        %4983 = vst.msk [vmem:[#allocation5 + $0x50] sm:$0xff] %vm2972, %v4898
        %4984 = vst.msk [vmem:[#allocation5 + $0x58] sm:$0xff] %vm2972, %v4900
        %4985 = vst.msk [vmem:[#allocation5 + $0x60] sm:$0xff] %vm2972, %v4902
        %4986 = vst.msk [vmem:[#allocation5 + $0x68] sm:$0xff] %vm2972, %v4904
        %4987 = vst.msk [vmem:[#allocation5 + $0x70] sm:$0xff] %vm2972, %v4906
        %4988 = vst.msk [vmem:[#allocation5 + $0x78] sm:$0xff] %vm2972, %v4908
        %4989 = vst.msk [vmem:[#allocation5 + $0x80] sm:$0xff] %vm2972, %v4910
        %4990 = vst.msk [vmem:[#allocation5 + $0x88] sm:$0xff] %vm2972, %v4912
        %4991 = vst.msk [vmem:[#allocation5 + $0x90] sm:$0xff] %vm2972, %v4914
        %4992 = vst.msk [vmem:[#allocation5 + $0x98] sm:$0xff] %vm2972, %v4916
        %4993 = vst.msk [vmem:[#allocation5 + $0xa0] sm:$0xff] %vm2972, %v4918
        %4994 = vst.msk [vmem:[#allocation5 + $0xa8] sm:$0xff] %vm2972, %v4920
        %4995 = vst.msk [vmem:[#allocation5 + $0xb0] sm:$0xff] %vm2972, %v4922
        %4996 = vst.msk [vmem:[#allocation5 + $0xb8] sm:$0xff] %vm2972, %v4924
        %4997 = vst.msk [vmem:[#allocation5 + $0xc0] sm:$0xff] %vm2972, %v4926
        %4998 = vst.msk [vmem:[#allocation5 + $0xc8] sm:$0xff] %vm2972, %v4928
        %4999 = vst.msk [vmem:[#allocation5 + $0xd0] sm:$0xff] %vm2972, %v4930
        %5000 = vst.msk [vmem:[#allocation5 + $0xd8] sm:$0xff] %vm2972, %v4932
        %5001 = vst.msk [vmem:[#allocation5 + $0xe0] sm:$0xff] %vm2972, %v4934
        %5002 = vst.msk [vmem:[#allocation5 + $0xe8] sm:$0xff] %vm2972, %v4936
        %5003 = vst.msk [vmem:[#allocation5 + $0xf0] sm:$0xff] %vm2972, %v4938
        %5004 = vst.msk [vmem:[#allocation5 + $0xf8] sm:$0xff] %vm2972, %v4940
        %v5005 = vld [vmem:[%s2329 + $0x1] sm:$0xff]
        %v5006 = vld [vmem:[%s2329 + $0x9] sm:$0xff]
        %v5007 = vld [vmem:[%s2329 + $0x19] sm:$0xff]
        %v5008 = vld [vmem:[%s2329 + $0x21] sm:$0xff]
        %v5009 = vld [vmem:[%s2329 + $0x31] sm:$0xff]
        %v5010 = vld [vmem:[%s2329 + $0x39] sm:$0xff]
        %v5011 = vld [vmem:[%s2329 + $0x49] sm:$0xff]
        %v5012 = vld [vmem:[%s2329 + $0x51] sm:$0xff]
        %v5013 = vld [vmem:[%s2329 + $0x61] sm:$0xff]
        %v5014 = vld [vmem:[%s2329 + $0x69] sm:$0xff]
        %v5015 = vld [vmem:[%s2329 + $0x79] sm:$0xff]
        %v5016 = vld [vmem:[%s2329 + $0x81] sm:$0xff]
        %v5017 = vld [vmem:[%s2329 + $0x91] sm:$0xff]
        %v5018 = vld [vmem:[%s2329 + $0x99] sm:$0xff]
        %v5019 = vld [vmem:[%s2329 + $0xa9] sm:$0xff]
        %v5020 = vld [vmem:[%s2329 + $0xb1] sm:$0xff]
        %v5021 = vld [vmem:[%s2329 + $0xc1] sm:$0xff]
        %v5022 = vld [vmem:[%s2329 + $0xc9] sm:$0xff]
        %v5023 = vld [vmem:[%s2329 + $0xd9] sm:$0xff]
        %v5024 = vld [vmem:[%s2329 + $0xe1] sm:$0xff]
        %v5025 = vld [vmem:[%s2329 + $0xf1] sm:$0xff]
        %v5026 = vld [vmem:[%s2329 + $0xf9] sm:$0xff]
        %v5027 = vld [vmem:[%s2329 + $0x109] sm:$0xff]
        %v5028 = vld [vmem:[%s2329 + $0x111] sm:$0xff]
        %v5029 = vld [vmem:[%s2329 + $0x121] sm:$0xff]
        %v5030 = vld [vmem:[%s2329 + $0x129] sm:$0xff]
        %v5031 = vld [vmem:[%s2329 + $0x139] sm:$0xff]
        %v5032 = vld [vmem:[%s2329 + $0x141] sm:$0xff]
        %v5033 = vld [vmem:[%s2329 + $0x151] sm:$0xff]
        %v5034 = vld [vmem:[%s2329 + $0x159] sm:$0xff]
        %v5035 = vld [vmem:[%s2329 + $0x169] sm:$0xff]
        %v5036 = vld [vmem:[%s2329 + $0x171] sm:$0xff]
        %5069 = vrot.lane.b32.xlu0 %v5005, 32
        %v5070 = vpop.permute.xlu0 %5069
        %5071 = vrot.lane.b32.xlu0 %v5006, 32
        %v5072 = vpop.permute.xlu0 %5071
        %5073 = vrot.lane.b32.xlu0 %v5007, 32
        %v5074 = vpop.permute.xlu0 %5073
        %5075 = vrot.lane.b32.xlu0 %v5008, 32
        %v5076 = vpop.permute.xlu0 %5075
        %5077 = vrot.lane.b32.xlu0 %v5009, 32
        %v5078 = vpop.permute.xlu0 %5077
        %5079 = vrot.lane.b32.xlu0 %v5010, 32
        %v5080 = vpop.permute.xlu0 %5079
        %5081 = vrot.lane.b32.xlu0 %v5011, 32
        %v5082 = vpop.permute.xlu0 %5081
        %5083 = vrot.lane.b32.xlu0 %v5012, 32
        %v5084 = vpop.permute.xlu0 %5083
        %5085 = vrot.lane.b32.xlu0 %v5013, 32
        %v5086 = vpop.permute.xlu0 %5085
        %5087 = vrot.lane.b32.xlu0 %v5014, 32
        %v5088 = vpop.permute.xlu0 %5087
        %5089 = vrot.lane.b32.xlu0 %v5015, 32
        %v5090 = vpop.permute.xlu0 %5089
        %5091 = vrot.lane.b32.xlu0 %v5016, 32
        %v5092 = vpop.permute.xlu0 %5091
        %5093 = vrot.lane.b32.xlu0 %v5017, 32
        %v5094 = vpop.permute.xlu0 %5093
        %5095 = vrot.lane.b32.xlu0 %v5018, 32
        %v5096 = vpop.permute.xlu0 %5095
        %5097 = vrot.lane.b32.xlu0 %v5019, 32
        %v5098 = vpop.permute.xlu0 %5097
        %5099 = vrot.lane.b32.xlu0 %v5020, 32
        %v5100 = vpop.permute.xlu0 %5099
        %5101 = vrot.lane.b32.xlu0 %v5021, 32
        %v5102 = vpop.permute.xlu0 %5101
        %5103 = vrot.lane.b32.xlu0 %v5022, 32
        %v5104 = vpop.permute.xlu0 %5103
        %5105 = vrot.lane.b32.xlu0 %v5023, 32
        %v5106 = vpop.permute.xlu0 %5105
        %5107 = vrot.lane.b32.xlu0 %v5024, 32
        %v5108 = vpop.permute.xlu0 %5107
        %5109 = vrot.lane.b32.xlu0 %v5025, 32
        %v5110 = vpop.permute.xlu0 %5109
        %5111 = vrot.lane.b32.xlu0 %v5026, 32
        %v5112 = vpop.permute.xlu0 %5111
        %5113 = vrot.lane.b32.xlu0 %v5027, 32
        %v5114 = vpop.permute.xlu0 %5113
        %5115 = vrot.lane.b32.xlu0 %v5028, 32
        %v5116 = vpop.permute.xlu0 %5115
        %5117 = vrot.lane.b32.xlu0 %v5029, 32
        %v5118 = vpop.permute.xlu0 %5117
        %5119 = vrot.lane.b32.xlu0 %v5030, 32
        %v5120 = vpop.permute.xlu0 %5119
        %5121 = vrot.lane.b32.xlu0 %v5031, 32
        %v5122 = vpop.permute.xlu0 %5121
        %5123 = vrot.lane.b32.xlu0 %v5032, 32
        %v5124 = vpop.permute.xlu0 %5123
        %5125 = vrot.lane.b32.xlu0 %v5033, 32
        %v5126 = vpop.permute.xlu0 %5125
        %5127 = vrot.lane.b32.xlu0 %v5034, 32
        %v5128 = vpop.permute.xlu0 %5127
        %5129 = vrot.lane.b32.xlu0 %v5035, 32
        %v5130 = vpop.permute.xlu0 %5129
        %5131 = vrot.lane.b32.xlu0 %v5036, 32
        %v5132 = vpop.permute.xlu0 %5131
        %5165 = vst.msk [vmem:[#allocation5] sm:$0xff] %vm3165, %v5070
        %5166 = vst.msk [vmem:[#allocation5 + $0x8] sm:$0xff] %vm3165, %v5072
        %5167 = vst.msk [vmem:[#allocation5 + $0x10] sm:$0xff] %vm3165, %v5074
        %5168 = vst.msk [vmem:[#allocation5 + $0x18] sm:$0xff] %vm3165, %v5076
        %5169 = vst.msk [vmem:[#allocation5 + $0x20] sm:$0xff] %vm3165, %v5078
        %5170 = vst.msk [vmem:[#allocation5 + $0x28] sm:$0xff] %vm3165, %v5080
        %5171 = vst.msk [vmem:[#allocation5 + $0x30] sm:$0xff] %vm3165, %v5082
        %5172 = vst.msk [vmem:[#allocation5 + $0x38] sm:$0xff] %vm3165, %v5084
        %5173 = vst.msk [vmem:[#allocation5 + $0x40] sm:$0xff] %vm3165, %v5086
        %5174 = vst.msk [vmem:[#allocation5 + $0x48] sm:$0xff] %vm3165, %v5088
        %5175 = vst.msk [vmem:[#allocation5 + $0x50] sm:$0xff] %vm3165, %v5090
        %5176 = vst.msk [vmem:[#allocation5 + $0x58] sm:$0xff] %vm3165, %v5092
        %5177 = vst.msk [vmem:[#allocation5 + $0x60] sm:$0xff] %vm3165, %v5094
        %5178 = vst.msk [vmem:[#allocation5 + $0x68] sm:$0xff] %vm3165, %v5096
        %5179 = vst.msk [vmem:[#allocation5 + $0x70] sm:$0xff] %vm3165, %v5098
        %5180 = vst.msk [vmem:[#allocation5 + $0x78] sm:$0xff] %vm3165, %v5100
        %5181 = vst.msk [vmem:[#allocation5 + $0x80] sm:$0xff] %vm3165, %v5102
        %5182 = vst.msk [vmem:[#allocation5 + $0x88] sm:$0xff] %vm3165, %v5104
        %5183 = vst.msk [vmem:[#allocation5 + $0x90] sm:$0xff] %vm3165, %v5106
        %5184 = vst.msk [vmem:[#allocation5 + $0x98] sm:$0xff] %vm3165, %v5108
        %5185 = vst.msk [vmem:[#allocation5 + $0xa0] sm:$0xff] %vm3165, %v5110
        %5186 = vst.msk [vmem:[#allocation5 + $0xa8] sm:$0xff] %vm3165, %v5112
        %5187 = vst.msk [vmem:[#allocation5 + $0xb0] sm:$0xff] %vm3165, %v5114
        %5188 = vst.msk [vmem:[#allocation5 + $0xb8] sm:$0xff] %vm3165, %v5116
        %5189 = vst.msk [vmem:[#allocation5 + $0xc0] sm:$0xff] %vm3165, %v5118
        %5190 = vst.msk [vmem:[#allocation5 + $0xc8] sm:$0xff] %vm3165, %v5120
        %5191 = vst.msk [vmem:[#allocation5 + $0xd0] sm:$0xff] %vm3165, %v5122
        %5192 = vst.msk [vmem:[#allocation5 + $0xd8] sm:$0xff] %vm3165, %v5124
        %5193 = vst.msk [vmem:[#allocation5 + $0xe0] sm:$0xff] %vm3165, %v5126
        %5194 = vst.msk [vmem:[#allocation5 + $0xe8] sm:$0xff] %vm3165, %v5128
        %5195 = vst.msk [vmem:[#allocation5 + $0xf0] sm:$0xff] %vm3165, %v5130
        %5196 = vst.msk [vmem:[#allocation5 + $0xf8] sm:$0xff] %vm3165, %v5132
        %v5197 = vld [vmem:[%s2329 + $0x2] sm:$0xff]
        %v5198 = vld [vmem:[%s2329 + $0xa] sm:$0xff]
        %v5199 = vld [vmem:[%s2329 + $0x1a] sm:$0xff]
        %v5200 = vld [vmem:[%s2329 + $0x22] sm:$0xff]
        %v5201 = vld [vmem:[%s2329 + $0x32] sm:$0xff]
        %v5202 = vld [vmem:[%s2329 + $0x3a] sm:$0xff]
        %v5203 = vld [vmem:[%s2329 + $0x4a] sm:$0xff]
        %v5204 = vld [vmem:[%s2329 + $0x52] sm:$0xff]
        %v5205 = vld [vmem:[%s2329 + $0x62] sm:$0xff]
        %v5206 = vld [vmem:[%s2329 + $0x6a] sm:$0xff]
        %v5207 = vld [vmem:[%s2329 + $0x7a] sm:$0xff]
        %v5208 = vld [vmem:[%s2329 + $0x82] sm:$0xff]
        %v5209 = vld [vmem:[%s2329 + $0x92] sm:$0xff]
        %v5210 = vld [vmem:[%s2329 + $0x9a] sm:$0xff]
        %v5211 = vld [vmem:[%s2329 + $0xaa] sm:$0xff]
        %v5212 = vld [vmem:[%s2329 + $0xb2] sm:$0xff]
        %v5213 = vld [vmem:[%s2329 + $0xc2] sm:$0xff]
        %v5214 = vld [vmem:[%s2329 + $0xca] sm:$0xff]
        %v5215 = vld [vmem:[%s2329 + $0xda] sm:$0xff]
        %v5216 = vld [vmem:[%s2329 + $0xe2] sm:$0xff]
        %v5217 = vld [vmem:[%s2329 + $0xf2] sm:$0xff]
        %v5218 = vld [vmem:[%s2329 + $0xfa] sm:$0xff]
        %v5219 = vld [vmem:[%s2329 + $0x10a] sm:$0xff]
        %v5220 = vld [vmem:[%s2329 + $0x112] sm:$0xff]
        %v5221 = vld [vmem:[%s2329 + $0x122] sm:$0xff]
        %v5222 = vld [vmem:[%s2329 + $0x12a] sm:$0xff]
        %v5223 = vld [vmem:[%s2329 + $0x13a] sm:$0xff]
        %v5224 = vld [vmem:[%s2329 + $0x142] sm:$0xff]
        %v5225 = vld [vmem:[%s2329 + $0x152] sm:$0xff]
        %v5226 = vld [vmem:[%s2329 + $0x15a] sm:$0xff]
        %v5227 = vld [vmem:[%s2329 + $0x16a] sm:$0xff]
        %v5228 = vld [vmem:[%s2329 + $0x172] sm:$0xff]
        %5261 = vrot.lane.b32.xlu0 %v5197, 40
        %v5262 = vpop.permute.xlu0 %5261
        %5263 = vrot.lane.b32.xlu0 %v5198, 40
        %v5264 = vpop.permute.xlu0 %5263
        %5265 = vrot.lane.b32.xlu0 %v5199, 40
        %v5266 = vpop.permute.xlu0 %5265
        %5267 = vrot.lane.b32.xlu0 %v5200, 40
        %v5268 = vpop.permute.xlu0 %5267
        %5269 = vrot.lane.b32.xlu0 %v5201, 40
        %v5270 = vpop.permute.xlu0 %5269
        %5271 = vrot.lane.b32.xlu0 %v5202, 40
        %v5272 = vpop.permute.xlu0 %5271
        %5273 = vrot.lane.b32.xlu0 %v5203, 40
        %v5274 = vpop.permute.xlu0 %5273
        %5275 = vrot.lane.b32.xlu0 %v5204, 40
        %v5276 = vpop.permute.xlu0 %5275
        %5277 = vrot.lane.b32.xlu0 %v5205, 40
        %v5278 = vpop.permute.xlu0 %5277
        %5279 = vrot.lane.b32.xlu0 %v5206, 40
        %v5280 = vpop.permute.xlu0 %5279
        %5281 = vrot.lane.b32.xlu0 %v5207, 40
        %v5282 = vpop.permute.xlu0 %5281
        %5283 = vrot.lane.b32.xlu0 %v5208, 40
        %v5284 = vpop.permute.xlu0 %5283
        %5285 = vrot.lane.b32.xlu0 %v5209, 40
        %v5286 = vpop.permute.xlu0 %5285
        %5287 = vrot.lane.b32.xlu0 %v5210, 40
        %v5288 = vpop.permute.xlu0 %5287
        %5289 = vrot.lane.b32.xlu0 %v5211, 40
        %v5290 = vpop.permute.xlu0 %5289
        %5291 = vrot.lane.b32.xlu0 %v5212, 40
        %v5292 = vpop.permute.xlu0 %5291
        %5293 = vrot.lane.b32.xlu0 %v5213, 40
        %v5294 = vpop.permute.xlu0 %5293
        %5295 = vrot.lane.b32.xlu0 %v5214, 40
        %v5296 = vpop.permute.xlu0 %5295
        %5297 = vrot.lane.b32.xlu0 %v5215, 40
        %v5298 = vpop.permute.xlu0 %5297
        %5299 = vrot.lane.b32.xlu0 %v5216, 40
        %v5300 = vpop.permute.xlu0 %5299
        %5301 = vrot.lane.b32.xlu0 %v5217, 40
        %v5302 = vpop.permute.xlu0 %5301
        %5303 = vrot.lane.b32.xlu0 %v5218, 40
        %v5304 = vpop.permute.xlu0 %5303
        %5305 = vrot.lane.b32.xlu0 %v5219, 40
        %v5306 = vpop.permute.xlu0 %5305
        %5307 = vrot.lane.b32.xlu0 %v5220, 40
        %v5308 = vpop.permute.xlu0 %5307
        %5309 = vrot.lane.b32.xlu0 %v5221, 40
        %v5310 = vpop.permute.xlu0 %5309
        %5311 = vrot.lane.b32.xlu0 %v5222, 40
        %v5312 = vpop.permute.xlu0 %5311
        %5313 = vrot.lane.b32.xlu0 %v5223, 40
        %v5314 = vpop.permute.xlu0 %5313
        %5315 = vrot.lane.b32.xlu0 %v5224, 40
        %v5316 = vpop.permute.xlu0 %5315
        %5317 = vrot.lane.b32.xlu0 %v5225, 40
        %v5318 = vpop.permute.xlu0 %5317
        %5319 = vrot.lane.b32.xlu0 %v5226, 40
        %v5320 = vpop.permute.xlu0 %5319
        %5321 = vrot.lane.b32.xlu0 %v5227, 40
        %v5322 = vpop.permute.xlu0 %5321
        %5323 = vrot.lane.b32.xlu0 %v5228, 40
        %v5324 = vpop.permute.xlu0 %5323
        %5357 = vst.msk [vmem:[#allocation5] sm:$0xff] %vm3358, %v5262
        %5358 = vst.msk [vmem:[#allocation5 + $0x8] sm:$0xff] %vm3358, %v5264
        %5359 = vst.msk [vmem:[#allocation5 + $0x10] sm:$0xff] %vm3358, %v5266
        %5360 = vst.msk [vmem:[#allocation5 + $0x18] sm:$0xff] %vm3358, %v5268
        %5361 = vst.msk [vmem:[#allocation5 + $0x20] sm:$0xff] %vm3358, %v5270
        %5362 = vst.msk [vmem:[#allocation5 + $0x28] sm:$0xff] %vm3358, %v5272
        %5363 = vst.msk [vmem:[#allocation5 + $0x30] sm:$0xff] %vm3358, %v5274
        %5364 = vst.msk [vmem:[#allocation5 + $0x38] sm:$0xff] %vm3358, %v5276
        %5365 = vst.msk [vmem:[#allocation5 + $0x40] sm:$0xff] %vm3358, %v5278
        %5366 = vst.msk [vmem:[#allocation5 + $0x48] sm:$0xff] %vm3358, %v5280
        %5367 = vst.msk [vmem:[#allocation5 + $0x50] sm:$0xff] %vm3358, %v5282
        %5368 = vst.msk [vmem:[#allocation5 + $0x58] sm:$0xff] %vm3358, %v5284
        %5369 = vst.msk [vmem:[#allocation5 + $0x60] sm:$0xff] %vm3358, %v5286
        %5370 = vst.msk [vmem:[#allocation5 + $0x68] sm:$0xff] %vm3358, %v5288
        %5371 = vst.msk [vmem:[#allocation5 + $0x70] sm:$0xff] %vm3358, %v5290
        %5372 = vst.msk [vmem:[#allocation5 + $0x78] sm:$0xff] %vm3358, %v5292
        %5373 = vst.msk [vmem:[#allocation5 + $0x80] sm:$0xff] %vm3358, %v5294
        %5374 = vst.msk [vmem:[#allocation5 + $0x88] sm:$0xff] %vm3358, %v5296
        %5375 = vst.msk [vmem:[#allocation5 + $0x90] sm:$0xff] %vm3358, %v5298
        %5376 = vst.msk [vmem:[#allocation5 + $0x98] sm:$0xff] %vm3358, %v5300
        %5377 = vst.msk [vmem:[#allocation5 + $0xa0] sm:$0xff] %vm3358, %v5302
        %5378 = vst.msk [vmem:[#allocation5 + $0xa8] sm:$0xff] %vm3358, %v5304
        %5379 = vst.msk [vmem:[#allocation5 + $0xb0] sm:$0xff] %vm3358, %v5306
        %5380 = vst.msk [vmem:[#allocation5 + $0xb8] sm:$0xff] %vm3358, %v5308
        %5381 = vst.msk [vmem:[#allocation5 + $0xc0] sm:$0xff] %vm3358, %v5310
        %5382 = vst.msk [vmem:[#allocation5 + $0xc8] sm:$0xff] %vm3358, %v5312
        %5383 = vst.msk [vmem:[#allocation5 + $0xd0] sm:$0xff] %vm3358, %v5314
        %5384 = vst.msk [vmem:[#allocation5 + $0xd8] sm:$0xff] %vm3358, %v5316
        %5385 = vst.msk [vmem:[#allocation5 + $0xe0] sm:$0xff] %vm3358, %v5318
        %5386 = vst.msk [vmem:[#allocation5 + $0xe8] sm:$0xff] %vm3358, %v5320
        %5387 = vst.msk [vmem:[#allocation5 + $0xf0] sm:$0xff] %vm3358, %v5322
        %5388 = vst.msk [vmem:[#allocation5 + $0xf8] sm:$0xff] %vm3358, %v5324
        %v5389 = vld [vmem:[%s3391] sm:$0xff]
        %v5390 = vld [vmem:[%s3391 + $0x8] sm:$0xff]
        %v5391 = vld [vmem:[%s3391 + $0x18] sm:$0xff]
        %v5392 = vld [vmem:[%s3391 + $0x20] sm:$0xff]
        %v5393 = vld [vmem:[%s3391 + $0x30] sm:$0xff]
        %v5394 = vld [vmem:[%s3391 + $0x38] sm:$0xff]
        %v5395 = vld [vmem:[%s3391 + $0x48] sm:$0xff]
        %v5396 = vld [vmem:[%s3391 + $0x50] sm:$0xff]
        %v5397 = vld [vmem:[%s3391 + $0x60] sm:$0xff]
        %v5398 = vld [vmem:[%s3391 + $0x68] sm:$0xff]
        %v5399 = vld [vmem:[%s3391 + $0x78] sm:$0xff]
        %v5400 = vld [vmem:[%s3391 + $0x80] sm:$0xff]
        %v5401 = vld [vmem:[%s3391 + $0x90] sm:$0xff]
        %v5402 = vld [vmem:[%s3391 + $0x98] sm:$0xff]
        %v5403 = vld [vmem:[%s3391 + $0xa8] sm:$0xff]
        %v5404 = vld [vmem:[%s3391 + $0xb0] sm:$0xff]
        %v5405 = vld [vmem:[%s3391 + $0xc0] sm:$0xff]
        %v5406 = vld [vmem:[%s3391 + $0xc8] sm:$0xff]
        %v5407 = vld [vmem:[%s3391 + $0xd8] sm:$0xff]
        %v5408 = vld [vmem:[%s3391 + $0xe0] sm:$0xff]
        %v5409 = vld [vmem:[%s3391 + $0xf0] sm:$0xff]
        %v5410 = vld [vmem:[%s3391 + $0xf8] sm:$0xff]
        %v5411 = vld [vmem:[%s3391 + $0x108] sm:$0xff]
        %v5412 = vld [vmem:[%s3391 + $0x110] sm:$0xff]
        %v5413 = vld [vmem:[%s3391 + $0x120] sm:$0xff]
        %v5414 = vld [vmem:[%s3391 + $0x128] sm:$0xff]
        %v5415 = vld [vmem:[%s3391 + $0x138] sm:$0xff]
        %v5416 = vld [vmem:[%s3391 + $0x140] sm:$0xff]
        %v5417 = vld [vmem:[%s3391 + $0x150] sm:$0xff]
        %v5418 = vld [vmem:[%s3391 + $0x158] sm:$0xff]
        %v5419 = vld [vmem:[%s3391 + $0x168] sm:$0xff]
        %v5420 = vld [vmem:[%s3391 + $0x170] sm:$0xff]
        %5453 = vrot.lane.b32.xlu0 %v5389, 48
        %v5454 = vpop.permute.xlu0 %5453
        %5455 = vrot.lane.b32.xlu0 %v5390, 48
        %v5456 = vpop.permute.xlu0 %5455
        %5457 = vrot.lane.b32.xlu0 %v5391, 48
        %v5458 = vpop.permute.xlu0 %5457
        %5459 = vrot.lane.b32.xlu0 %v5392, 48
        %v5460 = vpop.permute.xlu0 %5459
        %5461 = vrot.lane.b32.xlu0 %v5393, 48
        %v5462 = vpop.permute.xlu0 %5461
        %5463 = vrot.lane.b32.xlu0 %v5394, 48
        %v5464 = vpop.permute.xlu0 %5463
        %5465 = vrot.lane.b32.xlu0 %v5395, 48
        %v5466 = vpop.permute.xlu0 %5465
        %5467 = vrot.lane.b32.xlu0 %v5396, 48
        %v5468 = vpop.permute.xlu0 %5467
        %5469 = vrot.lane.b32.xlu0 %v5397, 48
        %v5470 = vpop.permute.xlu0 %5469
        %5471 = vrot.lane.b32.xlu0 %v5398, 48
        %v5472 = vpop.permute.xlu0 %5471
        %5473 = vrot.lane.b32.xlu0 %v5399, 48
        %v5474 = vpop.permute.xlu0 %5473
        %5475 = vrot.lane.b32.xlu0 %v5400, 48
        %v5476 = vpop.permute.xlu0 %5475
        %5477 = vrot.lane.b32.xlu0 %v5401, 48
        %v5478 = vpop.permute.xlu0 %5477
        %5479 = vrot.lane.b32.xlu0 %v5402, 48
        %v5480 = vpop.permute.xlu0 %5479
        %5481 = vrot.lane.b32.xlu0 %v5403, 48
        %v5482 = vpop.permute.xlu0 %5481
        %5483 = vrot.lane.b32.xlu0 %v5404, 48
        %v5484 = vpop.permute.xlu0 %5483
        %5485 = vrot.lane.b32.xlu0 %v5405, 48
        %v5486 = vpop.permute.xlu0 %5485
        %5487 = vrot.lane.b32.xlu0 %v5406, 48
        %v5488 = vpop.permute.xlu0 %5487
        %5489 = vrot.lane.b32.xlu0 %v5407, 48
        %v5490 = vpop.permute.xlu0 %5489
        %5491 = vrot.lane.b32.xlu0 %v5408, 48
        %v5492 = vpop.permute.xlu0 %5491
        %5493 = vrot.lane.b32.xlu0 %v5409, 48
        %v5494 = vpop.permute.xlu0 %5493
        %5495 = vrot.lane.b32.xlu0 %v5410, 48
        %v5496 = vpop.permute.xlu0 %5495
        %5497 = vrot.lane.b32.xlu0 %v5411, 48
        %v5498 = vpop.permute.xlu0 %5497
        %5499 = vrot.lane.b32.xlu0 %v5412, 48
        %v5500 = vpop.permute.xlu0 %5499
        %5501 = vrot.lane.b32.xlu0 %v5413, 48
        %v5502 = vpop.permute.xlu0 %5501
        %5503 = vrot.lane.b32.xlu0 %v5414, 48
        %v5504 = vpop.permute.xlu0 %5503
        %5505 = vrot.lane.b32.xlu0 %v5415, 48
        %v5506 = vpop.permute.xlu0 %5505
        %5507 = vrot.lane.b32.xlu0 %v5416, 48
        %v5508 = vpop.permute.xlu0 %5507
        %5509 = vrot.lane.b32.xlu0 %v5417, 48
        %v5510 = vpop.permute.xlu0 %5509
        %5511 = vrot.lane.b32.xlu0 %v5418, 48
        %v5512 = vpop.permute.xlu0 %5511
        %5513 = vrot.lane.b32.xlu0 %v5419, 48
        %v5514 = vpop.permute.xlu0 %5513
        %5515 = vrot.lane.b32.xlu0 %v5420, 48
        %v5516 = vpop.permute.xlu0 %5515
        %5549 = vst.msk [vmem:[#allocation5] sm:$0xff] %vm3552, %v5454
        %5550 = vst.msk [vmem:[#allocation5 + $0x8] sm:$0xff] %vm3552, %v5456
        %5551 = vst.msk [vmem:[#allocation5 + $0x10] sm:$0xff] %vm3552, %v5458
        %5552 = vst.msk [vmem:[#allocation5 + $0x18] sm:$0xff] %vm3552, %v5460
        %5553 = vst.msk [vmem:[#allocation5 + $0x20] sm:$0xff] %vm3552, %v5462
        %5554 = vst.msk [vmem:[#allocation5 + $0x28] sm:$0xff] %vm3552, %v5464
        %5555 = vst.msk [vmem:[#allocation5 + $0x30] sm:$0xff] %vm3552, %v5466
        %5556 = vst.msk [vmem:[#allocation5 + $0x38] sm:$0xff] %vm3552, %v5468
        %5557 = vst.msk [vmem:[#allocation5 + $0x40] sm:$0xff] %vm3552, %v5470
        %5558 = vst.msk [vmem:[#allocation5 + $0x48] sm:$0xff] %vm3552, %v5472
        %5559 = vst.msk [vmem:[#allocation5 + $0x50] sm:$0xff] %vm3552, %v5474
        %5560 = vst.msk [vmem:[#allocation5 + $0x58] sm:$0xff] %vm3552, %v5476
        %5561 = vst.msk [vmem:[#allocation5 + $0x60] sm:$0xff] %vm3552, %v5478
        %5562 = vst.msk [vmem:[#allocation5 + $0x68] sm:$0xff] %vm3552, %v5480
        %5563 = vst.msk [vmem:[#allocation5 + $0x70] sm:$0xff] %vm3552, %v5482
        %5564 = vst.msk [vmem:[#allocation5 + $0x78] sm:$0xff] %vm3552, %v5484
        %5565 = vst.msk [vmem:[#allocation5 + $0x80] sm:$0xff] %vm3552, %v5486
        %5566 = vst.msk [vmem:[#allocation5 + $0x88] sm:$0xff] %vm3552, %v5488
        %5567 = vst.msk [vmem:[#allocation5 + $0x90] sm:$0xff] %vm3552, %v5490
        %5568 = vst.msk [vmem:[#allocation5 + $0x98] sm:$0xff] %vm3552, %v5492
        %5569 = vst.msk [vmem:[#allocation5 + $0xa0] sm:$0xff] %vm3552, %v5494
        %5570 = vst.msk [vmem:[#allocation5 + $0xa8] sm:$0xff] %vm3552, %v5496
        %5571 = vst.msk [vmem:[#allocation5 + $0xb0] sm:$0xff] %vm3552, %v5498
        %5572 = vst.msk [vmem:[#allocation5 + $0xb8] sm:$0xff] %vm3552, %v5500
        %5573 = vst.msk [vmem:[#allocation5 + $0xc0] sm:$0xff] %vm3552, %v5502
        %5574 = vst.msk [vmem:[#allocation5 + $0xc8] sm:$0xff] %vm3552, %v5504
        %5575 = vst.msk [vmem:[#allocation5 + $0xd0] sm:$0xff] %vm3552, %v5506
        %5576 = vst.msk [vmem:[#allocation5 + $0xd8] sm:$0xff] %vm3552, %v5508
        %5577 = vst.msk [vmem:[#allocation5 + $0xe0] sm:$0xff] %vm3552, %v5510
        %5578 = vst.msk [vmem:[#allocation5 + $0xe8] sm:$0xff] %vm3552, %v5512
        %5579 = vst.msk [vmem:[#allocation5 + $0xf0] sm:$0xff] %vm3552, %v5514
        %5580 = vst.msk [vmem:[#allocation5 + $0xf8] sm:$0xff] %vm3552, %v5516
        %v5581 = vld [vmem:[%s3391 + $0x1] sm:$0xff]
        %v5582 = vld [vmem:[%s3391 + $0x9] sm:$0xff]
        %v5583 = vld [vmem:[%s3391 + $0x19] sm:$0xff]
        %v5584 = vld [vmem:[%s3391 + $0x21] sm:$0xff]
        %v5585 = vld [vmem:[%s3391 + $0x31] sm:$0xff]
        %v5586 = vld [vmem:[%s3391 + $0x39] sm:$0xff]
        %v5587 = vld [vmem:[%s3391 + $0x49] sm:$0xff]
        %v5588 = vld [vmem:[%s3391 + $0x51] sm:$0xff]
        %v5589 = vld [vmem:[%s3391 + $0x61] sm:$0xff]
        %v5590 = vld [vmem:[%s3391 + $0x69] sm:$0xff]
        %v5591 = vld [vmem:[%s3391 + $0x79] sm:$0xff]
        %v5592 = vld [vmem:[%s3391 + $0x81] sm:$0xff]
        %v5593 = vld [vmem:[%s3391 + $0x91] sm:$0xff]
        %v5594 = vld [vmem:[%s3391 + $0x99] sm:$0xff]
        %v5595 = vld [vmem:[%s3391 + $0xa9] sm:$0xff]
        %v5596 = vld [vmem:[%s3391 + $0xb1] sm:$0xff]
        %v5597 = vld [vmem:[%s3391 + $0xc1] sm:$0xff]
        %v5598 = vld [vmem:[%s3391 + $0xc9] sm:$0xff]
        %v5599 = vld [vmem:[%s3391 + $0xd9] sm:$0xff]
        %v5600 = vld [vmem:[%s3391 + $0xe1] sm:$0xff]
        %v5601 = vld [vmem:[%s3391 + $0xf1] sm:$0xff]
        %v5602 = vld [vmem:[%s3391 + $0xf9] sm:$0xff]
        %v5603 = vld [vmem:[%s3391 + $0x109] sm:$0xff]
        %v5604 = vld [vmem:[%s3391 + $0x111] sm:$0xff]
        %v5605 = vld [vmem:[%s3391 + $0x121] sm:$0xff]
        %v5606 = vld [vmem:[%s3391 + $0x129] sm:$0xff]
        %v5607 = vld [vmem:[%s3391 + $0x139] sm:$0xff]
        %v5608 = vld [vmem:[%s3391 + $0x141] sm:$0xff]
        %v5609 = vld [vmem:[%s3391 + $0x151] sm:$0xff]
        %v5610 = vld [vmem:[%s3391 + $0x159] sm:$0xff]
        %v5611 = vld [vmem:[%s3391 + $0x169] sm:$0xff]
        %v5612 = vld [vmem:[%s3391 + $0x171] sm:$0xff]
        %5645 = vrot.lane.b32.xlu0 %v5581, 56
        %v5646 = vpop.permute.xlu0 %5645
        %5647 = vrot.lane.b32.xlu0 %v5582, 56
        %v5648 = vpop.permute.xlu0 %5647
        %5649 = vrot.lane.b32.xlu0 %v5583, 56
        %v5650 = vpop.permute.xlu0 %5649
        %5651 = vrot.lane.b32.xlu0 %v5584, 56
        %v5652 = vpop.permute.xlu0 %5651
        %5653 = vrot.lane.b32.xlu0 %v5585, 56
        %v5654 = vpop.permute.xlu0 %5653
        %5655 = vrot.lane.b32.xlu0 %v5586, 56
        %v5656 = vpop.permute.xlu0 %5655
        %5657 = vrot.lane.b32.xlu0 %v5587, 56
        %v5658 = vpop.permute.xlu0 %5657
        %5659 = vrot.lane.b32.xlu0 %v5588, 56
        %v5660 = vpop.permute.xlu0 %5659
        %5661 = vrot.lane.b32.xlu0 %v5589, 56
        %v5662 = vpop.permute.xlu0 %5661
        %5663 = vrot.lane.b32.xlu0 %v5590, 56
        %v5664 = vpop.permute.xlu0 %5663
        %5665 = vrot.lane.b32.xlu0 %v5591, 56
        %v5666 = vpop.permute.xlu0 %5665
        %5667 = vrot.lane.b32.xlu0 %v5592, 56
        %v5668 = vpop.permute.xlu0 %5667
        %5669 = vrot.lane.b32.xlu0 %v5593, 56
        %v5670 = vpop.permute.xlu0 %5669
        %5671 = vrot.lane.b32.xlu0 %v5594, 56
        %v5672 = vpop.permute.xlu0 %5671
        %5673 = vrot.lane.b32.xlu0 %v5595, 56
        %v5674 = vpop.permute.xlu0 %5673
        %5675 = vrot.lane.b32.xlu0 %v5596, 56
        %v5676 = vpop.permute.xlu0 %5675
        %5677 = vrot.lane.b32.xlu0 %v5597, 56
        %v5678 = vpop.permute.xlu0 %5677
        %5679 = vrot.lane.b32.xlu0 %v5598, 56
        %v5680 = vpop.permute.xlu0 %5679
        %5681 = vrot.lane.b32.xlu0 %v5599, 56
        %v5682 = vpop.permute.xlu0 %5681
        %5683 = vrot.lane.b32.xlu0 %v5600, 56
        %v5684 = vpop.permute.xlu0 %5683
        %5685 = vrot.lane.b32.xlu0 %v5601, 56
        %v5686 = vpop.permute.xlu0 %5685
        %5687 = vrot.lane.b32.xlu0 %v5602, 56
        %v5688 = vpop.permute.xlu0 %5687
        %5689 = vrot.lane.b32.xlu0 %v5603, 56
        %v5690 = vpop.permute.xlu0 %5689
        %5691 = vrot.lane.b32.xlu0 %v5604, 56
        %v5692 = vpop.permute.xlu0 %5691
        %5693 = vrot.lane.b32.xlu0 %v5605, 56
        %v5694 = vpop.permute.xlu0 %5693
        %5695 = vrot.lane.b32.xlu0 %v5606, 56
        %v5696 = vpop.permute.xlu0 %5695
        %5697 = vrot.lane.b32.xlu0 %v5607, 56
        %v5698 = vpop.permute.xlu0 %5697
        %5699 = vrot.lane.b32.xlu0 %v5608, 56
        %v5700 = vpop.permute.xlu0 %5699
        %5701 = vrot.lane.b32.xlu0 %v5609, 56
        %v5702 = vpop.permute.xlu0 %5701
        %5703 = vrot.lane.b32.xlu0 %v5610, 56
        %v5704 = vpop.permute.xlu0 %5703
        %5705 = vrot.lane.b32.xlu0 %v5611, 56
        %v5706 = vpop.permute.xlu0 %5705
        %5707 = vrot.lane.b32.xlu0 %v5612, 56
        %v5708 = vpop.permute.xlu0 %5707
        %5741 = vst.msk [vmem:[#allocation5] sm:$0xff] %vm3745, %v5646
        %5742 = vst.msk [vmem:[#allocation5 + $0x8] sm:$0xff] %vm3745, %v5648
        %5743 = vst.msk [vmem:[#allocation5 + $0x10] sm:$0xff] %vm3745, %v5650
        %5744 = vst.msk [vmem:[#allocation5 + $0x18] sm:$0xff] %vm3745, %v5652
        %5745 = vst.msk [vmem:[#allocation5 + $0x20] sm:$0xff] %vm3745, %v5654
        %5746 = vst.msk [vmem:[#allocation5 + $0x28] sm:$0xff] %vm3745, %v5656
        %5747 = vst.msk [vmem:[#allocation5 + $0x30] sm:$0xff] %vm3745, %v5658
        %5748 = vst.msk [vmem:[#allocation5 + $0x38] sm:$0xff] %vm3745, %v5660
        %5749 = vst.msk [vmem:[#allocation5 + $0x40] sm:$0xff] %vm3745, %v5662
        %5750 = vst.msk [vmem:[#allocation5 + $0x48] sm:$0xff] %vm3745, %v5664
        %5751 = vst.msk [vmem:[#allocation5 + $0x50] sm:$0xff] %vm3745, %v5666
        %5752 = vst.msk [vmem:[#allocation5 + $0x58] sm:$0xff] %vm3745, %v5668
        %5753 = vst.msk [vmem:[#allocation5 + $0x60] sm:$0xff] %vm3745, %v5670
        %5754 = vst.msk [vmem:[#allocation5 + $0x68] sm:$0xff] %vm3745, %v5672
        %5755 = vst.msk [vmem:[#allocation5 + $0x70] sm:$0xff] %vm3745, %v5674
        %5756 = vst.msk [vmem:[#allocation5 + $0x78] sm:$0xff] %vm3745, %v5676
        %5757 = vst.msk [vmem:[#allocation5 + $0x80] sm:$0xff] %vm3745, %v5678
        %5758 = vst.msk [vmem:[#allocation5 + $0x88] sm:$0xff] %vm3745, %v5680
        %5759 = vst.msk [vmem:[#allocation5 + $0x90] sm:$0xff] %vm3745, %v5682
        %5760 = vst.msk [vmem:[#allocation5 + $0x98] sm:$0xff] %vm3745, %v5684
        %5761 = vst.msk [vmem:[#allocation5 + $0xa0] sm:$0xff] %vm3745, %v5686
        %5762 = vst.msk [vmem:[#allocation5 + $0xa8] sm:$0xff] %vm3745, %v5688
        %5763 = vst.msk [vmem:[#allocation5 + $0xb0] sm:$0xff] %vm3745, %v5690
        %5764 = vst.msk [vmem:[#allocation5 + $0xb8] sm:$0xff] %vm3745, %v5692
        %5765 = vst.msk [vmem:[#allocation5 + $0xc0] sm:$0xff] %vm3745, %v5694
        %5766 = vst.msk [vmem:[#allocation5 + $0xc8] sm:$0xff] %vm3745, %v5696
        %5767 = vst.msk [vmem:[#allocation5 + $0xd0] sm:$0xff] %vm3745, %v5698
        %5768 = vst.msk [vmem:[#allocation5 + $0xd8] sm:$0xff] %vm3745, %v5700
        %5769 = vst.msk [vmem:[#allocation5 + $0xe0] sm:$0xff] %vm3745, %v5702
        %5770 = vst.msk [vmem:[#allocation5 + $0xe8] sm:$0xff] %vm3745, %v5704
        %5771 = vst.msk [vmem:[#allocation5 + $0xf0] sm:$0xff] %vm3745, %v5706
        %5772 = vst.msk [vmem:[#allocation5 + $0xf8] sm:$0xff] %vm3745, %v5708
        %v5773 = vld [vmem:[%s3391 + $0x2] sm:$0xff]
        %v5774 = vld [vmem:[%s3391 + $0xa] sm:$0xff]
        %v5775 = vld [vmem:[%s3391 + $0x1a] sm:$0xff]
        %v5776 = vld [vmem:[%s3391 + $0x22] sm:$0xff]
        %v5777 = vld [vmem:[%s3391 + $0x32] sm:$0xff]
        %v5778 = vld [vmem:[%s3391 + $0x3a] sm:$0xff]
        %v5779 = vld [vmem:[%s3391 + $0x4a] sm:$0xff]
        %v5780 = vld [vmem:[%s3391 + $0x52] sm:$0xff]
        %v5781 = vld [vmem:[%s3391 + $0x62] sm:$0xff]
        %v5782 = vld [vmem:[%s3391 + $0x6a] sm:$0xff]
        %v5783 = vld [vmem:[%s3391 + $0x7a] sm:$0xff]
        %v5784 = vld [vmem:[%s3391 + $0x82] sm:$0xff]
        %v5785 = vld [vmem:[%s3391 + $0x92] sm:$0xff]
        %v5786 = vld [vmem:[%s3391 + $0x9a] sm:$0xff]
        %v5787 = vld [vmem:[%s3391 + $0xaa] sm:$0xff]
        %v5788 = vld [vmem:[%s3391 + $0xb2] sm:$0xff]
        %v5789 = vld [vmem:[%s3391 + $0xc2] sm:$0xff]
        %v5790 = vld [vmem:[%s3391 + $0xca] sm:$0xff]
        %v5791 = vld [vmem:[%s3391 + $0xda] sm:$0xff]
        %v5792 = vld [vmem:[%s3391 + $0xe2] sm:$0xff]
        %v5793 = vld [vmem:[%s3391 + $0xf2] sm:$0xff]
        %v5794 = vld [vmem:[%s3391 + $0xfa] sm:$0xff]
        %v5795 = vld [vmem:[%s3391 + $0x10a] sm:$0xff]
        %v5796 = vld [vmem:[%s3391 + $0x112] sm:$0xff]
        %v5797 = vld [vmem:[%s3391 + $0x122] sm:$0xff]
        %v5798 = vld [vmem:[%s3391 + $0x12a] sm:$0xff]
        %v5799 = vld [vmem:[%s3391 + $0x13a] sm:$0xff]
        %v5800 = vld [vmem:[%s3391 + $0x142] sm:$0xff]
        %v5801 = vld [vmem:[%s3391 + $0x152] sm:$0xff]
        %v5802 = vld [vmem:[%s3391 + $0x15a] sm:$0xff]
        %v5803 = vld [vmem:[%s3391 + $0x16a] sm:$0xff]
        %v5804 = vld [vmem:[%s3391 + $0x172] sm:$0xff]
        %5837 = vrot.lane.b32.xlu0 %v5773, 64
        %v5838 = vpop.permute.xlu0 %5837
        %5839 = vrot.lane.b32.xlu0 %v5774, 64
        %v5840 = vpop.permute.xlu0 %5839
        %5841 = vrot.lane.b32.xlu0 %v5775, 64
        %v5842 = vpop.permute.xlu0 %5841
        %5843 = vrot.lane.b32.xlu0 %v5776, 64
        %v5844 = vpop.permute.xlu0 %5843
        %5845 = vrot.lane.b32.xlu0 %v5777, 64
        %v5846 = vpop.permute.xlu0 %5845
        %5847 = vrot.lane.b32.xlu0 %v5778, 64
        %v5848 = vpop.permute.xlu0 %5847
        %5849 = vrot.lane.b32.xlu0 %v5779, 64
        %v5850 = vpop.permute.xlu0 %5849
        %5851 = vrot.lane.b32.xlu0 %v5780, 64
        %v5852 = vpop.permute.xlu0 %5851
        %5853 = vrot.lane.b32.xlu0 %v5781, 64
        %v5854 = vpop.permute.xlu0 %5853
        %5855 = vrot.lane.b32.xlu0 %v5782, 64
        %v5856 = vpop.permute.xlu0 %5855
        %5857 = vrot.lane.b32.xlu0 %v5783, 64
        %v5858 = vpop.permute.xlu0 %5857
        %5859 = vrot.lane.b32.xlu0 %v5784, 64
        %v5860 = vpop.permute.xlu0 %5859
        %5861 = vrot.lane.b32.xlu0 %v5785, 64
        %v5862 = vpop.permute.xlu0 %5861
        %5863 = vrot.lane.b32.xlu0 %v5786, 64
        %v5864 = vpop.permute.xlu0 %5863
        %5865 = vrot.lane.b32.xlu0 %v5787, 64
        %v5866 = vpop.permute.xlu0 %5865
        %5867 = vrot.lane.b32.xlu0 %v5788, 64
        %v5868 = vpop.permute.xlu0 %5867
        %5869 = vrot.lane.b32.xlu0 %v5789, 64
        %v5870 = vpop.permute.xlu0 %5869
        %5871 = vrot.lane.b32.xlu0 %v5790, 64
        %v5872 = vpop.permute.xlu0 %5871
        %5873 = vrot.lane.b32.xlu0 %v5791, 64
        %v5874 = vpop.permute.xlu0 %5873
        %5875 = vrot.lane.b32.xlu0 %v5792, 64
        %v5876 = vpop.permute.xlu0 %5875
        %5877 = vrot.lane.b32.xlu0 %v5793, 64
        %v5878 = vpop.permute.xlu0 %5877
        %5879 = vrot.lane.b32.xlu0 %v5794, 64
        %v5880 = vpop.permute.xlu0 %5879
        %5881 = vrot.lane.b32.xlu0 %v5795, 64
        %v5882 = vpop.permute.xlu0 %5881
        %5883 = vrot.lane.b32.xlu0 %v5796, 64
        %v5884 = vpop.permute.xlu0 %5883
        %5885 = vrot.lane.b32.xlu0 %v5797, 64
        %v5886 = vpop.permute.xlu0 %5885
        %5887 = vrot.lane.b32.xlu0 %v5798, 64
        %v5888 = vpop.permute.xlu0 %5887
        %5889 = vrot.lane.b32.xlu0 %v5799, 64
        %v5890 = vpop.permute.xlu0 %5889
        %5891 = vrot.lane.b32.xlu0 %v5800, 64
        %v5892 = vpop.permute.xlu0 %5891
        %5893 = vrot.lane.b32.xlu0 %v5801, 64
        %v5894 = vpop.permute.xlu0 %5893
        %5895 = vrot.lane.b32.xlu0 %v5802, 64
        %v5896 = vpop.permute.xlu0 %5895
        %5897 = vrot.lane.b32.xlu0 %v5803, 64
        %v5898 = vpop.permute.xlu0 %5897
        %5899 = vrot.lane.b32.xlu0 %v5804, 64
        %v5900 = vpop.permute.xlu0 %5899
        %5933 = vst.msk [vmem:[#allocation5] sm:$0xff] %vm3938, %v5838
        %5934 = vst.msk [vmem:[#allocation5 + $0x8] sm:$0xff] %vm3938, %v5840
        %5935 = vst.msk [vmem:[#allocation5 + $0x10] sm:$0xff] %vm3938, %v5842
        %5936 = vst.msk [vmem:[#allocation5 + $0x18] sm:$0xff] %vm3938, %v5844
        %5937 = vst.msk [vmem:[#allocation5 + $0x20] sm:$0xff] %vm3938, %v5846
        %5938 = vst.msk [vmem:[#allocation5 + $0x28] sm:$0xff] %vm3938, %v5848
        %5939 = vst.msk [vmem:[#allocation5 + $0x30] sm:$0xff] %vm3938, %v5850
        %5940 = vst.msk [vmem:[#allocation5 + $0x38] sm:$0xff] %vm3938, %v5852
        %5941 = vst.msk [vmem:[#allocation5 + $0x40] sm:$0xff] %vm3938, %v5854
        %5942 = vst.msk [vmem:[#allocation5 + $0x48] sm:$0xff] %vm3938, %v5856
        %5943 = vst.msk [vmem:[#allocation5 + $0x50] sm:$0xff] %vm3938, %v5858
        %5944 = vst.msk [vmem:[#allocation5 + $0x58] sm:$0xff] %vm3938, %v5860
        %5945 = vst.msk [vmem:[#allocation5 + $0x60] sm:$0xff] %vm3938, %v5862
        %5946 = vst.msk [vmem:[#allocation5 + $0x68] sm:$0xff] %vm3938, %v5864
        %5947 = vst.msk [vmem:[#allocation5 + $0x70] sm:$0xff] %vm3938, %v5866
        %5948 = vst.msk [vmem:[#allocation5 + $0x78] sm:$0xff] %vm3938, %v5868
        %5949 = vst.msk [vmem:[#allocation5 + $0x80] sm:$0xff] %vm3938, %v5870
        %5950 = vst.msk [vmem:[#allocation5 + $0x88] sm:$0xff] %vm3938, %v5872
        %5951 = vst.msk [vmem:[#allocation5 + $0x90] sm:$0xff] %vm3938, %v5874
        %5952 = vst.msk [vmem:[#allocation5 + $0x98] sm:$0xff] %vm3938, %v5876
        %5953 = vst.msk [vmem:[#allocation5 + $0xa0] sm:$0xff] %vm3938, %v5878
        %5954 = vst.msk [vmem:[#allocation5 + $0xa8] sm:$0xff] %vm3938, %v5880
        %5955 = vst.msk [vmem:[#allocation5 + $0xb0] sm:$0xff] %vm3938, %v5882
        %5956 = vst.msk [vmem:[#allocation5 + $0xb8] sm:$0xff] %vm3938, %v5884
        %5957 = vst.msk [vmem:[#allocation5 + $0xc0] sm:$0xff] %vm3938, %v5886
        %5958 = vst.msk [vmem:[#allocation5 + $0xc8] sm:$0xff] %vm3938, %v5888
        %5959 = vst.msk [vmem:[#allocation5 + $0xd0] sm:$0xff] %vm3938, %v5890
        %5960 = vst.msk [vmem:[#allocation5 + $0xd8] sm:$0xff] %vm3938, %v5892
        %5961 = vst.msk [vmem:[#allocation5 + $0xe0] sm:$0xff] %vm3938, %v5894
        %5962 = vst.msk [vmem:[#allocation5 + $0xe8] sm:$0xff] %vm3938, %v5896
        %5963 = vst.msk [vmem:[#allocation5 + $0xf0] sm:$0xff] %vm3938, %v5898
        %5964 = vst.msk [vmem:[#allocation5 + $0xf8] sm:$0xff] %vm3938, %v5900
        %v5965 = vld [vmem:[#allocation5] sm:$0xff]
        %v5966 = vld [vmem:[#allocation5 + $0x8] sm:$0xff]
        %v5967 = vld [vmem:[#allocation5 + $0x10] sm:$0xff]
        %v5968 = vld [vmem:[#allocation5 + $0x18] sm:$0xff]
        %v5969 = vld [vmem:[#allocation5 + $0x20] sm:$0xff]
        %v5970 = vld [vmem:[#allocation5 + $0x28] sm:$0xff]
        %v5971 = vld [vmem:[#allocation5 + $0x30] sm:$0xff]
        %v5972 = vld [vmem:[#allocation5 + $0x38] sm:$0xff]
        %v5973 = vld [vmem:[#allocation5 + $0x40] sm:$0xff]
        %v5974 = vld [vmem:[#allocation5 + $0x48] sm:$0xff]
        %v5975 = vld [vmem:[#allocation5 + $0x50] sm:$0xff]
        %v5976 = vld [vmem:[#allocation5 + $0x58] sm:$0xff]
        %v5977 = vld [vmem:[#allocation5 + $0x60] sm:$0xff]
        %v5978 = vld [vmem:[#allocation5 + $0x68] sm:$0xff]
        %v5979 = vld [vmem:[#allocation5 + $0x70] sm:$0xff]
        %v5980 = vld [vmem:[#allocation5 + $0x78] sm:$0xff]
        %v5981 = vld [vmem:[#allocation5 + $0x80] sm:$0xff]
        %v5982 = vld [vmem:[#allocation5 + $0x88] sm:$0xff]
        %v5983 = vld [vmem:[#allocation5 + $0x90] sm:$0xff]
        %v5984 = vld [vmem:[#allocation5 + $0x98] sm:$0xff]
        %v5985 = vld [vmem:[#allocation5 + $0xa0] sm:$0xff]
        %v5986 = vld [vmem:[#allocation5 + $0xa8] sm:$0xff]
        %v5987 = vld [vmem:[#allocation5 + $0xb0] sm:$0xff]
        %v5988 = vld [vmem:[#allocation5 + $0xb8] sm:$0xff]
        %v5989 = vld [vmem:[#allocation5 + $0xc0] sm:$0xff]
        %v5990 = vld [vmem:[#allocation5 + $0xc8] sm:$0xff]
        %v5991 = vld [vmem:[#allocation5 + $0xd0] sm:$0xff]
        %v5992 = vld [vmem:[#allocation5 + $0xd8] sm:$0xff]
        %v5993 = vld [vmem:[#allocation5 + $0xe0] sm:$0xff]
        %v5994 = vld [vmem:[#allocation5 + $0xe8] sm:$0xff]
        %v5995 = vld [vmem:[#allocation5 + $0xf0] sm:$0xff]
        %v5996 = vld [vmem:[#allocation5 + $0xf8] sm:$0xff]
        %v5997 = vpack.c.bf16 %v5966, %v5965
        %v5998 = vpack.c.bf16 %v5968, %v5967
        %v5999 = vpack.c.bf16 %v5970, %v5969
        %v6000 = vpack.c.bf16 %v5972, %v5971
        %v6001 = vpack.c.bf16 %v5974, %v5973
        %v6002 = vpack.c.bf16 %v5976, %v5975
        %v6003 = vpack.c.bf16 %v5978, %v5977
        %v6004 = vpack.c.bf16 %v5980, %v5979
        %v6005 = vpack.c.bf16 %v5982, %v5981
        %v6006 = vpack.c.bf16 %v5984, %v5983
        %v6007 = vpack.c.bf16 %v5986, %v5985
        %v6008 = vpack.c.bf16 %v5988, %v5987
        %v6009 = vpack.c.bf16 %v5990, %v5989
        %v6010 = vpack.c.bf16 %v5992, %v5991
        %v6011 = vpack.c.bf16 %v5994, %v5993
        %v6012 = vpack.c.bf16 %v5996, %v5995
        %v6013 = vld [vmem:[%s3] sm:$0xf]
        %v6014 = vld [vmem:[%s3 + $0x4] sm:$0xf]
        %v6015 = vld [vmem:[%s3 + $0x8] sm:$0xf]
        %v6016 = vld [vmem:[%s3 + $0xc] sm:$0xf]
        %v6017 = vld [vmem:[%s3 + $0x10] sm:$0xf]
        %v6018 = vld [vmem:[%s3 + $0x14] sm:$0xf]
        %v6019 = vld [vmem:[%s3 + $0x18] sm:$0xf]
        %v6020 = vld [vmem:[%s3 + $0x1c] sm:$0xf]
        %v6021 = vld [vmem:[%s3 + $0x20] sm:$0xf]
        %v6031 = vunpack.c.l.b16 %v6013
        %v6032 = vunpack.c.l.b16 %v6014
        %v6033 = vunpack.c.l.b16 %v6015
        %v6034 = vunpack.c.l.b16 %v6016
        %v6035 = vunpack.c.l.b16 %v6017
        %v6036 = vunpack.c.l.b16 %v6018
        %v6037 = vunpack.c.l.b16 %v6019
        %v6038 = vunpack.c.l.b16 %v6020
        %v6039 = vunpack.c.l.b16 %v6021
        %v6040 = vpack.c.b16 %v6032, %v6031
        %v6041 = vpack.c.b16 %v6034, %v6033
        %v6042 = vpack.c.b16 %v6036, %v6035
        %v6043 = vpack.c.b16 %v6038, %v6037
        %v6044 = vpack.c.b16 %v6039, %v6039
        %v6050 = vsel %vm4055, %v5997, 0
        %v6053 = vsel %vm4055, %v5998, 0
        %v6056 = vsel %vm4055, %v5999, 0
        %v6059 = vsel %vm4055, %v6000, 0
        %v6062 = vsel %vm4055, %v6001, 0
        %v6065 = vsel %vm4055, %v6002, 0
        %v6068 = vsel %vm4055, %v6003, 0
        %v6071 = vsel %vm4055, %v6004, 0
        %v6074 = vsel %vm4055, %v6005, 0
        %v6077 = vsel %vm4055, %v6006, 0
        %v6080 = vsel %vm4055, %v6007, 0
        %v6083 = vsel %vm4055, %v6008, 0
        %v6086 = vsel %vm4055, %v6009, 0
        %v6089 = vsel %vm4055, %v6010, 0
        %v6092 = vsel %vm4055, %v6011, 0
        %v6095 = vsel %vm4055, %v6012, 0
        %v6098 = vsel %vm4104, %v6044, 0
        %6100 = vmatprep.subr.bf16.mxu0 0
        %6101 = vmatpush1.bf16.msra.mxu0 %v6040
        %6102 = vmatprep.subr.bf16.mxu0 0
        %6103 = vmatpush1.bf16.msra.mxu0 %v6041
        %6104 = vmatprep.subr.bf16.mxu0 0
        %6105 = vmatpush1.bf16.msra.mxu0 %v6042
        %6106 = vmatprep.subr.bf16.mxu0 0
        %6107 = vmatpush1.bf16.msra.mxu0 %v6043
        %6108 = vmatprep.subr.bf16.mxu0 0
        %6109 = vmatpush1.bf16.msra.mxu0 %v6098
        %6110 = vmatprep.subr.bf16.mxu0 0
        %6111 = vmatpush1.bf16.msra.mxu0 0
        %6112 = vmatprep.subr.bf16.mxu0 0
        %6113 = vmatpush1.bf16.msra.mxu0 0
        %6114 = vmatprep.subr.bf16.mxu0 0
        %6115 = vmatpush1.bf16.msra.mxu0 0
        %6116 = vmatprep.subr.bf16.mxu0 0
        %6117 = vmatpush1.bf16.msra.mxu0 0
        %6118 = vmatprep.subr.bf16.mxu0 0
        %6119 = vmatpush1.bf16.msra.mxu0 0
        %6120 = vmatprep.subr.bf16.mxu0 0
        %6121 = vmatpush1.bf16.msra.mxu0 0
        %6122 = vmatprep.subr.bf16.mxu0 0
        %6123 = vmatpush1.bf16.msra.mxu0 0
        %6124 = vmatprep.subr.bf16.mxu0 0
        %6125 = vmatpush1.bf16.msra.mxu0 0
        %6126 = vmatprep.subr.bf16.mxu0 0
        %6127 = vmatpush1.bf16.msra.mxu0 0
        %6128 = vmatprep.subr.bf16.mxu0 0
        %6129 = vmatpush1.bf16.msra.mxu0 0
        %6130 = vmatprep.subr.bf16.mxu0 0
        %6131 = vmatpush1.bf16.msra.mxu0 0
        %6132 = vmatprep.mubr.bf16.mxu0 0
        %6133 = vmatmul.mubr.bf16.gmra.mrb[0].mxu0 %v6050
        %v6134 = vpop.f32.mrb[0].mxu0
        %v6135 = vadd.f32 0.0, %v6134
        %v6136 = vpop.f32.mrb[0].mxu0
        %v6137 = vpop.f32.mrb[0].mxu0
        %v6138 = vadd.f32 0.0, %v6137
        %v6139 = vpop.f32.mrb[0].mxu0
        %6140 = vmatprep.mubr.bf16.mxu0 0
        %6141 = vmatmul.mubr.bf16.gmra.mrb[0].mxu0 %v6053
        %v6142 = vpop.f32.mrb[0].mxu0
        %v6143 = vadd.f32 0.0, %v6142
        %v6144 = vpop.f32.mrb[0].mxu0
        %v6145 = vpop.f32.mrb[0].mxu0
        %v6146 = vadd.f32 0.0, %v6145
        %v6147 = vpop.f32.mrb[0].mxu0
        %6148 = vmatprep.mubr.bf16.mxu0 0
        %6149 = vmatmul.mubr.bf16.gmra.mrb[0].mxu0 %v6056
        %v6150 = vpop.f32.mrb[0].mxu0
        %v6151 = vadd.f32 0.0, %v6150
        %v6152 = vpop.f32.mrb[0].mxu0
        %v6153 = vpop.f32.mrb[0].mxu0
        %v6154 = vadd.f32 0.0, %v6153
        %v6155 = vpop.f32.mrb[0].mxu0
        %6156 = vmatprep.mubr.bf16.mxu0 0
        %6157 = vmatmul.mubr.bf16.gmra.mrb[0].mxu0 %v6059
        %v6158 = vpop.f32.mrb[0].mxu0
        %v6159 = vadd.f32 0.0, %v6158
        %v6160 = vpop.f32.mrb[0].mxu0
        %v6161 = vpop.f32.mrb[0].mxu0
        %v6162 = vadd.f32 0.0, %v6161
        %v6163 = vpop.f32.mrb[0].mxu0
        %6164 = vmatprep.mubr.bf16.mxu0 0
        %6165 = vmatmul.mubr.bf16.gmra.mrb[0].mxu0 %v6062
        %v6166 = vpop.f32.mrb[0].mxu0
        %v6167 = vadd.f32 0.0, %v6166
        %v6168 = vpop.f32.mrb[0].mxu0
        %v6169 = vpop.f32.mrb[0].mxu0
        %v6170 = vadd.f32 0.0, %v6169
        %v6171 = vpop.f32.mrb[0].mxu0
        %6172 = vmatprep.mubr.bf16.mxu0 0
        %6173 = vmatmul.mubr.bf16.gmra.mrb[0].mxu0 %v6065
        %v6174 = vpop.f32.mrb[0].mxu0
        %v6175 = vadd.f32 0.0, %v6174
        %v6176 = vpop.f32.mrb[0].mxu0
        %v6177 = vpop.f32.mrb[0].mxu0
        %v6178 = vadd.f32 0.0, %v6177
        %v6179 = vpop.f32.mrb[0].mxu0
        %6180 = vmatprep.mubr.bf16.mxu0 0
        %6181 = vmatmul.mubr.bf16.gmra.mrb[0].mxu0 %v6068
        %v6182 = vpop.f32.mrb[0].mxu0
        %v6183 = vadd.f32 0.0, %v6182
        %v6184 = vpop.f32.mrb[0].mxu0
        %v6185 = vpop.f32.mrb[0].mxu0
        %v6186 = vadd.f32 0.0, %v6185
        %v6187 = vpop.f32.mrb[0].mxu0
        %6188 = vmatprep.mubr.bf16.mxu0 0
        %6189 = vmatmul.mubr.bf16.gmra.mrb[0].mxu0 %v6071
        %v6190 = vpop.f32.mrb[0].mxu0
        %v6191 = vadd.f32 0.0, %v6190
        %v6192 = vpop.f32.mrb[0].mxu0
        %v6193 = vpop.f32.mrb[0].mxu0
        %v6194 = vadd.f32 0.0, %v6193
        %v6195 = vpop.f32.mrb[0].mxu0
        %6196 = vmatprep.mubr.bf16.mxu0 0
        %6197 = vmatmul.mubr.bf16.gmra.mrb[0].mxu0 %v6074
        %v6198 = vpop.f32.mrb[0].mxu0
        %v6199 = vadd.f32 0.0, %v6198
        %v6200 = vpop.f32.mrb[0].mxu0
        %v6201 = vpop.f32.mrb[0].mxu0
        %v6202 = vadd.f32 0.0, %v6201
        %v6203 = vpop.f32.mrb[0].mxu0
        %6204 = vmatprep.mubr.bf16.mxu0 0
        %6205 = vmatmul.mubr.bf16.gmra.mrb[0].mxu0 %v6077
        %v6206 = vpop.f32.mrb[0].mxu0
        %v6207 = vadd.f32 0.0, %v6206
        %v6208 = vpop.f32.mrb[0].mxu0
        %v6209 = vpop.f32.mrb[0].mxu0
        %v6210 = vadd.f32 0.0, %v6209
        %v6211 = vpop.f32.mrb[0].mxu0
        %6212 = vmatprep.mubr.bf16.mxu0 0
        %6213 = vmatmul.mubr.bf16.gmra.mrb[0].mxu0 %v6080
        %v6214 = vpop.f32.mrb[0].mxu0
        %v6215 = vadd.f32 0.0, %v6214
        %v6216 = vpop.f32.mrb[0].mxu0
        %v6217 = vpop.f32.mrb[0].mxu0
        %v6218 = vadd.f32 0.0, %v6217
        %v6219 = vpop.f32.mrb[0].mxu0
        %6220 = vmatprep.mubr.bf16.mxu0 0
        %6221 = vmatmul.mubr.bf16.gmra.mrb[0].mxu0 %v6083
        %v6222 = vpop.f32.mrb[0].mxu0
        %v6223 = vadd.f32 0.0, %v6222
        %v6224 = vpop.f32.mrb[0].mxu0
        %v6225 = vpop.f32.mrb[0].mxu0
        %v6226 = vadd.f32 0.0, %v6225
        %v6227 = vpop.f32.mrb[0].mxu0
        %6228 = vmatprep.mubr.bf16.mxu0 0
        %6229 = vmatmul.mubr.bf16.gmra.mrb[0].mxu0 %v6086
        %v6230 = vpop.f32.mrb[0].mxu0
        %v6231 = vadd.f32 0.0, %v6230
        %v6232 = vpop.f32.mrb[0].mxu0
        %v6233 = vpop.f32.mrb[0].mxu0
        %v6234 = vadd.f32 0.0, %v6233
        %v6235 = vpop.f32.mrb[0].mxu0
        %6236 = vmatprep.mubr.bf16.mxu0 0
        %6237 = vmatmul.mubr.bf16.gmra.mrb[0].mxu0 %v6089
        %v6238 = vpop.f32.mrb[0].mxu0
        %v6239 = vadd.f32 0.0, %v6238
        %v6240 = vpop.f32.mrb[0].mxu0
        %v6241 = vpop.f32.mrb[0].mxu0
        %v6242 = vadd.f32 0.0, %v6241
        %v6243 = vpop.f32.mrb[0].mxu0
        %6244 = vmatprep.mubr.bf16.mxu0 0
        %6245 = vmatmul.mubr.bf16.gmra.mrb[0].mxu0 %v6092
        %v6246 = vpop.f32.mrb[0].mxu0
        %v6247 = vadd.f32 0.0, %v6246
        %v6248 = vpop.f32.mrb[0].mxu0
        %v6249 = vpop.f32.mrb[0].mxu0
        %v6250 = vadd.f32 0.0, %v6249
        %v6251 = vpop.f32.mrb[0].mxu0
        %6252 = vmatprep.mubr.bf16.mxu0 0
        %6253 = vmatmul.mubr.bf16.gmra.mrb[0].mxu0 %v6095
        %v6254 = vpop.f32.mrb[0].mxu0
        %v6255 = vadd.f32 0.0, %v6254
        %v6256 = vpop.f32.mrb[0].mxu0
        %v6257 = vpop.f32.mrb[0].mxu0
        %v6258 = vadd.f32 0.0, %v6257
        %v6259 = vpop.f32.mrb[0].mxu0
        %6260 = vdwg.mxu0
        %vm6261 = vcmp.ge.f32.partialorder %v6135, 2.0
        %vm6262 = vcmp.ge.f32.partialorder %v6138, 2.0
        %vm6263 = vcmp.ge.f32.partialorder %v6143, 2.0
        %vm6264 = vcmp.ge.f32.partialorder %v6146, 2.0
        %vm6265 = vcmp.ge.f32.partialorder %v6151, 2.0
        %vm6266 = vcmp.ge.f32.partialorder %v6154, 2.0
        %vm6267 = vcmp.ge.f32.partialorder %v6159, 2.0
        %vm6268 = vcmp.ge.f32.partialorder %v6162, 2.0
        %vm6269 = vcmp.ge.f32.partialorder %v6167, 2.0
        %vm6270 = vcmp.ge.f32.partialorder %v6170, 2.0
        %vm6271 = vcmp.ge.f32.partialorder %v6175, 2.0
        %vm6272 = vcmp.ge.f32.partialorder %v6178, 2.0
        %vm6273 = vcmp.ge.f32.partialorder %v6183, 2.0
        %vm6274 = vcmp.ge.f32.partialorder %v6186, 2.0
        %vm6275 = vcmp.ge.f32.partialorder %v6191, 2.0
        %vm6276 = vcmp.ge.f32.partialorder %v6194, 2.0
        %vm6277 = vcmp.ge.f32.partialorder %v6199, 2.0
        %vm6278 = vcmp.ge.f32.partialorder %v6202, 2.0
        %vm6279 = vcmp.ge.f32.partialorder %v6207, 2.0
        %vm6280 = vcmp.ge.f32.partialorder %v6210, 2.0
        %vm6281 = vcmp.ge.f32.partialorder %v6215, 2.0
        %vm6282 = vcmp.ge.f32.partialorder %v6218, 2.0
        %vm6283 = vcmp.ge.f32.partialorder %v6223, 2.0
        %vm6284 = vcmp.ge.f32.partialorder %v6226, 2.0
        %vm6285 = vcmp.ge.f32.partialorder %v6231, 2.0
        %vm6286 = vcmp.ge.f32.partialorder %v6234, 2.0
        %vm6287 = vcmp.ge.f32.partialorder %v6239, 2.0
        %vm6288 = vcmp.ge.f32.partialorder %v6242, 2.0
        %vm6289 = vcmp.ge.f32.partialorder %v6247, 2.0
        %vm6290 = vcmp.ge.f32.partialorder %v6250, 2.0
        %vm6291 = vcmp.ge.f32.partialorder %v6255, 2.0
        %vm6292 = vcmp.ge.f32.partialorder %v6258, 2.0
        %v6293 = vsel %vm6261, 1.0, 0.0
        %v6294 = vsel %vm6262, 1.0, 0.0
        %v6295 = vsel %vm6263, 1.0, 0.0
        %v6296 = vsel %vm6264, 1.0, 0.0
        %v6297 = vsel %vm6265, 1.0, 0.0
        %v6298 = vsel %vm6266, 1.0, 0.0
        %v6299 = vsel %vm6267, 1.0, 0.0
        %v6300 = vsel %vm6268, 1.0, 0.0
        %v6301 = vsel %vm6269, 1.0, 0.0
        %v6302 = vsel %vm6270, 1.0, 0.0
        %v6303 = vsel %vm6271, 1.0, 0.0
        %v6304 = vsel %vm6272, 1.0, 0.0
        %v6305 = vsel %vm6273, 1.0, 0.0
        %v6306 = vsel %vm6274, 1.0, 0.0
        %v6307 = vsel %vm6275, 1.0, 0.0
        %v6308 = vsel %vm6276, 1.0, 0.0
        %v6309 = vsel %vm6277, 1.0, 0.0
        %v6310 = vsel %vm6278, 1.0, 0.0
        %v6311 = vsel %vm6279, 1.0, 0.0
        %v6312 = vsel %vm6280, 1.0, 0.0
        %v6313 = vsel %vm6281, 1.0, 0.0
        %v6314 = vsel %vm6282, 1.0, 0.0
        %v6315 = vsel %vm6283, 1.0, 0.0
        %v6316 = vsel %vm6284, 1.0, 0.0
        %v6317 = vsel %vm6285, 1.0, 0.0
        %v6318 = vsel %vm6286, 1.0, 0.0
        %v6319 = vsel %vm6287, 1.0, 0.0
        %v6320 = vsel %vm6288, 1.0, 0.0
        %v6321 = vsel %vm6289, 1.0, 0.0
        %v6322 = vsel %vm6290, 1.0, 0.0
        %v6323 = vsel %vm6291, 1.0, 0.0
        %v6324 = vsel %vm6292, 1.0, 0.0
        %v6325 = vsel %vm2273, %v6293, -inf
        %v6326 = vsel %vm2273, %v6295, -inf
        %v6327 = vmax.f32 %v6325, %v6326
        %v6328 = vsel %vm2273, %v6294, -inf
        %v6329 = vsel %vm2273, %v6296, -inf
        %v6330 = vmax.f32 %v6328, %v6329
        %v6331 = vsel %vm2273, %v6297, -inf
        %v6332 = vsel %vm2273, %v6299, -inf
        %v6333 = vmax.f32 %v6331, %v6332
        %v6334 = vsel %vm2273, %v6298, -inf
        %v6335 = vsel %vm2273, %v6300, -inf
        %v6336 = vmax.f32 %v6334, %v6335
        %v6337 = vsel %vm2273, %v6301, -inf
        %v6338 = vsel %vm2273, %v6303, -inf
        %v6339 = vmax.f32 %v6337, %v6338
        %v6340 = vsel %vm2273, %v6302, -inf
        %v6341 = vsel %vm2273, %v6304, -inf
        %v6342 = vmax.f32 %v6340, %v6341
        %v6343 = vsel %vm2273, %v6305, -inf
        %v6344 = vsel %vm2273, %v6307, -inf
        %v6345 = vmax.f32 %v6343, %v6344
        %v6346 = vsel %vm2273, %v6306, -inf
        %v6347 = vsel %vm2273, %v6308, -inf
        %v6348 = vmax.f32 %v6346, %v6347
        %v6349 = vsel %vm2273, %v6309, -inf
        %v6350 = vsel %vm2273, %v6311, -inf
        %v6351 = vmax.f32 %v6349, %v6350
        %v6352 = vsel %vm2273, %v6310, -inf
        %v6353 = vsel %vm2273, %v6312, -inf
        %v6354 = vmax.f32 %v6352, %v6353
        %v6355 = vsel %vm2273, %v6313, -inf
        %v6356 = vsel %vm2273, %v6315, -inf
        %v6357 = vmax.f32 %v6355, %v6356
        %v6358 = vsel %vm2273, %v6314, -inf
        %v6359 = vsel %vm2273, %v6316, -inf
        %v6360 = vmax.f32 %v6358, %v6359
        %v6361 = vsel %vm2273, %v6317, -inf
        %v6362 = vsel %vm2273, %v6319, -inf
        %v6363 = vmax.f32 %v6361, %v6362
        %v6364 = vsel %vm2273, %v6318, -inf
        %v6365 = vsel %vm2273, %v6320, -inf
        %v6366 = vmax.f32 %v6364, %v6365
        %v6367 = vsel %vm2273, %v6321, -inf
        %v6368 = vsel %vm2273, %v6323, -inf
        %v6369 = vmax.f32 %v6367, %v6368
        %v6370 = vsel %vm2273, %v6322, -inf
        %v6371 = vsel %vm2273, %v6324, -inf
        %v6372 = vmax.f32 %v6370, %v6371
        %v6389 = vcombine.high %v6327, %v6327
        %v6391 = vunpack.c.l.s4 1983009808
        %v6392 = vunpack.c.0.s8 %v6391
        %v6393 = vlaneseq
        %v6394 = vshrl.u32 %v6393, 7
        %v6395 = vsub.s32 %v6392, %v6394
        %v6396 = vrot.slane %v6327, %v6395
        %v6398 = vunpack.c.l.s4 1983009808
        %v6399 = vunpack.c.0.s8 %v6398
        %v6400 = vlaneseq
        %v6401 = vshrl.u32 %v6400, 7
        %v6402 = vsub.s32 %v6399, %v6401
        %v6403 = vrot.slane %v6389, %v6402
        %v6404 = vcombine.high %v6396, %v6396
        %v6405 = vcombine.high %v6403, %v6403
        %v6406 = vcombine.high %v6330, %v6330
        %v6408 = vunpack.c.l.s4 1983009808
        %v6409 = vunpack.c.0.s8 %v6408
        %v6410 = vlaneseq
        %v6411 = vshrl.u32 %v6410, 7
        %v6412 = vsub.s32 %v6409, %v6411
        %v6413 = vrot.slane %v6330, %v6412
        %v6415 = vunpack.c.l.s4 1983009808
        %v6416 = vunpack.c.0.s8 %v6415
        %v6417 = vlaneseq
        %v6418 = vshrl.u32 %v6417, 7
        %v6419 = vsub.s32 %v6416, %v6418
        %v6420 = vrot.slane %v6406, %v6419
        %v6421 = vcombine.high %v6413, %v6413
        %v6422 = vcombine.high %v6420, %v6420
        %v6423 = vcombine.high %v6333, %v6333
        %v6425 = vunpack.c.l.s4 1983009808
        %v6426 = vunpack.c.0.s8 %v6425
        %v6427 = vlaneseq
        %v6428 = vshrl.u32 %v6427, 7
        %v6429 = vsub.s32 %v6426, %v6428
        %v6430 = vrot.slane %v6333, %v6429
        %v6432 = vunpack.c.l.s4 1983009808
        %v6433 = vunpack.c.0.s8 %v6432
        %v6434 = vlaneseq
        %v6435 = vshrl.u32 %v6434, 7
        %v6436 = vsub.s32 %v6433, %v6435
        %v6437 = vrot.slane %v6423, %v6436
        %v6438 = vcombine.high %v6430, %v6430
        %v6439 = vcombine.high %v6437, %v6437
        %v6440 = vcombine.high %v6336, %v6336
        %v6442 = vunpack.c.l.s4 1983009808
        %v6443 = vunpack.c.0.s8 %v6442
        %v6444 = vlaneseq
        %v6445 = vshrl.u32 %v6444, 7
        %v6446 = vsub.s32 %v6443, %v6445
        %v6447 = vrot.slane %v6336, %v6446
        %v6449 = vunpack.c.l.s4 1983009808
        %v6450 = vunpack.c.0.s8 %v6449
        %v6451 = vlaneseq
        %v6452 = vshrl.u32 %v6451, 7
        %v6453 = vsub.s32 %v6450, %v6452
        %v6454 = vrot.slane %v6440, %v6453
        %v6455 = vcombine.high %v6447, %v6447
        %v6456 = vcombine.high %v6454, %v6454
        %v6457 = vcombine.high %v6339, %v6339
        %v6459 = vunpack.c.l.s4 1983009808
        %v6460 = vunpack.c.0.s8 %v6459
        %v6461 = vlaneseq
        %v6462 = vshrl.u32 %v6461, 7
        %v6463 = vsub.s32 %v6460, %v6462
        %v6464 = vrot.slane %v6339, %v6463
        %v6466 = vunpack.c.l.s4 1983009808
        %v6467 = vunpack.c.0.s8 %v6466
        %v6468 = vlaneseq
        %v6469 = vshrl.u32 %v6468, 7
        %v6470 = vsub.s32 %v6467, %v6469
        %v6471 = vrot.slane %v6457, %v6470
        %v6472 = vcombine.high %v6464, %v6464
        %v6473 = vcombine.high %v6471, %v6471
        %v6474 = vcombine.high %v6342, %v6342
        %v6476 = vunpack.c.l.s4 1983009808
        %v6477 = vunpack.c.0.s8 %v6476
        %v6478 = vlaneseq
        %v6479 = vshrl.u32 %v6478, 7
        %v6480 = vsub.s32 %v6477, %v6479
        %v6481 = vrot.slane %v6342, %v6480
        %v6483 = vunpack.c.l.s4 1983009808
        %v6484 = vunpack.c.0.s8 %v6483
        %v6485 = vlaneseq
        %v6486 = vshrl.u32 %v6485, 7
        %v6487 = vsub.s32 %v6484, %v6486
        %v6488 = vrot.slane %v6474, %v6487
        %v6489 = vcombine.high %v6481, %v6481
        %v6490 = vcombine.high %v6488, %v6488
        %v6491 = vcombine.high %v6345, %v6345
        %v6493 = vunpack.c.l.s4 1983009808
        %v6494 = vunpack.c.0.s8 %v6493
        %v6495 = vlaneseq
        %v6496 = vshrl.u32 %v6495, 7
        %v6497 = vsub.s32 %v6494, %v6496
        %v6498 = vrot.slane %v6345, %v6497
        %v6500 = vunpack.c.l.s4 1983009808
        %v6501 = vunpack.c.0.s8 %v6500
        %v6502 = vlaneseq
        %v6503 = vshrl.u32 %v6502, 7
        %v6504 = vsub.s32 %v6501, %v6503
        %v6505 = vrot.slane %v6491, %v6504
        %v6506 = vcombine.high %v6498, %v6498
        %v6507 = vcombine.high %v6505, %v6505
        %v6508 = vcombine.high %v6348, %v6348
        %v6510 = vunpack.c.l.s4 1983009808
        %v6511 = vunpack.c.0.s8 %v6510
        %v6512 = vlaneseq
        %v6513 = vshrl.u32 %v6512, 7
        %v6514 = vsub.s32 %v6511, %v6513
        %v6515 = vrot.slane %v6348, %v6514
        %v6517 = vunpack.c.l.s4 1983009808
        %v6518 = vunpack.c.0.s8 %v6517
        %v6519 = vlaneseq
        %v6520 = vshrl.u32 %v6519, 7
        %v6521 = vsub.s32 %v6518, %v6520
        %v6522 = vrot.slane %v6508, %v6521
        %v6523 = vcombine.high %v6515, %v6515
        %v6524 = vcombine.high %v6522, %v6522
        %v6525 = vcombine.high %v6351, %v6351
        %v6527 = vunpack.c.l.s4 1983009808
        %v6528 = vunpack.c.0.s8 %v6527
        %v6529 = vlaneseq
        %v6530 = vshrl.u32 %v6529, 7
        %v6531 = vsub.s32 %v6528, %v6530
        %v6532 = vrot.slane %v6351, %v6531
        %v6534 = vunpack.c.l.s4 1983009808
        %v6535 = vunpack.c.0.s8 %v6534
        %v6536 = vlaneseq
        %v6537 = vshrl.u32 %v6536, 7
        %v6538 = vsub.s32 %v6535, %v6537
        %v6539 = vrot.slane %v6525, %v6538
        %v6540 = vcombine.high %v6532, %v6532
        %v6541 = vcombine.high %v6539, %v6539
        %v6542 = vcombine.high %v6354, %v6354
        %v6544 = vunpack.c.l.s4 1983009808
        %v6545 = vunpack.c.0.s8 %v6544
        %v6546 = vlaneseq
        %v6547 = vshrl.u32 %v6546, 7
        %v6548 = vsub.s32 %v6545, %v6547
        %v6549 = vrot.slane %v6354, %v6548
        %v6551 = vunpack.c.l.s4 1983009808
        %v6552 = vunpack.c.0.s8 %v6551
        %v6553 = vlaneseq
        %v6554 = vshrl.u32 %v6553, 7
        %v6555 = vsub.s32 %v6552, %v6554
        %v6556 = vrot.slane %v6542, %v6555
        %v6557 = vcombine.high %v6549, %v6549
        %v6558 = vcombine.high %v6556, %v6556
        %v6559 = vcombine.high %v6357, %v6357
        %v6561 = vunpack.c.l.s4 1983009808
        %v6562 = vunpack.c.0.s8 %v6561
        %v6563 = vlaneseq
        %v6564 = vshrl.u32 %v6563, 7
        %v6565 = vsub.s32 %v6562, %v6564
        %v6566 = vrot.slane %v6357, %v6565
        %v6568 = vunpack.c.l.s4 1983009808
        %v6569 = vunpack.c.0.s8 %v6568
        %v6570 = vlaneseq
        %v6571 = vshrl.u32 %v6570, 7
        %v6572 = vsub.s32 %v6569, %v6571
        %v6573 = vrot.slane %v6559, %v6572
        %v6574 = vcombine.high %v6566, %v6566
        %v6575 = vcombine.high %v6573, %v6573
        %v6576 = vcombine.high %v6360, %v6360
        %v6578 = vunpack.c.l.s4 1983009808
        %v6579 = vunpack.c.0.s8 %v6578
        %v6580 = vlaneseq
        %v6581 = vshrl.u32 %v6580, 7
        %v6582 = vsub.s32 %v6579, %v6581
        %v6583 = vrot.slane %v6360, %v6582
        %v6585 = vunpack.c.l.s4 1983009808
        %v6586 = vunpack.c.0.s8 %v6585
        %v6587 = vlaneseq
        %v6588 = vshrl.u32 %v6587, 7
        %v6589 = vsub.s32 %v6586, %v6588
        %v6590 = vrot.slane %v6576, %v6589
        %v6591 = vcombine.high %v6583, %v6583
        %v6592 = vcombine.high %v6590, %v6590
        %v6593 = vcombine.high %v6363, %v6363
        %v6595 = vunpack.c.l.s4 1983009808
        %v6596 = vunpack.c.0.s8 %v6595
        %v6597 = vlaneseq
        %v6598 = vshrl.u32 %v6597, 7
        %v6599 = vsub.s32 %v6596, %v6598
        %v6600 = vrot.slane %v6363, %v6599
        %v6602 = vunpack.c.l.s4 1983009808
        %v6603 = vunpack.c.0.s8 %v6602
        %v6604 = vlaneseq
        %v6605 = vshrl.u32 %v6604, 7
        %v6606 = vsub.s32 %v6603, %v6605
        %v6607 = vrot.slane %v6593, %v6606
        %v6608 = vcombine.high %v6600, %v6600
        %v6609 = vcombine.high %v6607, %v6607
        %v6610 = vcombine.high %v6366, %v6366
        %v6612 = vunpack.c.l.s4 1983009808
        %v6613 = vunpack.c.0.s8 %v6612
        %v6614 = vlaneseq
        %v6615 = vshrl.u32 %v6614, 7
        %v6616 = vsub.s32 %v6613, %v6615
        %v6617 = vrot.slane %v6366, %v6616
        %v6619 = vunpack.c.l.s4 1983009808
        %v6620 = vunpack.c.0.s8 %v6619
        %v6621 = vlaneseq
        %v6622 = vshrl.u32 %v6621, 7
        %v6623 = vsub.s32 %v6620, %v6622
        %v6624 = vrot.slane %v6610, %v6623
        %v6625 = vcombine.high %v6617, %v6617
        %v6626 = vcombine.high %v6624, %v6624
        %v6627 = vcombine.high %v6369, %v6369
        %v6629 = vunpack.c.l.s4 1983009808
        %v6630 = vunpack.c.0.s8 %v6629
        %v6631 = vlaneseq
        %v6632 = vshrl.u32 %v6631, 7
        %v6633 = vsub.s32 %v6630, %v6632
        %v6634 = vrot.slane %v6369, %v6633
        %v6636 = vunpack.c.l.s4 1983009808
        %v6637 = vunpack.c.0.s8 %v6636
        %v6638 = vlaneseq
        %v6639 = vshrl.u32 %v6638, 7
        %v6640 = vsub.s32 %v6637, %v6639
        %v6641 = vrot.slane %v6627, %v6640
        %v6642 = vcombine.high %v6634, %v6634
        %v6643 = vcombine.high %v6641, %v6641
        %v6644 = vcombine.high %v6372, %v6372
        %v6646 = vunpack.c.l.s4 1983009808
        %v6647 = vunpack.c.0.s8 %v6646
        %v6648 = vlaneseq
        %v6649 = vshrl.u32 %v6648, 7
        %v6650 = vsub.s32 %v6647, %v6649
        %v6651 = vrot.slane %v6372, %v6650
        %v6653 = vunpack.c.l.s4 1983009808
        %v6654 = vunpack.c.0.s8 %v6653
        %v6655 = vlaneseq
        %v6656 = vshrl.u32 %v6655, 7
        %v6657 = vsub.s32 %v6654, %v6656
        %v6658 = vrot.slane %v6644, %v6657
        %v6659 = vcombine.high %v6651, %v6651
        %v6660 = vcombine.high %v6658, %v6658
        %v6725 = vsel %vm2276, %v6396, -inf
        %v6726 = vrot.slane %v6725, 4
        %v6727 = vmax.f32 %v6725, %v6726
        %v6728 = vrot.slane %v6727, 2
        %v6729 = vmax.f32 %v6727, %v6728
        %v6730 = vrot.slane %v6729, 1
        %v6731 = vmax.f32 %v6729, %v6730
        %v6732 = vsel %vm2276, %v6404, -inf
        %v6733 = vrot.slane %v6732, 4
        %v6734 = vmax.f32 %v6732, %v6733
        %v6735 = vrot.slane %v6734, 2
        %v6736 = vmax.f32 %v6734, %v6735
        %v6737 = vrot.slane %v6736, 1
        %v6738 = vmax.f32 %v6736, %v6737
        %v6739 = vsel %vm2276, %v6403, -inf
        %v6740 = vrot.slane %v6739, 4
        %v6741 = vmax.f32 %v6739, %v6740
        %v6742 = vrot.slane %v6741, 2
        %v6743 = vmax.f32 %v6741, %v6742
        %v6744 = vrot.slane %v6743, 1
        %v6745 = vmax.f32 %v6743, %v6744
        %v6746 = vsel %vm2276, %v6405, -inf
        %v6747 = vrot.slane %v6746, 4
        %v6748 = vmax.f32 %v6746, %v6747
        %v6749 = vrot.slane %v6748, 2
        %v6750 = vmax.f32 %v6748, %v6749
        %v6751 = vrot.slane %v6750, 1
        %v6752 = vmax.f32 %v6750, %v6751
        %v6753 = vsel %vm2276, %v6413, -inf
        %v6754 = vrot.slane %v6753, 4
        %v6755 = vmax.f32 %v6753, %v6754
        %v6756 = vrot.slane %v6755, 2
        %v6757 = vmax.f32 %v6755, %v6756
        %v6758 = vrot.slane %v6757, 1
        %v6759 = vmax.f32 %v6757, %v6758
        %v6760 = vsel %vm2276, %v6421, -inf
        %v6761 = vrot.slane %v6760, 4
        %v6762 = vmax.f32 %v6760, %v6761
        %v6763 = vrot.slane %v6762, 2
        %v6764 = vmax.f32 %v6762, %v6763
        %v6765 = vrot.slane %v6764, 1
        %v6766 = vmax.f32 %v6764, %v6765
        %v6767 = vsel %vm2276, %v6420, -inf
        %v6768 = vrot.slane %v6767, 4
        %v6769 = vmax.f32 %v6767, %v6768
        %v6770 = vrot.slane %v6769, 2
        %v6771 = vmax.f32 %v6769, %v6770
        %v6772 = vrot.slane %v6771, 1
        %v6773 = vmax.f32 %v6771, %v6772
        %v6774 = vsel %vm2276, %v6422, -inf
        %v6775 = vrot.slane %v6774, 4
        %v6776 = vmax.f32 %v6774, %v6775
        %v6777 = vrot.slane %v6776, 2
        %v6778 = vmax.f32 %v6776, %v6777
        %v6779 = vrot.slane %v6778, 1
        %v6780 = vmax.f32 %v6778, %v6779
        %v6781 = vsel %vm2276, %v6430, -inf
        %v6782 = vrot.slane %v6781, 4
        %v6783 = vmax.f32 %v6781, %v6782
        %v6784 = vrot.slane %v6783, 2
        %v6785 = vmax.f32 %v6783, %v6784
        %v6786 = vrot.slane %v6785, 1
        %v6787 = vmax.f32 %v6785, %v6786
        %v6788 = vsel %vm2276, %v6438, -inf
        %v6789 = vrot.slane %v6788, 4
        %v6790 = vmax.f32 %v6788, %v6789
        %v6791 = vrot.slane %v6790, 2
        %v6792 = vmax.f32 %v6790, %v6791
        %v6793 = vrot.slane %v6792, 1
        %v6794 = vmax.f32 %v6792, %v6793
        %v6795 = vsel %vm2276, %v6437, -inf
        %v6796 = vrot.slane %v6795, 4
        %v6797 = vmax.f32 %v6795, %v6796
        %v6798 = vrot.slane %v6797, 2
        %v6799 = vmax.f32 %v6797, %v6798
        %v6800 = vrot.slane %v6799, 1
        %v6801 = vmax.f32 %v6799, %v6800
        %v6802 = vsel %vm2276, %v6439, -inf
        %v6803 = vrot.slane %v6802, 4
        %v6804 = vmax.f32 %v6802, %v6803
        %v6805 = vrot.slane %v6804, 2
        %v6806 = vmax.f32 %v6804, %v6805
        %v6807 = vrot.slane %v6806, 1
        %v6808 = vmax.f32 %v6806, %v6807
        %v6809 = vsel %vm2276, %v6447, -inf
        %v6810 = vrot.slane %v6809, 4
        %v6811 = vmax.f32 %v6809, %v6810
        %v6812 = vrot.slane %v6811, 2
        %v6813 = vmax.f32 %v6811, %v6812
        %v6814 = vrot.slane %v6813, 1
        %v6815 = vmax.f32 %v6813, %v6814
        %v6816 = vsel %vm2276, %v6455, -inf
        %v6817 = vrot.slane %v6816, 4
        %v6818 = vmax.f32 %v6816, %v6817
        %v6819 = vrot.slane %v6818, 2
        %v6820 = vmax.f32 %v6818, %v6819
        %v6821 = vrot.slane %v6820, 1
        %v6822 = vmax.f32 %v6820, %v6821
        %v6823 = vsel %vm2276, %v6454, -inf
        %v6824 = vrot.slane %v6823, 4
        %v6825 = vmax.f32 %v6823, %v6824
        %v6826 = vrot.slane %v6825, 2
        %v6827 = vmax.f32 %v6825, %v6826
        %v6828 = vrot.slane %v6827, 1
        %v6829 = vmax.f32 %v6827, %v6828
        %v6830 = vsel %vm2276, %v6456, -inf
        %v6831 = vrot.slane %v6830, 4
        %v6832 = vmax.f32 %v6830, %v6831
        %v6833 = vrot.slane %v6832, 2
        %v6834 = vmax.f32 %v6832, %v6833
        %v6835 = vrot.slane %v6834, 1
        %v6836 = vmax.f32 %v6834, %v6835
        %v6837 = vsel %vm2276, %v6464, -inf
        %v6838 = vrot.slane %v6837, 4
        %v6839 = vmax.f32 %v6837, %v6838
        %v6840 = vrot.slane %v6839, 2
        %v6841 = vmax.f32 %v6839, %v6840
        %v6842 = vrot.slane %v6841, 1
        %v6843 = vmax.f32 %v6841, %v6842
        %v6844 = vsel %vm2276, %v6472, -inf
        %v6845 = vrot.slane %v6844, 4
        %v6846 = vmax.f32 %v6844, %v6845
        %v6847 = vrot.slane %v6846, 2
        %v6848 = vmax.f32 %v6846, %v6847
        %v6849 = vrot.slane %v6848, 1
        %v6850 = vmax.f32 %v6848, %v6849
        %v6851 = vsel %vm2276, %v6471, -inf
        %v6852 = vrot.slane %v6851, 4
        %v6853 = vmax.f32 %v6851, %v6852
        %v6854 = vrot.slane %v6853, 2
        %v6855 = vmax.f32 %v6853, %v6854
        %v6856 = vrot.slane %v6855, 1
        %v6857 = vmax.f32 %v6855, %v6856
        %v6858 = vsel %vm2276, %v6473, -inf
        %v6859 = vrot.slane %v6858, 4
        %v6860 = vmax.f32 %v6858, %v6859
        %v6861 = vrot.slane %v6860, 2
        %v6862 = vmax.f32 %v6860, %v6861
        %v6863 = vrot.slane %v6862, 1
        %v6864 = vmax.f32 %v6862, %v6863
        %v6865 = vsel %vm2276, %v6481, -inf
        %v6866 = vrot.slane %v6865, 4
        %v6867 = vmax.f32 %v6865, %v6866
        %v6868 = vrot.slane %v6867, 2
        %v6869 = vmax.f32 %v6867, %v6868
        %v6870 = vrot.slane %v6869, 1
        %v6871 = vmax.f32 %v6869, %v6870
        %v6872 = vsel %vm2276, %v6489, -inf
        %v6873 = vrot.slane %v6872, 4
        %v6874 = vmax.f32 %v6872, %v6873
        %v6875 = vrot.slane %v6874, 2
        %v6876 = vmax.f32 %v6874, %v6875
        %v6877 = vrot.slane %v6876, 1
        %v6878 = vmax.f32 %v6876, %v6877
        %v6879 = vsel %vm2276, %v6488, -inf
        %v6880 = vrot.slane %v6879, 4
        %v6881 = vmax.f32 %v6879, %v6880
        %v6882 = vrot.slane %v6881, 2
        %v6883 = vmax.f32 %v6881, %v6882
        %v6884 = vrot.slane %v6883, 1
        %v6885 = vmax.f32 %v6883, %v6884
        %v6886 = vsel %vm2276, %v6490, -inf
        %v6887 = vrot.slane %v6886, 4
        %v6888 = vmax.f32 %v6886, %v6887
        %v6889 = vrot.slane %v6888, 2
        %v6890 = vmax.f32 %v6888, %v6889
        %v6891 = vrot.slane %v6890, 1
        %v6892 = vmax.f32 %v6890, %v6891
        %v6893 = vsel %vm2276, %v6498, -inf
        %v6894 = vrot.slane %v6893, 4
        %v6895 = vmax.f32 %v6893, %v6894
        %v6896 = vrot.slane %v6895, 2
        %v6897 = vmax.f32 %v6895, %v6896
        %v6898 = vrot.slane %v6897, 1
        %v6899 = vmax.f32 %v6897, %v6898
        %v6900 = vsel %vm2276, %v6506, -inf
        %v6901 = vrot.slane %v6900, 4
        %v6902 = vmax.f32 %v6900, %v6901
        %v6903 = vrot.slane %v6902, 2
        %v6904 = vmax.f32 %v6902, %v6903
        %v6905 = vrot.slane %v6904, 1
        %v6906 = vmax.f32 %v6904, %v6905
        %v6907 = vsel %vm2276, %v6505, -inf
        %v6908 = vrot.slane %v6907, 4
        %v6909 = vmax.f32 %v6907, %v6908
        %v6910 = vrot.slane %v6909, 2
        %v6911 = vmax.f32 %v6909, %v6910
        %v6912 = vrot.slane %v6911, 1
        %v6913 = vmax.f32 %v6911, %v6912
        %v6914 = vsel %vm2276, %v6507, -inf
        %v6915 = vrot.slane %v6914, 4
        %v6916 = vmax.f32 %v6914, %v6915
        %v6917 = vrot.slane %v6916, 2
        %v6918 = vmax.f32 %v6916, %v6917
        %v6919 = vrot.slane %v6918, 1
        %v6920 = vmax.f32 %v6918, %v6919
        %v6921 = vsel %vm2276, %v6515, -inf
        %v6922 = vrot.slane %v6921, 4
        %v6923 = vmax.f32 %v6921, %v6922
        %v6924 = vrot.slane %v6923, 2
        %v6925 = vmax.f32 %v6923, %v6924
        %v6926 = vrot.slane %v6925, 1
        %v6927 = vmax.f32 %v6925, %v6926
        %v6928 = vsel %vm2276, %v6523, -inf
        %v6929 = vrot.slane %v6928, 4
        %v6930 = vmax.f32 %v6928, %v6929
        %v6931 = vrot.slane %v6930, 2
        %v6932 = vmax.f32 %v6930, %v6931
        %v6933 = vrot.slane %v6932, 1
        %v6934 = vmax.f32 %v6932, %v6933
        %v6935 = vsel %vm2276, %v6522, -inf
        %v6936 = vrot.slane %v6935, 4
        %v6937 = vmax.f32 %v6935, %v6936
        %v6938 = vrot.slane %v6937, 2
        %v6939 = vmax.f32 %v6937, %v6938
        %v6940 = vrot.slane %v6939, 1
        %v6941 = vmax.f32 %v6939, %v6940
        %v6942 = vsel %vm2276, %v6524, -inf
        %v6943 = vrot.slane %v6942, 4
        %v6944 = vmax.f32 %v6942, %v6943
        %v6945 = vrot.slane %v6944, 2
        %v6946 = vmax.f32 %v6944, %v6945
        %v6947 = vrot.slane %v6946, 1
        %v6948 = vmax.f32 %v6946, %v6947
        %v6949 = vsel %vm2276, %v6532, -inf
        %v6950 = vrot.slane %v6949, 4
        %v6951 = vmax.f32 %v6949, %v6950
        %v6952 = vrot.slane %v6951, 2
        %v6953 = vmax.f32 %v6951, %v6952
        %v6954 = vrot.slane %v6953, 1
        %v6955 = vmax.f32 %v6953, %v6954
        %v6956 = vsel %vm2276, %v6540, -inf
        %v6957 = vrot.slane %v6956, 4
        %v6958 = vmax.f32 %v6956, %v6957
        %v6959 = vrot.slane %v6958, 2
        %v6960 = vmax.f32 %v6958, %v6959
        %v6961 = vrot.slane %v6960, 1
        %v6962 = vmax.f32 %v6960, %v6961
        %v6963 = vsel %vm2276, %v6539, -inf
        %v6964 = vrot.slane %v6963, 4
        %v6965 = vmax.f32 %v6963, %v6964
        %v6966 = vrot.slane %v6965, 2
        %v6967 = vmax.f32 %v6965, %v6966
        %v6968 = vrot.slane %v6967, 1
        %v6969 = vmax.f32 %v6967, %v6968
        %v6970 = vsel %vm2276, %v6541, -inf
        %v6971 = vrot.slane %v6970, 4
        %v6972 = vmax.f32 %v6970, %v6971
        %v6973 = vrot.slane %v6972, 2
        %v6974 = vmax.f32 %v6972, %v6973
        %v6975 = vrot.slane %v6974, 1
        %v6976 = vmax.f32 %v6974, %v6975
        %v6977 = vsel %vm2276, %v6549, -inf
        %v6978 = vrot.slane %v6977, 4
        %v6979 = vmax.f32 %v6977, %v6978
        %v6980 = vrot.slane %v6979, 2
        %v6981 = vmax.f32 %v6979, %v6980
        %v6982 = vrot.slane %v6981, 1
        %v6983 = vmax.f32 %v6981, %v6982
        %v6984 = vsel %vm2276, %v6557, -inf
        %v6985 = vrot.slane %v6984, 4
        %v6986 = vmax.f32 %v6984, %v6985
        %v6987 = vrot.slane %v6986, 2
        %v6988 = vmax.f32 %v6986, %v6987
        %v6989 = vrot.slane %v6988, 1
        %v6990 = vmax.f32 %v6988, %v6989
        %v6991 = vsel %vm2276, %v6556, -inf
        %v6992 = vrot.slane %v6991, 4
        %v6993 = vmax.f32 %v6991, %v6992
        %v6994 = vrot.slane %v6993, 2
        %v6995 = vmax.f32 %v6993, %v6994
        %v6996 = vrot.slane %v6995, 1
        %v6997 = vmax.f32 %v6995, %v6996
        %v6998 = vsel %vm2276, %v6558, -inf
        %v6999 = vrot.slane %v6998, 4
        %v7000 = vmax.f32 %v6998, %v6999
        %v7001 = vrot.slane %v7000, 2
        %v7002 = vmax.f32 %v7000, %v7001
        %v7003 = vrot.slane %v7002, 1
        %v7004 = vmax.f32 %v7002, %v7003
        %v7005 = vsel %vm2276, %v6566, -inf
        %v7006 = vrot.slane %v7005, 4
        %v7007 = vmax.f32 %v7005, %v7006
        %v7008 = vrot.slane %v7007, 2
        %v7009 = vmax.f32 %v7007, %v7008
        %v7010 = vrot.slane %v7009, 1
        %v7011 = vmax.f32 %v7009, %v7010
        %v7012 = vsel %vm2276, %v6574, -inf
        %v7013 = vrot.slane %v7012, 4
        %v7014 = vmax.f32 %v7012, %v7013
        %v7015 = vrot.slane %v7014, 2
        %v7016 = vmax.f32 %v7014, %v7015
        %v7017 = vrot.slane %v7016, 1
        %v7018 = vmax.f32 %v7016, %v7017
        %v7019 = vsel %vm2276, %v6573, -inf
        %v7020 = vrot.slane %v7019, 4
        %v7021 = vmax.f32 %v7019, %v7020
        %v7022 = vrot.slane %v7021, 2
        %v7023 = vmax.f32 %v7021, %v7022
        %v7024 = vrot.slane %v7023, 1
        %v7025 = vmax.f32 %v7023, %v7024
        %v7026 = vsel %vm2276, %v6575, -inf
        %v7027 = vrot.slane %v7026, 4
        %v7028 = vmax.f32 %v7026, %v7027
        %v7029 = vrot.slane %v7028, 2
        %v7030 = vmax.f32 %v7028, %v7029
        %v7031 = vrot.slane %v7030, 1
        %v7032 = vmax.f32 %v7030, %v7031
        %v7033 = vsel %vm2276, %v6583, -inf
        %v7034 = vrot.slane %v7033, 4
        %v7035 = vmax.f32 %v7033, %v7034
        %v7036 = vrot.slane %v7035, 2
        %v7037 = vmax.f32 %v7035, %v7036
        %v7038 = vrot.slane %v7037, 1
        %v7039 = vmax.f32 %v7037, %v7038
        %v7040 = vsel %vm2276, %v6591, -inf
        %v7041 = vrot.slane %v7040, 4
        %v7042 = vmax.f32 %v7040, %v7041
        %v7043 = vrot.slane %v7042, 2
        %v7044 = vmax.f32 %v7042, %v7043
        %v7045 = vrot.slane %v7044, 1
        %v7046 = vmax.f32 %v7044, %v7045
        %v7047 = vsel %vm2276, %v6590, -inf
        %v7048 = vrot.slane %v7047, 4
        %v7049 = vmax.f32 %v7047, %v7048
        %v7050 = vrot.slane %v7049, 2
        %v7051 = vmax.f32 %v7049, %v7050
        %v7052 = vrot.slane %v7051, 1
        %v7053 = vmax.f32 %v7051, %v7052
        %v7054 = vsel %vm2276, %v6592, -inf
        %v7055 = vrot.slane %v7054, 4
        %v7056 = vmax.f32 %v7054, %v7055
        %v7057 = vrot.slane %v7056, 2
        %v7058 = vmax.f32 %v7056, %v7057
        %v7059 = vrot.slane %v7058, 1
        %v7060 = vmax.f32 %v7058, %v7059
        %v7061 = vsel %vm2276, %v6600, -inf
        %v7062 = vrot.slane %v7061, 4
        %v7063 = vmax.f32 %v7061, %v7062
        %v7064 = vrot.slane %v7063, 2
        %v7065 = vmax.f32 %v7063, %v7064
        %v7066 = vrot.slane %v7065, 1
        %v7067 = vmax.f32 %v7065, %v7066
        %v7068 = vsel %vm2276, %v6608, -inf
        %v7069 = vrot.slane %v7068, 4
        %v7070 = vmax.f32 %v7068, %v7069
        %v7071 = vrot.slane %v7070, 2
        %v7072 = vmax.f32 %v7070, %v7071
        %v7073 = vrot.slane %v7072, 1
        %v7074 = vmax.f32 %v7072, %v7073
        %v7075 = vsel %vm2276, %v6607, -inf
        %v7076 = vrot.slane %v7075, 4
        %v7077 = vmax.f32 %v7075, %v7076
        %v7078 = vrot.slane %v7077, 2
        %v7079 = vmax.f32 %v7077, %v7078
        %v7080 = vrot.slane %v7079, 1
        %v7081 = vmax.f32 %v7079, %v7080
        %v7082 = vsel %vm2276, %v6609, -inf
        %v7083 = vrot.slane %v7082, 4
        %v7084 = vmax.f32 %v7082, %v7083
        %v7085 = vrot.slane %v7084, 2
        %v7086 = vmax.f32 %v7084, %v7085
        %v7087 = vrot.slane %v7086, 1
        %v7088 = vmax.f32 %v7086, %v7087
        %v7089 = vsel %vm2276, %v6617, -inf
        %v7090 = vrot.slane %v7089, 4
        %v7091 = vmax.f32 %v7089, %v7090
        %v7092 = vrot.slane %v7091, 2
        %v7093 = vmax.f32 %v7091, %v7092
        %v7094 = vrot.slane %v7093, 1
        %v7095 = vmax.f32 %v7093, %v7094
        %v7096 = vsel %vm2276, %v6625, -inf
        %v7097 = vrot.slane %v7096, 4
        %v7098 = vmax.f32 %v7096, %v7097
        %v7099 = vrot.slane %v7098, 2
        %v7100 = vmax.f32 %v7098, %v7099
        %v7101 = vrot.slane %v7100, 1
        %v7102 = vmax.f32 %v7100, %v7101
        %v7103 = vsel %vm2276, %v6624, -inf
        %v7104 = vrot.slane %v7103, 4
        %v7105 = vmax.f32 %v7103, %v7104
        %v7106 = vrot.slane %v7105, 2
        %v7107 = vmax.f32 %v7105, %v7106
        %v7108 = vrot.slane %v7107, 1
        %v7109 = vmax.f32 %v7107, %v7108
        %v7110 = vsel %vm2276, %v6626, -inf
        %v7111 = vrot.slane %v7110, 4
        %v7112 = vmax.f32 %v7110, %v7111
        %v7113 = vrot.slane %v7112, 2
        %v7114 = vmax.f32 %v7112, %v7113
        %v7115 = vrot.slane %v7114, 1
        %v7116 = vmax.f32 %v7114, %v7115
        %v7117 = vsel %vm2276, %v6634, -inf
        %v7118 = vrot.slane %v7117, 4
        %v7119 = vmax.f32 %v7117, %v7118
        %v7120 = vrot.slane %v7119, 2
        %v7121 = vmax.f32 %v7119, %v7120
        %v7122 = vrot.slane %v7121, 1
        %v7123 = vmax.f32 %v7121, %v7122
        %v7124 = vsel %vm2276, %v6642, -inf
        %v7125 = vrot.slane %v7124, 4
        %v7126 = vmax.f32 %v7124, %v7125
        %v7127 = vrot.slane %v7126, 2
        %v7128 = vmax.f32 %v7126, %v7127
        %v7129 = vrot.slane %v7128, 1
        %v7130 = vmax.f32 %v7128, %v7129
        %v7131 = vsel %vm2276, %v6641, -inf
        %v7132 = vrot.slane %v7131, 4
        %v7133 = vmax.f32 %v7131, %v7132
        %v7134 = vrot.slane %v7133, 2
        %v7135 = vmax.f32 %v7133, %v7134
        %v7136 = vrot.slane %v7135, 1
        %v7137 = vmax.f32 %v7135, %v7136
        %v7138 = vsel %vm2276, %v6643, -inf
        %v7139 = vrot.slane %v7138, 4
        %v7140 = vmax.f32 %v7138, %v7139
        %v7141 = vrot.slane %v7140, 2
        %v7142 = vmax.f32 %v7140, %v7141
        %v7143 = vrot.slane %v7142, 1
        %v7144 = vmax.f32 %v7142, %v7143
        %v7145 = vsel %vm2276, %v6651, -inf
        %v7146 = vrot.slane %v7145, 4
        %v7147 = vmax.f32 %v7145, %v7146
        %v7148 = vrot.slane %v7147, 2
        %v7149 = vmax.f32 %v7147, %v7148
        %v7150 = vrot.slane %v7149, 1
        %v7151 = vmax.f32 %v7149, %v7150
        %v7152 = vsel %vm2276, %v6659, -inf
        %v7153 = vrot.slane %v7152, 4
        %v7154 = vmax.f32 %v7152, %v7153
        %v7155 = vrot.slane %v7154, 2
        %v7156 = vmax.f32 %v7154, %v7155
        %v7157 = vrot.slane %v7156, 1
        %v7158 = vmax.f32 %v7156, %v7157
        %v7159 = vsel %vm2276, %v6658, -inf
        %v7160 = vrot.slane %v7159, 4
        %v7161 = vmax.f32 %v7159, %v7160
        %v7162 = vrot.slane %v7161, 2
        %v7163 = vmax.f32 %v7161, %v7162
        %v7164 = vrot.slane %v7163, 1
        %v7165 = vmax.f32 %v7163, %v7164
        %v7166 = vsel %vm2276, %v6660, -inf
        %v7167 = vrot.slane %v7166, 4
        %v7168 = vmax.f32 %v7166, %v7167
        %v7169 = vrot.slane %v7168, 2
        %v7170 = vmax.f32 %v7168, %v7169
        %v7171 = vrot.slane %v7170, 1
        %v7172 = vmax.f32 %v7170, %v7171
        %vm7237 = vcmask 1041409
        %v7238 = vsel %vm7237, %v6738, %v6731
        %vm7239 = vcmask 1042434
        %v7240 = vsel %vm7239, %v6745, %v7238
        %vm7241 = vcmask 1043459
        %v7242 = vsel %vm7241, %v6752, %v7240
        %vm7243 = vcmask 1044484
        %v7244 = vsel %vm7243, %v6759, %v7242
        %vm7245 = vcmask 1045509
        %v7246 = vsel %vm7245, %v6766, %v7244
        %vm7247 = vcmask 1046534
        %v7248 = vsel %vm7247, %v6773, %v7246
        %vm7249 = vcmask 1047559
        %v7250 = vsel %vm7249, %v6780, %v7248
        %v7251 = vsel %vm7237, %v6794, %v6787
        %v7252 = vsel %vm7239, %v6801, %v7251
        %v7253 = vsel %vm7241, %v6808, %v7252
        %v7254 = vsel %vm7243, %v6815, %v7253
        %v7255 = vsel %vm7245, %v6822, %v7254
        %v7256 = vsel %vm7247, %v6829, %v7255
        %v7257 = vsel %vm7249, %v6836, %v7256
        %v7258 = vsel %vm7237, %v6850, %v6843
        %v7259 = vsel %vm7239, %v6857, %v7258
        %v7260 = vsel %vm7241, %v6864, %v7259
        %v7261 = vsel %vm7243, %v6871, %v7260
        %v7262 = vsel %vm7245, %v6878, %v7261
        %v7263 = vsel %vm7247, %v6885, %v7262
        %v7264 = vsel %vm7249, %v6892, %v7263
        %v7265 = vsel %vm7237, %v6906, %v6899
        %v7266 = vsel %vm7239, %v6913, %v7265
        %v7267 = vsel %vm7241, %v6920, %v7266
        %v7268 = vsel %vm7243, %v6927, %v7267
        %v7269 = vsel %vm7245, %v6934, %v7268
        %v7270 = vsel %vm7247, %v6941, %v7269
        %v7271 = vsel %vm7249, %v6948, %v7270
        %v7272 = vsel %vm7237, %v6962, %v6955
        %v7273 = vsel %vm7239, %v6969, %v7272
        %v7274 = vsel %vm7241, %v6976, %v7273
        %v7275 = vsel %vm7243, %v6983, %v7274
        %v7276 = vsel %vm7245, %v6990, %v7275
        %v7277 = vsel %vm7247, %v6997, %v7276
        %v7278 = vsel %vm7249, %v7004, %v7277
        %v7279 = vsel %vm7237, %v7018, %v7011
        %v7280 = vsel %vm7239, %v7025, %v7279
        %v7281 = vsel %vm7241, %v7032, %v7280
        %v7282 = vsel %vm7243, %v7039, %v7281
        %v7283 = vsel %vm7245, %v7046, %v7282
        %v7284 = vsel %vm7247, %v7053, %v7283
        %v7285 = vsel %vm7249, %v7060, %v7284
        %v7286 = vsel %vm7237, %v7074, %v7067
        %v7287 = vsel %vm7239, %v7081, %v7286
        %v7288 = vsel %vm7241, %v7088, %v7287
        %v7289 = vsel %vm7243, %v7095, %v7288
        %v7290 = vsel %vm7245, %v7102, %v7289
        %v7291 = vsel %vm7247, %v7109, %v7290
        %v7292 = vsel %vm7249, %v7116, %v7291
        %v7293 = vsel %vm7237, %v7130, %v7123
        %v7294 = vsel %vm7239, %v7137, %v7293
        %v7295 = vsel %vm7241, %v7144, %v7294
        %v7296 = vsel %vm7243, %v7151, %v7295
        %v7297 = vsel %vm7245, %v7158, %v7296
        %v7298 = vsel %vm7247, %v7165, %v7297
        %v7299 = vsel %vm7249, %v7172, %v7298
        %7308 = vst.msk [vmem:[%s190] sm:$0xff] %vm2273, %v7250
        %7309 = vst.msk [vmem:[%s190 + $0x8] sm:$0xff] %vm2273, %v7257
        %7310 = vst.msk [vmem:[%s190 + $0x10] sm:$0xff] %vm2273, %v7264
        %7311 = vst.msk [vmem:[%s190 + $0x18] sm:$0xff] %vm2273, %v7271
        %7312 = vst.msk [vmem:[%s190 + $0x20] sm:$0xff] %vm2273, %v7278
        %7313 = vst.msk [vmem:[%s190 + $0x28] sm:$0xff] %vm2273, %v7285
        %7314 = vst.msk [vmem:[%s190 + $0x30] sm:$0xff] %vm2273, %v7292
        %7315 = vst.msk [vmem:[%s190 + $0x38] sm:$0xff] %vm2273, %v7299
        %s7316 = sand.u32 %s115, 1
        %s7317 = scalar_lea.sflag [#allocation7], %s7316
        %s7318 = sand.u32 %s115, 1
        %s7319 = smul.addr %s7318, 64
        %s7320 = scalar_lea.vmem [#allocation6], %s7319
        // Predicated region
        $region37: #{tpu_custom_call.1} parent=35 // pred_check
          %p7321 = pneg %p125
        $region38: #{tpu_custom_call.1} parent=35 // pred_check_branch
          %7323 = sbr.rel (%p7321) target = $region40
        $region39: #{tpu_custom_call.1} parent=35 // pred_region
          %s7325 = ssub.s32 1024, 1024
          %7326 = vsyncadd %s7317, %s7325
          %s7327 = smul.addr %s18, 8
          %s7328 = smul.addr %s7327, 128
          %s7329 = scalar_lea.hbm %s4, %s7328
          %s7330 = sshll.u32 %s7320, 4
          %s7331 = int_to_ptr.vmem [resolvable:$true] %s7330
          %7336 = dma.vmem_to_hbm [thread:$0]  %s7331, 1024, %s7329, %s7317, 128, 128, 8
        $region40: #{tpu_custom_call.1} parent=35 // pred_fallthru
          _
      $region36: #{tpu_custom_call.1} parent=5 // pred_fallthru
        _
      %p7337 = scmp.le.s32.totalorder 2, %s13
      // Predicated region
      $region41: #{tpu_custom_call.1} parent=5 // pred_check
        %p7338 = pneg %p7337
      $region42: #{tpu_custom_call.1} parent=5 // pred_check_branch
        %7340 = sbr.rel (%p7338) target = $region44
      $region43: #{tpu_custom_call.1} parent=5 // pred_region
        %s7341 = ssub.s32 %s13, 2
        // Predicated region
        $region45: #{tpu_custom_call.1} parent=43 // pred_check
          %p7342 = pneg %p131
        $region46: #{tpu_custom_call.1} parent=43 // pred_check_branch
          %7344 = sbr.rel (%p7342) target = $region48
        $region47: #{tpu_custom_call.1} parent=43 // pred_region
          %s7345 = sand.u32 %s116, 1
          %s7346 = scalar_lea.sflag [#allocation7], %s7345
          %s7347 = sand.u32 %s116, 1
          %s7348 = smul.addr %s7347, 64
          %s7349 = scalar_lea.vmem [#allocation6], %s7348
          %7350 = dma.done %s7346, 1024
        $region48: #{tpu_custom_call.1} parent=43 // pred_fallthru
          _
      $region44: #{tpu_custom_call.1} parent=5 // pred_fallthru
        _
    $region6: #{tpu_custom_call.1} parent=1 // loop_footer
      %s17 = sadd.s32 1, %s13
    $region7: #{tpu_custom_call.1} parent=1 // loop_footer_branch
      %12 = sbr.rel target = $region3
    $region8: #{tpu_custom_call.1} parent=1 // loop_exit
      _
    %7351 = vsyncpa [#allocation7], 1
    %s7352 = scalar_lea.sflag [#allocation7], 1
    %7353 = vsyncpa %s7352, 1

</llo_original>
